<compile_context>
chip_gen: v7x
topology: tpu7x:2x2x1
jax: 0.10.0
libtpu: 0.0.40
codegen_flags: <defaults>
</compile_context>

<pallas_src>
import jax
import jax.numpy as jnp
from jax.experimental import pallas as pl
from jax.experimental.pallas import tpu as pltpu


WEIGHT_ORDER = [
    # posterior_net (GaussianGRU, 1 layer)
    "Wq_x", "wq_t", "bq_e", "Wih_q", "Whh_q", "bih_q", "bhh_q",
    "Wmu_q", "bmu_q", "Wlv_q", "blv_q",
    # prior_net (GaussianGRU, 1 layer)
    "Wp_x", "wp_t", "bp_e", "Wih_p", "Whh_p", "bih_p", "bhh_p",
    "Wmu_p", "bmu_p", "Wlv_p", "blv_p",
    # decoder (DecoderGRU, 2 layers)
    "Wd_x", "wd_t", "Wd_z", "bd_e",
    "Wih0", "Whh0", "bih0", "bhh0",
    "Wih1", "Whh1", "bih1", "bhh1",
    "Wout", "bout",
]


def _pack_weights(w, D, H, Z):
    """Consolidate the 36 parameter tensors into 13 fused slabs."""
    f32 = jnp.float32

    def zeros(r, c):
        return jnp.zeros((r, c), f32)

    # Stage A: [x_t | pv] @ W_A -> [emb_q_raw | emb_p_raw | emb_d_pv_raw]
    W_A = jnp.concatenate([
        jnp.concatenate([w["Wq_x"], zeros(D, 2 * H)], axis=1),
        jnp.concatenate([zeros(D, H), w["Wp_x"], w["Wd_x"]], axis=1),
    ], axis=0)                                                        # (2D, 3H)
    # time-counter row / bias row for the three embed layers
    tb = jnp.concatenate([
        jnp.concatenate([w["wq_t"], w["wp_t"], w["wd_t"]], axis=1),
        jnp.concatenate([w["bq_e"], w["bp_e"], w["bd_e"]], axis=1),
    ], axis=0)                                                        # (2, 3H)

    def gru_fuse(Wih, Whh, bih, bhh):
        # [x | h] @ Wg -> [ (gi+gh)_rz | gi_n | gh_n ];  bias pre-summed for r/z
        top = jnp.concatenate([Wih[:, :2 * H], Wih[:, 2 * H:], zeros(H, H)], axis=1)
        bot = jnp.concatenate([Whh[:, :2 * H], zeros(H, H), Whh[:, 2 * H:]], axis=1)
        Wg = jnp.concatenate([top, bot], axis=0)                      # (2H, 4H)
        bg = jnp.concatenate([bih[:, :2 * H] + bhh[:, :2 * H],
                              bih[:, 2 * H:], bhh[:, 2 * H:]], axis=1)  # (1, 4H)
        return Wg, bg

    Wg_q, bg_q = gru_fuse(w["Wih_q"], w["Whh_q"], w["bih_q"], w["bhh_q"])
    Wg_p, bg_p = gru_fuse(w["Wih_p"], w["Whh_p"], w["bih_p"], w["bhh_p"])
    Wg_d0, bg_d0 = gru_fuse(w["Wih0"], w["Whh0"], w["bih0"], w["bhh0"])
    Wg_d1, bg_d1 = gru_fuse(w["Wih1"], w["Whh1"], w["bih1"], w["bhh1"])

    # Stage B: block-diag fusion of posterior + prior GRU cells
    W_B = jnp.concatenate([
        jnp.concatenate([Wg_q, zeros(2 * H, 4 * H)], axis=1),
        jnp.concatenate([zeros(2 * H, 4 * H), Wg_p], axis=1),
    ], axis=0)                                                        # (4H, 8H)
    b_B = jnp.concatenate([bg_q, bg_p], axis=1)                       # (1, 8H)

    # Stage C: block-diag fusion of [mu_q|lv_q] and [mu_p|lv_p] heads
    W_C = jnp.concatenate([
        jnp.concatenate([w["Wmu_q"], w["Wlv_q"], zeros(H, 2 * Z)], axis=1),
        jnp.concatenate([zeros(H, 2 * Z), w["Wmu_p"], w["Wlv_p"]], axis=1),
    ], axis=0)                                                        # (2H, 4Z)
    b_C = jnp.concatenate([w["bmu_q"], w["blv_q"], w["bmu_p"], w["blv_p"]], axis=1)  # (1, 4Z)

    return (W_A, tb, W_B, b_B, W_C, b_C, w["Wd_z"],
            Wg_d0, bg_d0, Wg_d1, bg_d1, w["Wout"], w["bout"])


def _make_kernel(T, B, D, H, Z, unroll_threshold=32):
    inv_T1 = 1.0 / max(T - 1, 1)   # guard T == 1
    inv_BD = 1.0 / (B * D)
    inv_B = 1.0 / B

    def kernel(data_ref, eps_ref,
               WA_ref, tb_ref, WB_ref, bB_ref, WC_ref, bC_ref, Wz_ref,
               Wd0_ref, bd0_ref, Wd1_ref, bd1_ref, Wout_ref, bout_ref,
               gen_ref, mse_ref, kld_ref):

        def gru_out(g, h):
            # g: (B, 4H), bias already added; layout [rz_sum | gi_n | gh_n]
            # TODO(synk): at H % 128 != 0 these lane slices are masked; repack
            #             gates lane-aligned when scaling H.
            r = jax.nn.sigmoid(g[:, :H])
            z = jax.nn.sigmoid(g[:, H:2 * H])
            n = jnp.tanh(g[:, 2 * H:3 * H] + r * g[:, 3 * H:])
            return (1.0 - z) * n + z * h

        def step(i, carry):
            hq, hp, hd0, hd1, pv, se_acc, kl_acc = carry
            tc = jnp.asarray(i, jnp.float32) * inv_T1     # time_counter = i/(T-1)
            x_t = data_ref[i]                             # (B, D) ground truth frame
            eps = eps_ref[i]                              # (B, Z) reparam noise

            # ---- stage A: all three embed projections in one matmul ----
            embA = (jnp.dot(jnp.concatenate([x_t, pv], axis=1), WA_ref[...],
                            preferred_element_type=jnp.float32)
                    + tc * tb_ref[0:1] + tb_ref[1:2])     # (B, 3H)
            emb_q = embA[:, :H]
            emb_p = embA[:, H:2 * H]
            emb_d_pv = embA[:, 2 * H:]

            # ---- stage B: posterior + prior GRU cells, one block-diag matmul ----
            gB = (jnp.dot(jnp.concatenate([emb_q, hq, emb_p, hp], axis=1), WB_ref[...],
                          preferred_element_type=jnp.float32) + bB_ref[...])   # (B, 8H)
            hq = gru_out(gB[:, :4 * H], hq)
            hp = gru_out(gB[:, 4 * H:], hp)

            # ---- stage C: both Gaussian heads, one block-diag matmul ----
            headC = (jnp.dot(jnp.concatenate([hq, hp], axis=1), WC_ref[...],
                             preferred_element_type=jnp.float32) + bC_ref[...])  # (B, 4Z)
            mu = headC[:, :Z]
            logvar = headC[:, Z:2 * Z]
            mu_p = headC[:, 2 * Z:3 * Z]
            logvar_p = headC[:, 3 * Z:]

            # reparameterize (posterior); prior sample z_p is never used -> omitted
            z_t = eps * jnp.exp(0.5 * logvar) + mu

            # ---- decoder: 2 fused GRU cells + output ----
            emb_d = emb_d_pv + jnp.dot(z_t, Wz_ref[...],
                                       preferred_element_type=jnp.float32)
            g0 = (jnp.dot(jnp.concatenate([emb_d, hd0], axis=1), Wd0_ref[...],
                          preferred_element_type=jnp.float32) + bd0_ref[...])
            hd0 = gru_out(g0, hd0)
            g1 = (jnp.dot(jnp.concatenate([hd0, hd1], axis=1), Wd1_ref[...],
                          preferred_element_type=jnp.float32) + bd1_ref[...])
            hd1 = gru_out(g1, hd1)
            x_pred = (jnp.dot(hd1, Wout_ref[...], preferred_element_type=jnp.float32)
                      + bout_ref[...])

            # teacher_force == True (deterministic stand-in for random.random())
            # TODO(synk): at realistic D, write a lane-dense (T, B*D_pad) slab instead.
            gen_ref[i] = x_pred

            # deferred losses: accumulate per-element, reduce once after the loop
            se_acc = se_acc + (x_pred - x_t) ** 2
            e_lv = jnp.exp(logvar)
            kl_acc = kl_acc + (0.5 * (logvar_p - logvar)
                               + (e_lv + (mu - mu_p) ** 2) * (0.5 * jnp.exp(-logvar_p))
                               - 0.5)
            return (hq, hp, hd0, hd1, x_pred, se_acc, kl_acc)

        zero_h = jnp.zeros((B, H), jnp.float32)
        init = (zero_h, zero_h, zero_h, zero_h,
                jnp.zeros((B, D), jnp.float32),   # prior_vec
                jnp.zeros((B, D), jnp.float32),   # squared-error accumulator
                jnp.zeros((B, Z), jnp.float32))   # KL accumulator

        if T <= unroll_threshold:
            # full trace-time unroll: LLO can overlap step i+1's posterior chain
            # with step i's decoder chain.
            carry = init
            for i in range(T):
                carry = step(i, carry)
        else:
            carry = jax.lax.fori_loop(0, T, step, init)

        se_acc, kl_acc = carry[5], carry[6]
        mse_ref[...] = jnp.sum(se_acc, keepdims=True) * inv_BD
        kld_ref[...] = jnp.sum(kl_acc, keepdims=True) * inv_B

    return kernel


def action2motion_forward(data, eps_post, weights, lambdas):
    """Runs the Action2Motion forward pass; returns (generate_batch, mixed_loss, losses)."""
    B, T, D = data.shape
    H = weights["Whh_q"].shape[0]
    Z = weights["Wmu_q"].shape[1]

    packed = _pack_weights(weights, D, H, Z)
    data_t = jnp.transpose(data, (1, 0, 2))     # (T, B, D): time-major for ref[i] loads

    vmem = pl.BlockSpec(memory_space=pltpu.MemorySpace.VMEM)
    n_in = 2 + len(packed)

    gen_tbd, mse_sum, kld_sum = pl.pallas_call(
        _make_kernel(T, B, D, H, Z),
        out_shape=(
            jax.ShapeDtypeStruct((T, B, D), jnp.float32),   # generated motion (time-major)
            jax.ShapeDtypeStruct((1, 1), jnp.float32),      # sum of per-step MSE
            jax.ShapeDtypeStruct((1, 1), jnp.float32),      # sum of per-step KL
        ),
        in_specs=[vmem] * n_in,
        out_specs=(vmem, vmem, vmem),
        compiler_params=pltpu.CompilerParams(vmem_limit_bytes=32 * 1024 * 1024),
    )(data_t, eps_post, *packed)

    gen = jnp.transpose(gen_tbd, (1, 0, 2))                 # back to (B, T, D)
    recons = mse_sum[0, 0] / T
    kl = kld_sum[0, 0] / T
    mixed_loss = recons * lambdas["recons"] + kl * lambdas["kl"]
    losses = {"recons": recons, "kl": kl}                   # kept on-device (no host sync)
    return gen, mixed_loss, losses


def init_params(key, D, H, Z):
    shapes = {
        # posterior
        "Wq_x": (D, H), "wq_t": (1, H), "bq_e": (1, H),
        "Wih_q": (H, 3 * H), "Whh_q": (H, 3 * H), "bih_q": (1, 3 * H), "bhh_q": (1, 3 * H),
        "Wmu_q": (H, Z), "bmu_q": (1, Z), "Wlv_q": (H, Z), "blv_q": (1, Z),
        # prior
        "Wp_x": (D, H), "wp_t": (1, H), "bp_e": (1, H),
        "Wih_p": (H, 3 * H), "Whh_p": (H, 3 * H), "bih_p": (1, 3 * H), "bhh_p": (1, 3 * H),
        "Wmu_p": (H, Z), "bmu_p": (1, Z), "Wlv_p": (H, Z), "blv_p": (1, Z),
        # decoder
        "Wd_x": (D, H), "wd_t": (1, H), "Wd_z": (Z, H), "bd_e": (1, H),
        "Wih0": (H, 3 * H), "Whh0": (H, 3 * H), "bih0": (1, 3 * H), "bhh0": (1, 3 * H),
        "Wih1": (H, 3 * H), "Whh1": (H, 3 * H), "bih1": (1, 3 * H), "bhh1": (1, 3 * H),
        "Wout": (H, D), "bout": (1, D),
    }
    params = {}
    for name in WEIGHT_ORDER:
        key, sub = jax.random.split(key)
        params[name] = jax.random.uniform(sub, shapes[name], jnp.float32, -0.1, 0.1)
    return params


def reference_forward(data, eps_post, w):
    """Pure-JAX reference of the same forward pass (for validation)."""
    B, T, D = data.shape
    H = w["Whh_q"].shape[0]

    def gru(x, h, Wih, Whh, bih, bhh):
        gi = x @ Wih + bih
        gh = h @ Whh + bhh
        r = jax.nn.sigmoid(gi[:, :H] + gh[:, :H])
        z = jax.nn.sigmoid(gi[:, H:2 * H] + gh[:, H:2 * H])
        n = jnp.tanh(gi[:, 2 * H:] + r * gh[:, 2 * H:])
        return (1 - z) * n + z * h

    hid_q = jnp.zeros((B, H)); hid_p = jnp.zeros((B, H))
    hid_d0 = jnp.zeros((B, H)); hid_d1 = jnp.zeros((B, H))
    prior_vec = jnp.zeros((B, D))
    mse_sum = 0.0; kld_sum = 0.0; gens = []
    denom = max(T - 1, 1)
    for i in range(T):
        tc = i / denom
        x_t = data[:, i]
        emb_q = x_t @ w["Wq_x"] + tc * w["wq_t"] + w["bq_e"]
        hid_q = gru(emb_q, hid_q, w["Wih_q"], w["Whh_q"], w["bih_q"], w["bhh_q"])
        mu = hid_q @ w["Wmu_q"] + w["bmu_q"]
        logvar = hid_q @ w["Wlv_q"] + w["blv_q"]
        z_t = eps_post[i] * jnp.exp(0.5 * logvar) + mu
        emb_p = prior_vec @ w["Wp_x"] + tc * w["wp_t"] + w["bp_e"]
        hid_p = gru(emb_p, hid_p, w["Wih_p"], w["Whh_p"], w["bih_p"], w["bhh_p"])
        mu_p = hid_p @ w["Wmu_p"] + w["bmu_p"]
        logvar_p = hid_p @ w["Wlv_p"] + w["blv_p"]
        emb_d = (prior_vec @ w["Wd_x"] + tc * w["wd_t"] + z_t @ w["Wd_z"] + w["bd_e"])
        hid_d0 = gru(emb_d, hid_d0, w["Wih0"], w["Whh0"], w["bih0"], w["bhh0"])
        hid_d1 = gru(hid_d0, hid_d1, w["Wih1"], w["Whh1"], w["bih1"], w["bhh1"])
        x_pred = hid_d1 @ w["Wout"] + w["bout"]
        prior_vec = x_pred  # teacher_force = True
        gens.append(x_pred[:, None])
        mse_sum = mse_sum + jnp.mean((x_pred - x_t) ** 2)
        kld = (0.5 * (logvar_p - logvar)
               + (jnp.exp(logvar) + (mu - mu_p) ** 2) / (2 * jnp.exp(logvar_p)) - 0.5)
        kld_sum = kld_sum + jnp.sum(kld) / B
    return jnp.concatenate(gens, axis=1), mse_sum, kld_sum


if __name__ == "__main__":
    B, T, D, H, Z = 2, 8, 16, 32, 8   # batch, seq len, pose dim, hidden, dim_z
    lambdas = {"recons": 1.0, "kl": 0.001}

    key = jax.random.PRNGKey(0)
    k_data, k_eps, k_params = jax.random.split(key, 3)
    data = jax.random.normal(k_data, (B, T, D), jnp.float32)       # batch['motion']
    eps_post = jax.random.normal(k_eps, (T, B, Z), jnp.float32)    # reparam noise (posterior)
    params = init_params(k_params, D, H, Z)

    gen, mixed_loss, losses = action2motion_forward(data, eps_post, params, lambdas)
    gen = jax.block_until_ready(gen)
    mixed_loss = jax.block_until_ready(mixed_loss)

    # Validate against a pure-JAX reference of the same forward pass.
    gen_ref, mse_ref, kld_ref = reference_forward(data, eps_post, params)
    assert gen.shape == (B, T, D)
    assert jnp.allclose(gen, gen_ref, rtol=1e-2, atol=1e-2)
    mixed_ref = (mse_ref / T) * lambdas["recons"] + (kld_ref / T) * lambdas["kl"]
    assert jnp.allclose(mixed_loss, mixed_ref, rtol=1e-2, atol=1e-2)

    print("KERNEL_OK")
</pallas_src>

<mosaic_0001>
module attributes {stable_mosaic.version = 11 : i64} {
  func.func @kernel(%arg0: memref<8x2x16xf32, #tpu.memory_space<vmem>>, %arg1: memref<8x2x8xf32, #tpu.memory_space<vmem>>, %arg2: memref<32x96xf32, #tpu.memory_space<vmem>>, %arg3: memref<2x96xf32, #tpu.memory_space<vmem>>, %arg4: memref<128x256xf32, #tpu.memory_space<vmem>>, %arg5: memref<1x256xf32, #tpu.memory_space<vmem>>, %arg6: memref<64x32xf32, #tpu.memory_space<vmem>>, %arg7: memref<1x32xf32, #tpu.memory_space<vmem>>, %arg8: memref<8x32xf32, #tpu.memory_space<vmem>>, %arg9: memref<64x128xf32, #tpu.memory_space<vmem>>, %arg10: memref<1x128xf32, #tpu.memory_space<vmem>>, %arg11: memref<64x128xf32, #tpu.memory_space<vmem>>, %arg12: memref<1x128xf32, #tpu.memory_space<vmem>>, %arg13: memref<32x16xf32, #tpu.memory_space<vmem>>, %arg14: memref<1x16xf32, #tpu.memory_space<vmem>>, %arg15: memref<8x2x16xf32, #tpu.memory_space<vmem>>, %arg16: memref<1x1xf32, #tpu.memory_space<vmem>>, %arg17: memref<1x1xf32, #tpu.memory_space<vmem>>) attributes {dimension_semantics = [], scalar_prefetch = 0 : i64, scratch_operands = 0 : i64, tpu.core_type = #tpu.core_type<tc>} {
    %cst = arith.constant 0.000000e+00 : f32
    %0 = vector.broadcast %cst : f32 to vector<2x32xf32>
    %cst_0 = arith.constant 0.000000e+00 : f32
    %1 = vector.broadcast %cst_0 : f32 to vector<2x16xf32>
    %cst_1 = arith.constant 0.000000e+00 : f32
    %2 = vector.broadcast %cst_1 : f32 to vector<2x16xf32>
    %cst_2 = arith.constant 0.000000e+00 : f32
    %3 = vector.broadcast %cst_2 : f32 to vector<2x8xf32>
    %cst_3 = arith.constant 0.000000e+00 : f32
    %cst_4 = arith.constant 0.142857149 : f32
    %4 = arith.mulf %cst_3, %cst_4 : f32
    %c0 = arith.constant 0 : index
    %c0_5 = arith.constant 0 : index
    %c0_6 = arith.constant 0 : index
    %5 = vector.load %arg0[%c0, %c0_5, %c0_6] : memref<8x2x16xf32, #tpu.memory_space<vmem>>, vector<1x2x16xf32>
    %6 = vector.shape_cast %5 : vector<1x2x16xf32> to vector<2x16xf32>
    %c0_7 = arith.constant 0 : index
    %c0_8 = arith.constant 0 : index
    %c0_9 = arith.constant 0 : index
    %7 = vector.load %arg1[%c0_7, %c0_8, %c0_9] : memref<8x2x8xf32, #tpu.memory_space<vmem>>, vector<1x2x8xf32>
    %8 = vector.shape_cast %7 : vector<1x2x8xf32> to vector<2x8xf32>
    %9 = tpu.concatenate %6, %1 in 1 : vector<2x16xf32>, vector<2x16xf32> -> vector<2x32xf32>
    %c0_10 = arith.constant 0 : index
    %c0_11 = arith.constant 0 : index
    %10 = vector.load %arg2[%c0_10, %c0_11] : memref<32x96xf32, #tpu.memory_space<vmem>>, vector<32x96xf32>
    %cst_12 = arith.constant dense<0.000000e+00> : vector<2x96xf32>
    %11 = tpu.matmul %9, %10, %cst_12 {dimension_numbers = #tpu.dot_dimension_numbers<[1], [0], [0], [1], [0, 0, 1, 1], [], []>} : vector<2x32xf32>, vector<32x96xf32>, vector<2x96xf32> -> vector<2x96xf32>
    %c0_13 = arith.constant 0 : index
    %c0_14 = arith.constant 0 : index
    %12 = vector.load %arg3[%c0_13, %c0_14] : memref<2x96xf32, #tpu.memory_space<vmem>>, vector<1x96xf32>
    %13 = vector.broadcast %4 : f32 to vector<1x96xf32>
    %14 = arith.mulf %13, %12 : vector<1x96xf32>
    %15 = vector.broadcast %14 : vector<1x96xf32> to vector<2x96xf32>
    %16 = arith.addf %11, %15 : vector<2x96xf32>
    %c1 = arith.constant 1 : index
    %c0_15 = arith.constant 0 : index
    %17 = vector.load %arg3[%c1, %c0_15] : memref<2x96xf32, #tpu.memory_space<vmem>>, vector<1x96xf32>
    %18 = vector.broadcast %17 : vector<1x96xf32> to vector<2x96xf32>
    %19 = arith.addf %16, %18 : vector<2x96xf32>
    %20 = vector.extract_strided_slice %19 {offsets = [0, 0], sizes = [2, 32], strides = [1, 1]} : vector<2x96xf32> to vector<2x32xf32>
    %21 = vector.extract_strided_slice %19 {offsets = [0, 32], sizes = [2, 32], strides = [1, 1]} : vector<2x96xf32> to vector<2x32xf32>
    %22 = vector.extract_strided_slice %19 {offsets = [0, 64], sizes = [2, 32], strides = [1, 1]} : vector<2x96xf32> to vector<2x32xf32>
    %23 = tpu.concatenate %20, %0, %21, %0 in 1 : vector<2x32xf32>, vector<2x32xf32>, vector<2x32xf32>, vector<2x32xf32> -> vector<2x128xf32>
    %c0_16 = arith.constant 0 : index
    %c0_17 = arith.constant 0 : index
    %24 = vector.load %arg4[%c0_16, %c0_17] : memref<128x256xf32, #tpu.memory_space<vmem>>, vector<128x256xf32>
    %cst_18 = arith.constant dense<0.000000e+00> : vector<2x256xf32>
    %25 = tpu.matmul %23, %24, %cst_18 {dimension_numbers = #tpu.dot_dimension_numbers<[1], [0], [0], [1], [0, 0, 1, 1], [], []>} : vector<2x128xf32>, vector<128x256xf32>, vector<2x256xf32> -> vector<2x256xf32>
    %c0_19 = arith.constant 0 : index
    %c0_20 = arith.constant 0 : index
    %26 = vector.load %arg5[%c0_19, %c0_20] : memref<1x256xf32, #tpu.memory_space<vmem>>, vector<1x256xf32>
    %27 = vector.broadcast %26 : vector<1x256xf32> to vector<2x256xf32>
    %28 = arith.addf %25, %27 : vector<2x256xf32>
    %29 = vector.extract_strided_slice %28 {offsets = [0, 0], sizes = [2, 128], strides = [1, 1]} : vector<2x256xf32> to vector<2x128xf32>
    %30 = vector.extract_strided_slice %29 {offsets = [0, 0], sizes = [2, 32], strides = [1, 1]} : vector<2x128xf32> to vector<2x32xf32>
    %31 = arith.negf %30 : vector<2x32xf32>
    %32 = math.exp %31 : vector<2x32xf32>
    %cst_21 = arith.constant 1.000000e+00 : f32
    %33 = vector.broadcast %cst_21 : f32 to vector<2x32xf32>
    %34 = arith.addf %33, %32 : vector<2x32xf32>
    %35 = arith.divf %33, %34 : vector<2x32xf32>
    %36 = vector.extract_strided_slice %29 {offsets = [0, 32], sizes = [2, 32], strides = [1, 1]} : vector<2x128xf32> to vector<2x32xf32>
    %37 = arith.negf %36 : vector<2x32xf32>
    %38 = math.exp %37 : vector<2x32xf32>
    %cst_22 = arith.constant 1.000000e+00 : f32
    %39 = vector.broadcast %cst_22 : f32 to vector<2x32xf32>
    %40 = arith.addf %39, %38 : vector<2x32xf32>
    %41 = arith.divf %39, %40 : vector<2x32xf32>
    %42 = vector.extract_strided_slice %29 {offsets = [0, 64], sizes = [2, 32], strides = [1, 1]} : vector<2x128xf32> to vector<2x32xf32>
    %43 = vector.extract_strided_slice %29 {offsets = [0, 96], sizes = [2, 32], strides = [1, 1]} : vector<2x128xf32> to vector<2x32xf32>
    %44 = arith.mulf %35, %43 : vector<2x32xf32>
    %45 = arith.addf %42, %44 : vector<2x32xf32>
    %46 = math.tanh %45 : vector<2x32xf32>
    %cst_23 = arith.constant 1.000000e+00 : f32
    %47 = vector.broadcast %cst_23 : f32 to vector<2x32xf32>
    %48 = arith.subf %47, %41 : vector<2x32xf32>
    %49 = arith.mulf %48, %46 : vector<2x32xf32>
    %50 = arith.mulf %41, %0 : vector<2x32xf32>
    %51 = arith.addf %49, %50 : vector<2x32xf32>
    %52 = vector.extract_strided_slice %28 {offsets = [0, 128], sizes = [2, 128], strides = [1, 1]} : vector<2x256xf32> to vector<2x128xf32>
    %53 = vector.extract_strided_slice %52 {offsets = [0, 0], sizes = [2, 32], strides = [1, 1]} : vector<2x128xf32> to vector<2x32xf32>
    %54 = arith.negf %53 : vector<2x32xf32>
    %55 = math.exp %54 : vector<2x32xf32>
    %cst_24 = arith.constant 1.000000e+00 : f32
    %56 = vector.broadcast %cst_24 : f32 to vector<2x32xf32>
    %57 = arith.addf %56, %55 : vector<2x32xf32>
    %58 = arith.divf %56, %57 : vector<2x32xf32>
    %59 = vector.extract_strided_slice %52 {offsets = [0, 32], sizes = [2, 32], strides = [1, 1]} : vector<2x128xf32> to vector<2x32xf32>
    %60 = arith.negf %59 : vector<2x32xf32>
    %61 = math.exp %60 : vector<2x32xf32>
    %cst_25 = arith.constant 1.000000e+00 : f32
    %62 = vector.broadcast %cst_25 : f32 to vector<2x32xf32>
    %63 = arith.addf %62, %61 : vector<2x32xf32>
    %64 = arith.divf %62, %63 : vector<2x32xf32>
    %65 = vector.extract_strided_slice %52 {offsets = [0, 64], sizes = [2, 32], strides = [1, 1]} : vector<2x128xf32> to vector<2x32xf32>
    %66 = vector.extract_strided_slice %52 {offsets = [0, 96], sizes = [2, 32], strides = [1, 1]} : vector<2x128xf32> to vector<2x32xf32>
    %67 = arith.mulf %58, %66 : vector<2x32xf32>
    %68 = arith.addf %65, %67 : vector<2x32xf32>
    %69 = math.tanh %68 : vector<2x32xf32>
    %cst_26 = arith.constant 1.000000e+00 : f32
    %70 = vector.broadcast %cst_26 : f32 to vector<2x32xf32>
    %71 = arith.subf %70, %64 : vector<2x32xf32>
    %72 = arith.mulf %71, %69 : vector<2x32xf32>
    %73 = arith.mulf %64, %0 : vector<2x32xf32>
    %74 = arith.addf %72, %73 : vector<2x32xf32>
    %75 = tpu.concatenate %51, %74 in 1 : vector<2x32xf32>, vector<2x32xf32> -> vector<2x64xf32>
    %c0_27 = arith.constant 0 : index
    %c0_28 = arith.constant 0 : index
    %76 = vector.load %arg6[%c0_27, %c0_28] : memref<64x32xf32, #tpu.memory_space<vmem>>, vector<64x32xf32>
    %cst_29 = arith.constant dense<0.000000e+00> : vector<2x32xf32>
    %77 = tpu.matmul %75, %76, %cst_29 {dimension_numbers = #tpu.dot_dimension_numbers<[1], [0], [0], [1], [0, 0, 1, 1], [], []>} : vector<2x64xf32>, vector<64x32xf32>, vector<2x32xf32> -> vector<2x32xf32>
    %c0_30 = arith.constant 0 : index
    %c0_31 = arith.constant 0 : index
    %78 = vector.load %arg7[%c0_30, %c0_31] : memref<1x32xf32, #tpu.memory_space<vmem>>, vector<1x32xf32>
    %79 = vector.broadcast %78 : vector<1x32xf32> to vector<2x32xf32>
    %80 = arith.addf %77, %79 : vector<2x32xf32>
    %81 = vector.extract_strided_slice %80 {offsets = [0, 0], sizes = [2, 8], strides = [1, 1]} : vector<2x32xf32> to vector<2x8xf32>
    %82 = vector.extract_strided_slice %80 {offsets = [0, 8], sizes = [2, 8], strides = [1, 1]} : vector<2x32xf32> to vector<2x8xf32>
    %83 = vector.extract_strided_slice %80 {offsets = [0, 16], sizes = [2, 8], strides = [1, 1]} : vector<2x32xf32> to vector<2x8xf32>
    %84 = vector.extract_strided_slice %80 {offsets = [0, 24], sizes = [2, 8], strides = [1, 1]} : vector<2x32xf32> to vector<2x8xf32>
    %cst_32 = arith.constant 5.000000e-01 : f32
    %85 = vector.broadcast %cst_32 : f32 to vector<2x8xf32>
    %86 = arith.mulf %85, %82 : vector<2x8xf32>
    %87 = math.exp %86 : vector<2x8xf32>
    %88 = arith.mulf %8, %87 : vector<2x8xf32>
    %89 = arith.addf %88, %81 : vector<2x8xf32>
    %c0_33 = arith.constant 0 : index
    %c0_34 = arith.constant 0 : index
    %90 = vector.load %arg8[%c0_33, %c0_34] : memref<8x32xf32, #tpu.memory_space<vmem>>, vector<8x32xf32>
    %cst_35 = arith.constant dense<0.000000e+00> : vector<2x32xf32>
    %91 = tpu.matmul %89, %90, %cst_35 {dimension_numbers = #tpu.dot_dimension_numbers<[1], [0], [0], [1], [0, 0, 1, 1], [], []>} : vector<2x8xf32>, vector<8x32xf32>, vector<2x32xf32> -> vector<2x32xf32>
    %92 = arith.addf %22, %91 : vector<2x32xf32>
    %93 = tpu.concatenate %92, %0 in 1 : vector<2x32xf32>, vector<2x32xf32> -> vector<2x64xf32>
    %c0_36 = arith.constant 0 : index
    %c0_37 = arith.constant 0 : index
    %94 = vector.load %arg9[%c0_36, %c0_37] : memref<64x128xf32, #tpu.memory_space<vmem>>, vector<64x128xf32>
    %cst_38 = arith.constant dense<0.000000e+00> : vector<2x128xf32>
    %95 = tpu.matmul %93, %94, %cst_38 {dimension_numbers = #tpu.dot_dimension_numbers<[1], [0], [0], [1], [0, 0, 1, 1], [], []>} : vector<2x64xf32>, vector<64x128xf32>, vector<2x128xf32> -> vector<2x128xf32>
    %c0_39 = arith.constant 0 : index
    %c0_40 = arith.constant 0 : index
    %96 = vector.load %arg10[%c0_39, %c0_40] : memref<1x128xf32, #tpu.memory_space<vmem>>, vector<1x128xf32>
    %97 = vector.broadcast %96 : vector<1x128xf32> to vector<2x128xf32>
    %98 = arith.addf %95, %97 : vector<2x128xf32>
    %99 = vector.extract_strided_slice %98 {offsets = [0, 0], sizes = [2, 32], strides = [1, 1]} : vector<2x128xf32> to vector<2x32xf32>
    %100 = arith.negf %99 : vector<2x32xf32>
    %101 = math.exp %100 : vector<2x32xf32>
    %cst_41 = arith.constant 1.000000e+00 : f32
    %102 = vector.broadcast %cst_41 : f32 to vector<2x32xf32>
    %103 = arith.addf %102, %101 : vector<2x32xf32>
    %104 = arith.divf %102, %103 : vector<2x32xf32>
    %105 = vector.extract_strided_slice %98 {offsets = [0, 32], sizes = [2, 32], strides = [1, 1]} : vector<2x128xf32> to vector<2x32xf32>
    %106 = arith.negf %105 : vector<2x32xf32>
    %107 = math.exp %106 : vector<2x32xf32>
    %cst_42 = arith.constant 1.000000e+00 : f32
    %108 = vector.broadcast %cst_42 : f32 to vector<2x32xf32>
    %109 = arith.addf %108, %107 : vector<2x32xf32>
    %110 = arith.divf %108, %109 : vector<2x32xf32>
    %111 = vector.extract_strided_slice %98 {offsets = [0, 64], sizes = [2, 32], strides = [1, 1]} : vector<2x128xf32> to vector<2x32xf32>
    %112 = vector.extract_strided_slice %98 {offsets = [0, 96], sizes = [2, 32], strides = [1, 1]} : vector<2x128xf32> to vector<2x32xf32>
    %113 = arith.mulf %104, %112 : vector<2x32xf32>
    %114 = arith.addf %111, %113 : vector<2x32xf32>
    %115 = math.tanh %114 : vector<2x32xf32>
    %cst_43 = arith.constant 1.000000e+00 : f32
    %116 = vector.broadcast %cst_43 : f32 to vector<2x32xf32>
    %117 = arith.subf %116, %110 : vector<2x32xf32>
    %118 = arith.mulf %117, %115 : vector<2x32xf32>
    %119 = arith.mulf %110, %0 : vector<2x32xf32>
    %120 = arith.addf %118, %119 : vector<2x32xf32>
    %121 = tpu.concatenate %120, %0 in 1 : vector<2x32xf32>, vector<2x32xf32> -> vector<2x64xf32>
    %c0_44 = arith.constant 0 : index
    %c0_45 = arith.constant 0 : index
    %122 = vector.load %arg11[%c0_44, %c0_45] : memref<64x128xf32, #tpu.memory_space<vmem>>, vector<64x128xf32>
    %cst_46 = arith.constant dense<0.000000e+00> : vector<2x128xf32>
    %123 = tpu.matmul %121, %122, %cst_46 {dimension_numbers = #tpu.dot_dimension_numbers<[1], [0], [0], [1], [0, 0, 1, 1], [], []>} : vector<2x64xf32>, vector<64x128xf32>, vector<2x128xf32> -> vector<2x128xf32>
    %c0_47 = arith.constant 0 : index
    %c0_48 = arith.constant 0 : index
    %124 = vector.load %arg12[%c0_47, %c0_48] : memref<1x128xf32, #tpu.memory_space<vmem>>, vector<1x128xf32>
    %125 = vector.broadcast %124 : vector<1x128xf32> to vector<2x128xf32>
    %126 = arith.addf %123, %125 : vector<2x128xf32>
    %127 = vector.extract_strided_slice %126 {offsets = [0, 0], sizes = [2, 32], strides = [1, 1]} : vector<2x128xf32> to vector<2x32xf32>
    %128 = arith.negf %127 : vector<2x32xf32>
    %129 = math.exp %128 : vector<2x32xf32>
    %cst_49 = arith.constant 1.000000e+00 : f32
    %130 = vector.broadcast %cst_49 : f32 to vector<2x32xf32>
    %131 = arith.addf %130, %129 : vector<2x32xf32>
    %132 = arith.divf %130, %131 : vector<2x32xf32>
    %133 = vector.extract_strided_slice %126 {offsets = [0, 32], sizes = [2, 32], strides = [1, 1]} : vector<2x128xf32> to vector<2x32xf32>
    %134 = arith.negf %133 : vector<2x32xf32>
    %135 = math.exp %134 : vector<2x32xf32>
    %cst_50 = arith.constant 1.000000e+00 : f32
    %136 = vector.broadcast %cst_50 : f32 to vector<2x32xf32>
    %137 = arith.addf %136, %135 : vector<2x32xf32>
    %138 = arith.divf %136, %137 : vector<2x32xf32>
    %139 = vector.extract_strided_slice %126 {offsets = [0, 64], sizes = [2, 32], strides = [1, 1]} : vector<2x128xf32> to vector<2x32xf32>
    %140 = vector.extract_strided_slice %126 {offsets = [0, 96], sizes = [2, 32], strides = [1, 1]} : vector<2x128xf32> to vector<2x32xf32>
    %141 = arith.mulf %132, %140 : vector<2x32xf32>
    %142 = arith.addf %139, %141 : vector<2x32xf32>
    %143 = math.tanh %142 : vector<2x32xf32>
    %cst_51 = arith.constant 1.000000e+00 : f32
    %144 = vector.broadcast %cst_51 : f32 to vector<2x32xf32>
    %145 = arith.subf %144, %138 : vector<2x32xf32>
    %146 = arith.mulf %145, %143 : vector<2x32xf32>
    %147 = arith.mulf %138, %0 : vector<2x32xf32>
    %148 = arith.addf %146, %147 : vector<2x32xf32>
    %c0_52 = arith.constant 0 : index
    %c0_53 = arith.constant 0 : index
    %149 = vector.load %arg13[%c0_52, %c0_53] : memref<32x16xf32, #tpu.memory_space<vmem>>, vector<32x16xf32>
    %cst_54 = arith.constant dense<0.000000e+00> : vector<2x16xf32>
    %150 = tpu.matmul %148, %149, %cst_54 {dimension_numbers = #tpu.dot_dimension_numbers<[1], [0], [0], [1], [0, 0, 1, 1], [], []>} : vector<2x32xf32>, vector<32x16xf32>, vector<2x16xf32> -> vector<2x16xf32>
    %c0_55 = arith.constant 0 : index
    %c0_56 = arith.constant 0 : index
    %151 = vector.load %arg14[%c0_55, %c0_56] : memref<1x16xf32, #tpu.memory_space<vmem>>, vector<1x16xf32>
    %152 = vector.broadcast %151 : vector<1x16xf32> to vector<2x16xf32>
    %153 = arith.addf %150, %152 : vector<2x16xf32>
    %c0_57 = arith.constant 0 : index
    %c0_58 = arith.constant 0 : index
    %c0_59 = arith.constant 0 : index
    %154 = vector.load %arg15[%c0_57, %c0_58, %c0_59] : memref<8x2x16xf32, #tpu.memory_space<vmem>>, vector<1x2x16xf32>
    %155 = vector.shape_cast %154 : vector<1x2x16xf32> to vector<2x16xf32>
    %156 = vector.shape_cast %153 : vector<2x16xf32> to vector<1x2x16xf32>
    tpu.vector_store %arg15[%c0_57, %c0_58, %c0_59], %156 {strides = array<i32>} : memref<8x2x16xf32, #tpu.memory_space<vmem>>, vector<1x2x16xf32>,
    %157 = arith.subf %153, %6 : vector<2x16xf32>
    %158 = arith.mulf %157, %157 : vector<2x16xf32>
    %159 = arith.addf %2, %158 : vector<2x16xf32>
    %160 = math.exp %82 : vector<2x8xf32>
    %161 = arith.subf %84, %82 : vector<2x8xf32>
    %cst_60 = arith.constant 5.000000e-01 : f32
    %162 = vector.broadcast %cst_60 : f32 to vector<2x8xf32>
    %163 = arith.mulf %162, %161 : vector<2x8xf32>
    %164 = arith.subf %81, %83 : vector<2x8xf32>
    %165 = arith.mulf %164, %164 : vector<2x8xf32>
    %166 = arith.addf %160, %165 : vector<2x8xf32>
    %cst_61 = arith.constant 0.000000e+00 : f32
    %167 = vector.broadcast %cst_61 : f32 to vector<2x8xf32>
    %168 = arith.subf %167, %84 : vector<2x8xf32>
    %169 = math.exp %168 : vector<2x8xf32>
    %cst_62 = arith.constant 5.000000e-01 : f32
    %170 = vector.broadcast %cst_62 : f32 to vector<2x8xf32>
    %171 = arith.mulf %170, %169 : vector<2x8xf32>
    %172 = arith.mulf %166, %171 : vector<2x8xf32>
    %173 = arith.addf %163, %172 : vector<2x8xf32>
    %cst_63 = arith.constant 5.000000e-01 : f32
    %174 = vector.broadcast %cst_63 : f32 to vector<2x8xf32>
    %175 = arith.subf %173, %174 : vector<2x8xf32>
    %176 = arith.addf %3, %175 : vector<2x8xf32>
    %cst_64 = arith.constant 1.000000e+00 : f32
    %cst_65 = arith.constant 0.142857149 : f32
    %177 = arith.mulf %cst_64, %cst_65 : f32
    %c1_66 = arith.constant 1 : index
    %c0_67 = arith.constant 0 : index
    %c0_68 = arith.constant 0 : index
    %178 = vector.load %arg0[%c1_66, %c0_67, %c0_68] : memref<8x2x16xf32, #tpu.memory_space<vmem>>, vector<1x2x16xf32>
    %179 = vector.shape_cast %178 : vector<1x2x16xf32> to vector<2x16xf32>
    %c1_69 = arith.constant 1 : index
    %c0_70 = arith.constant 0 : index
    %c0_71 = arith.constant 0 : index
    %180 = vector.load %arg1[%c1_69, %c0_70, %c0_71] : memref<8x2x8xf32, #tpu.memory_space<vmem>>, vector<1x2x8xf32>
    %181 = vector.shape_cast %180 : vector<1x2x8xf32> to vector<2x8xf32>
    %182 = tpu.concatenate %179, %153 in 1 : vector<2x16xf32>, vector<2x16xf32> -> vector<2x32xf32>
    %c0_72 = arith.constant 0 : index
    %c0_73 = arith.constant 0 : index
    %183 = vector.load %arg2[%c0_72, %c0_73] : memref<32x96xf32, #tpu.memory_space<vmem>>, vector<32x96xf32>
    %cst_74 = arith.constant dense<0.000000e+00> : vector<2x96xf32>
    %184 = tpu.matmul %182, %183, %cst_74 {dimension_numbers = #tpu.dot_dimension_numbers<[1], [0], [0], [1], [0, 0, 1, 1], [], []>} : vector<2x32xf32>, vector<32x96xf32>, vector<2x96xf32> -> vector<2x96xf32>
    %c0_75 = arith.constant 0 : index
    %c0_76 = arith.constant 0 : index
    %185 = vector.load %arg3[%c0_75, %c0_76] : memref<2x96xf32, #tpu.memory_space<vmem>>, vector<1x96xf32>
    %186 = vector.broadcast %177 : f32 to vector<1x96xf32>
    %187 = arith.mulf %186, %185 : vector<1x96xf32>
    %188 = vector.broadcast %187 : vector<1x96xf32> to vector<2x96xf32>
    %189 = arith.addf %184, %188 : vector<2x96xf32>
    %c1_77 = arith.constant 1 : index
    %c0_78 = arith.constant 0 : index
    %190 = vector.load %arg3[%c1_77, %c0_78] : memref<2x96xf32, #tpu.memory_space<vmem>>, vector<1x96xf32>
    %191 = vector.broadcast %190 : vector<1x96xf32> to vector<2x96xf32>
    %192 = arith.addf %189, %191 : vector<2x96xf32>
    %193 = vector.extract_strided_slice %192 {offsets = [0, 0], sizes = [2, 32], strides = [1, 1]} : vector<2x96xf32> to vector<2x32xf32>
    %194 = vector.extract_strided_slice %192 {offsets = [0, 32], sizes = [2, 32], strides = [1, 1]} : vector<2x96xf32> to vector<2x32xf32>
    %195 = vector.extract_strided_slice %192 {offsets = [0, 64], sizes = [2, 32], strides = [1, 1]} : vector<2x96xf32> to vector<2x32xf32>
    %196 = tpu.concatenate %193, %51, %194, %74 in 1 : vector<2x32xf32>, vector<2x32xf32>, vector<2x32xf32>, vector<2x32xf32> -> vector<2x128xf32>
    %c0_79 = arith.constant 0 : index
    %c0_80 = arith.constant 0 : index
    %197 = vector.load %arg4[%c0_79, %c0_80] : memref<128x256xf32, #tpu.memory_space<vmem>>, vector<128x256xf32>
    %cst_81 = arith.constant dense<0.000000e+00> : vector<2x256xf32>
    %198 = tpu.matmul %196, %197, %cst_81 {dimension_numbers = #tpu.dot_dimension_numbers<[1], [0], [0], [1], [0, 0, 1, 1], [], []>} : vector<2x128xf32>, vector<128x256xf32>, vector<2x256xf32> -> vector<2x256xf32>
    %c0_82 = arith.constant 0 : index
    %c0_83 = arith.constant 0 : index
    %199 = vector.load %arg5[%c0_82, %c0_83] : memref<1x256xf32, #tpu.memory_space<vmem>>, vector<1x256xf32>
    %200 = vector.broadcast %199 : vector<1x256xf32> to vector<2x256xf32>
    %201 = arith.addf %198, %200 : vector<2x256xf32>
    %202 = vector.extract_strided_slice %201 {offsets = [0, 0], sizes = [2, 128], strides = [1, 1]} : vector<2x256xf32> to vector<2x128xf32>
    %203 = vector.extract_strided_slice %202 {offsets = [0, 0], sizes = [2, 32], strides = [1, 1]} : vector<2x128xf32> to vector<2x32xf32>
    %204 = arith.negf %203 : vector<2x32xf32>
    %205 = math.exp %204 : vector<2x32xf32>
    %cst_84 = arith.constant 1.000000e+00 : f32
    %206 = vector.broadcast %cst_84 : f32 to vector<2x32xf32>
    %207 = arith.addf %206, %205 : vector<2x32xf32>
    %208 = arith.divf %206, %207 : vector<2x32xf32>
    %209 = vector.extract_strided_slice %202 {offsets = [0, 32], sizes = [2, 32], strides = [1, 1]} : vector<2x128xf32> to vector<2x32xf32>
    %210 = arith.negf %209 : vector<2x32xf32>
    %211 = math.exp %210 : vector<2x32xf32>
    %cst_85 = arith.constant 1.000000e+00 : f32
    %212 = vector.broadcast %cst_85 : f32 to vector<2x32xf32>
    %213 = arith.addf %212, %211 : vector<2x32xf32>
    %214 = arith.divf %212, %213 : vector<2x32xf32>
    %215 = vector.extract_strided_slice %202 {offsets = [0, 64], sizes = [2, 32], strides = [1, 1]} : vector<2x128xf32> to vector<2x32xf32>
    %216 = vector.extract_strided_slice %202 {offsets = [0, 96], sizes = [2, 32], strides = [1, 1]} : vector<2x128xf32> to vector<2x32xf32>
    %217 = arith.mulf %208, %216 : vector<2x32xf32>
    %218 = arith.addf %215, %217 : vector<2x32xf32>
    %219 = math.tanh %218 : vector<2x32xf32>
    %cst_86 = arith.constant 1.000000e+00 : f32
    %220 = vector.broadcast %cst_86 : f32 to vector<2x32xf32>
    %221 = arith.subf %220, %214 : vector<2x32xf32>
    %222 = arith.mulf %221, %219 : vector<2x32xf32>
    %223 = arith.mulf %214, %51 : vector<2x32xf32>
    %224 = arith.addf %222, %223 : vector<2x32xf32>
    %225 = vector.extract_strided_slice %201 {offsets = [0, 128], sizes = [2, 128], strides = [1, 1]} : vector<2x256xf32> to vector<2x128xf32>
    %226 = vector.extract_strided_slice %225 {offsets = [0, 0], sizes = [2, 32], strides = [1, 1]} : vector<2x128xf32> to vector<2x32xf32>
    %227 = arith.negf %226 : vector<2x32xf32>
    %228 = math.exp %227 : vector<2x32xf32>
    %cst_87 = arith.constant 1.000000e+00 : f32
    %229 = vector.broadcast %cst_87 : f32 to vector<2x32xf32>
    %230 = arith.addf %229, %228 : vector<2x32xf32>
    %231 = arith.divf %229, %230 : vector<2x32xf32>
    %232 = vector.extract_strided_slice %225 {offsets = [0, 32], sizes = [2, 32], strides = [1, 1]} : vector<2x128xf32> to vector<2x32xf32>
    %233 = arith.negf %232 : vector<2x32xf32>
    %234 = math.exp %233 : vector<2x32xf32>
    %cst_88 = arith.constant 1.000000e+00 : f32
    %235 = vector.broadcast %cst_88 : f32 to vector<2x32xf32>
    %236 = arith.addf %235, %234 : vector<2x32xf32>
    %237 = arith.divf %235, %236 : vector<2x32xf32>
    %238 = vector.extract_strided_slice %225 {offsets = [0, 64], sizes = [2, 32], strides = [1, 1]} : vector<2x128xf32> to vector<2x32xf32>
    %239 = vector.extract_strided_slice %225 {offsets = [0, 96], sizes = [2, 32], strides = [1, 1]} : vector<2x128xf32> to vector<2x32xf32>
    %240 = arith.mulf %231, %239 : vector<2x32xf32>
    %241 = arith.addf %238, %240 : vector<2x32xf32>
    %242 = math.tanh %241 : vector<2x32xf32>
    %cst_89 = arith.constant 1.000000e+00 : f32
    %243 = vector.broadcast %cst_89 : f32 to vector<2x32xf32>
    %244 = arith.subf %243, %237 : vector<2x32xf32>
    %245 = arith.mulf %244, %242 : vector<2x32xf32>
    %246 = arith.mulf %237, %74 : vector<2x32xf32>
    %247 = arith.addf %245, %246 : vector<2x32xf32>
    %248 = tpu.concatenate %224, %247 in 1 : vector<2x32xf32>, vector<2x32xf32> -> vector<2x64xf32>
    %c0_90 = arith.constant 0 : index
    %c0_91 = arith.constant 0 : index
    %249 = vector.load %arg6[%c0_90, %c0_91] : memref<64x32xf32, #tpu.memory_space<vmem>>, vector<64x32xf32>
    %cst_92 = arith.constant dense<0.000000e+00> : vector<2x32xf32>
    %250 = tpu.matmul %248, %249, %cst_92 {dimension_numbers = #tpu.dot_dimension_numbers<[1], [0], [0], [1], [0, 0, 1, 1], [], []>} : vector<2x64xf32>, vector<64x32xf32>, vector<2x32xf32> -> vector<2x32xf32>
    %c0_93 = arith.constant 0 : index
    %c0_94 = arith.constant 0 : index
    %251 = vector.load %arg7[%c0_93, %c0_94] : memref<1x32xf32, #tpu.memory_space<vmem>>, vector<1x32xf32>
    %252 = vector.broadcast %251 : vector<1x32xf32> to vector<2x32xf32>
    %253 = arith.addf %250, %252 : vector<2x32xf32>
    %254 = vector.extract_strided_slice %253 {offsets = [0, 0], sizes = [2, 8], strides = [1, 1]} : vector<2x32xf32> to vector<2x8xf32>
    %255 = vector.extract_strided_slice %253 {offsets = [0, 8], sizes = [2, 8], strides = [1, 1]} : vector<2x32xf32> to vector<2x8xf32>
    %256 = vector.extract_strided_slice %253 {offsets = [0, 16], sizes = [2, 8], strides = [1, 1]} : vector<2x32xf32> to vector<2x8xf32>
    %257 = vector.extract_strided_slice %253 {offsets = [0, 24], sizes = [2, 8], strides = [1, 1]} : vector<2x32xf32> to vector<2x8xf32>
    %cst_95 = arith.constant 5.000000e-01 : f32
    %258 = vector.broadcast %cst_95 : f32 to vector<2x8xf32>
    %259 = arith.mulf %258, %255 : vector<2x8xf32>
    %260 = math.exp %259 : vector<2x8xf32>
    %261 = arith.mulf %181, %260 : vector<2x8xf32>
    %262 = arith.addf %261, %254 : vector<2x8xf32>
    %c0_96 = arith.constant 0 : index
    %c0_97 = arith.constant 0 : index
    %263 = vector.load %arg8[%c0_96, %c0_97] : memref<8x32xf32, #tpu.memory_space<vmem>>, vector<8x32xf32>
    %cst_98 = arith.constant dense<0.000000e+00> : vector<2x32xf32>
    %264 = tpu.matmul %262, %263, %cst_98 {dimension_numbers = #tpu.dot_dimension_numbers<[1], [0], [0], [1], [0, 0, 1, 1], [], []>} : vector<2x8xf32>, vector<8x32xf32>, vector<2x32xf32> -> vector<2x32xf32>
    %265 = arith.addf %195, %264 : vector<2x32xf32>
    %266 = tpu.concatenate %265, %120 in 1 : vector<2x32xf32>, vector<2x32xf32> -> vector<2x64xf32>
    %c0_99 = arith.constant 0 : index
    %c0_100 = arith.constant 0 : index
    %267 = vector.load %arg9[%c0_99, %c0_100] : memref<64x128xf32, #tpu.memory_space<vmem>>, vector<64x128xf32>
    %cst_101 = arith.constant dense<0.000000e+00> : vector<2x128xf32>
    %268 = tpu.matmul %266, %267, %cst_101 {dimension_numbers = #tpu.dot_dimension_numbers<[1], [0], [0], [1], [0, 0, 1, 1], [], []>} : vector<2x64xf32>, vector<64x128xf32>, vector<2x128xf32> -> vector<2x128xf32>
    %c0_102 = arith.constant 0 : index
    %c0_103 = arith.constant 0 : index
    %269 = vector.load %arg10[%c0_102, %c0_103] : memref<1x128xf32, #tpu.memory_space<vmem>>, vector<1x128xf32>
    %270 = vector.broadcast %269 : vector<1x128xf32> to vector<2x128xf32>
    %271 = arith.addf %268, %270 : vector<2x128xf32>
    %272 = vector.extract_strided_slice %271 {offsets = [0, 0], sizes = [2, 32], strides = [1, 1]} : vector<2x128xf32> to vector<2x32xf32>
    %273 = arith.negf %272 : vector<2x32xf32>
    %274 = math.exp %273 : vector<2x32xf32>
    %cst_104 = arith.constant 1.000000e+00 : f32
    %275 = vector.broadcast %cst_104 : f32 to vector<2x32xf32>
    %276 = arith.addf %275, %274 : vector<2x32xf32>
    %277 = arith.divf %275, %276 : vector<2x32xf32>
    %278 = vector.extract_strided_slice %271 {offsets = [0, 32], sizes = [2, 32], strides = [1, 1]} : vector<2x128xf32> to vector<2x32xf32>
    %279 = arith.negf %278 : vector<2x32xf32>
    %280 = math.exp %279 : vector<2x32xf32>
    %cst_105 = arith.constant 1.000000e+00 : f32
    %281 = vector.broadcast %cst_105 : f32 to vector<2x32xf32>
    %282 = arith.addf %281, %280 : vector<2x32xf32>
    %283 = arith.divf %281, %282 : vector<2x32xf32>
    %284 = vector.extract_strided_slice %271 {offsets = [0, 64], sizes = [2, 32], strides = [1, 1]} : vector<2x128xf32> to vector<2x32xf32>
    %285 = vector.extract_strided_slice %271 {offsets = [0, 96], sizes = [2, 32], strides = [1, 1]} : vector<2x128xf32> to vector<2x32xf32>
    %286 = arith.mulf %277, %285 : vector<2x32xf32>
    %287 = arith.addf %284, %286 : vector<2x32xf32>
    %288 = math.tanh %287 : vector<2x32xf32>
    %cst_106 = arith.constant 1.000000e+00 : f32
    %289 = vector.broadcast %cst_106 : f32 to vector<2x32xf32>
    %290 = arith.subf %289, %283 : vector<2x32xf32>
    %291 = arith.mulf %290, %288 : vector<2x32xf32>
    %292 = arith.mulf %283, %120 : vector<2x32xf32>
    %293 = arith.addf %291, %292 : vector<2x32xf32>
    %294 = tpu.concatenate %293, %148 in 1 : vector<2x32xf32>, vector<2x32xf32> -> vector<2x64xf32>
    %c0_107 = arith.constant 0 : index
    %c0_108 = arith.constant 0 : index
    %295 = vector.load %arg11[%c0_107, %c0_108] : memref<64x128xf32, #tpu.memory_space<vmem>>, vector<64x128xf32>
    %cst_109 = arith.constant dense<0.000000e+00> : vector<2x128xf32>
    %296 = tpu.matmul %294, %295, %cst_109 {dimension_numbers = #tpu.dot_dimension_numbers<[1], [0], [0], [1], [0, 0, 1, 1], [], []>} : vector<2x64xf32>, vector<64x128xf32>, vector<2x128xf32> -> vector<2x128xf32>
    %c0_110 = arith.constant 0 : index
    %c0_111 = arith.constant 0 : index
    %297 = vector.load %arg12[%c0_110, %c0_111] : memref<1x128xf32, #tpu.memory_space<vmem>>, vector<1x128xf32>
    %298 = vector.broadcast %297 : vector<1x128xf32> to vector<2x128xf32>
    %299 = arith.addf %296, %298 : vector<2x128xf32>
    %300 = vector.extract_strided_slice %299 {offsets = [0, 0], sizes = [2, 32], strides = [1, 1]} : vector<2x128xf32> to vector<2x32xf32>
    %301 = arith.negf %300 : vector<2x32xf32>
    %302 = math.exp %301 : vector<2x32xf32>
    %cst_112 = arith.constant 1.000000e+00 : f32
    %303 = vector.broadcast %cst_112 : f32 to vector<2x32xf32>
    %304 = arith.addf %303, %302 : vector<2x32xf32>
    %305 = arith.divf %303, %304 : vector<2x32xf32>
    %306 = vector.extract_strided_slice %299 {offsets = [0, 32], sizes = [2, 32], strides = [1, 1]} : vector<2x128xf32> to vector<2x32xf32>
    %307 = arith.negf %306 : vector<2x32xf32>
    %308 = math.exp %307 : vector<2x32xf32>
    %cst_113 = arith.constant 1.000000e+00 : f32
    %309 = vector.broadcast %cst_113 : f32 to vector<2x32xf32>
    %310 = arith.addf %309, %308 : vector<2x32xf32>
    %311 = arith.divf %309, %310 : vector<2x32xf32>
    %312 = vector.extract_strided_slice %299 {offsets = [0, 64], sizes = [2, 32], strides = [1, 1]} : vector<2x128xf32> to vector<2x32xf32>
    %313 = vector.extract_strided_slice %299 {offsets = [0, 96], sizes = [2, 32], strides = [1, 1]} : vector<2x128xf32> to vector<2x32xf32>
    %314 = arith.mulf %305, %313 : vector<2x32xf32>
    %315 = arith.addf %312, %314 : vector<2x32xf32>
    %316 = math.tanh %315 : vector<2x32xf32>
    %cst_114 = arith.constant 1.000000e+00 : f32
    %317 = vector.broadcast %cst_114 : f32 to vector<2x32xf32>
    %318 = arith.subf %317, %311 : vector<2x32xf32>
    %319 = arith.mulf %318, %316 : vector<2x32xf32>
    %320 = arith.mulf %311, %148 : vector<2x32xf32>
    %321 = arith.addf %319, %320 : vector<2x32xf32>
    %c0_115 = arith.constant 0 : index
    %c0_116 = arith.constant 0 : index
    %322 = vector.load %arg13[%c0_115, %c0_116] : memref<32x16xf32, #tpu.memory_space<vmem>>, vector<32x16xf32>
    %cst_117 = arith.constant dense<0.000000e+00> : vector<2x16xf32>
    %323 = tpu.matmul %321, %322, %cst_117 {dimension_numbers = #tpu.dot_dimension_numbers<[1], [0], [0], [1], [0, 0, 1, 1], [], []>} : vector<2x32xf32>, vector<32x16xf32>, vector<2x16xf32> -> vector<2x16xf32>
    %c0_118 = arith.constant 0 : index
    %c0_119 = arith.constant 0 : index
    %324 = vector.load %arg14[%c0_118, %c0_119] : memref<1x16xf32, #tpu.memory_space<vmem>>, vector<1x16xf32>
    %325 = vector.broadcast %324 : vector<1x16xf32> to vector<2x16xf32>
    %326 = arith.addf %323, %325 : vector<2x16xf32>
    %c1_120 = arith.constant 1 : index
    %c0_121 = arith.constant 0 : index
    %c0_122 = arith.constant 0 : index
    %327 = vector.load %arg15[%c1_120, %c0_121, %c0_122] : memref<8x2x16xf32, #tpu.memory_space<vmem>>, vector<1x2x16xf32>
    %328 = vector.shape_cast %327 : vector<1x2x16xf32> to vector<2x16xf32>
    %329 = vector.shape_cast %326 : vector<2x16xf32> to vector<1x2x16xf32>
    tpu.vector_store %arg15[%c1_120, %c0_121, %c0_122], %329 {strides = array<i32>} : memref<8x2x16xf32, #tpu.memory_space<vmem>>, vector<1x2x16xf32>,
    %330 = arith.subf %326, %179 : vector<2x16xf32>
    %331 = arith.mulf %330, %330 : vector<2x16xf32>
    %332 = arith.addf %159, %331 : vector<2x16xf32>
    %333 = math.exp %255 : vector<2x8xf32>
    %334 = arith.subf %257, %255 : vector<2x8xf32>
    %cst_123 = arith.constant 5.000000e-01 : f32
    %335 = vector.broadcast %cst_123 : f32 to vector<2x8xf32>
    %336 = arith.mulf %335, %334 : vector<2x8xf32>
    %337 = arith.subf %254, %256 : vector<2x8xf32>
    %338 = arith.mulf %337, %337 : vector<2x8xf32>
    %339 = arith.addf %333, %338 : vector<2x8xf32>
    %cst_124 = arith.constant 0.000000e+00 : f32
    %340 = vector.broadcast %cst_124 : f32 to vector<2x8xf32>
    %341 = arith.subf %340, %257 : vector<2x8xf32>
    %342 = math.exp %341 : vector<2x8xf32>
    %cst_125 = arith.constant 5.000000e-01 : f32
    %343 = vector.broadcast %cst_125 : f32 to vector<2x8xf32>
    %344 = arith.mulf %343, %342 : vector<2x8xf32>
    %345 = arith.mulf %339, %344 : vector<2x8xf32>
    %346 = arith.addf %336, %345 : vector<2x8xf32>
    %cst_126 = arith.constant 5.000000e-01 : f32
    %347 = vector.broadcast %cst_126 : f32 to vector<2x8xf32>
    %348 = arith.subf %346, %347 : vector<2x8xf32>
    %349 = arith.addf %176, %348 : vector<2x8xf32>
    %cst_127 = arith.constant 2.000000e+00 : f32
    %cst_128 = arith.constant 0.142857149 : f32
    %350 = arith.mulf %cst_127, %cst_128 : f32
    %c2 = arith.constant 2 : index
    %c0_129 = arith.constant 0 : index
    %c0_130 = arith.constant 0 : index
    %351 = vector.load %arg0[%c2, %c0_129, %c0_130] : memref<8x2x16xf32, #tpu.memory_space<vmem>>, vector<1x2x16xf32>
    %352 = vector.shape_cast %351 : vector<1x2x16xf32> to vector<2x16xf32>
    %c2_131 = arith.constant 2 : index
    %c0_132 = arith.constant 0 : index
    %c0_133 = arith.constant 0 : index
    %353 = vector.load %arg1[%c2_131, %c0_132, %c0_133] : memref<8x2x8xf32, #tpu.memory_space<vmem>>, vector<1x2x8xf32>
    %354 = vector.shape_cast %353 : vector<1x2x8xf32> to vector<2x8xf32>
    %355 = tpu.concatenate %352, %326 in 1 : vector<2x16xf32>, vector<2x16xf32> -> vector<2x32xf32>
    %c0_134 = arith.constant 0 : index
    %c0_135 = arith.constant 0 : index
    %356 = vector.load %arg2[%c0_134, %c0_135] : memref<32x96xf32, #tpu.memory_space<vmem>>, vector<32x96xf32>
    %cst_136 = arith.constant dense<0.000000e+00> : vector<2x96xf32>
    %357 = tpu.matmul %355, %356, %cst_136 {dimension_numbers = #tpu.dot_dimension_numbers<[1], [0], [0], [1], [0, 0, 1, 1], [], []>} : vector<2x32xf32>, vector<32x96xf32>, vector<2x96xf32> -> vector<2x96xf32>
    %c0_137 = arith.constant 0 : index
    %c0_138 = arith.constant 0 : index
    %358 = vector.load %arg3[%c0_137, %c0_138] : memref<2x96xf32, #tpu.memory_space<vmem>>, vector<1x96xf32>
    %359 = vector.broadcast %350 : f32 to vector<1x96xf32>
    %360 = arith.mulf %359, %358 : vector<1x96xf32>
    %361 = vector.broadcast %360 : vector<1x96xf32> to vector<2x96xf32>
    %362 = arith.addf %357, %361 : vector<2x96xf32>
    %c1_139 = arith.constant 1 : index
    %c0_140 = arith.constant 0 : index
    %363 = vector.load %arg3[%c1_139, %c0_140] : memref<2x96xf32, #tpu.memory_space<vmem>>, vector<1x96xf32>
    %364 = vector.broadcast %363 : vector<1x96xf32> to vector<2x96xf32>
    %365 = arith.addf %362, %364 : vector<2x96xf32>
    %366 = vector.extract_strided_slice %365 {offsets = [0, 0], sizes = [2, 32], strides = [1, 1]} : vector<2x96xf32> to vector<2x32xf32>
    %367 = vector.extract_strided_slice %365 {offsets = [0, 32], sizes = [2, 32], strides = [1, 1]} : vector<2x96xf32> to vector<2x32xf32>
    %368 = vector.extract_strided_slice %365 {offsets = [0, 64], sizes = [2, 32], strides = [1, 1]} : vector<2x96xf32> to vector<2x32xf32>
    %369 = tpu.concatenate %366, %224, %367, %247 in 1 : vector<2x32xf32>, vector<2x32xf32>, vector<2x32xf32>, vector<2x32xf32> -> vector<2x128xf32>
    %c0_141 = arith.constant 0 : index
    %c0_142 = arith.constant 0 : index
    %370 = vector.load %arg4[%c0_141, %c0_142] : memref<128x256xf32, #tpu.memory_space<vmem>>, vector<128x256xf32>
    %cst_143 = arith.constant dense<0.000000e+00> : vector<2x256xf32>
    %371 = tpu.matmul %369, %370, %cst_143 {dimension_numbers = #tpu.dot_dimension_numbers<[1], [0], [0], [1], [0, 0, 1, 1], [], []>} : vector<2x128xf32>, vector<128x256xf32>, vector<2x256xf32> -> vector<2x256xf32>
    %c0_144 = arith.constant 0 : index
    %c0_145 = arith.constant 0 : index
    %372 = vector.load %arg5[%c0_144, %c0_145] : memref<1x256xf32, #tpu.memory_space<vmem>>, vector<1x256xf32>
    %373 = vector.broadcast %372 : vector<1x256xf32> to vector<2x256xf32>
    %374 = arith.addf %371, %373 : vector<2x256xf32>
    %375 = vector.extract_strided_slice %374 {offsets = [0, 0], sizes = [2, 128], strides = [1, 1]} : vector<2x256xf32> to vector<2x128xf32>
    %376 = vector.extract_strided_slice %375 {offsets = [0, 0], sizes = [2, 32], strides = [1, 1]} : vector<2x128xf32> to vector<2x32xf32>
    %377 = arith.negf %376 : vector<2x32xf32>
    %378 = math.exp %377 : vector<2x32xf32>
    %cst_146 = arith.constant 1.000000e+00 : f32
    %379 = vector.broadcast %cst_146 : f32 to vector<2x32xf32>
    %380 = arith.addf %379, %378 : vector<2x32xf32>
    %381 = arith.divf %379, %380 : vector<2x32xf32>
    %382 = vector.extract_strided_slice %375 {offsets = [0, 32], sizes = [2, 32], strides = [1, 1]} : vector<2x128xf32> to vector<2x32xf32>
    %383 = arith.negf %382 : vector<2x32xf32>
    %384 = math.exp %383 : vector<2x32xf32>
    %cst_147 = arith.constant 1.000000e+00 : f32
    %385 = vector.broadcast %cst_147 : f32 to vector<2x32xf32>
    %386 = arith.addf %385, %384 : vector<2x32xf32>
    %387 = arith.divf %385, %386 : vector<2x32xf32>
    %388 = vector.extract_strided_slice %375 {offsets = [0, 64], sizes = [2, 32], strides = [1, 1]} : vector<2x128xf32> to vector<2x32xf32>
    %389 = vector.extract_strided_slice %375 {offsets = [0, 96], sizes = [2, 32], strides = [1, 1]} : vector<2x128xf32> to vector<2x32xf32>
    %390 = arith.mulf %381, %389 : vector<2x32xf32>
    %391 = arith.addf %388, %390 : vector<2x32xf32>
    %392 = math.tanh %391 : vector<2x32xf32>
    %cst_148 = arith.constant 1.000000e+00 : f32
    %393 = vector.broadcast %cst_148 : f32 to vector<2x32xf32>
    %394 = arith.subf %393, %387 : vector<2x32xf32>
    %395 = arith.mulf %394, %392 : vector<2x32xf32>
    %396 = arith.mulf %387, %224 : vector<2x32xf32>
    %397 = arith.addf %395, %396 : vector<2x32xf32>
    %398 = vector.extract_strided_slice %374 {offsets = [0, 128], sizes = [2, 128], strides = [1, 1]} : vector<2x256xf32> to vector<2x128xf32>
    %399 = vector.extract_strided_slice %398 {offsets = [0, 0], sizes = [2, 32], strides = [1, 1]} : vector<2x128xf32> to vector<2x32xf32>
    %400 = arith.negf %399 : vector<2x32xf32>
    %401 = math.exp %400 : vector<2x32xf32>
    %cst_149 = arith.constant 1.000000e+00 : f32
    %402 = vector.broadcast %cst_149 : f32 to vector<2x32xf32>
    %403 = arith.addf %402, %401 : vector<2x32xf32>
    %404 = arith.divf %402, %403 : vector<2x32xf32>
    %405 = vector.extract_strided_slice %398 {offsets = [0, 32], sizes = [2, 32], strides = [1, 1]} : vector<2x128xf32> to vector<2x32xf32>
    %406 = arith.negf %405 : vector<2x32xf32>
    %407 = math.exp %406 : vector<2x32xf32>
    %cst_150 = arith.constant 1.000000e+00 : f32
    %408 = vector.broadcast %cst_150 : f32 to vector<2x32xf32>
    %409 = arith.addf %408, %407 : vector<2x32xf32>
    %410 = arith.divf %408, %409 : vector<2x32xf32>
    %411 = vector.extract_strided_slice %398 {offsets = [0, 64], sizes = [2, 32], strides = [1, 1]} : vector<2x128xf32> to vector<2x32xf32>
    %412 = vector.extract_strided_slice %398 {offsets = [0, 96], sizes = [2, 32], strides = [1, 1]} : vector<2x128xf32> to vector<2x32xf32>
    %413 = arith.mulf %404, %412 : vector<2x32xf32>
    %414 = arith.addf %411, %413 : vector<2x32xf32>
    %415 = math.tanh %414 : vector<2x32xf32>
    %cst_151 = arith.constant 1.000000e+00 : f32
    %416 = vector.broadcast %cst_151 : f32 to vector<2x32xf32>
    %417 = arith.subf %416, %410 : vector<2x32xf32>
    %418 = arith.mulf %417, %415 : vector<2x32xf32>
    %419 = arith.mulf %410, %247 : vector<2x32xf32>
    %420 = arith.addf %418, %419 : vector<2x32xf32>
    %421 = tpu.concatenate %397, %420 in 1 : vector<2x32xf32>, vector<2x32xf32> -> vector<2x64xf32>
    %c0_152 = arith.constant 0 : index
    %c0_153 = arith.constant 0 : index
    %422 = vector.load %arg6[%c0_152, %c0_153] : memref<64x32xf32, #tpu.memory_space<vmem>>, vector<64x32xf32>
    %cst_154 = arith.constant dense<0.000000e+00> : vector<2x32xf32>
    %423 = tpu.matmul %421, %422, %cst_154 {dimension_numbers = #tpu.dot_dimension_numbers<[1], [0], [0], [1], [0, 0, 1, 1], [], []>} : vector<2x64xf32>, vector<64x32xf32>, vector<2x32xf32> -> vector<2x32xf32>
    %c0_155 = arith.constant 0 : index
    %c0_156 = arith.constant 0 : index
    %424 = vector.load %arg7[%c0_155, %c0_156] : memref<1x32xf32, #tpu.memory_space<vmem>>, vector<1x32xf32>
    %425 = vector.broadcast %424 : vector<1x32xf32> to vector<2x32xf32>
    %426 = arith.addf %423, %425 : vector<2x32xf32>
    %427 = vector.extract_strided_slice %426 {offsets = [0, 0], sizes = [2, 8], strides = [1, 1]} : vector<2x32xf32> to vector<2x8xf32>
    %428 = vector.extract_strided_slice %426 {offsets = [0, 8], sizes = [2, 8], strides = [1, 1]} : vector<2x32xf32> to vector<2x8xf32>
    %429 = vector.extract_strided_slice %426 {offsets = [0, 16], sizes = [2, 8], strides = [1, 1]} : vector<2x32xf32> to vector<2x8xf32>
    %430 = vector.extract_strided_slice %426 {offsets = [0, 24], sizes = [2, 8], strides = [1, 1]} : vector<2x32xf32> to vector<2x8xf32>
    %cst_157 = arith.constant 5.000000e-01 : f32
    %431 = vector.broadcast %cst_157 : f32 to vector<2x8xf32>
    %432 = arith.mulf %431, %428 : vector<2x8xf32>
    %433 = math.exp %432 : vector<2x8xf32>
    %434 = arith.mulf %354, %433 : vector<2x8xf32>
    %435 = arith.addf %434, %427 : vector<2x8xf32>
    %c0_158 = arith.constant 0 : index
    %c0_159 = arith.constant 0 : index
    %436 = vector.load %arg8[%c0_158, %c0_159] : memref<8x32xf32, #tpu.memory_space<vmem>>, vector<8x32xf32>
    %cst_160 = arith.constant dense<0.000000e+00> : vector<2x32xf32>
    %437 = tpu.matmul %435, %436, %cst_160 {dimension_numbers = #tpu.dot_dimension_numbers<[1], [0], [0], [1], [0, 0, 1, 1], [], []>} : vector<2x8xf32>, vector<8x32xf32>, vector<2x32xf32> -> vector<2x32xf32>
    %438 = arith.addf %368, %437 : vector<2x32xf32>
    %439 = tpu.concatenate %438, %293 in 1 : vector<2x32xf32>, vector<2x32xf32> -> vector<2x64xf32>
    %c0_161 = arith.constant 0 : index
    %c0_162 = arith.constant 0 : index
    %440 = vector.load %arg9[%c0_161, %c0_162] : memref<64x128xf32, #tpu.memory_space<vmem>>, vector<64x128xf32>
    %cst_163 = arith.constant dense<0.000000e+00> : vector<2x128xf32>
    %441 = tpu.matmul %439, %440, %cst_163 {dimension_numbers = #tpu.dot_dimension_numbers<[1], [0], [0], [1], [0, 0, 1, 1], [], []>} : vector<2x64xf32>, vector<64x128xf32>, vector<2x128xf32> -> vector<2x128xf32>
    %c0_164 = arith.constant 0 : index
    %c0_165 = arith.constant 0 : index
    %442 = vector.load %arg10[%c0_164, %c0_165] : memref<1x128xf32, #tpu.memory_space<vmem>>, vector<1x128xf32>
    %443 = vector.broadcast %442 : vector<1x128xf32> to vector<2x128xf32>
    %444 = arith.addf %441, %443 : vector<2x128xf32>
    %445 = vector.extract_strided_slice %444 {offsets = [0, 0], sizes = [2, 32], strides = [1, 1]} : vector<2x128xf32> to vector<2x32xf32>
    %446 = arith.negf %445 : vector<2x32xf32>
    %447 = math.exp %446 : vector<2x32xf32>
    %cst_166 = arith.constant 1.000000e+00 : f32
    %448 = vector.broadcast %cst_166 : f32 to vector<2x32xf32>
    %449 = arith.addf %448, %447 : vector<2x32xf32>
    %450 = arith.divf %448, %449 : vector<2x32xf32>
    %451 = vector.extract_strided_slice %444 {offsets = [0, 32], sizes = [2, 32], strides = [1, 1]} : vector<2x128xf32> to vector<2x32xf32>
    %452 = arith.negf %451 : vector<2x32xf32>
    %453 = math.exp %452 : vector<2x32xf32>
    %cst_167 = arith.constant 1.000000e+00 : f32
    %454 = vector.broadcast %cst_167 : f32 to vector<2x32xf32>
    %455 = arith.addf %454, %453 : vector<2x32xf32>
    %456 = arith.divf %454, %455 : vector<2x32xf32>
    %457 = vector.extract_strided_slice %444 {offsets = [0, 64], sizes = [2, 32], strides = [1, 1]} : vector<2x128xf32> to vector<2x32xf32>
    %458 = vector.extract_strided_slice %444 {offsets = [0, 96], sizes = [2, 32], strides = [1, 1]} : vector<2x128xf32> to vector<2x32xf32>
    %459 = arith.mulf %450, %458 : vector<2x32xf32>
    %460 = arith.addf %457, %459 : vector<2x32xf32>
    %461 = math.tanh %460 : vector<2x32xf32>
    %cst_168 = arith.constant 1.000000e+00 : f32
    %462 = vector.broadcast %cst_168 : f32 to vector<2x32xf32>
    %463 = arith.subf %462, %456 : vector<2x32xf32>
    %464 = arith.mulf %463, %461 : vector<2x32xf32>
    %465 = arith.mulf %456, %293 : vector<2x32xf32>
    %466 = arith.addf %464, %465 : vector<2x32xf32>
    %467 = tpu.concatenate %466, %321 in 1 : vector<2x32xf32>, vector<2x32xf32> -> vector<2x64xf32>
    %c0_169 = arith.constant 0 : index
    %c0_170 = arith.constant 0 : index
    %468 = vector.load %arg11[%c0_169, %c0_170] : memref<64x128xf32, #tpu.memory_space<vmem>>, vector<64x128xf32>
    %cst_171 = arith.constant dense<0.000000e+00> : vector<2x128xf32>
    %469 = tpu.matmul %467, %468, %cst_171 {dimension_numbers = #tpu.dot_dimension_numbers<[1], [0], [0], [1], [0, 0, 1, 1], [], []>} : vector<2x64xf32>, vector<64x128xf32>, vector<2x128xf32> -> vector<2x128xf32>
    %c0_172 = arith.constant 0 : index
    %c0_173 = arith.constant 0 : index
    %470 = vector.load %arg12[%c0_172, %c0_173] : memref<1x128xf32, #tpu.memory_space<vmem>>, vector<1x128xf32>
    %471 = vector.broadcast %470 : vector<1x128xf32> to vector<2x128xf32>
    %472 = arith.addf %469, %471 : vector<2x128xf32>
    %473 = vector.extract_strided_slice %472 {offsets = [0, 0], sizes = [2, 32], strides = [1, 1]} : vector<2x128xf32> to vector<2x32xf32>
    %474 = arith.negf %473 : vector<2x32xf32>
    %475 = math.exp %474 : vector<2x32xf32>
    %cst_174 = arith.constant 1.000000e+00 : f32
    %476 = vector.broadcast %cst_174 : f32 to vector<2x32xf32>
    %477 = arith.addf %476, %475 : vector<2x32xf32>
    %478 = arith.divf %476, %477 : vector<2x32xf32>
    %479 = vector.extract_strided_slice %472 {offsets = [0, 32], sizes = [2, 32], strides = [1, 1]} : vector<2x128xf32> to vector<2x32xf32>
    %480 = arith.negf %479 : vector<2x32xf32>
    %481 = math.exp %480 : vector<2x32xf32>
    %cst_175 = arith.constant 1.000000e+00 : f32
    %482 = vector.broadcast %cst_175 : f32 to vector<2x32xf32>
    %483 = arith.addf %482, %481 : vector<2x32xf32>
    %484 = arith.divf %482, %483 : vector<2x32xf32>
    %485 = vector.extract_strided_slice %472 {offsets = [0, 64], sizes = [2, 32], strides = [1, 1]} : vector<2x128xf32> to vector<2x32xf32>
    %486 = vector.extract_strided_slice %472 {offsets = [0, 96], sizes = [2, 32], strides = [1, 1]} : vector<2x128xf32> to vector<2x32xf32>
    %487 = arith.mulf %478, %486 : vector<2x32xf32>
    %488 = arith.addf %485, %487 : vector<2x32xf32>
    %489 = math.tanh %488 : vector<2x32xf32>
    %cst_176 = arith.constant 1.000000e+00 : f32
    %490 = vector.broadcast %cst_176 : f32 to vector<2x32xf32>
    %491 = arith.subf %490, %484 : vector<2x32xf32>
    %492 = arith.mulf %491, %489 : vector<2x32xf32>
    %493 = arith.mulf %484, %321 : vector<2x32xf32>
    %494 = arith.addf %492, %493 : vector<2x32xf32>
    %c0_177 = arith.constant 0 : index
    %c0_178 = arith.constant 0 : index
    %495 = vector.load %arg13[%c0_177, %c0_178] : memref<32x16xf32, #tpu.memory_space<vmem>>, vector<32x16xf32>
    %cst_179 = arith.constant dense<0.000000e+00> : vector<2x16xf32>
    %496 = tpu.matmul %494, %495, %cst_179 {dimension_numbers = #tpu.dot_dimension_numbers<[1], [0], [0], [1], [0, 0, 1, 1], [], []>} : vector<2x32xf32>, vector<32x16xf32>, vector<2x16xf32> -> vector<2x16xf32>
    %c0_180 = arith.constant 0 : index
    %c0_181 = arith.constant 0 : index
    %497 = vector.load %arg14[%c0_180, %c0_181] : memref<1x16xf32, #tpu.memory_space<vmem>>, vector<1x16xf32>
    %498 = vector.broadcast %497 : vector<1x16xf32> to vector<2x16xf32>
    %499 = arith.addf %496, %498 : vector<2x16xf32>
    %c2_182 = arith.constant 2 : index
    %c0_183 = arith.constant 0 : index
    %c0_184 = arith.constant 0 : index
    %500 = vector.load %arg15[%c2_182, %c0_183, %c0_184] : memref<8x2x16xf32, #tpu.memory_space<vmem>>, vector<1x2x16xf32>
    %501 = vector.shape_cast %500 : vector<1x2x16xf32> to vector<2x16xf32>
    %502 = vector.shape_cast %499 : vector<2x16xf32> to vector<1x2x16xf32>
    tpu.vector_store %arg15[%c2_182, %c0_183, %c0_184], %502 {strides = array<i32>} : memref<8x2x16xf32, #tpu.memory_space<vmem>>, vector<1x2x16xf32>,
    %503 = arith.subf %499, %352 : vector<2x16xf32>
    %504 = arith.mulf %503, %503 : vector<2x16xf32>
    %505 = arith.addf %332, %504 : vector<2x16xf32>
    %506 = math.exp %428 : vector<2x8xf32>
    %507 = arith.subf %430, %428 : vector<2x8xf32>
    %cst_185 = arith.constant 5.000000e-01 : f32
    %508 = vector.broadcast %cst_185 : f32 to vector<2x8xf32>
    %509 = arith.mulf %508, %507 : vector<2x8xf32>
    %510 = arith.subf %427, %429 : vector<2x8xf32>
    %511 = arith.mulf %510, %510 : vector<2x8xf32>
    %512 = arith.addf %506, %511 : vector<2x8xf32>
    %cst_186 = arith.constant 0.000000e+00 : f32
    %513 = vector.broadcast %cst_186 : f32 to vector<2x8xf32>
    %514 = arith.subf %513, %430 : vector<2x8xf32>
    %515 = math.exp %514 : vector<2x8xf32>
    %cst_187 = arith.constant 5.000000e-01 : f32
    %516 = vector.broadcast %cst_187 : f32 to vector<2x8xf32>
    %517 = arith.mulf %516, %515 : vector<2x8xf32>
    %518 = arith.mulf %512, %517 : vector<2x8xf32>
    %519 = arith.addf %509, %518 : vector<2x8xf32>
    %cst_188 = arith.constant 5.000000e-01 : f32
    %520 = vector.broadcast %cst_188 : f32 to vector<2x8xf32>
    %521 = arith.subf %519, %520 : vector<2x8xf32>
    %522 = arith.addf %349, %521 : vector<2x8xf32>
    %cst_189 = arith.constant 3.000000e+00 : f32
    %cst_190 = arith.constant 0.142857149 : f32
    %523 = arith.mulf %cst_189, %cst_190 : f32
    %c3 = arith.constant 3 : index
    %c0_191 = arith.constant 0 : index
    %c0_192 = arith.constant 0 : index
    %524 = vector.load %arg0[%c3, %c0_191, %c0_192] : memref<8x2x16xf32, #tpu.memory_space<vmem>>, vector<1x2x16xf32>
    %525 = vector.shape_cast %524 : vector<1x2x16xf32> to vector<2x16xf32>
    %c3_193 = arith.constant 3 : index
    %c0_194 = arith.constant 0 : index
    %c0_195 = arith.constant 0 : index
    %526 = vector.load %arg1[%c3_193, %c0_194, %c0_195] : memref<8x2x8xf32, #tpu.memory_space<vmem>>, vector<1x2x8xf32>
    %527 = vector.shape_cast %526 : vector<1x2x8xf32> to vector<2x8xf32>
    %528 = tpu.concatenate %525, %499 in 1 : vector<2x16xf32>, vector<2x16xf32> -> vector<2x32xf32>
    %c0_196 = arith.constant 0 : index
    %c0_197 = arith.constant 0 : index
    %529 = vector.load %arg2[%c0_196, %c0_197] : memref<32x96xf32, #tpu.memory_space<vmem>>, vector<32x96xf32>
    %cst_198 = arith.constant dense<0.000000e+00> : vector<2x96xf32>
    %530 = tpu.matmul %528, %529, %cst_198 {dimension_numbers = #tpu.dot_dimension_numbers<[1], [0], [0], [1], [0, 0, 1, 1], [], []>} : vector<2x32xf32>, vector<32x96xf32>, vector<2x96xf32> -> vector<2x96xf32>
    %c0_199 = arith.constant 0 : index
    %c0_200 = arith.constant 0 : index
    %531 = vector.load %arg3[%c0_199, %c0_200] : memref<2x96xf32, #tpu.memory_space<vmem>>, vector<1x96xf32>
    %532 = vector.broadcast %523 : f32 to vector<1x96xf32>
    %533 = arith.mulf %532, %531 : vector<1x96xf32>
    %534 = vector.broadcast %533 : vector<1x96xf32> to vector<2x96xf32>
    %535 = arith.addf %530, %534 : vector<2x96xf32>
    %c1_201 = arith.constant 1 : index
    %c0_202 = arith.constant 0 : index
    %536 = vector.load %arg3[%c1_201, %c0_202] : memref<2x96xf32, #tpu.memory_space<vmem>>, vector<1x96xf32>
    %537 = vector.broadcast %536 : vector<1x96xf32> to vector<2x96xf32>
    %538 = arith.addf %535, %537 : vector<2x96xf32>
    %539 = vector.extract_strided_slice %538 {offsets = [0, 0], sizes = [2, 32], strides = [1, 1]} : vector<2x96xf32> to vector<2x32xf32>
    %540 = vector.extract_strided_slice %538 {offsets = [0, 32], sizes = [2, 32], strides = [1, 1]} : vector<2x96xf32> to vector<2x32xf32>
    %541 = vector.extract_strided_slice %538 {offsets = [0, 64], sizes = [2, 32], strides = [1, 1]} : vector<2x96xf32> to vector<2x32xf32>
    %542 = tpu.concatenate %539, %397, %540, %420 in 1 : vector<2x32xf32>, vector<2x32xf32>, vector<2x32xf32>, vector<2x32xf32> -> vector<2x128xf32>
    %c0_203 = arith.constant 0 : index
    %c0_204 = arith.constant 0 : index
    %543 = vector.load %arg4[%c0_203, %c0_204] : memref<128x256xf32, #tpu.memory_space<vmem>>, vector<128x256xf32>
    %cst_205 = arith.constant dense<0.000000e+00> : vector<2x256xf32>
    %544 = tpu.matmul %542, %543, %cst_205 {dimension_numbers = #tpu.dot_dimension_numbers<[1], [0], [0], [1], [0, 0, 1, 1], [], []>} : vector<2x128xf32>, vector<128x256xf32>, vector<2x256xf32> -> vector<2x256xf32>
    %c0_206 = arith.constant 0 : index
    %c0_207 = arith.constant 0 : index
    %545 = vector.load %arg5[%c0_206, %c0_207] : memref<1x256xf32, #tpu.memory_space<vmem>>, vector<1x256xf32>
    %546 = vector.broadcast %545 : vector<1x256xf32> to vector<2x256xf32>
    %547 = arith.addf %544, %546 : vector<2x256xf32>
    %548 = vector.extract_strided_slice %547 {offsets = [0, 0], sizes = [2, 128], strides = [1, 1]} : vector<2x256xf32> to vector<2x128xf32>
    %549 = vector.extract_strided_slice %548 {offsets = [0, 0], sizes = [2, 32], strides = [1, 1]} : vector<2x128xf32> to vector<2x32xf32>
    %550 = arith.negf %549 : vector<2x32xf32>
    %551 = math.exp %550 : vector<2x32xf32>
    %cst_208 = arith.constant 1.000000e+00 : f32
    %552 = vector.broadcast %cst_208 : f32 to vector<2x32xf32>
    %553 = arith.addf %552, %551 : vector<2x32xf32>
    %554 = arith.divf %552, %553 : vector<2x32xf32>
    %555 = vector.extract_strided_slice %548 {offsets = [0, 32], sizes = [2, 32], strides = [1, 1]} : vector<2x128xf32> to vector<2x32xf32>
    %556 = arith.negf %555 : vector<2x32xf32>
    %557 = math.exp %556 : vector<2x32xf32>
    %cst_209 = arith.constant 1.000000e+00 : f32
    %558 = vector.broadcast %cst_209 : f32 to vector<2x32xf32>
    %559 = arith.addf %558, %557 : vector<2x32xf32>
    %560 = arith.divf %558, %559 : vector<2x32xf32>
    %561 = vector.extract_strided_slice %548 {offsets = [0, 64], sizes = [2, 32], strides = [1, 1]} : vector<2x128xf32> to vector<2x32xf32>
    %562 = vector.extract_strided_slice %548 {offsets = [0, 96], sizes = [2, 32], strides = [1, 1]} : vector<2x128xf32> to vector<2x32xf32>
    %563 = arith.mulf %554, %562 : vector<2x32xf32>
    %564 = arith.addf %561, %563 : vector<2x32xf32>
    %565 = math.tanh %564 : vector<2x32xf32>
    %cst_210 = arith.constant 1.000000e+00 : f32
    %566 = vector.broadcast %cst_210 : f32 to vector<2x32xf32>
    %567 = arith.subf %566, %560 : vector<2x32xf32>
    %568 = arith.mulf %567, %565 : vector<2x32xf32>
    %569 = arith.mulf %560, %397 : vector<2x32xf32>
    %570 = arith.addf %568, %569 : vector<2x32xf32>
    %571 = vector.extract_strided_slice %547 {offsets = [0, 128], sizes = [2, 128], strides = [1, 1]} : vector<2x256xf32> to vector<2x128xf32>
    %572 = vector.extract_strided_slice %571 {offsets = [0, 0], sizes = [2, 32], strides = [1, 1]} : vector<2x128xf32> to vector<2x32xf32>
    %573 = arith.negf %572 : vector<2x32xf32>
    %574 = math.exp %573 : vector<2x32xf32>
    %cst_211 = arith.constant 1.000000e+00 : f32
    %575 = vector.broadcast %cst_211 : f32 to vector<2x32xf32>
    %576 = arith.addf %575, %574 : vector<2x32xf32>
    %577 = arith.divf %575, %576 : vector<2x32xf32>
    %578 = vector.extract_strided_slice %571 {offsets = [0, 32], sizes = [2, 32], strides = [1, 1]} : vector<2x128xf32> to vector<2x32xf32>
    %579 = arith.negf %578 : vector<2x32xf32>
    %580 = math.exp %579 : vector<2x32xf32>
    %cst_212 = arith.constant 1.000000e+00 : f32
    %581 = vector.broadcast %cst_212 : f32 to vector<2x32xf32>
    %582 = arith.addf %581, %580 : vector<2x32xf32>
    %583 = arith.divf %581, %582 : vector<2x32xf32>
    %584 = vector.extract_strided_slice %571 {offsets = [0, 64], sizes = [2, 32], strides = [1, 1]} : vector<2x128xf32> to vector<2x32xf32>
    %585 = vector.extract_strided_slice %571 {offsets = [0, 96], sizes = [2, 32], strides = [1, 1]} : vector<2x128xf32> to vector<2x32xf32>
    %586 = arith.mulf %577, %585 : vector<2x32xf32>
    %587 = arith.addf %584, %586 : vector<2x32xf32>
    %588 = math.tanh %587 : vector<2x32xf32>
    %cst_213 = arith.constant 1.000000e+00 : f32
    %589 = vector.broadcast %cst_213 : f32 to vector<2x32xf32>
    %590 = arith.subf %589, %583 : vector<2x32xf32>
    %591 = arith.mulf %590, %588 : vector<2x32xf32>
    %592 = arith.mulf %583, %420 : vector<2x32xf32>
    %593 = arith.addf %591, %592 : vector<2x32xf32>
    %594 = tpu.concatenate %570, %593 in 1 : vector<2x32xf32>, vector<2x32xf32> -> vector<2x64xf32>
    %c0_214 = arith.constant 0 : index
    %c0_215 = arith.constant 0 : index
    %595 = vector.load %arg6[%c0_214, %c0_215] : memref<64x32xf32, #tpu.memory_space<vmem>>, vector<64x32xf32>
    %cst_216 = arith.constant dense<0.000000e+00> : vector<2x32xf32>
    %596 = tpu.matmul %594, %595, %cst_216 {dimension_numbers = #tpu.dot_dimension_numbers<[1], [0], [0], [1], [0, 0, 1, 1], [], []>} : vector<2x64xf32>, vector<64x32xf32>, vector<2x32xf32> -> vector<2x32xf32>
    %c0_217 = arith.constant 0 : index
    %c0_218 = arith.constant 0 : index
    %597 = vector.load %arg7[%c0_217, %c0_218] : memref<1x32xf32, #tpu.memory_space<vmem>>, vector<1x32xf32>
    %598 = vector.broadcast %597 : vector<1x32xf32> to vector<2x32xf32>
    %599 = arith.addf %596, %598 : vector<2x32xf32>
    %600 = vector.extract_strided_slice %599 {offsets = [0, 0], sizes = [2, 8], strides = [1, 1]} : vector<2x32xf32> to vector<2x8xf32>
    %601 = vector.extract_strided_slice %599 {offsets = [0, 8], sizes = [2, 8], strides = [1, 1]} : vector<2x32xf32> to vector<2x8xf32>
    %602 = vector.extract_strided_slice %599 {offsets = [0, 16], sizes = [2, 8], strides = [1, 1]} : vector<2x32xf32> to vector<2x8xf32>
    %603 = vector.extract_strided_slice %599 {offsets = [0, 24], sizes = [2, 8], strides = [1, 1]} : vector<2x32xf32> to vector<2x8xf32>
    %cst_219 = arith.constant 5.000000e-01 : f32
    %604 = vector.broadcast %cst_219 : f32 to vector<2x8xf32>
    %605 = arith.mulf %604, %601 : vector<2x8xf32>
    %606 = math.exp %605 : vector<2x8xf32>
    %607 = arith.mulf %527, %606 : vector<2x8xf32>
    %608 = arith.addf %607, %600 : vector<2x8xf32>
    %c0_220 = arith.constant 0 : index
    %c0_221 = arith.constant 0 : index
    %609 = vector.load %arg8[%c0_220, %c0_221] : memref<8x32xf32, #tpu.memory_space<vmem>>, vector<8x32xf32>
    %cst_222 = arith.constant dense<0.000000e+00> : vector<2x32xf32>
    %610 = tpu.matmul %608, %609, %cst_222 {dimension_numbers = #tpu.dot_dimension_numbers<[1], [0], [0], [1], [0, 0, 1, 1], [], []>} : vector<2x8xf32>, vector<8x32xf32>, vector<2x32xf32> -> vector<2x32xf32>
    %611 = arith.addf %541, %610 : vector<2x32xf32>
    %612 = tpu.concatenate %611, %466 in 1 : vector<2x32xf32>, vector<2x32xf32> -> vector<2x64xf32>
    %c0_223 = arith.constant 0 : index
    %c0_224 = arith.constant 0 : index
    %613 = vector.load %arg9[%c0_223, %c0_224] : memref<64x128xf32, #tpu.memory_space<vmem>>, vector<64x128xf32>
    %cst_225 = arith.constant dense<0.000000e+00> : vector<2x128xf32>
    %614 = tpu.matmul %612, %613, %cst_225 {dimension_numbers = #tpu.dot_dimension_numbers<[1], [0], [0], [1], [0, 0, 1, 1], [], []>} : vector<2x64xf32>, vector<64x128xf32>, vector<2x128xf32> -> vector<2x128xf32>
    %c0_226 = arith.constant 0 : index
    %c0_227 = arith.constant 0 : index
    %615 = vector.load %arg10[%c0_226, %c0_227] : memref<1x128xf32, #tpu.memory_space<vmem>>, vector<1x128xf32>
    %616 = vector.broadcast %615 : vector<1x128xf32> to vector<2x128xf32>
    %617 = arith.addf %614, %616 : vector<2x128xf32>
    %618 = vector.extract_strided_slice %617 {offsets = [0, 0], sizes = [2, 32], strides = [1, 1]} : vector<2x128xf32> to vector<2x32xf32>
    %619 = arith.negf %618 : vector<2x32xf32>
    %620 = math.exp %619 : vector<2x32xf32>
    %cst_228 = arith.constant 1.000000e+00 : f32
    %621 = vector.broadcast %cst_228 : f32 to vector<2x32xf32>
    %622 = arith.addf %621, %620 : vector<2x32xf32>
    %623 = arith.divf %621, %622 : vector<2x32xf32>
    %624 = vector.extract_strided_slice %617 {offsets = [0, 32], sizes = [2, 32], strides = [1, 1]} : vector<2x128xf32> to vector<2x32xf32>
    %625 = arith.negf %624 : vector<2x32xf32>
    %626 = math.exp %625 : vector<2x32xf32>
    %cst_229 = arith.constant 1.000000e+00 : f32
    %627 = vector.broadcast %cst_229 : f32 to vector<2x32xf32>
    %628 = arith.addf %627, %626 : vector<2x32xf32>
    %629 = arith.divf %627, %628 : vector<2x32xf32>
    %630 = vector.extract_strided_slice %617 {offsets = [0, 64], sizes = [2, 32], strides = [1, 1]} : vector<2x128xf32> to vector<2x32xf32>
    %631 = vector.extract_strided_slice %617 {offsets = [0, 96], sizes = [2, 32], strides = [1, 1]} : vector<2x128xf32> to vector<2x32xf32>
    %632 = arith.mulf %623, %631 : vector<2x32xf32>
    %633 = arith.addf %630, %632 : vector<2x32xf32>
    %634 = math.tanh %633 : vector<2x32xf32>
    %cst_230 = arith.constant 1.000000e+00 : f32
    %635 = vector.broadcast %cst_230 : f32 to vector<2x32xf32>
    %636 = arith.subf %635, %629 : vector<2x32xf32>
    %637 = arith.mulf %636, %634 : vector<2x32xf32>
    %638 = arith.mulf %629, %466 : vector<2x32xf32>
    %639 = arith.addf %637, %638 : vector<2x32xf32>
    %640 = tpu.concatenate %639, %494 in 1 : vector<2x32xf32>, vector<2x32xf32> -> vector<2x64xf32>
    %c0_231 = arith.constant 0 : index
    %c0_232 = arith.constant 0 : index
    %641 = vector.load %arg11[%c0_231, %c0_232] : memref<64x128xf32, #tpu.memory_space<vmem>>, vector<64x128xf32>
    %cst_233 = arith.constant dense<0.000000e+00> : vector<2x128xf32>
    %642 = tpu.matmul %640, %641, %cst_233 {dimension_numbers = #tpu.dot_dimension_numbers<[1], [0], [0], [1], [0, 0, 1, 1], [], []>} : vector<2x64xf32>, vector<64x128xf32>, vector<2x128xf32> -> vector<2x128xf32>
    %c0_234 = arith.constant 0 : index
    %c0_235 = arith.constant 0 : index
    %643 = vector.load %arg12[%c0_234, %c0_235] : memref<1x128xf32, #tpu.memory_space<vmem>>, vector<1x128xf32>
    %644 = vector.broadcast %643 : vector<1x128xf32> to vector<2x128xf32>
    %645 = arith.addf %642, %644 : vector<2x128xf32>
    %646 = vector.extract_strided_slice %645 {offsets = [0, 0], sizes = [2, 32], strides = [1, 1]} : vector<2x128xf32> to vector<2x32xf32>
    %647 = arith.negf %646 : vector<2x32xf32>
    %648 = math.exp %647 : vector<2x32xf32>
    %cst_236 = arith.constant 1.000000e+00 : f32
    %649 = vector.broadcast %cst_236 : f32 to vector<2x32xf32>
    %650 = arith.addf %649, %648 : vector<2x32xf32>
    %651 = arith.divf %649, %650 : vector<2x32xf32>
    %652 = vector.extract_strided_slice %645 {offsets = [0, 32], sizes = [2, 32], strides = [1, 1]} : vector<2x128xf32> to vector<2x32xf32>
    %653 = arith.negf %652 : vector<2x32xf32>
    %654 = math.exp %653 : vector<2x32xf32>
    %cst_237 = arith.constant 1.000000e+00 : f32
    %655 = vector.broadcast %cst_237 : f32 to vector<2x32xf32>
    %656 = arith.addf %655, %654 : vector<2x32xf32>
    %657 = arith.divf %655, %656 : vector<2x32xf32>
    %658 = vector.extract_strided_slice %645 {offsets = [0, 64], sizes = [2, 32], strides = [1, 1]} : vector<2x128xf32> to vector<2x32xf32>
    %659 = vector.extract_strided_slice %645 {offsets = [0, 96], sizes = [2, 32], strides = [1, 1]} : vector<2x128xf32> to vector<2x32xf32>
    %660 = arith.mulf %651, %659 : vector<2x32xf32>
    %661 = arith.addf %658, %660 : vector<2x32xf32>
    %662 = math.tanh %661 : vector<2x32xf32>
    %cst_238 = arith.constant 1.000000e+00 : f32
    %663 = vector.broadcast %cst_238 : f32 to vector<2x32xf32>
    %664 = arith.subf %663, %657 : vector<2x32xf32>
    %665 = arith.mulf %664, %662 : vector<2x32xf32>
    %666 = arith.mulf %657, %494 : vector<2x32xf32>
    %667 = arith.addf %665, %666 : vector<2x32xf32>
    %c0_239 = arith.constant 0 : index
    %c0_240 = arith.constant 0 : index
    %668 = vector.load %arg13[%c0_239, %c0_240] : memref<32x16xf32, #tpu.memory_space<vmem>>, vector<32x16xf32>
    %cst_241 = arith.constant dense<0.000000e+00> : vector<2x16xf32>
    %669 = tpu.matmul %667, %668, %cst_241 {dimension_numbers = #tpu.dot_dimension_numbers<[1], [0], [0], [1], [0, 0, 1, 1], [], []>} : vector<2x32xf32>, vector<32x16xf32>, vector<2x16xf32> -> vector<2x16xf32>
    %c0_242 = arith.constant 0 : index
    %c0_243 = arith.constant 0 : index
    %670 = vector.load %arg14[%c0_242, %c0_243] : memref<1x16xf32, #tpu.memory_space<vmem>>, vector<1x16xf32>
    %671 = vector.broadcast %670 : vector<1x16xf32> to vector<2x16xf32>
    %672 = arith.addf %669, %671 : vector<2x16xf32>
    %c3_244 = arith.constant 3 : index
    %c0_245 = arith.constant 0 : index
    %c0_246 = arith.constant 0 : index
    %673 = vector.load %arg15[%c3_244, %c0_245, %c0_246] : memref<8x2x16xf32, #tpu.memory_space<vmem>>, vector<1x2x16xf32>
    %674 = vector.shape_cast %673 : vector<1x2x16xf32> to vector<2x16xf32>
    %675 = vector.shape_cast %672 : vector<2x16xf32> to vector<1x2x16xf32>
    tpu.vector_store %arg15[%c3_244, %c0_245, %c0_246], %675 {strides = array<i32>} : memref<8x2x16xf32, #tpu.memory_space<vmem>>, vector<1x2x16xf32>,
    %676 = arith.subf %672, %525 : vector<2x16xf32>
    %677 = arith.mulf %676, %676 : vector<2x16xf32>
    %678 = arith.addf %505, %677 : vector<2x16xf32>
    %679 = math.exp %601 : vector<2x8xf32>
    %680 = arith.subf %603, %601 : vector<2x8xf32>
    %cst_247 = arith.constant 5.000000e-01 : f32
    %681 = vector.broadcast %cst_247 : f32 to vector<2x8xf32>
    %682 = arith.mulf %681, %680 : vector<2x8xf32>
    %683 = arith.subf %600, %602 : vector<2x8xf32>
    %684 = arith.mulf %683, %683 : vector<2x8xf32>
    %685 = arith.addf %679, %684 : vector<2x8xf32>
    %cst_248 = arith.constant 0.000000e+00 : f32
    %686 = vector.broadcast %cst_248 : f32 to vector<2x8xf32>
    %687 = arith.subf %686, %603 : vector<2x8xf32>
    %688 = math.exp %687 : vector<2x8xf32>
    %cst_249 = arith.constant 5.000000e-01 : f32
    %689 = vector.broadcast %cst_249 : f32 to vector<2x8xf32>
    %690 = arith.mulf %689, %688 : vector<2x8xf32>
    %691 = arith.mulf %685, %690 : vector<2x8xf32>
    %692 = arith.addf %682, %691 : vector<2x8xf32>
    %cst_250 = arith.constant 5.000000e-01 : f32
    %693 = vector.broadcast %cst_250 : f32 to vector<2x8xf32>
    %694 = arith.subf %692, %693 : vector<2x8xf32>
    %695 = arith.addf %522, %694 : vector<2x8xf32>
    %cst_251 = arith.constant 4.000000e+00 : f32
    %cst_252 = arith.constant 0.142857149 : f32
    %696 = arith.mulf %cst_251, %cst_252 : f32
    %c4 = arith.constant 4 : index
    %c0_253 = arith.constant 0 : index
    %c0_254 = arith.constant 0 : index
    %697 = vector.load %arg0[%c4, %c0_253, %c0_254] : memref<8x2x16xf32, #tpu.memory_space<vmem>>, vector<1x2x16xf32>
    %698 = vector.shape_cast %697 : vector<1x2x16xf32> to vector<2x16xf32>
    %c4_255 = arith.constant 4 : index
    %c0_256 = arith.constant 0 : index
    %c0_257 = arith.constant 0 : index
    %699 = vector.load %arg1[%c4_255, %c0_256, %c0_257] : memref<8x2x8xf32, #tpu.memory_space<vmem>>, vector<1x2x8xf32>
    %700 = vector.shape_cast %699 : vector<1x2x8xf32> to vector<2x8xf32>
    %701 = tpu.concatenate %698, %672 in 1 : vector<2x16xf32>, vector<2x16xf32> -> vector<2x32xf32>
    %c0_258 = arith.constant 0 : index
    %c0_259 = arith.constant 0 : index
    %702 = vector.load %arg2[%c0_258, %c0_259] : memref<32x96xf32, #tpu.memory_space<vmem>>, vector<32x96xf32>
    %cst_260 = arith.constant dense<0.000000e+00> : vector<2x96xf32>
    %703 = tpu.matmul %701, %702, %cst_260 {dimension_numbers = #tpu.dot_dimension_numbers<[1], [0], [0], [1], [0, 0, 1, 1], [], []>} : vector<2x32xf32>, vector<32x96xf32>, vector<2x96xf32> -> vector<2x96xf32>
    %c0_261 = arith.constant 0 : index
    %c0_262 = arith.constant 0 : index
    %704 = vector.load %arg3[%c0_261, %c0_262] : memref<2x96xf32, #tpu.memory_space<vmem>>, vector<1x96xf32>
    %705 = vector.broadcast %696 : f32 to vector<1x96xf32>
    %706 = arith.mulf %705, %704 : vector<1x96xf32>
    %707 = vector.broadcast %706 : vector<1x96xf32> to vector<2x96xf32>
    %708 = arith.addf %703, %707 : vector<2x96xf32>
    %c1_263 = arith.constant 1 : index
    %c0_264 = arith.constant 0 : index
    %709 = vector.load %arg3[%c1_263, %c0_264] : memref<2x96xf32, #tpu.memory_space<vmem>>, vector<1x96xf32>
    %710 = vector.broadcast %709 : vector<1x96xf32> to vector<2x96xf32>
    %711 = arith.addf %708, %710 : vector<2x96xf32>
    %712 = vector.extract_strided_slice %711 {offsets = [0, 0], sizes = [2, 32], strides = [1, 1]} : vector<2x96xf32> to vector<2x32xf32>
    %713 = vector.extract_strided_slice %711 {offsets = [0, 32], sizes = [2, 32], strides = [1, 1]} : vector<2x96xf32> to vector<2x32xf32>
    %714 = vector.extract_strided_slice %711 {offsets = [0, 64], sizes = [2, 32], strides = [1, 1]} : vector<2x96xf32> to vector<2x32xf32>
    %715 = tpu.concatenate %712, %570, %713, %593 in 1 : vector<2x32xf32>, vector<2x32xf32>, vector<2x32xf32>, vector<2x32xf32> -> vector<2x128xf32>
    %c0_265 = arith.constant 0 : index
    %c0_266 = arith.constant 0 : index
    %716 = vector.load %arg4[%c0_265, %c0_266] : memref<128x256xf32, #tpu.memory_space<vmem>>, vector<128x256xf32>
    %cst_267 = arith.constant dense<0.000000e+00> : vector<2x256xf32>
    %717 = tpu.matmul %715, %716, %cst_267 {dimension_numbers = #tpu.dot_dimension_numbers<[1], [0], [0], [1], [0, 0, 1, 1], [], []>} : vector<2x128xf32>, vector<128x256xf32>, vector<2x256xf32> -> vector<2x256xf32>
    %c0_268 = arith.constant 0 : index
    %c0_269 = arith.constant 0 : index
    %718 = vector.load %arg5[%c0_268, %c0_269] : memref<1x256xf32, #tpu.memory_space<vmem>>, vector<1x256xf32>
    %719 = vector.broadcast %718 : vector<1x256xf32> to vector<2x256xf32>
    %720 = arith.addf %717, %719 : vector<2x256xf32>
    %721 = vector.extract_strided_slice %720 {offsets = [0, 0], sizes = [2, 128], strides = [1, 1]} : vector<2x256xf32> to vector<2x128xf32>
    %722 = vector.extract_strided_slice %721 {offsets = [0, 0], sizes = [2, 32], strides = [1, 1]} : vector<2x128xf32> to vector<2x32xf32>
    %723 = arith.negf %722 : vector<2x32xf32>
    %724 = math.exp %723 : vector<2x32xf32>
    %cst_270 = arith.constant 1.000000e+00 : f32
    %725 = vector.broadcast %cst_270 : f32 to vector<2x32xf32>
    %726 = arith.addf %725, %724 : vector<2x32xf32>
    %727 = arith.divf %725, %726 : vector<2x32xf32>
    %728 = vector.extract_strided_slice %721 {offsets = [0, 32], sizes = [2, 32], strides = [1, 1]} : vector<2x128xf32> to vector<2x32xf32>
    %729 = arith.negf %728 : vector<2x32xf32>
    %730 = math.exp %729 : vector<2x32xf32>
    %cst_271 = arith.constant 1.000000e+00 : f32
    %731 = vector.broadcast %cst_271 : f32 to vector<2x32xf32>
    %732 = arith.addf %731, %730 : vector<2x32xf32>
    %733 = arith.divf %731, %732 : vector<2x32xf32>
    %734 = vector.extract_strided_slice %721 {offsets = [0, 64], sizes = [2, 32], strides = [1, 1]} : vector<2x128xf32> to vector<2x32xf32>
    %735 = vector.extract_strided_slice %721 {offsets = [0, 96], sizes = [2, 32], strides = [1, 1]} : vector<2x128xf32> to vector<2x32xf32>
    %736 = arith.mulf %727, %735 : vector<2x32xf32>
    %737 = arith.addf %734, %736 : vector<2x32xf32>
    %738 = math.tanh %737 : vector<2x32xf32>
    %cst_272 = arith.constant 1.000000e+00 : f32
    %739 = vector.broadcast %cst_272 : f32 to vector<2x32xf32>
    %740 = arith.subf %739, %733 : vector<2x32xf32>
    %741 = arith.mulf %740, %738 : vector<2x32xf32>
    %742 = arith.mulf %733, %570 : vector<2x32xf32>
    %743 = arith.addf %741, %742 : vector<2x32xf32>
    %744 = vector.extract_strided_slice %720 {offsets = [0, 128], sizes = [2, 128], strides = [1, 1]} : vector<2x256xf32> to vector<2x128xf32>
    %745 = vector.extract_strided_slice %744 {offsets = [0, 0], sizes = [2, 32], strides = [1, 1]} : vector<2x128xf32> to vector<2x32xf32>
    %746 = arith.negf %745 : vector<2x32xf32>
    %747 = math.exp %746 : vector<2x32xf32>
    %cst_273 = arith.constant 1.000000e+00 : f32
    %748 = vector.broadcast %cst_273 : f32 to vector<2x32xf32>
    %749 = arith.addf %748, %747 : vector<2x32xf32>
    %750 = arith.divf %748, %749 : vector<2x32xf32>
    %751 = vector.extract_strided_slice %744 {offsets = [0, 32], sizes = [2, 32], strides = [1, 1]} : vector<2x128xf32> to vector<2x32xf32>
    %752 = arith.negf %751 : vector<2x32xf32>
    %753 = math.exp %752 : vector<2x32xf32>
    %cst_274 = arith.constant 1.000000e+00 : f32
    %754 = vector.broadcast %cst_274 : f32 to vector<2x32xf32>
    %755 = arith.addf %754, %753 : vector<2x32xf32>
    %756 = arith.divf %754, %755 : vector<2x32xf32>
    %757 = vector.extract_strided_slice %744 {offsets = [0, 64], sizes = [2, 32], strides = [1, 1]} : vector<2x128xf32> to vector<2x32xf32>
    %758 = vector.extract_strided_slice %744 {offsets = [0, 96], sizes = [2, 32], strides = [1, 1]} : vector<2x128xf32> to vector<2x32xf32>
    %759 = arith.mulf %750, %758 : vector<2x32xf32>
    %760 = arith.addf %757, %759 : vector<2x32xf32>
    %761 = math.tanh %760 : vector<2x32xf32>
    %cst_275 = arith.constant 1.000000e+00 : f32
    %762 = vector.broadcast %cst_275 : f32 to vector<2x32xf32>
    %763 = arith.subf %762, %756 : vector<2x32xf32>
    %764 = arith.mulf %763, %761 : vector<2x32xf32>
    %765 = arith.mulf %756, %593 : vector<2x32xf32>
    %766 = arith.addf %764, %765 : vector<2x32xf32>
    %767 = tpu.concatenate %743, %766 in 1 : vector<2x32xf32>, vector<2x32xf32> -> vector<2x64xf32>
    %c0_276 = arith.constant 0 : index
    %c0_277 = arith.constant 0 : index
    %768 = vector.load %arg6[%c0_276, %c0_277] : memref<64x32xf32, #tpu.memory_space<vmem>>, vector<64x32xf32>
    %cst_278 = arith.constant dense<0.000000e+00> : vector<2x32xf32>
    %769 = tpu.matmul %767, %768, %cst_278 {dimension_numbers = #tpu.dot_dimension_numbers<[1], [0], [0], [1], [0, 0, 1, 1], [], []>} : vector<2x64xf32>, vector<64x32xf32>, vector<2x32xf32> -> vector<2x32xf32>
    %c0_279 = arith.constant 0 : index
    %c0_280 = arith.constant 0 : index
    %770 = vector.load %arg7[%c0_279, %c0_280] : memref<1x32xf32, #tpu.memory_space<vmem>>, vector<1x32xf32>
    %771 = vector.broadcast %770 : vector<1x32xf32> to vector<2x32xf32>
    %772 = arith.addf %769, %771 : vector<2x32xf32>
    %773 = vector.extract_strided_slice %772 {offsets = [0, 0], sizes = [2, 8], strides = [1, 1]} : vector<2x32xf32> to vector<2x8xf32>
    %774 = vector.extract_strided_slice %772 {offsets = [0, 8], sizes = [2, 8], strides = [1, 1]} : vector<2x32xf32> to vector<2x8xf32>
    %775 = vector.extract_strided_slice %772 {offsets = [0, 16], sizes = [2, 8], strides = [1, 1]} : vector<2x32xf32> to vector<2x8xf32>
    %776 = vector.extract_strided_slice %772 {offsets = [0, 24], sizes = [2, 8], strides = [1, 1]} : vector<2x32xf32> to vector<2x8xf32>
    %cst_281 = arith.constant 5.000000e-01 : f32
    %777 = vector.broadcast %cst_281 : f32 to vector<2x8xf32>
    %778 = arith.mulf %777, %774 : vector<2x8xf32>
    %779 = math.exp %778 : vector<2x8xf32>
    %780 = arith.mulf %700, %779 : vector<2x8xf32>
    %781 = arith.addf %780, %773 : vector<2x8xf32>
    %c0_282 = arith.constant 0 : index
    %c0_283 = arith.constant 0 : index
    %782 = vector.load %arg8[%c0_282, %c0_283] : memref<8x32xf32, #tpu.memory_space<vmem>>, vector<8x32xf32>
    %cst_284 = arith.constant dense<0.000000e+00> : vector<2x32xf32>
    %783 = tpu.matmul %781, %782, %cst_284 {dimension_numbers = #tpu.dot_dimension_numbers<[1], [0], [0], [1], [0, 0, 1, 1], [], []>} : vector<2x8xf32>, vector<8x32xf32>, vector<2x32xf32> -> vector<2x32xf32>
    %784 = arith.addf %714, %783 : vector<2x32xf32>
    %785 = tpu.concatenate %784, %639 in 1 : vector<2x32xf32>, vector<2x32xf32> -> vector<2x64xf32>
    %c0_285 = arith.constant 0 : index
    %c0_286 = arith.constant 0 : index
    %786 = vector.load %arg9[%c0_285, %c0_286] : memref<64x128xf32, #tpu.memory_space<vmem>>, vector<64x128xf32>
    %cst_287 = arith.constant dense<0.000000e+00> : vector<2x128xf32>
    %787 = tpu.matmul %785, %786, %cst_287 {dimension_numbers = #tpu.dot_dimension_numbers<[1], [0], [0], [1], [0, 0, 1, 1], [], []>} : vector<2x64xf32>, vector<64x128xf32>, vector<2x128xf32> -> vector<2x128xf32>
    %c0_288 = arith.constant 0 : index
    %c0_289 = arith.constant 0 : index
    %788 = vector.load %arg10[%c0_288, %c0_289] : memref<1x128xf32, #tpu.memory_space<vmem>>, vector<1x128xf32>
    %789 = vector.broadcast %788 : vector<1x128xf32> to vector<2x128xf32>
    %790 = arith.addf %787, %789 : vector<2x128xf32>
    %791 = vector.extract_strided_slice %790 {offsets = [0, 0], sizes = [2, 32], strides = [1, 1]} : vector<2x128xf32> to vector<2x32xf32>
    %792 = arith.negf %791 : vector<2x32xf32>
    %793 = math.exp %792 : vector<2x32xf32>
    %cst_290 = arith.constant 1.000000e+00 : f32
    %794 = vector.broadcast %cst_290 : f32 to vector<2x32xf32>
    %795 = arith.addf %794, %793 : vector<2x32xf32>
    %796 = arith.divf %794, %795 : vector<2x32xf32>
    %797 = vector.extract_strided_slice %790 {offsets = [0, 32], sizes = [2, 32], strides = [1, 1]} : vector<2x128xf32> to vector<2x32xf32>
    %798 = arith.negf %797 : vector<2x32xf32>
    %799 = math.exp %798 : vector<2x32xf32>
    %cst_291 = arith.constant 1.000000e+00 : f32
    %800 = vector.broadcast %cst_291 : f32 to vector<2x32xf32>
    %801 = arith.addf %800, %799 : vector<2x32xf32>
    %802 = arith.divf %800, %801 : vector<2x32xf32>
    %803 = vector.extract_strided_slice %790 {offsets = [0, 64], sizes = [2, 32], strides = [1, 1]} : vector<2x128xf32> to vector<2x32xf32>
    %804 = vector.extract_strided_slice %790 {offsets = [0, 96], sizes = [2, 32], strides = [1, 1]} : vector<2x128xf32> to vector<2x32xf32>
    %805 = arith.mulf %796, %804 : vector<2x32xf32>
    %806 = arith.addf %803, %805 : vector<2x32xf32>
    %807 = math.tanh %806 : vector<2x32xf32>
    %cst_292 = arith.constant 1.000000e+00 : f32
    %808 = vector.broadcast %cst_292 : f32 to vector<2x32xf32>
    %809 = arith.subf %808, %802 : vector<2x32xf32>
    %810 = arith.mulf %809, %807 : vector<2x32xf32>
    %811 = arith.mulf %802, %639 : vector<2x32xf32>
    %812 = arith.addf %810, %811 : vector<2x32xf32>
    %813 = tpu.concatenate %812, %667 in 1 : vector<2x32xf32>, vector<2x32xf32> -> vector<2x64xf32>
    %c0_293 = arith.constant 0 : index
    %c0_294 = arith.constant 0 : index
    %814 = vector.load %arg11[%c0_293, %c0_294] : memref<64x128xf32, #tpu.memory_space<vmem>>, vector<64x128xf32>
    %cst_295 = arith.constant dense<0.000000e+00> : vector<2x128xf32>
    %815 = tpu.matmul %813, %814, %cst_295 {dimension_numbers = #tpu.dot_dimension_numbers<[1], [0], [0], [1], [0, 0, 1, 1], [], []>} : vector<2x64xf32>, vector<64x128xf32>, vector<2x128xf32> -> vector<2x128xf32>
    %c0_296 = arith.constant 0 : index
    %c0_297 = arith.constant 0 : index
    %816 = vector.load %arg12[%c0_296, %c0_297] : memref<1x128xf32, #tpu.memory_space<vmem>>, vector<1x128xf32>
    %817 = vector.broadcast %816 : vector<1x128xf32> to vector<2x128xf32>
    %818 = arith.addf %815, %817 : vector<2x128xf32>
    %819 = vector.extract_strided_slice %818 {offsets = [0, 0], sizes = [2, 32], strides = [1, 1]} : vector<2x128xf32> to vector<2x32xf32>
    %820 = arith.negf %819 : vector<2x32xf32>
    %821 = math.exp %820 : vector<2x32xf32>
    %cst_298 = arith.constant 1.000000e+00 : f32
    %822 = vector.broadcast %cst_298 : f32 to vector<2x32xf32>
    %823 = arith.addf %822, %821 : vector<2x32xf32>
    %824 = arith.divf %822, %823 : vector<2x32xf32>
    %825 = vector.extract_strided_slice %818 {offsets = [0, 32], sizes = [2, 32], strides = [1, 1]} : vector<2x128xf32> to vector<2x32xf32>
    %826 = arith.negf %825 : vector<2x32xf32>
    %827 = math.exp %826 : vector<2x32xf32>
    %cst_299 = arith.constant 1.000000e+00 : f32
    %828 = vector.broadcast %cst_299 : f32 to vector<2x32xf32>
    %829 = arith.addf %828, %827 : vector<2x32xf32>
    %830 = arith.divf %828, %829 : vector<2x32xf32>
    %831 = vector.extract_strided_slice %818 {offsets = [0, 64], sizes = [2, 32], strides = [1, 1]} : vector<2x128xf32> to vector<2x32xf32>
    %832 = vector.extract_strided_slice %818 {offsets = [0, 96], sizes = [2, 32], strides = [1, 1]} : vector<2x128xf32> to vector<2x32xf32>
    %833 = arith.mulf %824, %832 : vector<2x32xf32>
    %834 = arith.addf %831, %833 : vector<2x32xf32>
    %835 = math.tanh %834 : vector<2x32xf32>
    %cst_300 = arith.constant 1.000000e+00 : f32
    %836 = vector.broadcast %cst_300 : f32 to vector<2x32xf32>
    %837 = arith.subf %836, %830 : vector<2x32xf32>
    %838 = arith.mulf %837, %835 : vector<2x32xf32>
    %839 = arith.mulf %830, %667 : vector<2x32xf32>
    %840 = arith.addf %838, %839 : vector<2x32xf32>
    %c0_301 = arith.constant 0 : index
    %c0_302 = arith.constant 0 : index
    %841 = vector.load %arg13[%c0_301, %c0_302] : memref<32x16xf32, #tpu.memory_space<vmem>>, vector<32x16xf32>
    %cst_303 = arith.constant dense<0.000000e+00> : vector<2x16xf32>
    %842 = tpu.matmul %840, %841, %cst_303 {dimension_numbers = #tpu.dot_dimension_numbers<[1], [0], [0], [1], [0, 0, 1, 1], [], []>} : vector<2x32xf32>, vector<32x16xf32>, vector<2x16xf32> -> vector<2x16xf32>
    %c0_304 = arith.constant 0 : index
    %c0_305 = arith.constant 0 : index
    %843 = vector.load %arg14[%c0_304, %c0_305] : memref<1x16xf32, #tpu.memory_space<vmem>>, vector<1x16xf32>
    %844 = vector.broadcast %843 : vector<1x16xf32> to vector<2x16xf32>
    %845 = arith.addf %842, %844 : vector<2x16xf32>
    %c4_306 = arith.constant 4 : index
    %c0_307 = arith.constant 0 : index
    %c0_308 = arith.constant 0 : index
    %846 = vector.load %arg15[%c4_306, %c0_307, %c0_308] : memref<8x2x16xf32, #tpu.memory_space<vmem>>, vector<1x2x16xf32>
    %847 = vector.shape_cast %846 : vector<1x2x16xf32> to vector<2x16xf32>
    %848 = vector.shape_cast %845 : vector<2x16xf32> to vector<1x2x16xf32>
    tpu.vector_store %arg15[%c4_306, %c0_307, %c0_308], %848 {strides = array<i32>} : memref<8x2x16xf32, #tpu.memory_space<vmem>>, vector<1x2x16xf32>,
    %849 = arith.subf %845, %698 : vector<2x16xf32>
    %850 = arith.mulf %849, %849 : vector<2x16xf32>
    %851 = arith.addf %678, %850 : vector<2x16xf32>
    %852 = math.exp %774 : vector<2x8xf32>
    %853 = arith.subf %776, %774 : vector<2x8xf32>
    %cst_309 = arith.constant 5.000000e-01 : f32
    %854 = vector.broadcast %cst_309 : f32 to vector<2x8xf32>
    %855 = arith.mulf %854, %853 : vector<2x8xf32>
    %856 = arith.subf %773, %775 : vector<2x8xf32>
    %857 = arith.mulf %856, %856 : vector<2x8xf32>
    %858 = arith.addf %852, %857 : vector<2x8xf32>
    %cst_310 = arith.constant 0.000000e+00 : f32
    %859 = vector.broadcast %cst_310 : f32 to vector<2x8xf32>
    %860 = arith.subf %859, %776 : vector<2x8xf32>
    %861 = math.exp %860 : vector<2x8xf32>
    %cst_311 = arith.constant 5.000000e-01 : f32
    %862 = vector.broadcast %cst_311 : f32 to vector<2x8xf32>
    %863 = arith.mulf %862, %861 : vector<2x8xf32>
    %864 = arith.mulf %858, %863 : vector<2x8xf32>
    %865 = arith.addf %855, %864 : vector<2x8xf32>
    %cst_312 = arith.constant 5.000000e-01 : f32
    %866 = vector.broadcast %cst_312 : f32 to vector<2x8xf32>
    %867 = arith.subf %865, %866 : vector<2x8xf32>
    %868 = arith.addf %695, %867 : vector<2x8xf32>
    %cst_313 = arith.constant 5.000000e+00 : f32
    %cst_314 = arith.constant 0.142857149 : f32
    %869 = arith.mulf %cst_313, %cst_314 : f32
    %c5 = arith.constant 5 : index
    %c0_315 = arith.constant 0 : index
    %c0_316 = arith.constant 0 : index
    %870 = vector.load %arg0[%c5, %c0_315, %c0_316] : memref<8x2x16xf32, #tpu.memory_space<vmem>>, vector<1x2x16xf32>
    %871 = vector.shape_cast %870 : vector<1x2x16xf32> to vector<2x16xf32>
    %c5_317 = arith.constant 5 : index
    %c0_318 = arith.constant 0 : index
    %c0_319 = arith.constant 0 : index
    %872 = vector.load %arg1[%c5_317, %c0_318, %c0_319] : memref<8x2x8xf32, #tpu.memory_space<vmem>>, vector<1x2x8xf32>
    %873 = vector.shape_cast %872 : vector<1x2x8xf32> to vector<2x8xf32>
    %874 = tpu.concatenate %871, %845 in 1 : vector<2x16xf32>, vector<2x16xf32> -> vector<2x32xf32>
    %c0_320 = arith.constant 0 : index
    %c0_321 = arith.constant 0 : index
    %875 = vector.load %arg2[%c0_320, %c0_321] : memref<32x96xf32, #tpu.memory_space<vmem>>, vector<32x96xf32>
    %cst_322 = arith.constant dense<0.000000e+00> : vector<2x96xf32>
    %876 = tpu.matmul %874, %875, %cst_322 {dimension_numbers = #tpu.dot_dimension_numbers<[1], [0], [0], [1], [0, 0, 1, 1], [], []>} : vector<2x32xf32>, vector<32x96xf32>, vector<2x96xf32> -> vector<2x96xf32>
    %c0_323 = arith.constant 0 : index
    %c0_324 = arith.constant 0 : index
    %877 = vector.load %arg3[%c0_323, %c0_324] : memref<2x96xf32, #tpu.memory_space<vmem>>, vector<1x96xf32>
    %878 = vector.broadcast %869 : f32 to vector<1x96xf32>
    %879 = arith.mulf %878, %877 : vector<1x96xf32>
    %880 = vector.broadcast %879 : vector<1x96xf32> to vector<2x96xf32>
    %881 = arith.addf %876, %880 : vector<2x96xf32>
    %c1_325 = arith.constant 1 : index
    %c0_326 = arith.constant 0 : index
    %882 = vector.load %arg3[%c1_325, %c0_326] : memref<2x96xf32, #tpu.memory_space<vmem>>, vector<1x96xf32>
    %883 = vector.broadcast %882 : vector<1x96xf32> to vector<2x96xf32>
    %884 = arith.addf %881, %883 : vector<2x96xf32>
    %885 = vector.extract_strided_slice %884 {offsets = [0, 0], sizes = [2, 32], strides = [1, 1]} : vector<2x96xf32> to vector<2x32xf32>
    %886 = vector.extract_strided_slice %884 {offsets = [0, 32], sizes = [2, 32], strides = [1, 1]} : vector<2x96xf32> to vector<2x32xf32>
    %887 = vector.extract_strided_slice %884 {offsets = [0, 64], sizes = [2, 32], strides = [1, 1]} : vector<2x96xf32> to vector<2x32xf32>
    %888 = tpu.concatenate %885, %743, %886, %766 in 1 : vector<2x32xf32>, vector<2x32xf32>, vector<2x32xf32>, vector<2x32xf32> -> vector<2x128xf32>
    %c0_327 = arith.constant 0 : index
    %c0_328 = arith.constant 0 : index
    %889 = vector.load %arg4[%c0_327, %c0_328] : memref<128x256xf32, #tpu.memory_space<vmem>>, vector<128x256xf32>
    %cst_329 = arith.constant dense<0.000000e+00> : vector<2x256xf32>
    %890 = tpu.matmul %888, %889, %cst_329 {dimension_numbers = #tpu.dot_dimension_numbers<[1], [0], [0], [1], [0, 0, 1, 1], [], []>} : vector<2x128xf32>, vector<128x256xf32>, vector<2x256xf32> -> vector<2x256xf32>
    %c0_330 = arith.constant 0 : index
    %c0_331 = arith.constant 0 : index
    %891 = vector.load %arg5[%c0_330, %c0_331] : memref<1x256xf32, #tpu.memory_space<vmem>>, vector<1x256xf32>
    %892 = vector.broadcast %891 : vector<1x256xf32> to vector<2x256xf32>
    %893 = arith.addf %890, %892 : vector<2x256xf32>
    %894 = vector.extract_strided_slice %893 {offsets = [0, 0], sizes = [2, 128], strides = [1, 1]} : vector<2x256xf32> to vector<2x128xf32>
    %895 = vector.extract_strided_slice %894 {offsets = [0, 0], sizes = [2, 32], strides = [1, 1]} : vector<2x128xf32> to vector<2x32xf32>
    %896 = arith.negf %895 : vector<2x32xf32>
    %897 = math.exp %896 : vector<2x32xf32>
    %cst_332 = arith.constant 1.000000e+00 : f32
    %898 = vector.broadcast %cst_332 : f32 to vector<2x32xf32>
    %899 = arith.addf %898, %897 : vector<2x32xf32>
    %900 = arith.divf %898, %899 : vector<2x32xf32>
    %901 = vector.extract_strided_slice %894 {offsets = [0, 32], sizes = [2, 32], strides = [1, 1]} : vector<2x128xf32> to vector<2x32xf32>
    %902 = arith.negf %901 : vector<2x32xf32>
    %903 = math.exp %902 : vector<2x32xf32>
    %cst_333 = arith.constant 1.000000e+00 : f32
    %904 = vector.broadcast %cst_333 : f32 to vector<2x32xf32>
    %905 = arith.addf %904, %903 : vector<2x32xf32>
    %906 = arith.divf %904, %905 : vector<2x32xf32>
    %907 = vector.extract_strided_slice %894 {offsets = [0, 64], sizes = [2, 32], strides = [1, 1]} : vector<2x128xf32> to vector<2x32xf32>
    %908 = vector.extract_strided_slice %894 {offsets = [0, 96], sizes = [2, 32], strides = [1, 1]} : vector<2x128xf32> to vector<2x32xf32>
    %909 = arith.mulf %900, %908 : vector<2x32xf32>
    %910 = arith.addf %907, %909 : vector<2x32xf32>
    %911 = math.tanh %910 : vector<2x32xf32>
    %cst_334 = arith.constant 1.000000e+00 : f32
    %912 = vector.broadcast %cst_334 : f32 to vector<2x32xf32>
    %913 = arith.subf %912, %906 : vector<2x32xf32>
    %914 = arith.mulf %913, %911 : vector<2x32xf32>
    %915 = arith.mulf %906, %743 : vector<2x32xf32>
    %916 = arith.addf %914, %915 : vector<2x32xf32>
    %917 = vector.extract_strided_slice %893 {offsets = [0, 128], sizes = [2, 128], strides = [1, 1]} : vector<2x256xf32> to vector<2x128xf32>
    %918 = vector.extract_strided_slice %917 {offsets = [0, 0], sizes = [2, 32], strides = [1, 1]} : vector<2x128xf32> to vector<2x32xf32>
    %919 = arith.negf %918 : vector<2x32xf32>
    %920 = math.exp %919 : vector<2x32xf32>
    %cst_335 = arith.constant 1.000000e+00 : f32
    %921 = vector.broadcast %cst_335 : f32 to vector<2x32xf32>
    %922 = arith.addf %921, %920 : vector<2x32xf32>
    %923 = arith.divf %921, %922 : vector<2x32xf32>
    %924 = vector.extract_strided_slice %917 {offsets = [0, 32], sizes = [2, 32], strides = [1, 1]} : vector<2x128xf32> to vector<2x32xf32>
    %925 = arith.negf %924 : vector<2x32xf32>
    %926 = math.exp %925 : vector<2x32xf32>
    %cst_336 = arith.constant 1.000000e+00 : f32
    %927 = vector.broadcast %cst_336 : f32 to vector<2x32xf32>
    %928 = arith.addf %927, %926 : vector<2x32xf32>
    %929 = arith.divf %927, %928 : vector<2x32xf32>
    %930 = vector.extract_strided_slice %917 {offsets = [0, 64], sizes = [2, 32], strides = [1, 1]} : vector<2x128xf32> to vector<2x32xf32>
    %931 = vector.extract_strided_slice %917 {offsets = [0, 96], sizes = [2, 32], strides = [1, 1]} : vector<2x128xf32> to vector<2x32xf32>
    %932 = arith.mulf %923, %931 : vector<2x32xf32>
    %933 = arith.addf %930, %932 : vector<2x32xf32>
    %934 = math.tanh %933 : vector<2x32xf32>
    %cst_337 = arith.constant 1.000000e+00 : f32
    %935 = vector.broadcast %cst_337 : f32 to vector<2x32xf32>
    %936 = arith.subf %935, %929 : vector<2x32xf32>
    %937 = arith.mulf %936, %934 : vector<2x32xf32>
    %938 = arith.mulf %929, %766 : vector<2x32xf32>
    %939 = arith.addf %937, %938 : vector<2x32xf32>
    %940 = tpu.concatenate %916, %939 in 1 : vector<2x32xf32>, vector<2x32xf32> -> vector<2x64xf32>
    %c0_338 = arith.constant 0 : index
    %c0_339 = arith.constant 0 : index
    %941 = vector.load %arg6[%c0_338, %c0_339] : memref<64x32xf32, #tpu.memory_space<vmem>>, vector<64x32xf32>
    %cst_340 = arith.constant dense<0.000000e+00> : vector<2x32xf32>
    %942 = tpu.matmul %940, %941, %cst_340 {dimension_numbers = #tpu.dot_dimension_numbers<[1], [0], [0], [1], [0, 0, 1, 1], [], []>} : vector<2x64xf32>, vector<64x32xf32>, vector<2x32xf32> -> vector<2x32xf32>
    %c0_341 = arith.constant 0 : index
    %c0_342 = arith.constant 0 : index
    %943 = vector.load %arg7[%c0_341, %c0_342] : memref<1x32xf32, #tpu.memory_space<vmem>>, vector<1x32xf32>
    %944 = vector.broadcast %943 : vector<1x32xf32> to vector<2x32xf32>
    %945 = arith.addf %942, %944 : vector<2x32xf32>
    %946 = vector.extract_strided_slice %945 {offsets = [0, 0], sizes = [2, 8], strides = [1, 1]} : vector<2x32xf32> to vector<2x8xf32>
    %947 = vector.extract_strided_slice %945 {offsets = [0, 8], sizes = [2, 8], strides = [1, 1]} : vector<2x32xf32> to vector<2x8xf32>
    %948 = vector.extract_strided_slice %945 {offsets = [0, 16], sizes = [2, 8], strides = [1, 1]} : vector<2x32xf32> to vector<2x8xf32>
    %949 = vector.extract_strided_slice %945 {offsets = [0, 24], sizes = [2, 8], strides = [1, 1]} : vector<2x32xf32> to vector<2x8xf32>
    %cst_343 = arith.constant 5.000000e-01 : f32
    %950 = vector.broadcast %cst_343 : f32 to vector<2x8xf32>
    %951 = arith.mulf %950, %947 : vector<2x8xf32>
    %952 = math.exp %951 : vector<2x8xf32>
    %953 = arith.mulf %873, %952 : vector<2x8xf32>
    %954 = arith.addf %953, %946 : vector<2x8xf32>
    %c0_344 = arith.constant 0 : index
    %c0_345 = arith.constant 0 : index
    %955 = vector.load %arg8[%c0_344, %c0_345] : memref<8x32xf32, #tpu.memory_space<vmem>>, vector<8x32xf32>
    %cst_346 = arith.constant dense<0.000000e+00> : vector<2x32xf32>
    %956 = tpu.matmul %954, %955, %cst_346 {dimension_numbers = #tpu.dot_dimension_numbers<[1], [0], [0], [1], [0, 0, 1, 1], [], []>} : vector<2x8xf32>, vector<8x32xf32>, vector<2x32xf32> -> vector<2x32xf32>
    %957 = arith.addf %887, %956 : vector<2x32xf32>
    %958 = tpu.concatenate %957, %812 in 1 : vector<2x32xf32>, vector<2x32xf32> -> vector<2x64xf32>
    %c0_347 = arith.constant 0 : index
    %c0_348 = arith.constant 0 : index
    %959 = vector.load %arg9[%c0_347, %c0_348] : memref<64x128xf32, #tpu.memory_space<vmem>>, vector<64x128xf32>
    %cst_349 = arith.constant dense<0.000000e+00> : vector<2x128xf32>
    %960 = tpu.matmul %958, %959, %cst_349 {dimension_numbers = #tpu.dot_dimension_numbers<[1], [0], [0], [1], [0, 0, 1, 1], [], []>} : vector<2x64xf32>, vector<64x128xf32>, vector<2x128xf32> -> vector<2x128xf32>
    %c0_350 = arith.constant 0 : index
    %c0_351 = arith.constant 0 : index
    %961 = vector.load %arg10[%c0_350, %c0_351] : memref<1x128xf32, #tpu.memory_space<vmem>>, vector<1x128xf32>
    %962 = vector.broadcast %961 : vector<1x128xf32> to vector<2x128xf32>
    %963 = arith.addf %960, %962 : vector<2x128xf32>
    %964 = vector.extract_strided_slice %963 {offsets = [0, 0], sizes = [2, 32], strides = [1, 1]} : vector<2x128xf32> to vector<2x32xf32>
    %965 = arith.negf %964 : vector<2x32xf32>
    %966 = math.exp %965 : vector<2x32xf32>
    %cst_352 = arith.constant 1.000000e+00 : f32
    %967 = vector.broadcast %cst_352 : f32 to vector<2x32xf32>
    %968 = arith.addf %967, %966 : vector<2x32xf32>
    %969 = arith.divf %967, %968 : vector<2x32xf32>
    %970 = vector.extract_strided_slice %963 {offsets = [0, 32], sizes = [2, 32], strides = [1, 1]} : vector<2x128xf32> to vector<2x32xf32>
    %971 = arith.negf %970 : vector<2x32xf32>
    %972 = math.exp %971 : vector<2x32xf32>
    %cst_353 = arith.constant 1.000000e+00 : f32
    %973 = vector.broadcast %cst_353 : f32 to vector<2x32xf32>
    %974 = arith.addf %973, %972 : vector<2x32xf32>
    %975 = arith.divf %973, %974 : vector<2x32xf32>
    %976 = vector.extract_strided_slice %963 {offsets = [0, 64], sizes = [2, 32], strides = [1, 1]} : vector<2x128xf32> to vector<2x32xf32>
    %977 = vector.extract_strided_slice %963 {offsets = [0, 96], sizes = [2, 32], strides = [1, 1]} : vector<2x128xf32> to vector<2x32xf32>
    %978 = arith.mulf %969, %977 : vector<2x32xf32>
    %979 = arith.addf %976, %978 : vector<2x32xf32>
    %980 = math.tanh %979 : vector<2x32xf32>
    %cst_354 = arith.constant 1.000000e+00 : f32
    %981 = vector.broadcast %cst_354 : f32 to vector<2x32xf32>
    %982 = arith.subf %981, %975 : vector<2x32xf32>
    %983 = arith.mulf %982, %980 : vector<2x32xf32>
    %984 = arith.mulf %975, %812 : vector<2x32xf32>
    %985 = arith.addf %983, %984 : vector<2x32xf32>
    %986 = tpu.concatenate %985, %840 in 1 : vector<2x32xf32>, vector<2x32xf32> -> vector<2x64xf32>
    %c0_355 = arith.constant 0 : index
    %c0_356 = arith.constant 0 : index
    %987 = vector.load %arg11[%c0_355, %c0_356] : memref<64x128xf32, #tpu.memory_space<vmem>>, vector<64x128xf32>
    %cst_357 = arith.constant dense<0.000000e+00> : vector<2x128xf32>
    %988 = tpu.matmul %986, %987, %cst_357 {dimension_numbers = #tpu.dot_dimension_numbers<[1], [0], [0], [1], [0, 0, 1, 1], [], []>} : vector<2x64xf32>, vector<64x128xf32>, vector<2x128xf32> -> vector<2x128xf32>
    %c0_358 = arith.constant 0 : index
    %c0_359 = arith.constant 0 : index
    %989 = vector.load %arg12[%c0_358, %c0_359] : memref<1x128xf32, #tpu.memory_space<vmem>>, vector<1x128xf32>
    %990 = vector.broadcast %989 : vector<1x128xf32> to vector<2x128xf32>
    %991 = arith.addf %988, %990 : vector<2x128xf32>
    %992 = vector.extract_strided_slice %991 {offsets = [0, 0], sizes = [2, 32], strides = [1, 1]} : vector<2x128xf32> to vector<2x32xf32>
    %993 = arith.negf %992 : vector<2x32xf32>
    %994 = math.exp %993 : vector<2x32xf32>
    %cst_360 = arith.constant 1.000000e+00 : f32
    %995 = vector.broadcast %cst_360 : f32 to vector<2x32xf32>
    %996 = arith.addf %995, %994 : vector<2x32xf32>
    %997 = arith.divf %995, %996 : vector<2x32xf32>
    %998 = vector.extract_strided_slice %991 {offsets = [0, 32], sizes = [2, 32], strides = [1, 1]} : vector<2x128xf32> to vector<2x32xf32>
    %999 = arith.negf %998 : vector<2x32xf32>
    %1000 = math.exp %999 : vector<2x32xf32>
    %cst_361 = arith.constant 1.000000e+00 : f32
    %1001 = vector.broadcast %cst_361 : f32 to vector<2x32xf32>
    %1002 = arith.addf %1001, %1000 : vector<2x32xf32>
    %1003 = arith.divf %1001, %1002 : vector<2x32xf32>
    %1004 = vector.extract_strided_slice %991 {offsets = [0, 64], sizes = [2, 32], strides = [1, 1]} : vector<2x128xf32> to vector<2x32xf32>
    %1005 = vector.extract_strided_slice %991 {offsets = [0, 96], sizes = [2, 32], strides = [1, 1]} : vector<2x128xf32> to vector<2x32xf32>
    %1006 = arith.mulf %997, %1005 : vector<2x32xf32>
    %1007 = arith.addf %1004, %1006 : vector<2x32xf32>
    %1008 = math.tanh %1007 : vector<2x32xf32>
    %cst_362 = arith.constant 1.000000e+00 : f32
    %1009 = vector.broadcast %cst_362 : f32 to vector<2x32xf32>
    %1010 = arith.subf %1009, %1003 : vector<2x32xf32>
    %1011 = arith.mulf %1010, %1008 : vector<2x32xf32>
    %1012 = arith.mulf %1003, %840 : vector<2x32xf32>
    %1013 = arith.addf %1011, %1012 : vector<2x32xf32>
    %c0_363 = arith.constant 0 : index
    %c0_364 = arith.constant 0 : index
    %1014 = vector.load %arg13[%c0_363, %c0_364] : memref<32x16xf32, #tpu.memory_space<vmem>>, vector<32x16xf32>
    %cst_365 = arith.constant dense<0.000000e+00> : vector<2x16xf32>
    %1015 = tpu.matmul %1013, %1014, %cst_365 {dimension_numbers = #tpu.dot_dimension_numbers<[1], [0], [0], [1], [0, 0, 1, 1], [], []>} : vector<2x32xf32>, vector<32x16xf32>, vector<2x16xf32> -> vector<2x16xf32>
    %c0_366 = arith.constant 0 : index
    %c0_367 = arith.constant 0 : index
    %1016 = vector.load %arg14[%c0_366, %c0_367] : memref<1x16xf32, #tpu.memory_space<vmem>>, vector<1x16xf32>
    %1017 = vector.broadcast %1016 : vector<1x16xf32> to vector<2x16xf32>
    %1018 = arith.addf %1015, %1017 : vector<2x16xf32>
    %c5_368 = arith.constant 5 : index
    %c0_369 = arith.constant 0 : index
    %c0_370 = arith.constant 0 : index
    %1019 = vector.load %arg15[%c5_368, %c0_369, %c0_370] : memref<8x2x16xf32, #tpu.memory_space<vmem>>, vector<1x2x16xf32>
    %1020 = vector.shape_cast %1019 : vector<1x2x16xf32> to vector<2x16xf32>
    %1021 = vector.shape_cast %1018 : vector<2x16xf32> to vector<1x2x16xf32>
    tpu.vector_store %arg15[%c5_368, %c0_369, %c0_370], %1021 {strides = array<i32>} : memref<8x2x16xf32, #tpu.memory_space<vmem>>, vector<1x2x16xf32>,
    %1022 = arith.subf %1018, %871 : vector<2x16xf32>
    %1023 = arith.mulf %1022, %1022 : vector<2x16xf32>
    %1024 = arith.addf %851, %1023 : vector<2x16xf32>
    %1025 = math.exp %947 : vector<2x8xf32>
    %1026 = arith.subf %949, %947 : vector<2x8xf32>
    %cst_371 = arith.constant 5.000000e-01 : f32
    %1027 = vector.broadcast %cst_371 : f32 to vector<2x8xf32>
    %1028 = arith.mulf %1027, %1026 : vector<2x8xf32>
    %1029 = arith.subf %946, %948 : vector<2x8xf32>
    %1030 = arith.mulf %1029, %1029 : vector<2x8xf32>
    %1031 = arith.addf %1025, %1030 : vector<2x8xf32>
    %cst_372 = arith.constant 0.000000e+00 : f32
    %1032 = vector.broadcast %cst_372 : f32 to vector<2x8xf32>
    %1033 = arith.subf %1032, %949 : vector<2x8xf32>
    %1034 = math.exp %1033 : vector<2x8xf32>
    %cst_373 = arith.constant 5.000000e-01 : f32
    %1035 = vector.broadcast %cst_373 : f32 to vector<2x8xf32>
    %1036 = arith.mulf %1035, %1034 : vector<2x8xf32>
    %1037 = arith.mulf %1031, %1036 : vector<2x8xf32>
    %1038 = arith.addf %1028, %1037 : vector<2x8xf32>
    %cst_374 = arith.constant 5.000000e-01 : f32
    %1039 = vector.broadcast %cst_374 : f32 to vector<2x8xf32>
    %1040 = arith.subf %1038, %1039 : vector<2x8xf32>
    %1041 = arith.addf %868, %1040 : vector<2x8xf32>
    %cst_375 = arith.constant 6.000000e+00 : f32
    %cst_376 = arith.constant 0.142857149 : f32
    %1042 = arith.mulf %cst_375, %cst_376 : f32
    %c6 = arith.constant 6 : index
    %c0_377 = arith.constant 0 : index
    %c0_378 = arith.constant 0 : index
    %1043 = vector.load %arg0[%c6, %c0_377, %c0_378] : memref<8x2x16xf32, #tpu.memory_space<vmem>>, vector<1x2x16xf32>
    %1044 = vector.shape_cast %1043 : vector<1x2x16xf32> to vector<2x16xf32>
    %c6_379 = arith.constant 6 : index
    %c0_380 = arith.constant 0 : index
    %c0_381 = arith.constant 0 : index
    %1045 = vector.load %arg1[%c6_379, %c0_380, %c0_381] : memref<8x2x8xf32, #tpu.memory_space<vmem>>, vector<1x2x8xf32>
    %1046 = vector.shape_cast %1045 : vector<1x2x8xf32> to vector<2x8xf32>
    %1047 = tpu.concatenate %1044, %1018 in 1 : vector<2x16xf32>, vector<2x16xf32> -> vector<2x32xf32>
    %c0_382 = arith.constant 0 : index
    %c0_383 = arith.constant 0 : index
    %1048 = vector.load %arg2[%c0_382, %c0_383] : memref<32x96xf32, #tpu.memory_space<vmem>>, vector<32x96xf32>
    %cst_384 = arith.constant dense<0.000000e+00> : vector<2x96xf32>
    %1049 = tpu.matmul %1047, %1048, %cst_384 {dimension_numbers = #tpu.dot_dimension_numbers<[1], [0], [0], [1], [0, 0, 1, 1], [], []>} : vector<2x32xf32>, vector<32x96xf32>, vector<2x96xf32> -> vector<2x96xf32>
    %c0_385 = arith.constant 0 : index
    %c0_386 = arith.constant 0 : index
    %1050 = vector.load %arg3[%c0_385, %c0_386] : memref<2x96xf32, #tpu.memory_space<vmem>>, vector<1x96xf32>
    %1051 = vector.broadcast %1042 : f32 to vector<1x96xf32>
    %1052 = arith.mulf %1051, %1050 : vector<1x96xf32>
    %1053 = vector.broadcast %1052 : vector<1x96xf32> to vector<2x96xf32>
    %1054 = arith.addf %1049, %1053 : vector<2x96xf32>
    %c1_387 = arith.constant 1 : index
    %c0_388 = arith.constant 0 : index
    %1055 = vector.load %arg3[%c1_387, %c0_388] : memref<2x96xf32, #tpu.memory_space<vmem>>, vector<1x96xf32>
    %1056 = vector.broadcast %1055 : vector<1x96xf32> to vector<2x96xf32>
    %1057 = arith.addf %1054, %1056 : vector<2x96xf32>
    %1058 = vector.extract_strided_slice %1057 {offsets = [0, 0], sizes = [2, 32], strides = [1, 1]} : vector<2x96xf32> to vector<2x32xf32>
    %1059 = vector.extract_strided_slice %1057 {offsets = [0, 32], sizes = [2, 32], strides = [1, 1]} : vector<2x96xf32> to vector<2x32xf32>
    %1060 = vector.extract_strided_slice %1057 {offsets = [0, 64], sizes = [2, 32], strides = [1, 1]} : vector<2x96xf32> to vector<2x32xf32>
    %1061 = tpu.concatenate %1058, %916, %1059, %939 in 1 : vector<2x32xf32>, vector<2x32xf32>, vector<2x32xf32>, vector<2x32xf32> -> vector<2x128xf32>
    %c0_389 = arith.constant 0 : index
    %c0_390 = arith.constant 0 : index
    %1062 = vector.load %arg4[%c0_389, %c0_390] : memref<128x256xf32, #tpu.memory_space<vmem>>, vector<128x256xf32>
    %cst_391 = arith.constant dense<0.000000e+00> : vector<2x256xf32>
    %1063 = tpu.matmul %1061, %1062, %cst_391 {dimension_numbers = #tpu.dot_dimension_numbers<[1], [0], [0], [1], [0, 0, 1, 1], [], []>} : vector<2x128xf32>, vector<128x256xf32>, vector<2x256xf32> -> vector<2x256xf32>
    %c0_392 = arith.constant 0 : index
    %c0_393 = arith.constant 0 : index
    %1064 = vector.load %arg5[%c0_392, %c0_393] : memref<1x256xf32, #tpu.memory_space<vmem>>, vector<1x256xf32>
    %1065 = vector.broadcast %1064 : vector<1x256xf32> to vector<2x256xf32>
    %1066 = arith.addf %1063, %1065 : vector<2x256xf32>
    %1067 = vector.extract_strided_slice %1066 {offsets = [0, 0], sizes = [2, 128], strides = [1, 1]} : vector<2x256xf32> to vector<2x128xf32>
    %1068 = vector.extract_strided_slice %1067 {offsets = [0, 0], sizes = [2, 32], strides = [1, 1]} : vector<2x128xf32> to vector<2x32xf32>
    %1069 = arith.negf %1068 : vector<2x32xf32>
    %1070 = math.exp %1069 : vector<2x32xf32>
    %cst_394 = arith.constant 1.000000e+00 : f32
    %1071 = vector.broadcast %cst_394 : f32 to vector<2x32xf32>
    %1072 = arith.addf %1071, %1070 : vector<2x32xf32>
    %1073 = arith.divf %1071, %1072 : vector<2x32xf32>
    %1074 = vector.extract_strided_slice %1067 {offsets = [0, 32], sizes = [2, 32], strides = [1, 1]} : vector<2x128xf32> to vector<2x32xf32>
    %1075 = arith.negf %1074 : vector<2x32xf32>
    %1076 = math.exp %1075 : vector<2x32xf32>
    %cst_395 = arith.constant 1.000000e+00 : f32
    %1077 = vector.broadcast %cst_395 : f32 to vector<2x32xf32>
    %1078 = arith.addf %1077, %1076 : vector<2x32xf32>
    %1079 = arith.divf %1077, %1078 : vector<2x32xf32>
    %1080 = vector.extract_strided_slice %1067 {offsets = [0, 64], sizes = [2, 32], strides = [1, 1]} : vector<2x128xf32> to vector<2x32xf32>
    %1081 = vector.extract_strided_slice %1067 {offsets = [0, 96], sizes = [2, 32], strides = [1, 1]} : vector<2x128xf32> to vector<2x32xf32>
    %1082 = arith.mulf %1073, %1081 : vector<2x32xf32>
    %1083 = arith.addf %1080, %1082 : vector<2x32xf32>
    %1084 = math.tanh %1083 : vector<2x32xf32>
    %cst_396 = arith.constant 1.000000e+00 : f32
    %1085 = vector.broadcast %cst_396 : f32 to vector<2x32xf32>
    %1086 = arith.subf %1085, %1079 : vector<2x32xf32>
    %1087 = arith.mulf %1086, %1084 : vector<2x32xf32>
    %1088 = arith.mulf %1079, %916 : vector<2x32xf32>
    %1089 = arith.addf %1087, %1088 : vector<2x32xf32>
    %1090 = vector.extract_strided_slice %1066 {offsets = [0, 128], sizes = [2, 128], strides = [1, 1]} : vector<2x256xf32> to vector<2x128xf32>
    %1091 = vector.extract_strided_slice %1090 {offsets = [0, 0], sizes = [2, 32], strides = [1, 1]} : vector<2x128xf32> to vector<2x32xf32>
    %1092 = arith.negf %1091 : vector<2x32xf32>
    %1093 = math.exp %1092 : vector<2x32xf32>
    %cst_397 = arith.constant 1.000000e+00 : f32
    %1094 = vector.broadcast %cst_397 : f32 to vector<2x32xf32>
    %1095 = arith.addf %1094, %1093 : vector<2x32xf32>
    %1096 = arith.divf %1094, %1095 : vector<2x32xf32>
    %1097 = vector.extract_strided_slice %1090 {offsets = [0, 32], sizes = [2, 32], strides = [1, 1]} : vector<2x128xf32> to vector<2x32xf32>
    %1098 = arith.negf %1097 : vector<2x32xf32>
    %1099 = math.exp %1098 : vector<2x32xf32>
    %cst_398 = arith.constant 1.000000e+00 : f32
    %1100 = vector.broadcast %cst_398 : f32 to vector<2x32xf32>
    %1101 = arith.addf %1100, %1099 : vector<2x32xf32>
    %1102 = arith.divf %1100, %1101 : vector<2x32xf32>
    %1103 = vector.extract_strided_slice %1090 {offsets = [0, 64], sizes = [2, 32], strides = [1, 1]} : vector<2x128xf32> to vector<2x32xf32>
    %1104 = vector.extract_strided_slice %1090 {offsets = [0, 96], sizes = [2, 32], strides = [1, 1]} : vector<2x128xf32> to vector<2x32xf32>
    %1105 = arith.mulf %1096, %1104 : vector<2x32xf32>
    %1106 = arith.addf %1103, %1105 : vector<2x32xf32>
    %1107 = math.tanh %1106 : vector<2x32xf32>
    %cst_399 = arith.constant 1.000000e+00 : f32
    %1108 = vector.broadcast %cst_399 : f32 to vector<2x32xf32>
    %1109 = arith.subf %1108, %1102 : vector<2x32xf32>
    %1110 = arith.mulf %1109, %1107 : vector<2x32xf32>
    %1111 = arith.mulf %1102, %939 : vector<2x32xf32>
    %1112 = arith.addf %1110, %1111 : vector<2x32xf32>
    %1113 = tpu.concatenate %1089, %1112 in 1 : vector<2x32xf32>, vector<2x32xf32> -> vector<2x64xf32>
    %c0_400 = arith.constant 0 : index
    %c0_401 = arith.constant 0 : index
    %1114 = vector.load %arg6[%c0_400, %c0_401] : memref<64x32xf32, #tpu.memory_space<vmem>>, vector<64x32xf32>
    %cst_402 = arith.constant dense<0.000000e+00> : vector<2x32xf32>
    %1115 = tpu.matmul %1113, %1114, %cst_402 {dimension_numbers = #tpu.dot_dimension_numbers<[1], [0], [0], [1], [0, 0, 1, 1], [], []>} : vector<2x64xf32>, vector<64x32xf32>, vector<2x32xf32> -> vector<2x32xf32>
    %c0_403 = arith.constant 0 : index
    %c0_404 = arith.constant 0 : index
    %1116 = vector.load %arg7[%c0_403, %c0_404] : memref<1x32xf32, #tpu.memory_space<vmem>>, vector<1x32xf32>
    %1117 = vector.broadcast %1116 : vector<1x32xf32> to vector<2x32xf32>
    %1118 = arith.addf %1115, %1117 : vector<2x32xf32>
    %1119 = vector.extract_strided_slice %1118 {offsets = [0, 0], sizes = [2, 8], strides = [1, 1]} : vector<2x32xf32> to vector<2x8xf32>
    %1120 = vector.extract_strided_slice %1118 {offsets = [0, 8], sizes = [2, 8], strides = [1, 1]} : vector<2x32xf32> to vector<2x8xf32>
    %1121 = vector.extract_strided_slice %1118 {offsets = [0, 16], sizes = [2, 8], strides = [1, 1]} : vector<2x32xf32> to vector<2x8xf32>
    %1122 = vector.extract_strided_slice %1118 {offsets = [0, 24], sizes = [2, 8], strides = [1, 1]} : vector<2x32xf32> to vector<2x8xf32>
    %cst_405 = arith.constant 5.000000e-01 : f32
    %1123 = vector.broadcast %cst_405 : f32 to vector<2x8xf32>
    %1124 = arith.mulf %1123, %1120 : vector<2x8xf32>
    %1125 = math.exp %1124 : vector<2x8xf32>
    %1126 = arith.mulf %1046, %1125 : vector<2x8xf32>
    %1127 = arith.addf %1126, %1119 : vector<2x8xf32>
    %c0_406 = arith.constant 0 : index
    %c0_407 = arith.constant 0 : index
    %1128 = vector.load %arg8[%c0_406, %c0_407] : memref<8x32xf32, #tpu.memory_space<vmem>>, vector<8x32xf32>
    %cst_408 = arith.constant dense<0.000000e+00> : vector<2x32xf32>
    %1129 = tpu.matmul %1127, %1128, %cst_408 {dimension_numbers = #tpu.dot_dimension_numbers<[1], [0], [0], [1], [0, 0, 1, 1], [], []>} : vector<2x8xf32>, vector<8x32xf32>, vector<2x32xf32> -> vector<2x32xf32>
    %1130 = arith.addf %1060, %1129 : vector<2x32xf32>
    %1131 = tpu.concatenate %1130, %985 in 1 : vector<2x32xf32>, vector<2x32xf32> -> vector<2x64xf32>
    %c0_409 = arith.constant 0 : index
    %c0_410 = arith.constant 0 : index
    %1132 = vector.load %arg9[%c0_409, %c0_410] : memref<64x128xf32, #tpu.memory_space<vmem>>, vector<64x128xf32>
    %cst_411 = arith.constant dense<0.000000e+00> : vector<2x128xf32>
    %1133 = tpu.matmul %1131, %1132, %cst_411 {dimension_numbers = #tpu.dot_dimension_numbers<[1], [0], [0], [1], [0, 0, 1, 1], [], []>} : vector<2x64xf32>, vector<64x128xf32>, vector<2x128xf32> -> vector<2x128xf32>
    %c0_412 = arith.constant 0 : index
    %c0_413 = arith.constant 0 : index
    %1134 = vector.load %arg10[%c0_412, %c0_413] : memref<1x128xf32, #tpu.memory_space<vmem>>, vector<1x128xf32>
    %1135 = vector.broadcast %1134 : vector<1x128xf32> to vector<2x128xf32>
    %1136 = arith.addf %1133, %1135 : vector<2x128xf32>
    %1137 = vector.extract_strided_slice %1136 {offsets = [0, 0], sizes = [2, 32], strides = [1, 1]} : vector<2x128xf32> to vector<2x32xf32>
    %1138 = arith.negf %1137 : vector<2x32xf32>
    %1139 = math.exp %1138 : vector<2x32xf32>
    %cst_414 = arith.constant 1.000000e+00 : f32
    %1140 = vector.broadcast %cst_414 : f32 to vector<2x32xf32>
    %1141 = arith.addf %1140, %1139 : vector<2x32xf32>
    %1142 = arith.divf %1140, %1141 : vector<2x32xf32>
    %1143 = vector.extract_strided_slice %1136 {offsets = [0, 32], sizes = [2, 32], strides = [1, 1]} : vector<2x128xf32> to vector<2x32xf32>
    %1144 = arith.negf %1143 : vector<2x32xf32>
    %1145 = math.exp %1144 : vector<2x32xf32>
    %cst_415 = arith.constant 1.000000e+00 : f32
    %1146 = vector.broadcast %cst_415 : f32 to vector<2x32xf32>
    %1147 = arith.addf %1146, %1145 : vector<2x32xf32>
    %1148 = arith.divf %1146, %1147 : vector<2x32xf32>
    %1149 = vector.extract_strided_slice %1136 {offsets = [0, 64], sizes = [2, 32], strides = [1, 1]} : vector<2x128xf32> to vector<2x32xf32>
    %1150 = vector.extract_strided_slice %1136 {offsets = [0, 96], sizes = [2, 32], strides = [1, 1]} : vector<2x128xf32> to vector<2x32xf32>
    %1151 = arith.mulf %1142, %1150 : vector<2x32xf32>
    %1152 = arith.addf %1149, %1151 : vector<2x32xf32>
    %1153 = math.tanh %1152 : vector<2x32xf32>
    %cst_416 = arith.constant 1.000000e+00 : f32
    %1154 = vector.broadcast %cst_416 : f32 to vector<2x32xf32>
    %1155 = arith.subf %1154, %1148 : vector<2x32xf32>
    %1156 = arith.mulf %1155, %1153 : vector<2x32xf32>
    %1157 = arith.mulf %1148, %985 : vector<2x32xf32>
    %1158 = arith.addf %1156, %1157 : vector<2x32xf32>
    %1159 = tpu.concatenate %1158, %1013 in 1 : vector<2x32xf32>, vector<2x32xf32> -> vector<2x64xf32>
    %c0_417 = arith.constant 0 : index
    %c0_418 = arith.constant 0 : index
    %1160 = vector.load %arg11[%c0_417, %c0_418] : memref<64x128xf32, #tpu.memory_space<vmem>>, vector<64x128xf32>
    %cst_419 = arith.constant dense<0.000000e+00> : vector<2x128xf32>
    %1161 = tpu.matmul %1159, %1160, %cst_419 {dimension_numbers = #tpu.dot_dimension_numbers<[1], [0], [0], [1], [0, 0, 1, 1], [], []>} : vector<2x64xf32>, vector<64x128xf32>, vector<2x128xf32> -> vector<2x128xf32>
    %c0_420 = arith.constant 0 : index
    %c0_421 = arith.constant 0 : index
    %1162 = vector.load %arg12[%c0_420, %c0_421] : memref<1x128xf32, #tpu.memory_space<vmem>>, vector<1x128xf32>
    %1163 = vector.broadcast %1162 : vector<1x128xf32> to vector<2x128xf32>
    %1164 = arith.addf %1161, %1163 : vector<2x128xf32>
    %1165 = vector.extract_strided_slice %1164 {offsets = [0, 0], sizes = [2, 32], strides = [1, 1]} : vector<2x128xf32> to vector<2x32xf32>
    %1166 = arith.negf %1165 : vector<2x32xf32>
    %1167 = math.exp %1166 : vector<2x32xf32>
    %cst_422 = arith.constant 1.000000e+00 : f32
    %1168 = vector.broadcast %cst_422 : f32 to vector<2x32xf32>
    %1169 = arith.addf %1168, %1167 : vector<2x32xf32>
    %1170 = arith.divf %1168, %1169 : vector<2x32xf32>
    %1171 = vector.extract_strided_slice %1164 {offsets = [0, 32], sizes = [2, 32], strides = [1, 1]} : vector<2x128xf32> to vector<2x32xf32>
    %1172 = arith.negf %1171 : vector<2x32xf32>
    %1173 = math.exp %1172 : vector<2x32xf32>
    %cst_423 = arith.constant 1.000000e+00 : f32
    %1174 = vector.broadcast %cst_423 : f32 to vector<2x32xf32>
    %1175 = arith.addf %1174, %1173 : vector<2x32xf32>
    %1176 = arith.divf %1174, %1175 : vector<2x32xf32>
    %1177 = vector.extract_strided_slice %1164 {offsets = [0, 64], sizes = [2, 32], strides = [1, 1]} : vector<2x128xf32> to vector<2x32xf32>
    %1178 = vector.extract_strided_slice %1164 {offsets = [0, 96], sizes = [2, 32], strides = [1, 1]} : vector<2x128xf32> to vector<2x32xf32>
    %1179 = arith.mulf %1170, %1178 : vector<2x32xf32>
    %1180 = arith.addf %1177, %1179 : vector<2x32xf32>
    %1181 = math.tanh %1180 : vector<2x32xf32>
    %cst_424 = arith.constant 1.000000e+00 : f32
    %1182 = vector.broadcast %cst_424 : f32 to vector<2x32xf32>
    %1183 = arith.subf %1182, %1176 : vector<2x32xf32>
    %1184 = arith.mulf %1183, %1181 : vector<2x32xf32>
    %1185 = arith.mulf %1176, %1013 : vector<2x32xf32>
    %1186 = arith.addf %1184, %1185 : vector<2x32xf32>
    %c0_425 = arith.constant 0 : index
    %c0_426 = arith.constant 0 : index
    %1187 = vector.load %arg13[%c0_425, %c0_426] : memref<32x16xf32, #tpu.memory_space<vmem>>, vector<32x16xf32>
    %cst_427 = arith.constant dense<0.000000e+00> : vector<2x16xf32>
    %1188 = tpu.matmul %1186, %1187, %cst_427 {dimension_numbers = #tpu.dot_dimension_numbers<[1], [0], [0], [1], [0, 0, 1, 1], [], []>} : vector<2x32xf32>, vector<32x16xf32>, vector<2x16xf32> -> vector<2x16xf32>
    %c0_428 = arith.constant 0 : index
    %c0_429 = arith.constant 0 : index
    %1189 = vector.load %arg14[%c0_428, %c0_429] : memref<1x16xf32, #tpu.memory_space<vmem>>, vector<1x16xf32>
    %1190 = vector.broadcast %1189 : vector<1x16xf32> to vector<2x16xf32>
    %1191 = arith.addf %1188, %1190 : vector<2x16xf32>
    %c6_430 = arith.constant 6 : index
    %c0_431 = arith.constant 0 : index
    %c0_432 = arith.constant 0 : index
    %1192 = vector.load %arg15[%c6_430, %c0_431, %c0_432] : memref<8x2x16xf32, #tpu.memory_space<vmem>>, vector<1x2x16xf32>
    %1193 = vector.shape_cast %1192 : vector<1x2x16xf32> to vector<2x16xf32>
    %1194 = vector.shape_cast %1191 : vector<2x16xf32> to vector<1x2x16xf32>
    tpu.vector_store %arg15[%c6_430, %c0_431, %c0_432], %1194 {strides = array<i32>} : memref<8x2x16xf32, #tpu.memory_space<vmem>>, vector<1x2x16xf32>,
    %1195 = arith.subf %1191, %1044 : vector<2x16xf32>
    %1196 = arith.mulf %1195, %1195 : vector<2x16xf32>
    %1197 = arith.addf %1024, %1196 : vector<2x16xf32>
    %1198 = math.exp %1120 : vector<2x8xf32>
    %1199 = arith.subf %1122, %1120 : vector<2x8xf32>
    %cst_433 = arith.constant 5.000000e-01 : f32
    %1200 = vector.broadcast %cst_433 : f32 to vector<2x8xf32>
    %1201 = arith.mulf %1200, %1199 : vector<2x8xf32>
    %1202 = arith.subf %1119, %1121 : vector<2x8xf32>
    %1203 = arith.mulf %1202, %1202 : vector<2x8xf32>
    %1204 = arith.addf %1198, %1203 : vector<2x8xf32>
    %cst_434 = arith.constant 0.000000e+00 : f32
    %1205 = vector.broadcast %cst_434 : f32 to vector<2x8xf32>
    %1206 = arith.subf %1205, %1122 : vector<2x8xf32>
    %1207 = math.exp %1206 : vector<2x8xf32>
    %cst_435 = arith.constant 5.000000e-01 : f32
    %1208 = vector.broadcast %cst_435 : f32 to vector<2x8xf32>
    %1209 = arith.mulf %1208, %1207 : vector<2x8xf32>
    %1210 = arith.mulf %1204, %1209 : vector<2x8xf32>
    %1211 = arith.addf %1201, %1210 : vector<2x8xf32>
    %cst_436 = arith.constant 5.000000e-01 : f32
    %1212 = vector.broadcast %cst_436 : f32 to vector<2x8xf32>
    %1213 = arith.subf %1211, %1212 : vector<2x8xf32>
    %1214 = arith.addf %1041, %1213 : vector<2x8xf32>
    %cst_437 = arith.constant 7.000000e+00 : f32
    %cst_438 = arith.constant 0.142857149 : f32
    %1215 = arith.mulf %cst_437, %cst_438 : f32
    %c7 = arith.constant 7 : index
    %c0_439 = arith.constant 0 : index
    %c0_440 = arith.constant 0 : index
    %1216 = vector.load %arg0[%c7, %c0_439, %c0_440] : memref<8x2x16xf32, #tpu.memory_space<vmem>>, vector<1x2x16xf32>
    %1217 = vector.shape_cast %1216 : vector<1x2x16xf32> to vector<2x16xf32>
    %c7_441 = arith.constant 7 : index
    %c0_442 = arith.constant 0 : index
    %c0_443 = arith.constant 0 : index
    %1218 = vector.load %arg1[%c7_441, %c0_442, %c0_443] : memref<8x2x8xf32, #tpu.memory_space<vmem>>, vector<1x2x8xf32>
    %1219 = vector.shape_cast %1218 : vector<1x2x8xf32> to vector<2x8xf32>
    %1220 = tpu.concatenate %1217, %1191 in 1 : vector<2x16xf32>, vector<2x16xf32> -> vector<2x32xf32>
    %c0_444 = arith.constant 0 : index
    %c0_445 = arith.constant 0 : index
    %1221 = vector.load %arg2[%c0_444, %c0_445] : memref<32x96xf32, #tpu.memory_space<vmem>>, vector<32x96xf32>
    %cst_446 = arith.constant dense<0.000000e+00> : vector<2x96xf32>
    %1222 = tpu.matmul %1220, %1221, %cst_446 {dimension_numbers = #tpu.dot_dimension_numbers<[1], [0], [0], [1], [0, 0, 1, 1], [], []>} : vector<2x32xf32>, vector<32x96xf32>, vector<2x96xf32> -> vector<2x96xf32>
    %c0_447 = arith.constant 0 : index
    %c0_448 = arith.constant 0 : index
    %1223 = vector.load %arg3[%c0_447, %c0_448] : memref<2x96xf32, #tpu.memory_space<vmem>>, vector<1x96xf32>
    %1224 = vector.broadcast %1215 : f32 to vector<1x96xf32>
    %1225 = arith.mulf %1224, %1223 : vector<1x96xf32>
    %1226 = vector.broadcast %1225 : vector<1x96xf32> to vector<2x96xf32>
    %1227 = arith.addf %1222, %1226 : vector<2x96xf32>
    %c1_449 = arith.constant 1 : index
    %c0_450 = arith.constant 0 : index
    %1228 = vector.load %arg3[%c1_449, %c0_450] : memref<2x96xf32, #tpu.memory_space<vmem>>, vector<1x96xf32>
    %1229 = vector.broadcast %1228 : vector<1x96xf32> to vector<2x96xf32>
    %1230 = arith.addf %1227, %1229 : vector<2x96xf32>
    %1231 = vector.extract_strided_slice %1230 {offsets = [0, 0], sizes = [2, 32], strides = [1, 1]} : vector<2x96xf32> to vector<2x32xf32>
    %1232 = vector.extract_strided_slice %1230 {offsets = [0, 32], sizes = [2, 32], strides = [1, 1]} : vector<2x96xf32> to vector<2x32xf32>
    %1233 = vector.extract_strided_slice %1230 {offsets = [0, 64], sizes = [2, 32], strides = [1, 1]} : vector<2x96xf32> to vector<2x32xf32>
    %1234 = tpu.concatenate %1231, %1089, %1232, %1112 in 1 : vector<2x32xf32>, vector<2x32xf32>, vector<2x32xf32>, vector<2x32xf32> -> vector<2x128xf32>
    %c0_451 = arith.constant 0 : index
    %c0_452 = arith.constant 0 : index
    %1235 = vector.load %arg4[%c0_451, %c0_452] : memref<128x256xf32, #tpu.memory_space<vmem>>, vector<128x256xf32>
    %cst_453 = arith.constant dense<0.000000e+00> : vector<2x256xf32>
    %1236 = tpu.matmul %1234, %1235, %cst_453 {dimension_numbers = #tpu.dot_dimension_numbers<[1], [0], [0], [1], [0, 0, 1, 1], [], []>} : vector<2x128xf32>, vector<128x256xf32>, vector<2x256xf32> -> vector<2x256xf32>
    %c0_454 = arith.constant 0 : index
    %c0_455 = arith.constant 0 : index
    %1237 = vector.load %arg5[%c0_454, %c0_455] : memref<1x256xf32, #tpu.memory_space<vmem>>, vector<1x256xf32>
    %1238 = vector.broadcast %1237 : vector<1x256xf32> to vector<2x256xf32>
    %1239 = arith.addf %1236, %1238 : vector<2x256xf32>
    %1240 = vector.extract_strided_slice %1239 {offsets = [0, 0], sizes = [2, 128], strides = [1, 1]} : vector<2x256xf32> to vector<2x128xf32>
    %1241 = vector.extract_strided_slice %1240 {offsets = [0, 0], sizes = [2, 32], strides = [1, 1]} : vector<2x128xf32> to vector<2x32xf32>
    %1242 = arith.negf %1241 : vector<2x32xf32>
    %1243 = math.exp %1242 : vector<2x32xf32>
    %cst_456 = arith.constant 1.000000e+00 : f32
    %1244 = vector.broadcast %cst_456 : f32 to vector<2x32xf32>
    %1245 = arith.addf %1244, %1243 : vector<2x32xf32>
    %1246 = arith.divf %1244, %1245 : vector<2x32xf32>
    %1247 = vector.extract_strided_slice %1240 {offsets = [0, 32], sizes = [2, 32], strides = [1, 1]} : vector<2x128xf32> to vector<2x32xf32>
    %1248 = arith.negf %1247 : vector<2x32xf32>
    %1249 = math.exp %1248 : vector<2x32xf32>
    %cst_457 = arith.constant 1.000000e+00 : f32
    %1250 = vector.broadcast %cst_457 : f32 to vector<2x32xf32>
    %1251 = arith.addf %1250, %1249 : vector<2x32xf32>
    %1252 = arith.divf %1250, %1251 : vector<2x32xf32>
    %1253 = vector.extract_strided_slice %1240 {offsets = [0, 64], sizes = [2, 32], strides = [1, 1]} : vector<2x128xf32> to vector<2x32xf32>
    %1254 = vector.extract_strided_slice %1240 {offsets = [0, 96], sizes = [2, 32], strides = [1, 1]} : vector<2x128xf32> to vector<2x32xf32>
    %1255 = arith.mulf %1246, %1254 : vector<2x32xf32>
    %1256 = arith.addf %1253, %1255 : vector<2x32xf32>
    %1257 = math.tanh %1256 : vector<2x32xf32>
    %cst_458 = arith.constant 1.000000e+00 : f32
    %1258 = vector.broadcast %cst_458 : f32 to vector<2x32xf32>
    %1259 = arith.subf %1258, %1252 : vector<2x32xf32>
    %1260 = arith.mulf %1259, %1257 : vector<2x32xf32>
    %1261 = arith.mulf %1252, %1089 : vector<2x32xf32>
    %1262 = arith.addf %1260, %1261 : vector<2x32xf32>
    %1263 = vector.extract_strided_slice %1239 {offsets = [0, 128], sizes = [2, 128], strides = [1, 1]} : vector<2x256xf32> to vector<2x128xf32>
    %1264 = vector.extract_strided_slice %1263 {offsets = [0, 0], sizes = [2, 32], strides = [1, 1]} : vector<2x128xf32> to vector<2x32xf32>
    %1265 = arith.negf %1264 : vector<2x32xf32>
    %1266 = math.exp %1265 : vector<2x32xf32>
    %cst_459 = arith.constant 1.000000e+00 : f32
    %1267 = vector.broadcast %cst_459 : f32 to vector<2x32xf32>
    %1268 = arith.addf %1267, %1266 : vector<2x32xf32>
    %1269 = arith.divf %1267, %1268 : vector<2x32xf32>
    %1270 = vector.extract_strided_slice %1263 {offsets = [0, 32], sizes = [2, 32], strides = [1, 1]} : vector<2x128xf32> to vector<2x32xf32>
    %1271 = arith.negf %1270 : vector<2x32xf32>
    %1272 = math.exp %1271 : vector<2x32xf32>
    %cst_460 = arith.constant 1.000000e+00 : f32
    %1273 = vector.broadcast %cst_460 : f32 to vector<2x32xf32>
    %1274 = arith.addf %1273, %1272 : vector<2x32xf32>
    %1275 = arith.divf %1273, %1274 : vector<2x32xf32>
    %1276 = vector.extract_strided_slice %1263 {offsets = [0, 64], sizes = [2, 32], strides = [1, 1]} : vector<2x128xf32> to vector<2x32xf32>
    %1277 = vector.extract_strided_slice %1263 {offsets = [0, 96], sizes = [2, 32], strides = [1, 1]} : vector<2x128xf32> to vector<2x32xf32>
    %1278 = arith.mulf %1269, %1277 : vector<2x32xf32>
    %1279 = arith.addf %1276, %1278 : vector<2x32xf32>
    %1280 = math.tanh %1279 : vector<2x32xf32>
    %cst_461 = arith.constant 1.000000e+00 : f32
    %1281 = vector.broadcast %cst_461 : f32 to vector<2x32xf32>
    %1282 = arith.subf %1281, %1275 : vector<2x32xf32>
    %1283 = arith.mulf %1282, %1280 : vector<2x32xf32>
    %1284 = arith.mulf %1275, %1112 : vector<2x32xf32>
    %1285 = arith.addf %1283, %1284 : vector<2x32xf32>
    %1286 = tpu.concatenate %1262, %1285 in 1 : vector<2x32xf32>, vector<2x32xf32> -> vector<2x64xf32>
    %c0_462 = arith.constant 0 : index
    %c0_463 = arith.constant 0 : index
    %1287 = vector.load %arg6[%c0_462, %c0_463] : memref<64x32xf32, #tpu.memory_space<vmem>>, vector<64x32xf32>
    %cst_464 = arith.constant dense<0.000000e+00> : vector<2x32xf32>
    %1288 = tpu.matmul %1286, %1287, %cst_464 {dimension_numbers = #tpu.dot_dimension_numbers<[1], [0], [0], [1], [0, 0, 1, 1], [], []>} : vector<2x64xf32>, vector<64x32xf32>, vector<2x32xf32> -> vector<2x32xf32>
    %c0_465 = arith.constant 0 : index
    %c0_466 = arith.constant 0 : index
    %1289 = vector.load %arg7[%c0_465, %c0_466] : memref<1x32xf32, #tpu.memory_space<vmem>>, vector<1x32xf32>
    %1290 = vector.broadcast %1289 : vector<1x32xf32> to vector<2x32xf32>
    %1291 = arith.addf %1288, %1290 : vector<2x32xf32>
    %1292 = vector.extract_strided_slice %1291 {offsets = [0, 0], sizes = [2, 8], strides = [1, 1]} : vector<2x32xf32> to vector<2x8xf32>
    %1293 = vector.extract_strided_slice %1291 {offsets = [0, 8], sizes = [2, 8], strides = [1, 1]} : vector<2x32xf32> to vector<2x8xf32>
    %1294 = vector.extract_strided_slice %1291 {offsets = [0, 16], sizes = [2, 8], strides = [1, 1]} : vector<2x32xf32> to vector<2x8xf32>
    %1295 = vector.extract_strided_slice %1291 {offsets = [0, 24], sizes = [2, 8], strides = [1, 1]} : vector<2x32xf32> to vector<2x8xf32>
    %cst_467 = arith.constant 5.000000e-01 : f32
    %1296 = vector.broadcast %cst_467 : f32 to vector<2x8xf32>
    %1297 = arith.mulf %1296, %1293 : vector<2x8xf32>
    %1298 = math.exp %1297 : vector<2x8xf32>
    %1299 = arith.mulf %1219, %1298 : vector<2x8xf32>
    %1300 = arith.addf %1299, %1292 : vector<2x8xf32>
    %c0_468 = arith.constant 0 : index
    %c0_469 = arith.constant 0 : index
    %1301 = vector.load %arg8[%c0_468, %c0_469] : memref<8x32xf32, #tpu.memory_space<vmem>>, vector<8x32xf32>
    %cst_470 = arith.constant dense<0.000000e+00> : vector<2x32xf32>
    %1302 = tpu.matmul %1300, %1301, %cst_470 {dimension_numbers = #tpu.dot_dimension_numbers<[1], [0], [0], [1], [0, 0, 1, 1], [], []>} : vector<2x8xf32>, vector<8x32xf32>, vector<2x32xf32> -> vector<2x32xf32>
    %1303 = arith.addf %1233, %1302 : vector<2x32xf32>
    %1304 = tpu.concatenate %1303, %1158 in 1 : vector<2x32xf32>, vector<2x32xf32> -> vector<2x64xf32>
    %c0_471 = arith.constant 0 : index
    %c0_472 = arith.constant 0 : index
    %1305 = vector.load %arg9[%c0_471, %c0_472] : memref<64x128xf32, #tpu.memory_space<vmem>>, vector<64x128xf32>
    %cst_473 = arith.constant dense<0.000000e+00> : vector<2x128xf32>
    %1306 = tpu.matmul %1304, %1305, %cst_473 {dimension_numbers = #tpu.dot_dimension_numbers<[1], [0], [0], [1], [0, 0, 1, 1], [], []>} : vector<2x64xf32>, vector<64x128xf32>, vector<2x128xf32> -> vector<2x128xf32>
    %c0_474 = arith.constant 0 : index
    %c0_475 = arith.constant 0 : index
    %1307 = vector.load %arg10[%c0_474, %c0_475] : memref<1x128xf32, #tpu.memory_space<vmem>>, vector<1x128xf32>
    %1308 = vector.broadcast %1307 : vector<1x128xf32> to vector<2x128xf32>
    %1309 = arith.addf %1306, %1308 : vector<2x128xf32>
    %1310 = vector.extract_strided_slice %1309 {offsets = [0, 0], sizes = [2, 32], strides = [1, 1]} : vector<2x128xf32> to vector<2x32xf32>
    %1311 = arith.negf %1310 : vector<2x32xf32>
    %1312 = math.exp %1311 : vector<2x32xf32>
    %cst_476 = arith.constant 1.000000e+00 : f32
    %1313 = vector.broadcast %cst_476 : f32 to vector<2x32xf32>
    %1314 = arith.addf %1313, %1312 : vector<2x32xf32>
    %1315 = arith.divf %1313, %1314 : vector<2x32xf32>
    %1316 = vector.extract_strided_slice %1309 {offsets = [0, 32], sizes = [2, 32], strides = [1, 1]} : vector<2x128xf32> to vector<2x32xf32>
    %1317 = arith.negf %1316 : vector<2x32xf32>
    %1318 = math.exp %1317 : vector<2x32xf32>
    %cst_477 = arith.constant 1.000000e+00 : f32
    %1319 = vector.broadcast %cst_477 : f32 to vector<2x32xf32>
    %1320 = arith.addf %1319, %1318 : vector<2x32xf32>
    %1321 = arith.divf %1319, %1320 : vector<2x32xf32>
    %1322 = vector.extract_strided_slice %1309 {offsets = [0, 64], sizes = [2, 32], strides = [1, 1]} : vector<2x128xf32> to vector<2x32xf32>
    %1323 = vector.extract_strided_slice %1309 {offsets = [0, 96], sizes = [2, 32], strides = [1, 1]} : vector<2x128xf32> to vector<2x32xf32>
    %1324 = arith.mulf %1315, %1323 : vector<2x32xf32>
    %1325 = arith.addf %1322, %1324 : vector<2x32xf32>
    %1326 = math.tanh %1325 : vector<2x32xf32>
    %cst_478 = arith.constant 1.000000e+00 : f32
    %1327 = vector.broadcast %cst_478 : f32 to vector<2x32xf32>
    %1328 = arith.subf %1327, %1321 : vector<2x32xf32>
    %1329 = arith.mulf %1328, %1326 : vector<2x32xf32>
    %1330 = arith.mulf %1321, %1158 : vector<2x32xf32>
    %1331 = arith.addf %1329, %1330 : vector<2x32xf32>
    %1332 = tpu.concatenate %1331, %1186 in 1 : vector<2x32xf32>, vector<2x32xf32> -> vector<2x64xf32>
    %c0_479 = arith.constant 0 : index
    %c0_480 = arith.constant 0 : index
    %1333 = vector.load %arg11[%c0_479, %c0_480] : memref<64x128xf32, #tpu.memory_space<vmem>>, vector<64x128xf32>
    %cst_481 = arith.constant dense<0.000000e+00> : vector<2x128xf32>
    %1334 = tpu.matmul %1332, %1333, %cst_481 {dimension_numbers = #tpu.dot_dimension_numbers<[1], [0], [0], [1], [0, 0, 1, 1], [], []>} : vector<2x64xf32>, vector<64x128xf32>, vector<2x128xf32> -> vector<2x128xf32>
    %c0_482 = arith.constant 0 : index
    %c0_483 = arith.constant 0 : index
    %1335 = vector.load %arg12[%c0_482, %c0_483] : memref<1x128xf32, #tpu.memory_space<vmem>>, vector<1x128xf32>
    %1336 = vector.broadcast %1335 : vector<1x128xf32> to vector<2x128xf32>
    %1337 = arith.addf %1334, %1336 : vector<2x128xf32>
    %1338 = vector.extract_strided_slice %1337 {offsets = [0, 0], sizes = [2, 32], strides = [1, 1]} : vector<2x128xf32> to vector<2x32xf32>
    %1339 = arith.negf %1338 : vector<2x32xf32>
    %1340 = math.exp %1339 : vector<2x32xf32>
    %cst_484 = arith.constant 1.000000e+00 : f32
    %1341 = vector.broadcast %cst_484 : f32 to vector<2x32xf32>
    %1342 = arith.addf %1341, %1340 : vector<2x32xf32>
    %1343 = arith.divf %1341, %1342 : vector<2x32xf32>
    %1344 = vector.extract_strided_slice %1337 {offsets = [0, 32], sizes = [2, 32], strides = [1, 1]} : vector<2x128xf32> to vector<2x32xf32>
    %1345 = arith.negf %1344 : vector<2x32xf32>
    %1346 = math.exp %1345 : vector<2x32xf32>
    %cst_485 = arith.constant 1.000000e+00 : f32
    %1347 = vector.broadcast %cst_485 : f32 to vector<2x32xf32>
    %1348 = arith.addf %1347, %1346 : vector<2x32xf32>
    %1349 = arith.divf %1347, %1348 : vector<2x32xf32>
    %1350 = vector.extract_strided_slice %1337 {offsets = [0, 64], sizes = [2, 32], strides = [1, 1]} : vector<2x128xf32> to vector<2x32xf32>
    %1351 = vector.extract_strided_slice %1337 {offsets = [0, 96], sizes = [2, 32], strides = [1, 1]} : vector<2x128xf32> to vector<2x32xf32>
    %1352 = arith.mulf %1343, %1351 : vector<2x32xf32>
    %1353 = arith.addf %1350, %1352 : vector<2x32xf32>
    %1354 = math.tanh %1353 : vector<2x32xf32>
    %cst_486 = arith.constant 1.000000e+00 : f32
    %1355 = vector.broadcast %cst_486 : f32 to vector<2x32xf32>
    %1356 = arith.subf %1355, %1349 : vector<2x32xf32>
    %1357 = arith.mulf %1356, %1354 : vector<2x32xf32>
    %1358 = arith.mulf %1349, %1186 : vector<2x32xf32>
    %1359 = arith.addf %1357, %1358 : vector<2x32xf32>
    %c0_487 = arith.constant 0 : index
    %c0_488 = arith.constant 0 : index
    %1360 = vector.load %arg13[%c0_487, %c0_488] : memref<32x16xf32, #tpu.memory_space<vmem>>, vector<32x16xf32>
    %cst_489 = arith.constant dense<0.000000e+00> : vector<2x16xf32>
    %1361 = tpu.matmul %1359, %1360, %cst_489 {dimension_numbers = #tpu.dot_dimension_numbers<[1], [0], [0], [1], [0, 0, 1, 1], [], []>} : vector<2x32xf32>, vector<32x16xf32>, vector<2x16xf32> -> vector<2x16xf32>
    %c0_490 = arith.constant 0 : index
    %c0_491 = arith.constant 0 : index
    %1362 = vector.load %arg14[%c0_490, %c0_491] : memref<1x16xf32, #tpu.memory_space<vmem>>, vector<1x16xf32>
    %1363 = vector.broadcast %1362 : vector<1x16xf32> to vector<2x16xf32>
    %1364 = arith.addf %1361, %1363 : vector<2x16xf32>
    %c7_492 = arith.constant 7 : index
    %c0_493 = arith.constant 0 : index
    %c0_494 = arith.constant 0 : index
    %1365 = vector.load %arg15[%c7_492, %c0_493, %c0_494] : memref<8x2x16xf32, #tpu.memory_space<vmem>>, vector<1x2x16xf32>
    %1366 = vector.shape_cast %1365 : vector<1x2x16xf32> to vector<2x16xf32>
    %1367 = vector.shape_cast %1364 : vector<2x16xf32> to vector<1x2x16xf32>
    tpu.vector_store %arg15[%c7_492, %c0_493, %c0_494], %1367 {strides = array<i32>} : memref<8x2x16xf32, #tpu.memory_space<vmem>>, vector<1x2x16xf32>,
    %1368 = arith.subf %1364, %1217 : vector<2x16xf32>
    %1369 = arith.mulf %1368, %1368 : vector<2x16xf32>
    %1370 = arith.addf %1197, %1369 : vector<2x16xf32>
    %1371 = math.exp %1293 : vector<2x8xf32>
    %1372 = arith.subf %1295, %1293 : vector<2x8xf32>
    %cst_495 = arith.constant 5.000000e-01 : f32
    %1373 = vector.broadcast %cst_495 : f32 to vector<2x8xf32>
    %1374 = arith.mulf %1373, %1372 : vector<2x8xf32>
    %1375 = arith.subf %1292, %1294 : vector<2x8xf32>
    %1376 = arith.mulf %1375, %1375 : vector<2x8xf32>
    %1377 = arith.addf %1371, %1376 : vector<2x8xf32>
    %cst_496 = arith.constant 0.000000e+00 : f32
    %1378 = vector.broadcast %cst_496 : f32 to vector<2x8xf32>
    %1379 = arith.subf %1378, %1295 : vector<2x8xf32>
    %1380 = math.exp %1379 : vector<2x8xf32>
    %cst_497 = arith.constant 5.000000e-01 : f32
    %1381 = vector.broadcast %cst_497 : f32 to vector<2x8xf32>
    %1382 = arith.mulf %1381, %1380 : vector<2x8xf32>
    %1383 = arith.mulf %1377, %1382 : vector<2x8xf32>
    %1384 = arith.addf %1374, %1383 : vector<2x8xf32>
    %cst_498 = arith.constant 5.000000e-01 : f32
    %1385 = vector.broadcast %cst_498 : f32 to vector<2x8xf32>
    %1386 = arith.subf %1384, %1385 : vector<2x8xf32>
    %1387 = arith.addf %1214, %1386 : vector<2x8xf32>
    %1388 = vector.shape_cast %1370 : vector<2x16xf32> to vector<1x2x16xf32>
    %cst_499 = arith.constant dense<0.000000e+00> : vector<1xf32>
    %1389 = vector.multi_reduction <add>, %1388, %cst_499 [1, 2] : vector<1x2x16xf32> to vector<1xf32>
    %1390 = vector.shape_cast %1389 : vector<1xf32> to vector<1x1x1xf32>
    %1391 = vector.extract %1390[0, 0, 0] : f32 from vector<1x1x1xf32>
    %1392 = vector.broadcast %1391 : f32 to vector<1x1xf32>
    %cst_500 = arith.constant 3.125000e-02 : f32
    %1393 = vector.broadcast %cst_500 : f32 to vector<1x1xf32>
    %1394 = arith.mulf %1392, %1393 : vector<1x1xf32>
    %c0_501 = arith.constant 0 : index
    %c0_502 = arith.constant 0 : index
    %1395 = vector.load %arg16[%c0_501, %c0_502] : memref<1x1xf32, #tpu.memory_space<vmem>>, vector<1x1xf32>
    tpu.vector_store %arg16[%c0_501, %c0_502], %1394 {strides = array<i32>} : memref<1x1xf32, #tpu.memory_space<vmem>>, vector<1x1xf32>,
    %1396 = vector.shape_cast %1387 : vector<2x8xf32> to vector<1x2x8xf32>
    %cst_503 = arith.constant dense<0.000000e+00> : vector<1xf32>
    %1397 = vector.multi_reduction <add>, %1396, %cst_503 [1, 2] : vector<1x2x8xf32> to vector<1xf32>
    %1398 = vector.shape_cast %1397 : vector<1xf32> to vector<1x1x1xf32>
    %1399 = vector.extract %1398[0, 0, 0] : f32 from vector<1x1x1xf32>
    %1400 = vector.broadcast %1399 : f32 to vector<1x1xf32>
    %cst_504 = arith.constant 5.000000e-01 : f32
    %1401 = vector.broadcast %cst_504 : f32 to vector<1x1xf32>
    %1402 = arith.mulf %1400, %1401 : vector<1x1xf32>
    %c0_505 = arith.constant 0 : index
    %c0_506 = arith.constant 0 : index
    %1403 = vector.load %arg17[%c0_505, %c0_506] : memref<1x1xf32, #tpu.memory_space<vmem>>, vector<1x1xf32>
    tpu.vector_store %arg17[%c0_505, %c0_506], %1402 {strides = array<i32>} : memref<1x1xf32, #tpu.memory_space<vmem>>, vector<1x1xf32>,
    return
  }
}

</mosaic_0001>

<llo_original>
// kernel: tpu_custom_call.1
$region0: #{tpu_custom_call.1}
  #allocation0 [shape = 'u32[]', space=smem, size = 0x4, offset = 0x4, fixed_abs, tag = 'smem constant byte address 0x4 - core index']
  #allocation1 [shape = 'u32[144,128]{1,0:T(1,128)}', space=vmem, size = 0x12000, scoped, tag = 'internal scratch']
  %s0 = inlined_call_operand.hbm [shape: f32[8,2,16], index: 0, kind: input, shape index: {}]
  %s1 = inlined_call_operand.hbm [shape: f32[8,2,8], index: 1, kind: input, shape index: {}]
  %s2 = inlined_call_operand.hbm [shape: f32[32,96], index: 2, kind: input, shape index: {}]
  %s3 = inlined_call_operand.vmem [shape: f32[2,96], index: 3, kind: input, shape index: {}]
  %s4 = inlined_call_operand.hbm [shape: f32[128,256], index: 4, kind: input, shape index: {}]
  %s5 = inlined_call_operand.hbm [shape: f32[1,256], index: 5, kind: input, shape index: {}]
  %s6 = inlined_call_operand.vmem [shape: f32[64,32], index: 6, kind: input, shape index: {}]
  %s7 = inlined_call_operand.hbm [shape: f32[1,32], index: 7, kind: input, shape index: {}]
  %s8 = inlined_call_operand.hbm [shape: f32[8,32], index: 8, kind: input, shape index: {}]
  %s9 = inlined_call_operand.vmem [shape: f32[64,128], index: 9, kind: input, shape index: {}]
  %s10 = inlined_call_operand.vmem [shape: f32[1,128], index: 10, kind: input, shape index: {}]
  %s11 = inlined_call_operand.vmem [shape: f32[64,128], index: 11, kind: input, shape index: {}]
  %s12 = inlined_call_operand.vmem [shape: f32[1,128], index: 12, kind: input, shape index: {}]
  %s13 = inlined_call_operand.vmem [shape: f32[32,16], index: 13, kind: input, shape index: {}]
  %s14 = inlined_call_operand.vmem [shape: f32[1,16], index: 14, kind: input, shape index: {}]
  %s15 = inlined_call_operand.hbm [shape: f32[8,2,16], index: 15, kind: output, shape index: {0}]
  %s16 = inlined_call_operand.hbm [shape: f32[1,1], index: 16, kind: output, shape index: {1}]
  %s17 = inlined_call_operand.hbm [shape: f32[1,1], index: 17, kind: output, shape index: {2}]
  %18 = xla_tuple %s15, %s16, %s17
  %s19 = sld [smem:[#allocation0]]
  $region114: #{tpu_custom_call.1} parent=0
    _
  %s21 = ssub.s32 1, %s19
  %s22 = scalar_select 0, %s21, %s19
  $region1: #{tpu_custom_call.1} parent=0
    #allocation2 [shape = 'u8[8192]{0}', space=vmem, size = 0x2000, scoped, tag = 'input window, operand 0, single buffered']
    #allocation3 [shape = 's32[1]{0}', space=sflag, size = 0x4, scoped, tag = 'scoped memory for tpu_custom_call.1']
    #allocation4 [shape = 's32[1]{0}', space=sflag, size = 0x4, scoped, tag = 'scoped memory for tpu_custom_call.1']
    #allocation5 [shape = 'u8[8192]{0}', space=vmem, size = 0x2000, scoped, tag = 'input window, operand 1, single buffered']
    #allocation6 [shape = 's32[1]{0}', space=sflag, size = 0x4, scoped, tag = 'scoped memory for tpu_custom_call.1']
    #allocation7 [shape = 'u8[16384]{0}', space=vmem, size = 0x4000, scoped, tag = 'input window, operand 2, single buffered']
    #allocation8 [shape = 'u8[131072]{0}', space=vmem, size = 0x20000, scoped, tag = 'input window, operand 4, single buffered']
    #allocation9 [shape = 's32[1]{0}', space=sflag, size = 0x4, scoped, tag = 'scoped memory for tpu_custom_call.1']
    #allocation10 [shape = 'u8[1024]{0}', space=vmem, size = 0x400, scoped, tag = 'input window, operand 5, single buffered']
    #allocation11 [shape = 'u8[512]{0}', space=vmem, size = 0x400, scoped, tag = 'input window, operand 7, single buffered']
    #allocation12 [shape = 's32[1]{0}', space=sflag, size = 0x4, scoped, tag = 'scoped memory for tpu_custom_call.1']
    #allocation13 [shape = 'u8[4096]{0}', space=vmem, size = 0x1000, scoped, tag = 'input window, operand 8, single buffered']
    #allocation14 [shape = 'u8[8192]{0}', space=vmem, size = 0x2000, scoped, tag = 'output window, operand 0, single buffered']
    #allocation15 [shape = 'u8[512]{0}', space=vmem, size = 0x400, scoped, tag = 'output window, operand 1, single buffered']
    #allocation16 [shape = 's32[1]{0}', space=sflag, size = 0x4, scoped, tag = 'scoped memory for tpu_custom_call.1']
    #allocation17 [shape = 'u8[512]{0}', space=vmem, size = 0x400, scoped, tag = 'output window, operand 2, single buffered']
    %23 = vsyncpa [#allocation3], 0
    %24 = vsyncpa [#allocation6], 0
    %25 = vsyncpa [#allocation9], 0
    %26 = vsyncpa [#allocation12], 0
    %27 = vsyncpa [#allocation4], 0
    %28 = vsyncpa [#allocation16], 0
    // Predicated region
    $region2: #{tpu_custom_call.1} parent=1 // pred_check
      _
    $region3: #{tpu_custom_call.1} parent=1 // pred_check_branch
      %30 = sbr.rel (0) target = $region5
    $region4: #{tpu_custom_call.1} parent=1 // pred_region
      %s32 = ssub.s32 256, 256
      %33 = vsyncadd [#allocation3], %s32
      %s34 = sshll.u32 [#allocation2], 4
      %s35 = int_to_ptr.vmem [resolvable:$true] %s34
      %40 = dma.hbm_to_vmem [thread:$0]  %s0, 256, %s35, [#allocation3], 32, 32, 2
    $region5: #{tpu_custom_call.1} parent=1 // pred_fallthru
      _
    // Predicated region
    $region6: #{tpu_custom_call.1} parent=1 // pred_check
      _
    $region7: #{tpu_custom_call.1} parent=1 // pred_check_branch
      %42 = sbr.rel (0) target = $region9
    $region8: #{tpu_custom_call.1} parent=1 // pred_region
      %s44 = ssub.s32 256, 256
      %45 = vsyncadd [#allocation6], %s44
      %s46 = sshll.u32 [#allocation5], 4
      %s47 = int_to_ptr.vmem [resolvable:$true] %s46
      %52 = dma.hbm_to_vmem [thread:$0]  %s1, 256, %s47, [#allocation6], 32, 32, 2
    $region9: #{tpu_custom_call.1} parent=1 // pred_fallthru
      _
    // Predicated region
    $region10: #{tpu_custom_call.1} parent=1 // pred_check
      _
    $region11: #{tpu_custom_call.1} parent=1 // pred_check_branch
      %54 = sbr.rel (0) target = $region13
    $region12: #{tpu_custom_call.1} parent=1 // pred_region
      %s56 = ssub.s32 512, 512
      %57 = vsyncadd [#allocation6], %s56
      %s58 = sshll.u32 [#allocation7], 4
      %s59 = int_to_ptr.vmem [resolvable:$true] %s58
      %64 = dma.hbm_to_vmem [thread:$0]  %s2, 512, %s59, [#allocation6], 128, 128, 8
    $region13: #{tpu_custom_call.1} parent=1 // pred_fallthru
      _
    // Predicated region
    $region14: #{tpu_custom_call.1} parent=1 // pred_check
      _
    $region15: #{tpu_custom_call.1} parent=1 // pred_check_branch
      %66 = sbr.rel (0) target = $region17
    $region16: #{tpu_custom_call.1} parent=1 // pred_region
      _
    $region17: #{tpu_custom_call.1} parent=1 // pred_fallthru
      _
    // Predicated region
    $region18: #{tpu_custom_call.1} parent=1 // pred_check
      _
    $region19: #{tpu_custom_call.1} parent=1 // pred_check_branch
      %68 = sbr.rel (0) target = $region21
    $region20: #{tpu_custom_call.1} parent=1 // pred_region
      %s70 = ssub.s32 4096, 4096
      %71 = vsyncadd [#allocation9], %s70
      %s72 = sshll.u32 [#allocation8], 4
      %s73 = int_to_ptr.vmem [resolvable:$true] %s72
      %78 = dma.hbm_to_vmem [thread:$0]  %s4, 4096, %s73, [#allocation9], 256, 256, 16
    $region21: #{tpu_custom_call.1} parent=1 // pred_fallthru
      _
    // Predicated region
    $region22: #{tpu_custom_call.1} parent=1 // pred_check
      _
    $region23: #{tpu_custom_call.1} parent=1 // pred_check_branch
      %80 = sbr.rel (0) target = $region25
    $region24: #{tpu_custom_call.1} parent=1 // pred_region
      %s82 = ssub.s32 32, 32
      %83 = vsyncadd [#allocation9], %s82
      %s85 = sshll.u32 [#allocation10], 4
      %s86 = int_to_ptr.vmem [resolvable:$true] %s85
      %88 = dma.hbm_to_vmem [thread:$0]  %s5, 32, %s86, [#allocation9]
    $region25: #{tpu_custom_call.1} parent=1 // pred_fallthru
      _
    // Predicated region
    $region26: #{tpu_custom_call.1} parent=1 // pred_check
      _
    $region27: #{tpu_custom_call.1} parent=1 // pred_check_branch
      %90 = sbr.rel (0) target = $region29
    $region28: #{tpu_custom_call.1} parent=1 // pred_region
      _
    $region29: #{tpu_custom_call.1} parent=1 // pred_fallthru
      _
    // Predicated region
    $region30: #{tpu_custom_call.1} parent=1 // pred_check
      _
    $region31: #{tpu_custom_call.1} parent=1 // pred_check_branch
      %92 = sbr.rel (0) target = $region33
    $region32: #{tpu_custom_call.1} parent=1 // pred_region
      %s94 = ssub.s32 16, 16
      %95 = vsyncadd [#allocation12], %s94
      %s97 = sshll.u32 [#allocation11], 4
      %s98 = int_to_ptr.vmem [resolvable:$true] %s97
      %100 = dma.hbm_to_vmem [thread:$0]  %s7, 16, %s98, [#allocation12]
    $region33: #{tpu_custom_call.1} parent=1 // pred_fallthru
      _
    // Predicated region
    $region34: #{tpu_custom_call.1} parent=1 // pred_check
      _
    $region35: #{tpu_custom_call.1} parent=1 // pred_check_branch
      %102 = sbr.rel (0) target = $region37
    $region36: #{tpu_custom_call.1} parent=1 // pred_region
      %s104 = ssub.s32 128, 128
      %105 = vsyncadd [#allocation12], %s104
      %s107 = sshll.u32 [#allocation13], 4
      %s108 = int_to_ptr.vmem [resolvable:$true] %s107
      %110 = dma.hbm_to_vmem [thread:$0]  %s8, 128, %s108, [#allocation12]
    $region37: #{tpu_custom_call.1} parent=1 // pred_fallthru
      _
    // Predicated region
    $region38: #{tpu_custom_call.1} parent=1 // pred_check
      _
    $region39: #{tpu_custom_call.1} parent=1 // pred_check_branch
      %112 = sbr.rel (0) target = $region41
    $region40: #{tpu_custom_call.1} parent=1 // pred_region
      _
    $region41: #{tpu_custom_call.1} parent=1 // pred_fallthru
      _
    // Predicated region
    $region42: #{tpu_custom_call.1} parent=1 // pred_check
      _
    $region43: #{tpu_custom_call.1} parent=1 // pred_check_branch
      %114 = sbr.rel (0) target = $region45
    $region44: #{tpu_custom_call.1} parent=1 // pred_region
      _
    $region45: #{tpu_custom_call.1} parent=1 // pred_fallthru
      _
    // Predicated region
    $region46: #{tpu_custom_call.1} parent=1 // pred_check
      _
    $region47: #{tpu_custom_call.1} parent=1 // pred_check_branch
      %116 = sbr.rel (0) target = $region49
    $region48: #{tpu_custom_call.1} parent=1 // pred_region
      _
    $region49: #{tpu_custom_call.1} parent=1 // pred_fallthru
      _
    // Predicated region
    $region50: #{tpu_custom_call.1} parent=1 // pred_check
      _
    $region51: #{tpu_custom_call.1} parent=1 // pred_check_branch
      %118 = sbr.rel (0) target = $region53
    $region52: #{tpu_custom_call.1} parent=1 // pred_region
      _
    $region53: #{tpu_custom_call.1} parent=1 // pred_fallthru
      _
    // Predicated region
    $region54: #{tpu_custom_call.1} parent=1 // pred_check
      _
    $region55: #{tpu_custom_call.1} parent=1 // pred_check_branch
      %120 = sbr.rel (0) target = $region57
    $region56: #{tpu_custom_call.1} parent=1 // pred_region
      _
    $region57: #{tpu_custom_call.1} parent=1 // pred_fallthru
      _
    // Predicated region
    $region58: #{tpu_custom_call.1} parent=1 // pred_check
      _
    $region59: #{tpu_custom_call.1} parent=1 // pred_check_branch
      %122 = sbr.rel (0) target = $region61
    $region60: #{tpu_custom_call.1} parent=1 // pred_region
      _
    $region61: #{tpu_custom_call.1} parent=1 // pred_fallthru
      _
    // Predicated region
    $region62: #{tpu_custom_call.1} parent=1 // pred_check
      _
    $region63: #{tpu_custom_call.1} parent=1 // pred_check_branch
      %124 = sbr.rel (0) target = $region65
    $region64: #{tpu_custom_call.1} parent=1 // pred_region
      %125 = dma.done [#allocation3], 256
    $region65: #{tpu_custom_call.1} parent=1 // pred_fallthru
      _
    // Predicated region
    $region66: #{tpu_custom_call.1} parent=1 // pred_check
      _
    $region67: #{tpu_custom_call.1} parent=1 // pred_check_branch
      %127 = sbr.rel (0) target = $region69
    $region68: #{tpu_custom_call.1} parent=1 // pred_region
      %128 = dma.done [#allocation6], 256
    $region69: #{tpu_custom_call.1} parent=1 // pred_fallthru
      _
    // Predicated region
    $region70: #{tpu_custom_call.1} parent=1 // pred_check
      _
    $region71: #{tpu_custom_call.1} parent=1 // pred_check_branch
      %130 = sbr.rel (0) target = $region73
    $region72: #{tpu_custom_call.1} parent=1 // pred_region
      %131 = dma.done [#allocation6], 512
    $region73: #{tpu_custom_call.1} parent=1 // pred_fallthru
      _
    // Predicated region
    $region74: #{tpu_custom_call.1} parent=1 // pred_check
      _
    $region75: #{tpu_custom_call.1} parent=1 // pred_check_branch
      %133 = sbr.rel (0) target = $region77
    $region76: #{tpu_custom_call.1} parent=1 // pred_region
      %134 = dma.done [#allocation9], 4096
    $region77: #{tpu_custom_call.1} parent=1 // pred_fallthru
      _
    // Predicated region
    $region78: #{tpu_custom_call.1} parent=1 // pred_check
      _
    $region79: #{tpu_custom_call.1} parent=1 // pred_check_branch
      %136 = sbr.rel (0) target = $region81
    $region80: #{tpu_custom_call.1} parent=1 // pred_region
      %137 = dma.done [#allocation9], 32
    $region81: #{tpu_custom_call.1} parent=1 // pred_fallthru
      _
    // Predicated region
    $region82: #{tpu_custom_call.1} parent=1 // pred_check
      _
    $region83: #{tpu_custom_call.1} parent=1 // pred_check_branch
      %139 = sbr.rel (0) target = $region85
    $region84: #{tpu_custom_call.1} parent=1 // pred_region
      %140 = dma.done [#allocation12], 16
    $region85: #{tpu_custom_call.1} parent=1 // pred_fallthru
      _
    // Predicated region
    $region86: #{tpu_custom_call.1} parent=1 // pred_check
      _
    $region87: #{tpu_custom_call.1} parent=1 // pred_check_branch
      %142 = sbr.rel (0) target = $region89
    $region88: #{tpu_custom_call.1} parent=1 // pred_region
      %143 = dma.done [#allocation12], 128
    $region89: #{tpu_custom_call.1} parent=1 // pred_fallthru
      _
    %v144 = vld [vmem:[#allocation2] sm:$0x3]
    %v145 = vld [vmem:[#allocation5] sm:$0x3]
    %vm146 = vcmask 130048
    %v147 = vsel %vm146, %v144, 0.0
    %v148 = vld [vmem:[#allocation7] sm:$0xff]
    %v149 = vld [vmem:[#allocation7 + $0x8] sm:$0xff]
    %v150 = vld [vmem:[#allocation7 + $0x10] sm:$0xff]
    %v151 = vld [vmem:[#allocation7 + $0x18] sm:$0xff]
    %v152 = vld [vmem:[%s3] sm:$0x1]
    %v153 = vmul.f32 %v152, 0.0
    %v154 = vlaneseq
    %v155 = vshrl.u32 %v154, 7
    %v156 = vsub.s32 0, %v155
    %v157 = vrot.slane %v153, %v156
    %vm158 = vcmask 261120
    %v160 = vsel %vm158, %v147, 0
    %162 = vmatprep.subr.mxu0 0.0
    %163 = vmatpush1.msra.mxu0 %v148
    %164 = vmatprep.subr.mxu0 0.0
    %165 = vmatpush1.msra.mxu0 %v149
    %166 = vmatprep.subr.mxu0 0.0
    %167 = vmatpush1.msra.mxu0 %v150
    %168 = vmatprep.subr.mxu0 0.0
    %169 = vmatpush1.msra.mxu0 %v151
    %170 = vmatprep.subr.mxu0 0.0
    %171 = vmatpush1.msra.mxu0 0.0
    %172 = vmatprep.subr.mxu0 0.0
    %173 = vmatpush1.msra.mxu0 0.0
    %174 = vmatprep.subr.mxu0 0.0
    %175 = vmatpush1.msra.mxu0 0.0
    %176 = vmatprep.subr.mxu0 0.0
    %177 = vmatpush1.msra.mxu0 0.0
    %178 = vmatprep.subr.mxu0 0.0
    %179 = vmatpush1.msra.mxu0 0.0
    %180 = vmatprep.subr.mxu0 0.0
    %181 = vmatpush1.msra.mxu0 0.0
    %182 = vmatprep.subr.mxu0 0.0
    %183 = vmatpush1.msra.mxu0 0.0
    %184 = vmatprep.subr.mxu0 0.0
    %185 = vmatpush1.msra.mxu0 0.0
    %186 = vmatprep.subr.mxu0 0.0
    %187 = vmatpush1.msra.mxu0 0.0
    %188 = vmatprep.subr.mxu0 0.0
    %189 = vmatpush1.msra.mxu0 0.0
    %190 = vmatprep.subr.mxu0 0.0
    %191 = vmatpush1.msra.mxu0 0.0
    %192 = vmatprep.subr.mxu0 0.0
    %193 = vmatpush1.msra.mxu0 0.0
    %194 = vmatprep.subr.mxu0 0.0
    %195 = vmatpush1.msra.mxu0 0.0
    %196 = vmatprep.subr.mxu0 0.0
    %197 = vmatpush1.msra.mxu0 0.0
    %198 = vmatprep.subr.mxu0 0.0
    %199 = vmatpush1.msra.mxu0 0.0
    %200 = vmatprep.subr.mxu0 0.0
    %201 = vmatpush1.msra.mxu0 0.0
    %202 = vmatprep.subr.mxu0 0.0
    %203 = vmatpush1.msra.mxu0 0.0
    %204 = vmatprep.subr.mxu0 0.0
    %205 = vmatpush1.msra.mxu0 0.0
    %206 = vmatprep.subr.mxu0 0.0
    %207 = vmatpush1.msra.mxu0 0.0
    %208 = vmatprep.subr.mxu0 0.0
    %209 = vmatpush1.msra.mxu0 0.0
    %210 = vmatprep.subr.mxu0 0.0
    %211 = vmatpush1.msra.mxu0 0.0
    %212 = vmatprep.subr.mxu0 0.0
    %213 = vmatpush1.msra.mxu0 0.0
    %214 = vmatprep.subr.mxu0 0.0
    %215 = vmatpush1.msra.mxu0 0.0
    %216 = vmatprep.subr.mxu0 0.0
    %217 = vmatpush1.msra.mxu0 0.0
    %218 = vmatprep.subr.mxu0 0.0
    %219 = vmatpush1.msra.mxu0 0.0
    %220 = vmatprep.subr.mxu0 0.0
    %221 = vmatpush1.msra.mxu0 0.0
    %222 = vmatprep.subr.mxu0 0.0
    %223 = vmatpush1.msra.mxu0 0.0
    %224 = vmatprep.subr.mxu0 0.0
    %225 = vmatpush1.msra.mxu0 0.0
    %226 = vmatprep.mubr.f32.mxu0 0.0
    %227 = vmatmul.mubr.f32.gmra.mrb[0].mxu0 %v160
    %v228 = vpop.f32.mrb[0].mxu0
    %v229 = vadd.f32 %v157, %v228
    %v230 = vpop.f32.mrb[0].mxu0
    %231 = vdwg.mxu0
    %v232 = vld [vmem:[%s3 + $0x1] sm:$0x1]
    %v233 = vlaneseq
    %v234 = vshrl.u32 %v233, 7
    %v235 = vsub.s32 0, %v234
    %v236 = vrot.slane %v232, %v235
    %v237 = vadd.f32 %v229, %v236
    %239 = vrot.lane.b32.xlu0 %v237, 32
    %v240 = vpop.permute.xlu0 %239
    %v242 = vsel %vm158, %v237, 0.0
    %vm243 = vcmask 523264
    %v244 = vsel %vm243, %v242, %v240
    %vm245 = vcmask 785408
    %v246 = vsel %vm245, %v244, 0.0
    %v247 = vld [vmem:[#allocation8] sm:$0xff]
    %v248 = vld [vmem:[#allocation8 + $0x8] sm:$0xff]
    %v249 = vld [vmem:[#allocation8 + $0x10] sm:$0xff]
    %v250 = vld [vmem:[#allocation8 + $0x18] sm:$0xff]
    %v251 = vld [vmem:[#allocation8 + $0x20] sm:$0xff]
    %v252 = vld [vmem:[#allocation8 + $0x28] sm:$0xff]
    %v253 = vld [vmem:[#allocation8 + $0x30] sm:$0xff]
    %v254 = vld [vmem:[#allocation8 + $0x38] sm:$0xff]
    %v255 = vld [vmem:[#allocation8 + $0x40] sm:$0xff]
    %v256 = vld [vmem:[#allocation8 + $0x48] sm:$0xff]
    %v257 = vld [vmem:[#allocation8 + $0x50] sm:$0xff]
    %v258 = vld [vmem:[#allocation8 + $0x58] sm:$0xff]
    %v259 = vld [vmem:[#allocation8 + $0x60] sm:$0xff]
    %v260 = vld [vmem:[#allocation8 + $0x68] sm:$0xff]
    %v261 = vld [vmem:[#allocation8 + $0x70] sm:$0xff]
    %v262 = vld [vmem:[#allocation8 + $0x78] sm:$0xff]
    %v263 = vld [vmem:[#allocation8 + $0x80] sm:$0xff]
    %v264 = vld [vmem:[#allocation8 + $0x88] sm:$0xff]
    %v265 = vld [vmem:[#allocation8 + $0x90] sm:$0xff]
    %v266 = vld [vmem:[#allocation8 + $0x98] sm:$0xff]
    %v267 = vld [vmem:[#allocation8 + $0xa0] sm:$0xff]
    %v268 = vld [vmem:[#allocation8 + $0xa8] sm:$0xff]
    %v269 = vld [vmem:[#allocation8 + $0xb0] sm:$0xff]
    %v270 = vld [vmem:[#allocation8 + $0xb8] sm:$0xff]
    %v271 = vld [vmem:[#allocation8 + $0xc0] sm:$0xff]
    %v272 = vld [vmem:[#allocation8 + $0xc8] sm:$0xff]
    %v273 = vld [vmem:[#allocation8 + $0xd0] sm:$0xff]
    %v274 = vld [vmem:[#allocation8 + $0xd8] sm:$0xff]
    %v275 = vld [vmem:[#allocation8 + $0xe0] sm:$0xff]
    %v276 = vld [vmem:[#allocation8 + $0xe8] sm:$0xff]
    %v277 = vld [vmem:[#allocation8 + $0xf0] sm:$0xff]
    %v278 = vld [vmem:[#allocation8 + $0xf8] sm:$0xff]
    %v279 = vld [vmem:[#allocation10] sm:$0x3]
    %v281 = vlaneseq
    %v282 = vshrl.u32 %v281, 7
    %v283 = vsub.s32 0, %v282
    %v284 = vrot.slane %v279, %v283
    %v285 = vlaneseq
    %v286 = vshrl.u32 %v285, 7
    %v287 = vsub.s32 1, %v286
    %v288 = vrot.slane %v279, %v287
    %291 = vmatprep.subr.mxu0 %v248
    %292 = vmatpush1.msra.mxu0 %v247
    %293 = vmatprep.subr.mxu0 %v250
    %294 = vmatpush1.msra.mxu0 %v249
    %295 = vmatprep.subr.mxu0 %v252
    %296 = vmatpush1.msra.mxu0 %v251
    %297 = vmatprep.subr.mxu0 %v254
    %298 = vmatpush1.msra.mxu0 %v253
    %299 = vmatprep.subr.mxu0 %v256
    %300 = vmatpush1.msra.mxu0 %v255
    %301 = vmatprep.subr.mxu0 %v258
    %302 = vmatpush1.msra.mxu0 %v257
    %303 = vmatprep.subr.mxu0 %v260
    %304 = vmatpush1.msra.mxu0 %v259
    %305 = vmatprep.subr.mxu0 %v262
    %306 = vmatpush1.msra.mxu0 %v261
    %307 = vmatprep.subr.mxu0 %v264
    %308 = vmatpush1.msra.mxu0 %v263
    %309 = vmatprep.subr.mxu0 %v266
    %310 = vmatpush1.msra.mxu0 %v265
    %311 = vmatprep.subr.mxu0 %v268
    %312 = vmatpush1.msra.mxu0 %v267
    %313 = vmatprep.subr.mxu0 %v270
    %314 = vmatpush1.msra.mxu0 %v269
    %315 = vmatprep.subr.mxu0 %v272
    %316 = vmatpush1.msra.mxu0 %v271
    %317 = vmatprep.subr.mxu0 %v274
    %318 = vmatpush1.msra.mxu0 %v273
    %319 = vmatprep.subr.mxu0 %v276
    %320 = vmatpush1.msra.mxu0 %v275
    %321 = vmatprep.subr.mxu0 %v278
    %322 = vmatpush1.msra.mxu0 %v277
    %323 = vmatprep.subr.mxu0 0.0
    %324 = vmatpush1.msra.mxu0 0.0
    %325 = vmatprep.subr.mxu0 0.0
    %326 = vmatpush1.msra.mxu0 0.0
    %327 = vmatprep.subr.mxu0 0.0
    %328 = vmatpush1.msra.mxu0 0.0
    %329 = vmatprep.subr.mxu0 0.0
    %330 = vmatpush1.msra.mxu0 0.0
    %331 = vmatprep.subr.mxu0 0.0
    %332 = vmatpush1.msra.mxu0 0.0
    %333 = vmatprep.subr.mxu0 0.0
    %334 = vmatpush1.msra.mxu0 0.0
    %335 = vmatprep.subr.mxu0 0.0
    %336 = vmatpush1.msra.mxu0 0.0
    %337 = vmatprep.subr.mxu0 0.0
    %338 = vmatpush1.msra.mxu0 0.0
    %339 = vmatprep.subr.mxu0 0.0
    %340 = vmatpush1.msra.mxu0 0.0
    %341 = vmatprep.subr.mxu0 0.0
    %342 = vmatpush1.msra.mxu0 0.0
    %343 = vmatprep.subr.mxu0 0.0
    %344 = vmatpush1.msra.mxu0 0.0
    %345 = vmatprep.subr.mxu0 0.0
    %346 = vmatpush1.msra.mxu0 0.0
    %347 = vmatprep.subr.mxu0 0.0
    %348 = vmatpush1.msra.mxu0 0.0
    %349 = vmatprep.subr.mxu0 0.0
    %350 = vmatpush1.msra.mxu0 0.0
    %351 = vmatprep.subr.mxu0 0.0
    %352 = vmatpush1.msra.mxu0 0.0
    %353 = vmatprep.subr.mxu0 0.0
    %354 = vmatpush1.msra.mxu0 0.0
    %355 = vmatprep.mubr.f32.mxu0 0.0
    %356 = vmatmul.mubr.f32.gmra.mrb[0].mxu0 %v246
    %v357 = vpop.f32.mrb[0].mxu0
    %v358 = vadd.f32 %v284, %v357
    %v359 = vpop.f32.mrb[0].mxu0
    %v360 = vadd.f32 %v288, %v359
    %361 = vdwg.mxu0
    %v362 = vxor.u32 %v358, 2147483648
    %v363 = vmul.f32 %v362, 1.442695
    %v364 = vpow.pop %v363
    %v365 = vadd.f32 %v364, 1.0
    %v366 = vrcp.pop %v365
    %v367 = vmul.f32 1.0, %v366
    %369 = vrot.lane.b32.xlu0 %v358, 32
    %v370 = vpop.permute.xlu0 %369
    %v372 = vmul.f32 %v367, %v370
    %374 = vrot.lane.b32.xlu0 %v372, 64
    %v375 = vpop.permute.xlu0 %374
    %v377 = vadd.f32 %v358, %v375
    %v378 = vtanh.pop %v377
    %v379 = vsub.f32 1.0, %v367
    %381 = vrot.lane.b32.xlu0 %v378, 96
    %v382 = vpop.permute.xlu0 %381
    %v384 = vmul.f32 %v379, %v382
    %v385 = vmul.f32 %v367, 0.0
    %v386 = vadd.f32 %v384, %v385
    %v387 = vxor.u32 %v360, 2147483648
    %v388 = vmul.f32 %v387, 1.442695
    %v389 = vpow.pop %v388
    %v390 = vadd.f32 %v389, 1.0
    %v391 = vrcp.pop %v390
    %v392 = vmul.f32 1.0, %v391
    %394 = vrot.lane.b32.xlu0 %v360, 32
    %v395 = vpop.permute.xlu0 %394
    %v397 = vmul.f32 %v392, %v395
    %399 = vrot.lane.b32.xlu0 %v397, 64
    %v400 = vpop.permute.xlu0 %399
    %v402 = vadd.f32 %v360, %v400
    %v403 = vtanh.pop %v402
    %v404 = vsub.f32 1.0, %v392
    %406 = vrot.lane.b32.xlu0 %v403, 96
    %v407 = vpop.permute.xlu0 %406
    %v409 = vmul.f32 %v404, %v407
    %v410 = vmul.f32 %v392, 0.0
    %v411 = vadd.f32 %v409, %v410
    %413 = vrot.lane.b32.xlu0 %v386, 96
    %v414 = vpop.permute.xlu0 %413
    %v416 = vsel %vm158, %v414, %v411
    %v417 = vld [vmem:[%s6] sm:$0xff]
    %v418 = vld [vmem:[%s6 + $0x8] sm:$0xff]
    %v419 = vld [vmem:[%s6 + $0x10] sm:$0xff]
    %v420 = vld [vmem:[%s6 + $0x18] sm:$0xff]
    %v421 = vld [vmem:[%s6 + $0x20] sm:$0xff]
    %v422 = vld [vmem:[%s6 + $0x28] sm:$0xff]
    %v423 = vld [vmem:[%s6 + $0x30] sm:$0xff]
    %v424 = vld [vmem:[%s6 + $0x38] sm:$0xff]
    %v425 = vld [vmem:[#allocation11] sm:$0x1]
    %v427 = vlaneseq
    %v428 = vshrl.u32 %v427, 7
    %v429 = vsub.s32 0, %v428
    %v430 = vrot.slane %v425, %v429
    %v433 = vsel %vm243, %v416, 0
    %435 = vmatprep.subr.mxu0 0.0
    %436 = vmatpush1.msra.mxu0 %v417
    %437 = vmatprep.subr.mxu0 0.0
    %438 = vmatpush1.msra.mxu0 %v418
    %439 = vmatprep.subr.mxu0 0.0
    %440 = vmatpush1.msra.mxu0 %v419
    %441 = vmatprep.subr.mxu0 0.0
    %442 = vmatpush1.msra.mxu0 %v420
    %443 = vmatprep.subr.mxu0 0.0
    %444 = vmatpush1.msra.mxu0 %v421
    %445 = vmatprep.subr.mxu0 0.0
    %446 = vmatpush1.msra.mxu0 %v422
    %447 = vmatprep.subr.mxu0 0.0
    %448 = vmatpush1.msra.mxu0 %v423
    %449 = vmatprep.subr.mxu0 0.0
    %450 = vmatpush1.msra.mxu0 %v424
    %451 = vmatprep.subr.mxu0 0.0
    %452 = vmatpush1.msra.mxu0 0.0
    %453 = vmatprep.subr.mxu0 0.0
    %454 = vmatpush1.msra.mxu0 0.0
    %455 = vmatprep.subr.mxu0 0.0
    %456 = vmatpush1.msra.mxu0 0.0
    %457 = vmatprep.subr.mxu0 0.0
    %458 = vmatpush1.msra.mxu0 0.0
    %459 = vmatprep.subr.mxu0 0.0
    %460 = vmatpush1.msra.mxu0 0.0
    %461 = vmatprep.subr.mxu0 0.0
    %462 = vmatpush1.msra.mxu0 0.0
    %463 = vmatprep.subr.mxu0 0.0
    %464 = vmatpush1.msra.mxu0 0.0
    %465 = vmatprep.subr.mxu0 0.0
    %466 = vmatpush1.msra.mxu0 0.0
    %467 = vmatprep.subr.mxu0 0.0
    %468 = vmatpush1.msra.mxu0 0.0
    %469 = vmatprep.subr.mxu0 0.0
    %470 = vmatpush1.msra.mxu0 0.0
    %471 = vmatprep.subr.mxu0 0.0
    %472 = vmatpush1.msra.mxu0 0.0
    %473 = vmatprep.subr.mxu0 0.0
    %474 = vmatpush1.msra.mxu0 0.0
    %475 = vmatprep.subr.mxu0 0.0
    %476 = vmatpush1.msra.mxu0 0.0
    %477 = vmatprep.subr.mxu0 0.0
    %478 = vmatpush1.msra.mxu0 0.0
    %479 = vmatprep.subr.mxu0 0.0
    %480 = vmatpush1.msra.mxu0 0.0
    %481 = vmatprep.subr.mxu0 0.0
    %482 = vmatpush1.msra.mxu0 0.0
    %483 = vmatprep.subr.mxu0 0.0
    %484 = vmatpush1.msra.mxu0 0.0
    %485 = vmatprep.subr.mxu0 0.0
    %486 = vmatpush1.msra.mxu0 0.0
    %487 = vmatprep.subr.mxu0 0.0
    %488 = vmatpush1.msra.mxu0 0.0
    %489 = vmatprep.subr.mxu0 0.0
    %490 = vmatpush1.msra.mxu0 0.0
    %491 = vmatprep.subr.mxu0 0.0
    %492 = vmatpush1.msra.mxu0 0.0
    %493 = vmatprep.subr.mxu0 0.0
    %494 = vmatpush1.msra.mxu0 0.0
    %495 = vmatprep.subr.mxu0 0.0
    %496 = vmatpush1.msra.mxu0 0.0
    %497 = vmatprep.subr.mxu0 0.0
    %498 = vmatpush1.msra.mxu0 0.0
    %499 = vmatprep.mubr.f32.mxu0 0.0
    %500 = vmatmul.mubr.f32.gmra.mrb[0].mxu0 %v433
    %v501 = vpop.f32.mrb[0].mxu0
    %v502 = vadd.f32 %v430, %v501
    %v503 = vpop.f32.mrb[0].mxu0
    %504 = vdwg.mxu0
    %v505 = vmul.f32 %v502, 0.5
    %v506 = vmul.f32 %v505, 1.442695
    %v507 = vpow.pop %v506
    %509 = vrot.lane.b32.xlu0 %v507, 120
    %v510 = vpop.permute.xlu0 %509
    %v512 = vmul.f32 %v145, %v510
    %v513 = vadd.f32 %v512, %v502
    %v514 = vld [vmem:[#allocation13] sm:$0xff]
    %vm515 = vcmask 64512
    %v517 = vsel %vm515, %v513, 0
    %519 = vmatprep.subr.mxu0 0.0
    %520 = vmatpush1.msra.mxu0 %v514
    %521 = vmatprep.subr.mxu0 0.0
    %522 = vmatpush1.msra.mxu0 0.0
    %523 = vmatprep.subr.mxu0 0.0
    %524 = vmatpush1.msra.mxu0 0.0
    %525 = vmatprep.subr.mxu0 0.0
    %526 = vmatpush1.msra.mxu0 0.0
    %527 = vmatprep.subr.mxu0 0.0
    %528 = vmatpush1.msra.mxu0 0.0
    %529 = vmatprep.subr.mxu0 0.0
    %530 = vmatpush1.msra.mxu0 0.0
    %531 = vmatprep.subr.mxu0 0.0
    %532 = vmatpush1.msra.mxu0 0.0
    %533 = vmatprep.subr.mxu0 0.0
    %534 = vmatpush1.msra.mxu0 0.0
    %535 = vmatprep.subr.mxu0 0.0
    %536 = vmatpush1.msra.mxu0 0.0
    %537 = vmatprep.subr.mxu0 0.0
    %538 = vmatpush1.msra.mxu0 0.0
    %539 = vmatprep.subr.mxu0 0.0
    %540 = vmatpush1.msra.mxu0 0.0
    %541 = vmatprep.subr.mxu0 0.0
    %542 = vmatpush1.msra.mxu0 0.0
    %543 = vmatprep.subr.mxu0 0.0
    %544 = vmatpush1.msra.mxu0 0.0
    %545 = vmatprep.subr.mxu0 0.0
    %546 = vmatpush1.msra.mxu0 0.0
    %547 = vmatprep.subr.mxu0 0.0
    %548 = vmatpush1.msra.mxu0 0.0
    %549 = vmatprep.subr.mxu0 0.0
    %550 = vmatpush1.msra.mxu0 0.0
    %551 = vmatprep.subr.mxu0 0.0
    %552 = vmatpush1.msra.mxu0 0.0
    %553 = vmatprep.subr.mxu0 0.0
    %554 = vmatpush1.msra.mxu0 0.0
    %555 = vmatprep.subr.mxu0 0.0
    %556 = vmatpush1.msra.mxu0 0.0
    %557 = vmatprep.subr.mxu0 0.0
    %558 = vmatpush1.msra.mxu0 0.0
    %559 = vmatprep.subr.mxu0 0.0
    %560 = vmatpush1.msra.mxu0 0.0
    %561 = vmatprep.subr.mxu0 0.0
    %562 = vmatpush1.msra.mxu0 0.0
    %563 = vmatprep.subr.mxu0 0.0
    %564 = vmatpush1.msra.mxu0 0.0
    %565 = vmatprep.subr.mxu0 0.0
    %566 = vmatpush1.msra.mxu0 0.0
    %567 = vmatprep.subr.mxu0 0.0
    %568 = vmatpush1.msra.mxu0 0.0
    %569 = vmatprep.subr.mxu0 0.0
    %570 = vmatpush1.msra.mxu0 0.0
    %571 = vmatprep.subr.mxu0 0.0
    %572 = vmatpush1.msra.mxu0 0.0
    %573 = vmatprep.subr.mxu0 0.0
    %574 = vmatpush1.msra.mxu0 0.0
    %575 = vmatprep.subr.mxu0 0.0
    %576 = vmatpush1.msra.mxu0 0.0
    %577 = vmatprep.subr.mxu0 0.0
    %578 = vmatpush1.msra.mxu0 0.0
    %579 = vmatprep.subr.mxu0 0.0
    %580 = vmatpush1.msra.mxu0 0.0
    %581 = vmatprep.subr.mxu0 0.0
    %582 = vmatpush1.msra.mxu0 0.0
    %583 = vmatprep.mubr.f32.mxu0 0.0
    %584 = vmatmul.mubr.f32.gmra.mrb[0].mxu0 %v517
    %v585 = vpop.f32.mrb[0].mxu0
    %v586 = vadd.f32 0.0, %v585
    %v587 = vpop.f32.mrb[0].mxu0
    %588 = vdwg.mxu0
    %590 = vrot.lane.b32.xlu0 %v586, 64
    %v591 = vpop.permute.xlu0 %590
    %v593 = vadd.f32 %v237, %v591
    %595 = vrot.lane.b32.xlu0 %v593, 64
    %v596 = vpop.permute.xlu0 %595
    %v598 = vsel %vm158, %v596, 0.0
    %v599 = vld [vmem:[%s9] sm:$0xff]
    %v600 = vld [vmem:[%s9 + $0x8] sm:$0xff]
    %v601 = vld [vmem:[%s9 + $0x10] sm:$0xff]
    %v602 = vld [vmem:[%s9 + $0x18] sm:$0xff]
    %v603 = vld [vmem:[%s9 + $0x20] sm:$0xff]
    %v604 = vld [vmem:[%s9 + $0x28] sm:$0xff]
    %v605 = vld [vmem:[%s9 + $0x30] sm:$0xff]
    %v606 = vld [vmem:[%s9 + $0x38] sm:$0xff]
    %v607 = vld [vmem:[%s10] sm:$0x1]
    %v609 = vlaneseq
    %v610 = vshrl.u32 %v609, 7
    %v611 = vsub.s32 0, %v610
    %v612 = vrot.slane %v607, %v611
    %v615 = vsel %vm243, %v598, 0
    %617 = vmatprep.subr.mxu0 0.0
    %618 = vmatpush1.msra.mxu0 %v599
    %619 = vmatprep.subr.mxu0 0.0
    %620 = vmatpush1.msra.mxu0 %v600
    %621 = vmatprep.subr.mxu0 0.0
    %622 = vmatpush1.msra.mxu0 %v601
    %623 = vmatprep.subr.mxu0 0.0
    %624 = vmatpush1.msra.mxu0 %v602
    %625 = vmatprep.subr.mxu0 0.0
    %626 = vmatpush1.msra.mxu0 %v603
    %627 = vmatprep.subr.mxu0 0.0
    %628 = vmatpush1.msra.mxu0 %v604
    %629 = vmatprep.subr.mxu0 0.0
    %630 = vmatpush1.msra.mxu0 %v605
    %631 = vmatprep.subr.mxu0 0.0
    %632 = vmatpush1.msra.mxu0 %v606
    %633 = vmatprep.subr.mxu0 0.0
    %634 = vmatpush1.msra.mxu0 0.0
    %635 = vmatprep.subr.mxu0 0.0
    %636 = vmatpush1.msra.mxu0 0.0
    %637 = vmatprep.subr.mxu0 0.0
    %638 = vmatpush1.msra.mxu0 0.0
    %639 = vmatprep.subr.mxu0 0.0
    %640 = vmatpush1.msra.mxu0 0.0
    %641 = vmatprep.subr.mxu0 0.0
    %642 = vmatpush1.msra.mxu0 0.0
    %643 = vmatprep.subr.mxu0 0.0
    %644 = vmatpush1.msra.mxu0 0.0
    %645 = vmatprep.subr.mxu0 0.0
    %646 = vmatpush1.msra.mxu0 0.0
    %647 = vmatprep.subr.mxu0 0.0
    %648 = vmatpush1.msra.mxu0 0.0
    %649 = vmatprep.subr.mxu0 0.0
    %650 = vmatpush1.msra.mxu0 0.0
    %651 = vmatprep.subr.mxu0 0.0
    %652 = vmatpush1.msra.mxu0 0.0
    %653 = vmatprep.subr.mxu0 0.0
    %654 = vmatpush1.msra.mxu0 0.0
    %655 = vmatprep.subr.mxu0 0.0
    %656 = vmatpush1.msra.mxu0 0.0
    %657 = vmatprep.subr.mxu0 0.0
    %658 = vmatpush1.msra.mxu0 0.0
    %659 = vmatprep.subr.mxu0 0.0
    %660 = vmatpush1.msra.mxu0 0.0
    %661 = vmatprep.subr.mxu0 0.0
    %662 = vmatpush1.msra.mxu0 0.0
    %663 = vmatprep.subr.mxu0 0.0
    %664 = vmatpush1.msra.mxu0 0.0
    %665 = vmatprep.subr.mxu0 0.0
    %666 = vmatpush1.msra.mxu0 0.0
    %667 = vmatprep.subr.mxu0 0.0
    %668 = vmatpush1.msra.mxu0 0.0
    %669 = vmatprep.subr.mxu0 0.0
    %670 = vmatpush1.msra.mxu0 0.0
    %671 = vmatprep.subr.mxu0 0.0
    %672 = vmatpush1.msra.mxu0 0.0
    %673 = vmatprep.subr.mxu0 0.0
    %674 = vmatpush1.msra.mxu0 0.0
    %675 = vmatprep.subr.mxu0 0.0
    %676 = vmatpush1.msra.mxu0 0.0
    %677 = vmatprep.subr.mxu0 0.0
    %678 = vmatpush1.msra.mxu0 0.0
    %679 = vmatprep.subr.mxu0 0.0
    %680 = vmatpush1.msra.mxu0 0.0
    %681 = vmatprep.mubr.f32.mxu0 0.0
    %682 = vmatmul.mubr.f32.gmra.mrb[0].mxu0 %v615
    %v683 = vpop.f32.mrb[0].mxu0
    %v684 = vadd.f32 %v612, %v683
    %v685 = vpop.f32.mrb[0].mxu0
    %686 = vdwg.mxu0
    %v687 = vxor.u32 %v684, 2147483648
    %v688 = vmul.f32 %v687, 1.442695
    %v689 = vpow.pop %v688
    %v690 = vadd.f32 %v689, 1.0
    %v691 = vrcp.pop %v690
    %v692 = vmul.f32 1.0, %v691
    %694 = vrot.lane.b32.xlu0 %v684, 32
    %v695 = vpop.permute.xlu0 %694
    %v697 = vmul.f32 %v692, %v695
    %699 = vrot.lane.b32.xlu0 %v697, 64
    %v700 = vpop.permute.xlu0 %699
    %v702 = vadd.f32 %v684, %v700
    %v703 = vtanh.pop %v702
    %v704 = vsub.f32 1.0, %v692
    %706 = vrot.lane.b32.xlu0 %v703, 96
    %v707 = vpop.permute.xlu0 %706
    %v709 = vmul.f32 %v704, %v707
    %v710 = vmul.f32 %v692, 0.0
    %v711 = vadd.f32 %v709, %v710
    %713 = vrot.lane.b32.xlu0 %v711, 96
    %v714 = vpop.permute.xlu0 %713
    %v716 = vsel %vm158, %v714, 0.0
    %v717 = vld [vmem:[%s11] sm:$0xff]
    %v718 = vld [vmem:[%s11 + $0x8] sm:$0xff]
    %v719 = vld [vmem:[%s11 + $0x10] sm:$0xff]
    %v720 = vld [vmem:[%s11 + $0x18] sm:$0xff]
    %v721 = vld [vmem:[%s11 + $0x20] sm:$0xff]
    %v722 = vld [vmem:[%s11 + $0x28] sm:$0xff]
    %v723 = vld [vmem:[%s11 + $0x30] sm:$0xff]
    %v724 = vld [vmem:[%s11 + $0x38] sm:$0xff]
    %v725 = vld [vmem:[%s12] sm:$0x1]
    %v727 = vlaneseq
    %v728 = vshrl.u32 %v727, 7
    %v729 = vsub.s32 0, %v728
    %v730 = vrot.slane %v725, %v729
    %v733 = vsel %vm243, %v716, 0
    %735 = vmatprep.subr.mxu0 0.0
    %736 = vmatpush1.msra.mxu0 %v717
    %737 = vmatprep.subr.mxu0 0.0
    %738 = vmatpush1.msra.mxu0 %v718
    %739 = vmatprep.subr.mxu0 0.0
    %740 = vmatpush1.msra.mxu0 %v719
    %741 = vmatprep.subr.mxu0 0.0
    %742 = vmatpush1.msra.mxu0 %v720
    %743 = vmatprep.subr.mxu0 0.0
    %744 = vmatpush1.msra.mxu0 %v721
    %745 = vmatprep.subr.mxu0 0.0
    %746 = vmatpush1.msra.mxu0 %v722
    %747 = vmatprep.subr.mxu0 0.0
    %748 = vmatpush1.msra.mxu0 %v723
    %749 = vmatprep.subr.mxu0 0.0
    %750 = vmatpush1.msra.mxu0 %v724
    %751 = vmatprep.subr.mxu0 0.0
    %752 = vmatpush1.msra.mxu0 0.0
    %753 = vmatprep.subr.mxu0 0.0
    %754 = vmatpush1.msra.mxu0 0.0
    %755 = vmatprep.subr.mxu0 0.0
    %756 = vmatpush1.msra.mxu0 0.0
    %757 = vmatprep.subr.mxu0 0.0
    %758 = vmatpush1.msra.mxu0 0.0
    %759 = vmatprep.subr.mxu0 0.0
    %760 = vmatpush1.msra.mxu0 0.0
    %761 = vmatprep.subr.mxu0 0.0
    %762 = vmatpush1.msra.mxu0 0.0
    %763 = vmatprep.subr.mxu0 0.0
    %764 = vmatpush1.msra.mxu0 0.0
    %765 = vmatprep.subr.mxu0 0.0
    %766 = vmatpush1.msra.mxu0 0.0
    %767 = vmatprep.subr.mxu0 0.0
    %768 = vmatpush1.msra.mxu0 0.0
    %769 = vmatprep.subr.mxu0 0.0
    %770 = vmatpush1.msra.mxu0 0.0
    %771 = vmatprep.subr.mxu0 0.0
    %772 = vmatpush1.msra.mxu0 0.0
    %773 = vmatprep.subr.mxu0 0.0
    %774 = vmatpush1.msra.mxu0 0.0
    %775 = vmatprep.subr.mxu0 0.0
    %776 = vmatpush1.msra.mxu0 0.0
    %777 = vmatprep.subr.mxu0 0.0
    %778 = vmatpush1.msra.mxu0 0.0
    %779 = vmatprep.subr.mxu0 0.0
    %780 = vmatpush1.msra.mxu0 0.0
    %781 = vmatprep.subr.mxu0 0.0
    %782 = vmatpush1.msra.mxu0 0.0
    %783 = vmatprep.subr.mxu0 0.0
    %784 = vmatpush1.msra.mxu0 0.0
    %785 = vmatprep.subr.mxu0 0.0
    %786 = vmatpush1.msra.mxu0 0.0
    %787 = vmatprep.subr.mxu0 0.0
    %788 = vmatpush1.msra.mxu0 0.0
    %789 = vmatprep.subr.mxu0 0.0
    %790 = vmatpush1.msra.mxu0 0.0
    %791 = vmatprep.subr.mxu0 0.0
    %792 = vmatpush1.msra.mxu0 0.0
    %793 = vmatprep.subr.mxu0 0.0
    %794 = vmatpush1.msra.mxu0 0.0
    %795 = vmatprep.subr.mxu0 0.0
    %796 = vmatpush1.msra.mxu0 0.0
    %797 = vmatprep.subr.mxu0 0.0
    %798 = vmatpush1.msra.mxu0 0.0
    %799 = vmatprep.mubr.f32.mxu0 0.0
    %800 = vmatmul.mubr.f32.gmra.mrb[0].mxu0 %v733
    %v801 = vpop.f32.mrb[0].mxu0
    %v802 = vadd.f32 %v730, %v801
    %v803 = vpop.f32.mrb[0].mxu0
    %804 = vdwg.mxu0
    %v805 = vxor.u32 %v802, 2147483648
    %v806 = vmul.f32 %v805, 1.442695
    %v807 = vpow.pop %v806
    %v808 = vadd.f32 %v807, 1.0
    %v809 = vrcp.pop %v808
    %v810 = vmul.f32 1.0, %v809
    %812 = vrot.lane.b32.xlu0 %v802, 32
    %v813 = vpop.permute.xlu0 %812
    %v815 = vmul.f32 %v810, %v813
    %817 = vrot.lane.b32.xlu0 %v815, 64
    %v818 = vpop.permute.xlu0 %817
    %v820 = vadd.f32 %v802, %v818
    %v821 = vtanh.pop %v820
    %v822 = vsub.f32 1.0, %v810
    %824 = vrot.lane.b32.xlu0 %v821, 96
    %v825 = vpop.permute.xlu0 %824
    %v827 = vmul.f32 %v822, %v825
    %v828 = vmul.f32 %v810, 0.0
    %v829 = vadd.f32 %v827, %v828
    %v830 = vld [vmem:[%s13] sm:$0xff]
    %v831 = vld [vmem:[%s13 + $0x8] sm:$0xff]
    %v832 = vld [vmem:[%s13 + $0x10] sm:$0xff]
    %v833 = vld [vmem:[%s13 + $0x18] sm:$0xff]
    %v834 = vld [vmem:[%s14] sm:$0x1]
    %v836 = vlaneseq
    %v837 = vshrl.u32 %v836, 7
    %v838 = vsub.s32 0, %v837
    %v839 = vrot.slane %v834, %v838
    %842 = vrot.lane.b32.xlu0 %v829, 96
    %v843 = vpop.permute.xlu0 %842
    %v844 = vsel %vm158, %v843, 0
    %846 = vmatprep.subr.mxu0 0.0
    %847 = vmatpush1.msra.mxu0 %v830
    %848 = vmatprep.subr.mxu0 0.0
    %849 = vmatpush1.msra.mxu0 %v831
    %850 = vmatprep.subr.mxu0 0.0
    %851 = vmatpush1.msra.mxu0 %v832
    %852 = vmatprep.subr.mxu0 0.0
    %853 = vmatpush1.msra.mxu0 %v833
    %854 = vmatprep.subr.mxu0 0.0
    %855 = vmatpush1.msra.mxu0 0.0
    %856 = vmatprep.subr.mxu0 0.0
    %857 = vmatpush1.msra.mxu0 0.0
    %858 = vmatprep.subr.mxu0 0.0
    %859 = vmatpush1.msra.mxu0 0.0
    %860 = vmatprep.subr.mxu0 0.0
    %861 = vmatpush1.msra.mxu0 0.0
    %862 = vmatprep.subr.mxu0 0.0
    %863 = vmatpush1.msra.mxu0 0.0
    %864 = vmatprep.subr.mxu0 0.0
    %865 = vmatpush1.msra.mxu0 0.0
    %866 = vmatprep.subr.mxu0 0.0
    %867 = vmatpush1.msra.mxu0 0.0
    %868 = vmatprep.subr.mxu0 0.0
    %869 = vmatpush1.msra.mxu0 0.0
    %870 = vmatprep.subr.mxu0 0.0
    %871 = vmatpush1.msra.mxu0 0.0
    %872 = vmatprep.subr.mxu0 0.0
    %873 = vmatpush1.msra.mxu0 0.0
    %874 = vmatprep.subr.mxu0 0.0
    %875 = vmatpush1.msra.mxu0 0.0
    %876 = vmatprep.subr.mxu0 0.0
    %877 = vmatpush1.msra.mxu0 0.0
    %878 = vmatprep.subr.mxu0 0.0
    %879 = vmatpush1.msra.mxu0 0.0
    %880 = vmatprep.subr.mxu0 0.0
    %881 = vmatpush1.msra.mxu0 0.0
    %882 = vmatprep.subr.mxu0 0.0
    %883 = vmatpush1.msra.mxu0 0.0
    %884 = vmatprep.subr.mxu0 0.0
    %885 = vmatpush1.msra.mxu0 0.0
    %886 = vmatprep.subr.mxu0 0.0
    %887 = vmatpush1.msra.mxu0 0.0
    %888 = vmatprep.subr.mxu0 0.0
    %889 = vmatpush1.msra.mxu0 0.0
    %890 = vmatprep.subr.mxu0 0.0
    %891 = vmatpush1.msra.mxu0 0.0
    %892 = vmatprep.subr.mxu0 0.0
    %893 = vmatpush1.msra.mxu0 0.0
    %894 = vmatprep.subr.mxu0 0.0
    %895 = vmatpush1.msra.mxu0 0.0
    %896 = vmatprep.subr.mxu0 0.0
    %897 = vmatpush1.msra.mxu0 0.0
    %898 = vmatprep.subr.mxu0 0.0
    %899 = vmatpush1.msra.mxu0 0.0
    %900 = vmatprep.subr.mxu0 0.0
    %901 = vmatpush1.msra.mxu0 0.0
    %902 = vmatprep.subr.mxu0 0.0
    %903 = vmatpush1.msra.mxu0 0.0
    %904 = vmatprep.subr.mxu0 0.0
    %905 = vmatpush1.msra.mxu0 0.0
    %906 = vmatprep.subr.mxu0 0.0
    %907 = vmatpush1.msra.mxu0 0.0
    %908 = vmatprep.subr.mxu0 0.0
    %909 = vmatpush1.msra.mxu0 0.0
    %910 = vmatprep.mubr.f32.mxu0 0.0
    %911 = vmatmul.mubr.f32.gmra.mrb[0].mxu0 %v844
    %v912 = vpop.f32.mrb[0].mxu0
    %v913 = vadd.f32 %v839, %v912
    %v914 = vpop.f32.mrb[0].mxu0
    %915 = vdwg.mxu0
    %vm916 = vcmask 123904
    %917 = vst.msk [vmem:[#allocation14] sm:$0x3] %vm916, %v913
    %v918 = vsub.f32 %v913, %v144
    %v919 = vmul.f32 %v918, %v918
    %v920 = vadd.f32 %v919, 0.0
    %v921 = vmul.f32 %v502, 1.442695
    %v922 = vpow.pop %v921
    %924 = vrot.lane.b32.xlu0 %v502, 16
    %v925 = vpop.permute.xlu0 %924
    %v927 = vsub.f32 %v502, %v925
    %v928 = vmul.f32 %v927, 0.5
    %929 = vrot.lane.b32.xlu0 %v502, 112
    %v930 = vpop.permute.xlu0 %929
    %v932 = vsub.f32 %v502, %v930
    %v933 = vmul.f32 %v932, %v932
    %935 = vrot.lane.b32.xlu0 %v933, 8
    %v936 = vpop.permute.xlu0 %935
    %v938 = vadd.f32 %v922, %v936
    %v939 = vsub.f32 0.0, %v502
    %v940 = vmul.f32 %v939, 1.442695
    %v941 = vpow.pop %v940
    %v942 = vmul.f32 %v941, 0.5
    %944 = vrot.lane.b32.xlu0 %v942, 112
    %v945 = vpop.permute.xlu0 %944
    %v947 = vmul.f32 %v938, %v945
    %949 = vrot.lane.b32.xlu0 %v947, 16
    %v950 = vpop.permute.xlu0 %949
    %v952 = vadd.f32 %v928, %v950
    %v953 = vsub.f32 %v952, 0.5
    %v954 = vadd.f32 %v953, 0.0
    %s955 = scalar_lea.vmem [#allocation2], 2
    %v956 = vld [vmem:[%s955] sm:$0x3]
    %s957 = scalar_lea.vmem [#allocation5], 2
    %v958 = vld [vmem:[%s957] sm:$0x3]
    %960 = vrot.lane.b32.xlu0 %v913, 16
    %v961 = vpop.permute.xlu0 %960
    %v963 = vsel %vm146, %v956, %v961
    %v964 = vld [vmem:[#allocation7] sm:$0xff]
    %v965 = vld [vmem:[#allocation7 + $0x8] sm:$0xff]
    %v966 = vld [vmem:[#allocation7 + $0x10] sm:$0xff]
    %v967 = vld [vmem:[#allocation7 + $0x18] sm:$0xff]
    %v968 = vld [vmem:[%s3] sm:$0x1]
    %v969 = vmul.f32 %v968, 0.14285715
    %v970 = vlaneseq
    %v971 = vshrl.u32 %v970, 7
    %v972 = vsub.s32 0, %v971
    %v973 = vrot.slane %v969, %v972
    %v975 = vsel %vm158, %v963, 0
    %977 = vmatprep.subr.mxu0 0.0
    %978 = vmatpush1.msra.mxu0 %v964
    %979 = vmatprep.subr.mxu0 0.0
    %980 = vmatpush1.msra.mxu0 %v965
    %981 = vmatprep.subr.mxu0 0.0
    %982 = vmatpush1.msra.mxu0 %v966
    %983 = vmatprep.subr.mxu0 0.0
    %984 = vmatpush1.msra.mxu0 %v967
    %985 = vmatprep.subr.mxu0 0.0
    %986 = vmatpush1.msra.mxu0 0.0
    %987 = vmatprep.subr.mxu0 0.0
    %988 = vmatpush1.msra.mxu0 0.0
    %989 = vmatprep.subr.mxu0 0.0
    %990 = vmatpush1.msra.mxu0 0.0
    %991 = vmatprep.subr.mxu0 0.0
    %992 = vmatpush1.msra.mxu0 0.0
    %993 = vmatprep.subr.mxu0 0.0
    %994 = vmatpush1.msra.mxu0 0.0
    %995 = vmatprep.subr.mxu0 0.0
    %996 = vmatpush1.msra.mxu0 0.0
    %997 = vmatprep.subr.mxu0 0.0
    %998 = vmatpush1.msra.mxu0 0.0
    %999 = vmatprep.subr.mxu0 0.0
    %1000 = vmatpush1.msra.mxu0 0.0
    %1001 = vmatprep.subr.mxu0 0.0
    %1002 = vmatpush1.msra.mxu0 0.0
    %1003 = vmatprep.subr.mxu0 0.0
    %1004 = vmatpush1.msra.mxu0 0.0
    %1005 = vmatprep.subr.mxu0 0.0
    %1006 = vmatpush1.msra.mxu0 0.0
    %1007 = vmatprep.subr.mxu0 0.0
    %1008 = vmatpush1.msra.mxu0 0.0
    %1009 = vmatprep.subr.mxu0 0.0
    %1010 = vmatpush1.msra.mxu0 0.0
    %1011 = vmatprep.subr.mxu0 0.0
    %1012 = vmatpush1.msra.mxu0 0.0
    %1013 = vmatprep.subr.mxu0 0.0
    %1014 = vmatpush1.msra.mxu0 0.0
    %1015 = vmatprep.subr.mxu0 0.0
    %1016 = vmatpush1.msra.mxu0 0.0
    %1017 = vmatprep.subr.mxu0 0.0
    %1018 = vmatpush1.msra.mxu0 0.0
    %1019 = vmatprep.subr.mxu0 0.0
    %1020 = vmatpush1.msra.mxu0 0.0
    %1021 = vmatprep.subr.mxu0 0.0
    %1022 = vmatpush1.msra.mxu0 0.0
    %1023 = vmatprep.subr.mxu0 0.0
    %1024 = vmatpush1.msra.mxu0 0.0
    %1025 = vmatprep.subr.mxu0 0.0
    %1026 = vmatpush1.msra.mxu0 0.0
    %1027 = vmatprep.subr.mxu0 0.0
    %1028 = vmatpush1.msra.mxu0 0.0
    %1029 = vmatprep.subr.mxu0 0.0
    %1030 = vmatpush1.msra.mxu0 0.0
    %1031 = vmatprep.subr.mxu0 0.0
    %1032 = vmatpush1.msra.mxu0 0.0
    %1033 = vmatprep.subr.mxu0 0.0
    %1034 = vmatpush1.msra.mxu0 0.0
    %1035 = vmatprep.subr.mxu0 0.0
    %1036 = vmatpush1.msra.mxu0 0.0
    %1037 = vmatprep.subr.mxu0 0.0
    %1038 = vmatpush1.msra.mxu0 0.0
    %1039 = vmatprep.subr.mxu0 0.0
    %1040 = vmatpush1.msra.mxu0 0.0
    %1041 = vmatprep.mubr.f32.mxu0 0.0
    %1042 = vmatmul.mubr.f32.gmra.mrb[0].mxu0 %v975
    %v1043 = vpop.f32.mrb[0].mxu0
    %v1044 = vadd.f32 %v973, %v1043
    %v1045 = vpop.f32.mrb[0].mxu0
    %1046 = vdwg.mxu0
    %v1047 = vld [vmem:[%s3 + $0x1] sm:$0x1]
    %v1048 = vlaneseq
    %v1049 = vshrl.u32 %v1048, 7
    %v1050 = vsub.s32 0, %v1049
    %v1051 = vrot.slane %v1047, %v1050
    %v1052 = vadd.f32 %v1044, %v1051
    %1054 = vrot.lane.b32.xlu0 %v1052, 32
    %v1055 = vpop.permute.xlu0 %1054
    %1058 = vrot.lane.b32.xlu0 %v411, 64
    %v1059 = vpop.permute.xlu0 %1058
    %v1061 = vsel %vm158, %v1052, %v386
    %v1062 = vsel %vm243, %v1061, %v1055
    %v1063 = vsel %vm245, %v1062, %v1059
    %v1064 = vld [vmem:[#allocation8] sm:$0xff]
    %v1065 = vld [vmem:[#allocation8 + $0x8] sm:$0xff]
    %v1066 = vld [vmem:[#allocation8 + $0x10] sm:$0xff]
    %v1067 = vld [vmem:[#allocation8 + $0x18] sm:$0xff]
    %v1068 = vld [vmem:[#allocation8 + $0x20] sm:$0xff]
    %v1069 = vld [vmem:[#allocation8 + $0x28] sm:$0xff]
    %v1070 = vld [vmem:[#allocation8 + $0x30] sm:$0xff]
    %v1071 = vld [vmem:[#allocation8 + $0x38] sm:$0xff]
    %v1072 = vld [vmem:[#allocation8 + $0x40] sm:$0xff]
    %v1073 = vld [vmem:[#allocation8 + $0x48] sm:$0xff]
    %v1074 = vld [vmem:[#allocation8 + $0x50] sm:$0xff]
    %v1075 = vld [vmem:[#allocation8 + $0x58] sm:$0xff]
    %v1076 = vld [vmem:[#allocation8 + $0x60] sm:$0xff]
    %v1077 = vld [vmem:[#allocation8 + $0x68] sm:$0xff]
    %v1078 = vld [vmem:[#allocation8 + $0x70] sm:$0xff]
    %v1079 = vld [vmem:[#allocation8 + $0x78] sm:$0xff]
    %v1080 = vld [vmem:[#allocation8 + $0x80] sm:$0xff]
    %v1081 = vld [vmem:[#allocation8 + $0x88] sm:$0xff]
    %v1082 = vld [vmem:[#allocation8 + $0x90] sm:$0xff]
    %v1083 = vld [vmem:[#allocation8 + $0x98] sm:$0xff]
    %v1084 = vld [vmem:[#allocation8 + $0xa0] sm:$0xff]
    %v1085 = vld [vmem:[#allocation8 + $0xa8] sm:$0xff]
    %v1086 = vld [vmem:[#allocation8 + $0xb0] sm:$0xff]
    %v1087 = vld [vmem:[#allocation8 + $0xb8] sm:$0xff]
    %v1088 = vld [vmem:[#allocation8 + $0xc0] sm:$0xff]
    %v1089 = vld [vmem:[#allocation8 + $0xc8] sm:$0xff]
    %v1090 = vld [vmem:[#allocation8 + $0xd0] sm:$0xff]
    %v1091 = vld [vmem:[#allocation8 + $0xd8] sm:$0xff]
    %v1092 = vld [vmem:[#allocation8 + $0xe0] sm:$0xff]
    %v1093 = vld [vmem:[#allocation8 + $0xe8] sm:$0xff]
    %v1094 = vld [vmem:[#allocation8 + $0xf0] sm:$0xff]
    %v1095 = vld [vmem:[#allocation8 + $0xf8] sm:$0xff]
    %v1096 = vld [vmem:[#allocation10] sm:$0x3]
    %v1098 = vlaneseq
    %v1099 = vshrl.u32 %v1098, 7
    %v1100 = vsub.s32 0, %v1099
    %v1101 = vrot.slane %v1096, %v1100
    %v1102 = vlaneseq
    %v1103 = vshrl.u32 %v1102, 7
    %v1104 = vsub.s32 1, %v1103
    %v1105 = vrot.slane %v1096, %v1104
    %1108 = vmatprep.subr.mxu0 %v1065
    %1109 = vmatpush1.msra.mxu0 %v1064
    %1110 = vmatprep.subr.mxu0 %v1067
    %1111 = vmatpush1.msra.mxu0 %v1066
    %1112 = vmatprep.subr.mxu0 %v1069
    %1113 = vmatpush1.msra.mxu0 %v1068
    %1114 = vmatprep.subr.mxu0 %v1071
    %1115 = vmatpush1.msra.mxu0 %v1070
    %1116 = vmatprep.subr.mxu0 %v1073
    %1117 = vmatpush1.msra.mxu0 %v1072
    %1118 = vmatprep.subr.mxu0 %v1075
    %1119 = vmatpush1.msra.mxu0 %v1074
    %1120 = vmatprep.subr.mxu0 %v1077
    %1121 = vmatpush1.msra.mxu0 %v1076
    %1122 = vmatprep.subr.mxu0 %v1079
    %1123 = vmatpush1.msra.mxu0 %v1078
    %1124 = vmatprep.subr.mxu0 %v1081
    %1125 = vmatpush1.msra.mxu0 %v1080
    %1126 = vmatprep.subr.mxu0 %v1083
    %1127 = vmatpush1.msra.mxu0 %v1082
    %1128 = vmatprep.subr.mxu0 %v1085
    %1129 = vmatpush1.msra.mxu0 %v1084
    %1130 = vmatprep.subr.mxu0 %v1087
    %1131 = vmatpush1.msra.mxu0 %v1086
    %1132 = vmatprep.subr.mxu0 %v1089
    %1133 = vmatpush1.msra.mxu0 %v1088
    %1134 = vmatprep.subr.mxu0 %v1091
    %1135 = vmatpush1.msra.mxu0 %v1090
    %1136 = vmatprep.subr.mxu0 %v1093
    %1137 = vmatpush1.msra.mxu0 %v1092
    %1138 = vmatprep.subr.mxu0 %v1095
    %1139 = vmatpush1.msra.mxu0 %v1094
    %1140 = vmatprep.subr.mxu0 0.0
    %1141 = vmatpush1.msra.mxu0 0.0
    %1142 = vmatprep.subr.mxu0 0.0
    %1143 = vmatpush1.msra.mxu0 0.0
    %1144 = vmatprep.subr.mxu0 0.0
    %1145 = vmatpush1.msra.mxu0 0.0
    %1146 = vmatprep.subr.mxu0 0.0
    %1147 = vmatpush1.msra.mxu0 0.0
    %1148 = vmatprep.subr.mxu0 0.0
    %1149 = vmatpush1.msra.mxu0 0.0
    %1150 = vmatprep.subr.mxu0 0.0
    %1151 = vmatpush1.msra.mxu0 0.0
    %1152 = vmatprep.subr.mxu0 0.0
    %1153 = vmatpush1.msra.mxu0 0.0
    %1154 = vmatprep.subr.mxu0 0.0
    %1155 = vmatpush1.msra.mxu0 0.0
    %1156 = vmatprep.subr.mxu0 0.0
    %1157 = vmatpush1.msra.mxu0 0.0
    %1158 = vmatprep.subr.mxu0 0.0
    %1159 = vmatpush1.msra.mxu0 0.0
    %1160 = vmatprep.subr.mxu0 0.0
    %1161 = vmatpush1.msra.mxu0 0.0
    %1162 = vmatprep.subr.mxu0 0.0
    %1163 = vmatpush1.msra.mxu0 0.0
    %1164 = vmatprep.subr.mxu0 0.0
    %1165 = vmatpush1.msra.mxu0 0.0
    %1166 = vmatprep.subr.mxu0 0.0
    %1167 = vmatpush1.msra.mxu0 0.0
    %1168 = vmatprep.subr.mxu0 0.0
    %1169 = vmatpush1.msra.mxu0 0.0
    %1170 = vmatprep.subr.mxu0 0.0
    %1171 = vmatpush1.msra.mxu0 0.0
    %1172 = vmatprep.mubr.f32.mxu0 0.0
    %1173 = vmatmul.mubr.f32.gmra.mrb[0].mxu0 %v1063
    %v1174 = vpop.f32.mrb[0].mxu0
    %v1175 = vadd.f32 %v1101, %v1174
    %v1176 = vpop.f32.mrb[0].mxu0
    %v1177 = vadd.f32 %v1105, %v1176
    %1178 = vdwg.mxu0
    %v1179 = vxor.u32 %v1175, 2147483648
    %v1180 = vmul.f32 %v1179, 1.442695
    %v1181 = vpow.pop %v1180
    %v1182 = vadd.f32 %v1181, 1.0
    %v1183 = vrcp.pop %v1182
    %v1184 = vmul.f32 1.0, %v1183
    %1186 = vrot.lane.b32.xlu0 %v1175, 32
    %v1187 = vpop.permute.xlu0 %1186
    %v1189 = vmul.f32 %v1184, %v1187
    %1191 = vrot.lane.b32.xlu0 %v1189, 64
    %v1192 = vpop.permute.xlu0 %1191
    %v1194 = vadd.f32 %v1175, %v1192
    %v1195 = vtanh.pop %v1194
    %v1196 = vsub.f32 1.0, %v1184
    %1198 = vrot.lane.b32.xlu0 %v1195, 96
    %v1199 = vpop.permute.xlu0 %1198
    %v1201 = vmul.f32 %v1196, %v1199
    %v1202 = vmul.f32 %v1184, %v386
    %v1203 = vadd.f32 %v1201, %v1202
    %v1204 = vxor.u32 %v1177, 2147483648
    %v1205 = vmul.f32 %v1204, 1.442695
    %v1206 = vpow.pop %v1205
    %v1207 = vadd.f32 %v1206, 1.0
    %v1208 = vrcp.pop %v1207
    %v1209 = vmul.f32 1.0, %v1208
    %1211 = vrot.lane.b32.xlu0 %v1177, 32
    %v1212 = vpop.permute.xlu0 %1211
    %v1214 = vmul.f32 %v1209, %v1212
    %1216 = vrot.lane.b32.xlu0 %v1214, 64
    %v1217 = vpop.permute.xlu0 %1216
    %v1219 = vadd.f32 %v1177, %v1217
    %v1220 = vtanh.pop %v1219
    %v1221 = vsub.f32 1.0, %v1209
    %1223 = vrot.lane.b32.xlu0 %v1220, 96
    %v1224 = vpop.permute.xlu0 %1223
    %v1226 = vmul.f32 %v1221, %v1224
    %v1227 = vmul.f32 %v1209, %v411
    %v1228 = vadd.f32 %v1226, %v1227
    %1230 = vrot.lane.b32.xlu0 %v1203, 96
    %v1231 = vpop.permute.xlu0 %1230
    %v1233 = vsel %vm158, %v1231, %v1228
    %v1234 = vld [vmem:[%s6] sm:$0xff]
    %v1235 = vld [vmem:[%s6 + $0x8] sm:$0xff]
    %v1236 = vld [vmem:[%s6 + $0x10] sm:$0xff]
    %v1237 = vld [vmem:[%s6 + $0x18] sm:$0xff]
    %v1238 = vld [vmem:[%s6 + $0x20] sm:$0xff]
    %v1239 = vld [vmem:[%s6 + $0x28] sm:$0xff]
    %v1240 = vld [vmem:[%s6 + $0x30] sm:$0xff]
    %v1241 = vld [vmem:[%s6 + $0x38] sm:$0xff]
    %v1242 = vld [vmem:[#allocation11] sm:$0x1]
    %v1244 = vlaneseq
    %v1245 = vshrl.u32 %v1244, 7
    %v1246 = vsub.s32 0, %v1245
    %v1247 = vrot.slane %v1242, %v1246
    %v1250 = vsel %vm243, %v1233, 0
    %1252 = vmatprep.subr.mxu0 0.0
    %1253 = vmatpush1.msra.mxu0 %v1234
    %1254 = vmatprep.subr.mxu0 0.0
    %1255 = vmatpush1.msra.mxu0 %v1235
    %1256 = vmatprep.subr.mxu0 0.0
    %1257 = vmatpush1.msra.mxu0 %v1236
    %1258 = vmatprep.subr.mxu0 0.0
    %1259 = vmatpush1.msra.mxu0 %v1237
    %1260 = vmatprep.subr.mxu0 0.0
    %1261 = vmatpush1.msra.mxu0 %v1238
    %1262 = vmatprep.subr.mxu0 0.0
    %1263 = vmatpush1.msra.mxu0 %v1239
    %1264 = vmatprep.subr.mxu0 0.0
    %1265 = vmatpush1.msra.mxu0 %v1240
    %1266 = vmatprep.subr.mxu0 0.0
    %1267 = vmatpush1.msra.mxu0 %v1241
    %1268 = vmatprep.subr.mxu0 0.0
    %1269 = vmatpush1.msra.mxu0 0.0
    %1270 = vmatprep.subr.mxu0 0.0
    %1271 = vmatpush1.msra.mxu0 0.0
    %1272 = vmatprep.subr.mxu0 0.0
    %1273 = vmatpush1.msra.mxu0 0.0
    %1274 = vmatprep.subr.mxu0 0.0
    %1275 = vmatpush1.msra.mxu0 0.0
    %1276 = vmatprep.subr.mxu0 0.0
    %1277 = vmatpush1.msra.mxu0 0.0
    %1278 = vmatprep.subr.mxu0 0.0
    %1279 = vmatpush1.msra.mxu0 0.0
    %1280 = vmatprep.subr.mxu0 0.0
    %1281 = vmatpush1.msra.mxu0 0.0
    %1282 = vmatprep.subr.mxu0 0.0
    %1283 = vmatpush1.msra.mxu0 0.0
    %1284 = vmatprep.subr.mxu0 0.0
    %1285 = vmatpush1.msra.mxu0 0.0
    %1286 = vmatprep.subr.mxu0 0.0
    %1287 = vmatpush1.msra.mxu0 0.0
    %1288 = vmatprep.subr.mxu0 0.0
    %1289 = vmatpush1.msra.mxu0 0.0
    %1290 = vmatprep.subr.mxu0 0.0
    %1291 = vmatpush1.msra.mxu0 0.0
    %1292 = vmatprep.subr.mxu0 0.0
    %1293 = vmatpush1.msra.mxu0 0.0
    %1294 = vmatprep.subr.mxu0 0.0
    %1295 = vmatpush1.msra.mxu0 0.0
    %1296 = vmatprep.subr.mxu0 0.0
    %1297 = vmatpush1.msra.mxu0 0.0
    %1298 = vmatprep.subr.mxu0 0.0
    %1299 = vmatpush1.msra.mxu0 0.0
    %1300 = vmatprep.subr.mxu0 0.0
    %1301 = vmatpush1.msra.mxu0 0.0
    %1302 = vmatprep.subr.mxu0 0.0
    %1303 = vmatpush1.msra.mxu0 0.0
    %1304 = vmatprep.subr.mxu0 0.0
    %1305 = vmatpush1.msra.mxu0 0.0
    %1306 = vmatprep.subr.mxu0 0.0
    %1307 = vmatpush1.msra.mxu0 0.0
    %1308 = vmatprep.subr.mxu0 0.0
    %1309 = vmatpush1.msra.mxu0 0.0
    %1310 = vmatprep.subr.mxu0 0.0
    %1311 = vmatpush1.msra.mxu0 0.0
    %1312 = vmatprep.subr.mxu0 0.0
    %1313 = vmatpush1.msra.mxu0 0.0
    %1314 = vmatprep.subr.mxu0 0.0
    %1315 = vmatpush1.msra.mxu0 0.0
    %1316 = vmatprep.mubr.f32.mxu0 0.0
    %1317 = vmatmul.mubr.f32.gmra.mrb[0].mxu0 %v1250
    %v1318 = vpop.f32.mrb[0].mxu0
    %v1319 = vadd.f32 %v1247, %v1318
    %v1320 = vpop.f32.mrb[0].mxu0
    %1321 = vdwg.mxu0
    %v1322 = vmul.f32 %v1319, 0.5
    %v1323 = vmul.f32 %v1322, 1.442695
    %v1324 = vpow.pop %v1323
    %1326 = vrot.lane.b32.xlu0 %v1324, 120
    %v1327 = vpop.permute.xlu0 %1326
    %v1329 = vmul.f32 %v958, %v1327
    %v1330 = vadd.f32 %v1329, %v1319
    %v1331 = vld [vmem:[#allocation13] sm:$0xff]
    %v1333 = vsel %vm515, %v1330, 0
    %1335 = vmatprep.subr.mxu0 0.0
    %1336 = vmatpush1.msra.mxu0 %v1331
    %1337 = vmatprep.subr.mxu0 0.0
    %1338 = vmatpush1.msra.mxu0 0.0
    %1339 = vmatprep.subr.mxu0 0.0
    %1340 = vmatpush1.msra.mxu0 0.0
    %1341 = vmatprep.subr.mxu0 0.0
    %1342 = vmatpush1.msra.mxu0 0.0
    %1343 = vmatprep.subr.mxu0 0.0
    %1344 = vmatpush1.msra.mxu0 0.0
    %1345 = vmatprep.subr.mxu0 0.0
    %1346 = vmatpush1.msra.mxu0 0.0
    %1347 = vmatprep.subr.mxu0 0.0
    %1348 = vmatpush1.msra.mxu0 0.0
    %1349 = vmatprep.subr.mxu0 0.0
    %1350 = vmatpush1.msra.mxu0 0.0
    %1351 = vmatprep.subr.mxu0 0.0
    %1352 = vmatpush1.msra.mxu0 0.0
    %1353 = vmatprep.subr.mxu0 0.0
    %1354 = vmatpush1.msra.mxu0 0.0
    %1355 = vmatprep.subr.mxu0 0.0
    %1356 = vmatpush1.msra.mxu0 0.0
    %1357 = vmatprep.subr.mxu0 0.0
    %1358 = vmatpush1.msra.mxu0 0.0
    %1359 = vmatprep.subr.mxu0 0.0
    %1360 = vmatpush1.msra.mxu0 0.0
    %1361 = vmatprep.subr.mxu0 0.0
    %1362 = vmatpush1.msra.mxu0 0.0
    %1363 = vmatprep.subr.mxu0 0.0
    %1364 = vmatpush1.msra.mxu0 0.0
    %1365 = vmatprep.subr.mxu0 0.0
    %1366 = vmatpush1.msra.mxu0 0.0
    %1367 = vmatprep.subr.mxu0 0.0
    %1368 = vmatpush1.msra.mxu0 0.0
    %1369 = vmatprep.subr.mxu0 0.0
    %1370 = vmatpush1.msra.mxu0 0.0
    %1371 = vmatprep.subr.mxu0 0.0
    %1372 = vmatpush1.msra.mxu0 0.0
    %1373 = vmatprep.subr.mxu0 0.0
    %1374 = vmatpush1.msra.mxu0 0.0
    %1375 = vmatprep.subr.mxu0 0.0
    %1376 = vmatpush1.msra.mxu0 0.0
    %1377 = vmatprep.subr.mxu0 0.0
    %1378 = vmatpush1.msra.mxu0 0.0
    %1379 = vmatprep.subr.mxu0 0.0
    %1380 = vmatpush1.msra.mxu0 0.0
    %1381 = vmatprep.subr.mxu0 0.0
    %1382 = vmatpush1.msra.mxu0 0.0
    %1383 = vmatprep.subr.mxu0 0.0
    %1384 = vmatpush1.msra.mxu0 0.0
    %1385 = vmatprep.subr.mxu0 0.0
    %1386 = vmatpush1.msra.mxu0 0.0
    %1387 = vmatprep.subr.mxu0 0.0
    %1388 = vmatpush1.msra.mxu0 0.0
    %1389 = vmatprep.subr.mxu0 0.0
    %1390 = vmatpush1.msra.mxu0 0.0
    %1391 = vmatprep.subr.mxu0 0.0
    %1392 = vmatpush1.msra.mxu0 0.0
    %1393 = vmatprep.subr.mxu0 0.0
    %1394 = vmatpush1.msra.mxu0 0.0
    %1395 = vmatprep.subr.mxu0 0.0
    %1396 = vmatpush1.msra.mxu0 0.0
    %1397 = vmatprep.subr.mxu0 0.0
    %1398 = vmatpush1.msra.mxu0 0.0
    %1399 = vmatprep.mubr.f32.mxu0 0.0
    %1400 = vmatmul.mubr.f32.gmra.mrb[0].mxu0 %v1333
    %v1401 = vpop.f32.mrb[0].mxu0
    %v1402 = vadd.f32 0.0, %v1401
    %v1403 = vpop.f32.mrb[0].mxu0
    %1404 = vdwg.mxu0
    %1406 = vrot.lane.b32.xlu0 %v1402, 64
    %v1407 = vpop.permute.xlu0 %1406
    %v1409 = vadd.f32 %v1052, %v1407
    %1411 = vrot.lane.b32.xlu0 %v1409, 64
    %v1412 = vpop.permute.xlu0 %1411
    %v1414 = vsel %vm158, %v1412, %v711
    %v1415 = vld [vmem:[%s9] sm:$0xff]
    %v1416 = vld [vmem:[%s9 + $0x8] sm:$0xff]
    %v1417 = vld [vmem:[%s9 + $0x10] sm:$0xff]
    %v1418 = vld [vmem:[%s9 + $0x18] sm:$0xff]
    %v1419 = vld [vmem:[%s9 + $0x20] sm:$0xff]
    %v1420 = vld [vmem:[%s9 + $0x28] sm:$0xff]
    %v1421 = vld [vmem:[%s9 + $0x30] sm:$0xff]
    %v1422 = vld [vmem:[%s9 + $0x38] sm:$0xff]
    %v1423 = vld [vmem:[%s10] sm:$0x1]
    %v1425 = vlaneseq
    %v1426 = vshrl.u32 %v1425, 7
    %v1427 = vsub.s32 0, %v1426
    %v1428 = vrot.slane %v1423, %v1427
    %v1431 = vsel %vm243, %v1414, 0
    %1433 = vmatprep.subr.mxu0 0.0
    %1434 = vmatpush1.msra.mxu0 %v1415
    %1435 = vmatprep.subr.mxu0 0.0
    %1436 = vmatpush1.msra.mxu0 %v1416
    %1437 = vmatprep.subr.mxu0 0.0
    %1438 = vmatpush1.msra.mxu0 %v1417
    %1439 = vmatprep.subr.mxu0 0.0
    %1440 = vmatpush1.msra.mxu0 %v1418
    %1441 = vmatprep.subr.mxu0 0.0
    %1442 = vmatpush1.msra.mxu0 %v1419
    %1443 = vmatprep.subr.mxu0 0.0
    %1444 = vmatpush1.msra.mxu0 %v1420
    %1445 = vmatprep.subr.mxu0 0.0
    %1446 = vmatpush1.msra.mxu0 %v1421
    %1447 = vmatprep.subr.mxu0 0.0
    %1448 = vmatpush1.msra.mxu0 %v1422
    %1449 = vmatprep.subr.mxu0 0.0
    %1450 = vmatpush1.msra.mxu0 0.0
    %1451 = vmatprep.subr.mxu0 0.0
    %1452 = vmatpush1.msra.mxu0 0.0
    %1453 = vmatprep.subr.mxu0 0.0
    %1454 = vmatpush1.msra.mxu0 0.0
    %1455 = vmatprep.subr.mxu0 0.0
    %1456 = vmatpush1.msra.mxu0 0.0
    %1457 = vmatprep.subr.mxu0 0.0
    %1458 = vmatpush1.msra.mxu0 0.0
    %1459 = vmatprep.subr.mxu0 0.0
    %1460 = vmatpush1.msra.mxu0 0.0
    %1461 = vmatprep.subr.mxu0 0.0
    %1462 = vmatpush1.msra.mxu0 0.0
    %1463 = vmatprep.subr.mxu0 0.0
    %1464 = vmatpush1.msra.mxu0 0.0
    %1465 = vmatprep.subr.mxu0 0.0
    %1466 = vmatpush1.msra.mxu0 0.0
    %1467 = vmatprep.subr.mxu0 0.0
    %1468 = vmatpush1.msra.mxu0 0.0
    %1469 = vmatprep.subr.mxu0 0.0
    %1470 = vmatpush1.msra.mxu0 0.0
    %1471 = vmatprep.subr.mxu0 0.0
    %1472 = vmatpush1.msra.mxu0 0.0
    %1473 = vmatprep.subr.mxu0 0.0
    %1474 = vmatpush1.msra.mxu0 0.0
    %1475 = vmatprep.subr.mxu0 0.0
    %1476 = vmatpush1.msra.mxu0 0.0
    %1477 = vmatprep.subr.mxu0 0.0
    %1478 = vmatpush1.msra.mxu0 0.0
    %1479 = vmatprep.subr.mxu0 0.0
    %1480 = vmatpush1.msra.mxu0 0.0
    %1481 = vmatprep.subr.mxu0 0.0
    %1482 = vmatpush1.msra.mxu0 0.0
    %1483 = vmatprep.subr.mxu0 0.0
    %1484 = vmatpush1.msra.mxu0 0.0
    %1485 = vmatprep.subr.mxu0 0.0
    %1486 = vmatpush1.msra.mxu0 0.0
    %1487 = vmatprep.subr.mxu0 0.0
    %1488 = vmatpush1.msra.mxu0 0.0
    %1489 = vmatprep.subr.mxu0 0.0
    %1490 = vmatpush1.msra.mxu0 0.0
    %1491 = vmatprep.subr.mxu0 0.0
    %1492 = vmatpush1.msra.mxu0 0.0
    %1493 = vmatprep.subr.mxu0 0.0
    %1494 = vmatpush1.msra.mxu0 0.0
    %1495 = vmatprep.subr.mxu0 0.0
    %1496 = vmatpush1.msra.mxu0 0.0
    %1497 = vmatprep.mubr.f32.mxu0 0.0
    %1498 = vmatmul.mubr.f32.gmra.mrb[0].mxu0 %v1431
    %v1499 = vpop.f32.mrb[0].mxu0
    %v1500 = vadd.f32 %v1428, %v1499
    %v1501 = vpop.f32.mrb[0].mxu0
    %1502 = vdwg.mxu0
    %v1503 = vxor.u32 %v1500, 2147483648
    %v1504 = vmul.f32 %v1503, 1.442695
    %v1505 = vpow.pop %v1504
    %v1506 = vadd.f32 %v1505, 1.0
    %v1507 = vrcp.pop %v1506
    %v1508 = vmul.f32 1.0, %v1507
    %1510 = vrot.lane.b32.xlu0 %v1500, 32
    %v1511 = vpop.permute.xlu0 %1510
    %v1513 = vmul.f32 %v1508, %v1511
    %1515 = vrot.lane.b32.xlu0 %v1513, 64
    %v1516 = vpop.permute.xlu0 %1515
    %v1518 = vadd.f32 %v1500, %v1516
    %v1519 = vtanh.pop %v1518
    %v1520 = vsub.f32 1.0, %v1508
    %1522 = vrot.lane.b32.xlu0 %v1519, 96
    %v1523 = vpop.permute.xlu0 %1522
    %v1525 = vmul.f32 %v1520, %v1523
    %v1526 = vmul.f32 %v1508, %v711
    %v1527 = vadd.f32 %v1525, %v1526
    %1529 = vrot.lane.b32.xlu0 %v1527, 96
    %v1530 = vpop.permute.xlu0 %1529
    %v1532 = vsel %vm158, %v1530, %v829
    %v1533 = vld [vmem:[%s11] sm:$0xff]
    %v1534 = vld [vmem:[%s11 + $0x8] sm:$0xff]
    %v1535 = vld [vmem:[%s11 + $0x10] sm:$0xff]
    %v1536 = vld [vmem:[%s11 + $0x18] sm:$0xff]
    %v1537 = vld [vmem:[%s11 + $0x20] sm:$0xff]
    %v1538 = vld [vmem:[%s11 + $0x28] sm:$0xff]
    %v1539 = vld [vmem:[%s11 + $0x30] sm:$0xff]
    %v1540 = vld [vmem:[%s11 + $0x38] sm:$0xff]
    %v1541 = vld [vmem:[%s12] sm:$0x1]
    %v1543 = vlaneseq
    %v1544 = vshrl.u32 %v1543, 7
    %v1545 = vsub.s32 0, %v1544
    %v1546 = vrot.slane %v1541, %v1545
    %v1549 = vsel %vm243, %v1532, 0
    %1551 = vmatprep.subr.mxu0 0.0
    %1552 = vmatpush1.msra.mxu0 %v1533
    %1553 = vmatprep.subr.mxu0 0.0
    %1554 = vmatpush1.msra.mxu0 %v1534
    %1555 = vmatprep.subr.mxu0 0.0
    %1556 = vmatpush1.msra.mxu0 %v1535
    %1557 = vmatprep.subr.mxu0 0.0
    %1558 = vmatpush1.msra.mxu0 %v1536
    %1559 = vmatprep.subr.mxu0 0.0
    %1560 = vmatpush1.msra.mxu0 %v1537
    %1561 = vmatprep.subr.mxu0 0.0
    %1562 = vmatpush1.msra.mxu0 %v1538
    %1563 = vmatprep.subr.mxu0 0.0
    %1564 = vmatpush1.msra.mxu0 %v1539
    %1565 = vmatprep.subr.mxu0 0.0
    %1566 = vmatpush1.msra.mxu0 %v1540
    %1567 = vmatprep.subr.mxu0 0.0
    %1568 = vmatpush1.msra.mxu0 0.0
    %1569 = vmatprep.subr.mxu0 0.0
    %1570 = vmatpush1.msra.mxu0 0.0
    %1571 = vmatprep.subr.mxu0 0.0
    %1572 = vmatpush1.msra.mxu0 0.0
    %1573 = vmatprep.subr.mxu0 0.0
    %1574 = vmatpush1.msra.mxu0 0.0
    %1575 = vmatprep.subr.mxu0 0.0
    %1576 = vmatpush1.msra.mxu0 0.0
    %1577 = vmatprep.subr.mxu0 0.0
    %1578 = vmatpush1.msra.mxu0 0.0
    %1579 = vmatprep.subr.mxu0 0.0
    %1580 = vmatpush1.msra.mxu0 0.0
    %1581 = vmatprep.subr.mxu0 0.0
    %1582 = vmatpush1.msra.mxu0 0.0
    %1583 = vmatprep.subr.mxu0 0.0
    %1584 = vmatpush1.msra.mxu0 0.0
    %1585 = vmatprep.subr.mxu0 0.0
    %1586 = vmatpush1.msra.mxu0 0.0
    %1587 = vmatprep.subr.mxu0 0.0
    %1588 = vmatpush1.msra.mxu0 0.0
    %1589 = vmatprep.subr.mxu0 0.0
    %1590 = vmatpush1.msra.mxu0 0.0
    %1591 = vmatprep.subr.mxu0 0.0
    %1592 = vmatpush1.msra.mxu0 0.0
    %1593 = vmatprep.subr.mxu0 0.0
    %1594 = vmatpush1.msra.mxu0 0.0
    %1595 = vmatprep.subr.mxu0 0.0
    %1596 = vmatpush1.msra.mxu0 0.0
    %1597 = vmatprep.subr.mxu0 0.0
    %1598 = vmatpush1.msra.mxu0 0.0
    %1599 = vmatprep.subr.mxu0 0.0
    %1600 = vmatpush1.msra.mxu0 0.0
    %1601 = vmatprep.subr.mxu0 0.0
    %1602 = vmatpush1.msra.mxu0 0.0
    %1603 = vmatprep.subr.mxu0 0.0
    %1604 = vmatpush1.msra.mxu0 0.0
    %1605 = vmatprep.subr.mxu0 0.0
    %1606 = vmatpush1.msra.mxu0 0.0
    %1607 = vmatprep.subr.mxu0 0.0
    %1608 = vmatpush1.msra.mxu0 0.0
    %1609 = vmatprep.subr.mxu0 0.0
    %1610 = vmatpush1.msra.mxu0 0.0
    %1611 = vmatprep.subr.mxu0 0.0
    %1612 = vmatpush1.msra.mxu0 0.0
    %1613 = vmatprep.subr.mxu0 0.0
    %1614 = vmatpush1.msra.mxu0 0.0
    %1615 = vmatprep.mubr.f32.mxu0 0.0
    %1616 = vmatmul.mubr.f32.gmra.mrb[0].mxu0 %v1549
    %v1617 = vpop.f32.mrb[0].mxu0
    %v1618 = vadd.f32 %v1546, %v1617
    %v1619 = vpop.f32.mrb[0].mxu0
    %1620 = vdwg.mxu0
    %v1621 = vxor.u32 %v1618, 2147483648
    %v1622 = vmul.f32 %v1621, 1.442695
    %v1623 = vpow.pop %v1622
    %v1624 = vadd.f32 %v1623, 1.0
    %v1625 = vrcp.pop %v1624
    %v1626 = vmul.f32 1.0, %v1625
    %1628 = vrot.lane.b32.xlu0 %v1618, 32
    %v1629 = vpop.permute.xlu0 %1628
    %v1631 = vmul.f32 %v1626, %v1629
    %1633 = vrot.lane.b32.xlu0 %v1631, 64
    %v1634 = vpop.permute.xlu0 %1633
    %v1636 = vadd.f32 %v1618, %v1634
    %v1637 = vtanh.pop %v1636
    %v1638 = vsub.f32 1.0, %v1626
    %1640 = vrot.lane.b32.xlu0 %v1637, 96
    %v1641 = vpop.permute.xlu0 %1640
    %v1643 = vmul.f32 %v1638, %v1641
    %v1644 = vmul.f32 %v1626, %v829
    %v1645 = vadd.f32 %v1643, %v1644
    %v1646 = vld [vmem:[%s13] sm:$0xff]
    %v1647 = vld [vmem:[%s13 + $0x8] sm:$0xff]
    %v1648 = vld [vmem:[%s13 + $0x10] sm:$0xff]
    %v1649 = vld [vmem:[%s13 + $0x18] sm:$0xff]
    %v1650 = vld [vmem:[%s14] sm:$0x1]
    %v1652 = vlaneseq
    %v1653 = vshrl.u32 %v1652, 7
    %v1654 = vsub.s32 0, %v1653
    %v1655 = vrot.slane %v1650, %v1654
    %1658 = vrot.lane.b32.xlu0 %v1645, 96
    %v1659 = vpop.permute.xlu0 %1658
    %v1660 = vsel %vm158, %v1659, 0
    %1662 = vmatprep.subr.mxu0 0.0
    %1663 = vmatpush1.msra.mxu0 %v1646
    %1664 = vmatprep.subr.mxu0 0.0
    %1665 = vmatpush1.msra.mxu0 %v1647
    %1666 = vmatprep.subr.mxu0 0.0
    %1667 = vmatpush1.msra.mxu0 %v1648
    %1668 = vmatprep.subr.mxu0 0.0
    %1669 = vmatpush1.msra.mxu0 %v1649
    %1670 = vmatprep.subr.mxu0 0.0
    %1671 = vmatpush1.msra.mxu0 0.0
    %1672 = vmatprep.subr.mxu0 0.0
    %1673 = vmatpush1.msra.mxu0 0.0
    %1674 = vmatprep.subr.mxu0 0.0
    %1675 = vmatpush1.msra.mxu0 0.0
    %1676 = vmatprep.subr.mxu0 0.0
    %1677 = vmatpush1.msra.mxu0 0.0
    %1678 = vmatprep.subr.mxu0 0.0
    %1679 = vmatpush1.msra.mxu0 0.0
    %1680 = vmatprep.subr.mxu0 0.0
    %1681 = vmatpush1.msra.mxu0 0.0
    %1682 = vmatprep.subr.mxu0 0.0
    %1683 = vmatpush1.msra.mxu0 0.0
    %1684 = vmatprep.subr.mxu0 0.0
    %1685 = vmatpush1.msra.mxu0 0.0
    %1686 = vmatprep.subr.mxu0 0.0
    %1687 = vmatpush1.msra.mxu0 0.0
    %1688 = vmatprep.subr.mxu0 0.0
    %1689 = vmatpush1.msra.mxu0 0.0
    %1690 = vmatprep.subr.mxu0 0.0
    %1691 = vmatpush1.msra.mxu0 0.0
    %1692 = vmatprep.subr.mxu0 0.0
    %1693 = vmatpush1.msra.mxu0 0.0
    %1694 = vmatprep.subr.mxu0 0.0
    %1695 = vmatpush1.msra.mxu0 0.0
    %1696 = vmatprep.subr.mxu0 0.0
    %1697 = vmatpush1.msra.mxu0 0.0
    %1698 = vmatprep.subr.mxu0 0.0
    %1699 = vmatpush1.msra.mxu0 0.0
    %1700 = vmatprep.subr.mxu0 0.0
    %1701 = vmatpush1.msra.mxu0 0.0
    %1702 = vmatprep.subr.mxu0 0.0
    %1703 = vmatpush1.msra.mxu0 0.0
    %1704 = vmatprep.subr.mxu0 0.0
    %1705 = vmatpush1.msra.mxu0 0.0
    %1706 = vmatprep.subr.mxu0 0.0
    %1707 = vmatpush1.msra.mxu0 0.0
    %1708 = vmatprep.subr.mxu0 0.0
    %1709 = vmatpush1.msra.mxu0 0.0
    %1710 = vmatprep.subr.mxu0 0.0
    %1711 = vmatpush1.msra.mxu0 0.0
    %1712 = vmatprep.subr.mxu0 0.0
    %1713 = vmatpush1.msra.mxu0 0.0
    %1714 = vmatprep.subr.mxu0 0.0
    %1715 = vmatpush1.msra.mxu0 0.0
    %1716 = vmatprep.subr.mxu0 0.0
    %1717 = vmatpush1.msra.mxu0 0.0
    %1718 = vmatprep.subr.mxu0 0.0
    %1719 = vmatpush1.msra.mxu0 0.0
    %1720 = vmatprep.subr.mxu0 0.0
    %1721 = vmatpush1.msra.mxu0 0.0
    %1722 = vmatprep.subr.mxu0 0.0
    %1723 = vmatpush1.msra.mxu0 0.0
    %1724 = vmatprep.subr.mxu0 0.0
    %1725 = vmatpush1.msra.mxu0 0.0
    %1726 = vmatprep.mubr.f32.mxu0 0.0
    %1727 = vmatmul.mubr.f32.gmra.mrb[0].mxu0 %v1660
    %v1728 = vpop.f32.mrb[0].mxu0
    %v1729 = vadd.f32 %v1655, %v1728
    %v1730 = vpop.f32.mrb[0].mxu0
    %1731 = vdwg.mxu0
    %s1732 = scalar_lea.vmem [#allocation14], 2
    %1733 = vst.msk [vmem:[%s1732] sm:$0x3] %vm916, %v1729
    %v1734 = vsub.f32 %v1729, %v956
    %v1735 = vmul.f32 %v1734, %v1734
    %v1736 = vadd.f32 %v920, %v1735
    %v1737 = vmul.f32 %v1319, 1.442695
    %v1738 = vpow.pop %v1737
    %1740 = vrot.lane.b32.xlu0 %v1319, 16
    %v1741 = vpop.permute.xlu0 %1740
    %v1743 = vsub.f32 %v1319, %v1741
    %v1744 = vmul.f32 %v1743, 0.5
    %1745 = vrot.lane.b32.xlu0 %v1319, 112
    %v1746 = vpop.permute.xlu0 %1745
    %v1748 = vsub.f32 %v1319, %v1746
    %v1749 = vmul.f32 %v1748, %v1748
    %1751 = vrot.lane.b32.xlu0 %v1749, 8
    %v1752 = vpop.permute.xlu0 %1751
    %v1754 = vadd.f32 %v1738, %v1752
    %v1755 = vsub.f32 0.0, %v1319
    %v1756 = vmul.f32 %v1755, 1.442695
    %v1757 = vpow.pop %v1756
    %v1758 = vmul.f32 %v1757, 0.5
    %1760 = vrot.lane.b32.xlu0 %v1758, 112
    %v1761 = vpop.permute.xlu0 %1760
    %v1763 = vmul.f32 %v1754, %v1761
    %1765 = vrot.lane.b32.xlu0 %v1763, 16
    %v1766 = vpop.permute.xlu0 %1765
    %v1768 = vadd.f32 %v1744, %v1766
    %v1769 = vsub.f32 %v1768, 0.5
    %v1770 = vadd.f32 %v954, %v1769
    %s1771 = scalar_lea.vmem [#allocation2], 4
    %v1772 = vld [vmem:[%s1771] sm:$0x3]
    %s1773 = scalar_lea.vmem [#allocation5], 4
    %v1774 = vld [vmem:[%s1773] sm:$0x3]
    %1776 = vrot.lane.b32.xlu0 %v1729, 16
    %v1777 = vpop.permute.xlu0 %1776
    %v1779 = vsel %vm146, %v1772, %v1777
    %v1780 = vld [vmem:[#allocation7] sm:$0xff]
    %v1781 = vld [vmem:[#allocation7 + $0x8] sm:$0xff]
    %v1782 = vld [vmem:[#allocation7 + $0x10] sm:$0xff]
    %v1783 = vld [vmem:[#allocation7 + $0x18] sm:$0xff]
    %v1784 = vld [vmem:[%s3] sm:$0x1]
    %v1785 = vmul.f32 %v1784, 0.2857143
    %v1786 = vlaneseq
    %v1787 = vshrl.u32 %v1786, 7
    %v1788 = vsub.s32 0, %v1787
    %v1789 = vrot.slane %v1785, %v1788
    %v1791 = vsel %vm158, %v1779, 0
    %1793 = vmatprep.subr.mxu0 0.0
    %1794 = vmatpush1.msra.mxu0 %v1780
    %1795 = vmatprep.subr.mxu0 0.0
    %1796 = vmatpush1.msra.mxu0 %v1781
    %1797 = vmatprep.subr.mxu0 0.0
    %1798 = vmatpush1.msra.mxu0 %v1782
    %1799 = vmatprep.subr.mxu0 0.0
    %1800 = vmatpush1.msra.mxu0 %v1783
    %1801 = vmatprep.subr.mxu0 0.0
    %1802 = vmatpush1.msra.mxu0 0.0
    %1803 = vmatprep.subr.mxu0 0.0
    %1804 = vmatpush1.msra.mxu0 0.0
    %1805 = vmatprep.subr.mxu0 0.0
    %1806 = vmatpush1.msra.mxu0 0.0
    %1807 = vmatprep.subr.mxu0 0.0
    %1808 = vmatpush1.msra.mxu0 0.0
    %1809 = vmatprep.subr.mxu0 0.0
    %1810 = vmatpush1.msra.mxu0 0.0
    %1811 = vmatprep.subr.mxu0 0.0
    %1812 = vmatpush1.msra.mxu0 0.0
    %1813 = vmatprep.subr.mxu0 0.0
    %1814 = vmatpush1.msra.mxu0 0.0
    %1815 = vmatprep.subr.mxu0 0.0
    %1816 = vmatpush1.msra.mxu0 0.0
    %1817 = vmatprep.subr.mxu0 0.0
    %1818 = vmatpush1.msra.mxu0 0.0
    %1819 = vmatprep.subr.mxu0 0.0
    %1820 = vmatpush1.msra.mxu0 0.0
    %1821 = vmatprep.subr.mxu0 0.0
    %1822 = vmatpush1.msra.mxu0 0.0
    %1823 = vmatprep.subr.mxu0 0.0
    %1824 = vmatpush1.msra.mxu0 0.0
    %1825 = vmatprep.subr.mxu0 0.0
    %1826 = vmatpush1.msra.mxu0 0.0
    %1827 = vmatprep.subr.mxu0 0.0
    %1828 = vmatpush1.msra.mxu0 0.0
    %1829 = vmatprep.subr.mxu0 0.0
    %1830 = vmatpush1.msra.mxu0 0.0
    %1831 = vmatprep.subr.mxu0 0.0
    %1832 = vmatpush1.msra.mxu0 0.0
    %1833 = vmatprep.subr.mxu0 0.0
    %1834 = vmatpush1.msra.mxu0 0.0
    %1835 = vmatprep.subr.mxu0 0.0
    %1836 = vmatpush1.msra.mxu0 0.0
    %1837 = vmatprep.subr.mxu0 0.0
    %1838 = vmatpush1.msra.mxu0 0.0
    %1839 = vmatprep.subr.mxu0 0.0
    %1840 = vmatpush1.msra.mxu0 0.0
    %1841 = vmatprep.subr.mxu0 0.0
    %1842 = vmatpush1.msra.mxu0 0.0
    %1843 = vmatprep.subr.mxu0 0.0
    %1844 = vmatpush1.msra.mxu0 0.0
    %1845 = vmatprep.subr.mxu0 0.0
    %1846 = vmatpush1.msra.mxu0 0.0
    %1847 = vmatprep.subr.mxu0 0.0
    %1848 = vmatpush1.msra.mxu0 0.0
    %1849 = vmatprep.subr.mxu0 0.0
    %1850 = vmatpush1.msra.mxu0 0.0
    %1851 = vmatprep.subr.mxu0 0.0
    %1852 = vmatpush1.msra.mxu0 0.0
    %1853 = vmatprep.subr.mxu0 0.0
    %1854 = vmatpush1.msra.mxu0 0.0
    %1855 = vmatprep.subr.mxu0 0.0
    %1856 = vmatpush1.msra.mxu0 0.0
    %1857 = vmatprep.mubr.f32.mxu0 0.0
    %1858 = vmatmul.mubr.f32.gmra.mrb[0].mxu0 %v1791
    %v1859 = vpop.f32.mrb[0].mxu0
    %v1860 = vadd.f32 %v1789, %v1859
    %v1861 = vpop.f32.mrb[0].mxu0
    %1862 = vdwg.mxu0
    %v1863 = vld [vmem:[%s3 + $0x1] sm:$0x1]
    %v1864 = vlaneseq
    %v1865 = vshrl.u32 %v1864, 7
    %v1866 = vsub.s32 0, %v1865
    %v1867 = vrot.slane %v1863, %v1866
    %v1868 = vadd.f32 %v1860, %v1867
    %1870 = vrot.lane.b32.xlu0 %v1868, 32
    %v1871 = vpop.permute.xlu0 %1870
    %1874 = vrot.lane.b32.xlu0 %v1228, 64
    %v1875 = vpop.permute.xlu0 %1874
    %v1877 = vsel %vm158, %v1868, %v1203
    %v1878 = vsel %vm243, %v1877, %v1871
    %v1879 = vsel %vm245, %v1878, %v1875
    %v1880 = vld [vmem:[#allocation8] sm:$0xff]
    %v1881 = vld [vmem:[#allocation8 + $0x8] sm:$0xff]
    %v1882 = vld [vmem:[#allocation8 + $0x10] sm:$0xff]
    %v1883 = vld [vmem:[#allocation8 + $0x18] sm:$0xff]
    %v1884 = vld [vmem:[#allocation8 + $0x20] sm:$0xff]
    %v1885 = vld [vmem:[#allocation8 + $0x28] sm:$0xff]
    %v1886 = vld [vmem:[#allocation8 + $0x30] sm:$0xff]
    %v1887 = vld [vmem:[#allocation8 + $0x38] sm:$0xff]
    %v1888 = vld [vmem:[#allocation8 + $0x40] sm:$0xff]
    %v1889 = vld [vmem:[#allocation8 + $0x48] sm:$0xff]
    %v1890 = vld [vmem:[#allocation8 + $0x50] sm:$0xff]
    %v1891 = vld [vmem:[#allocation8 + $0x58] sm:$0xff]
    %v1892 = vld [vmem:[#allocation8 + $0x60] sm:$0xff]
    %v1893 = vld [vmem:[#allocation8 + $0x68] sm:$0xff]
    %v1894 = vld [vmem:[#allocation8 + $0x70] sm:$0xff]
    %v1895 = vld [vmem:[#allocation8 + $0x78] sm:$0xff]
    %v1896 = vld [vmem:[#allocation8 + $0x80] sm:$0xff]
    %v1897 = vld [vmem:[#allocation8 + $0x88] sm:$0xff]
    %v1898 = vld [vmem:[#allocation8 + $0x90] sm:$0xff]
    %v1899 = vld [vmem:[#allocation8 + $0x98] sm:$0xff]
    %v1900 = vld [vmem:[#allocation8 + $0xa0] sm:$0xff]
    %v1901 = vld [vmem:[#allocation8 + $0xa8] sm:$0xff]
    %v1902 = vld [vmem:[#allocation8 + $0xb0] sm:$0xff]
    %v1903 = vld [vmem:[#allocation8 + $0xb8] sm:$0xff]
    %v1904 = vld [vmem:[#allocation8 + $0xc0] sm:$0xff]
    %v1905 = vld [vmem:[#allocation8 + $0xc8] sm:$0xff]
    %v1906 = vld [vmem:[#allocation8 + $0xd0] sm:$0xff]
    %v1907 = vld [vmem:[#allocation8 + $0xd8] sm:$0xff]
    %v1908 = vld [vmem:[#allocation8 + $0xe0] sm:$0xff]
    %v1909 = vld [vmem:[#allocation8 + $0xe8] sm:$0xff]
    %v1910 = vld [vmem:[#allocation8 + $0xf0] sm:$0xff]
    %v1911 = vld [vmem:[#allocation8 + $0xf8] sm:$0xff]
    %v1912 = vld [vmem:[#allocation10] sm:$0x3]
    %v1914 = vlaneseq
    %v1915 = vshrl.u32 %v1914, 7
    %v1916 = vsub.s32 0, %v1915
    %v1917 = vrot.slane %v1912, %v1916
    %v1918 = vlaneseq
    %v1919 = vshrl.u32 %v1918, 7
    %v1920 = vsub.s32 1, %v1919
    %v1921 = vrot.slane %v1912, %v1920
    %1924 = vmatprep.subr.mxu0 %v1881
    %1925 = vmatpush1.msra.mxu0 %v1880
    %1926 = vmatprep.subr.mxu0 %v1883
    %1927 = vmatpush1.msra.mxu0 %v1882
    %1928 = vmatprep.subr.mxu0 %v1885
    %1929 = vmatpush1.msra.mxu0 %v1884
    %1930 = vmatprep.subr.mxu0 %v1887
    %1931 = vmatpush1.msra.mxu0 %v1886
    %1932 = vmatprep.subr.mxu0 %v1889
    %1933 = vmatpush1.msra.mxu0 %v1888
    %1934 = vmatprep.subr.mxu0 %v1891
    %1935 = vmatpush1.msra.mxu0 %v1890
    %1936 = vmatprep.subr.mxu0 %v1893
    %1937 = vmatpush1.msra.mxu0 %v1892
    %1938 = vmatprep.subr.mxu0 %v1895
    %1939 = vmatpush1.msra.mxu0 %v1894
    %1940 = vmatprep.subr.mxu0 %v1897
    %1941 = vmatpush1.msra.mxu0 %v1896
    %1942 = vmatprep.subr.mxu0 %v1899
    %1943 = vmatpush1.msra.mxu0 %v1898
    %1944 = vmatprep.subr.mxu0 %v1901
    %1945 = vmatpush1.msra.mxu0 %v1900
    %1946 = vmatprep.subr.mxu0 %v1903
    %1947 = vmatpush1.msra.mxu0 %v1902
    %1948 = vmatprep.subr.mxu0 %v1905
    %1949 = vmatpush1.msra.mxu0 %v1904
    %1950 = vmatprep.subr.mxu0 %v1907
    %1951 = vmatpush1.msra.mxu0 %v1906
    %1952 = vmatprep.subr.mxu0 %v1909
    %1953 = vmatpush1.msra.mxu0 %v1908
    %1954 = vmatprep.subr.mxu0 %v1911
    %1955 = vmatpush1.msra.mxu0 %v1910
    %1956 = vmatprep.subr.mxu0 0.0
    %1957 = vmatpush1.msra.mxu0 0.0
    %1958 = vmatprep.subr.mxu0 0.0
    %1959 = vmatpush1.msra.mxu0 0.0
    %1960 = vmatprep.subr.mxu0 0.0
    %1961 = vmatpush1.msra.mxu0 0.0
    %1962 = vmatprep.subr.mxu0 0.0
    %1963 = vmatpush1.msra.mxu0 0.0
    %1964 = vmatprep.subr.mxu0 0.0
    %1965 = vmatpush1.msra.mxu0 0.0
    %1966 = vmatprep.subr.mxu0 0.0
    %1967 = vmatpush1.msra.mxu0 0.0
    %1968 = vmatprep.subr.mxu0 0.0
    %1969 = vmatpush1.msra.mxu0 0.0
    %1970 = vmatprep.subr.mxu0 0.0
    %1971 = vmatpush1.msra.mxu0 0.0
    %1972 = vmatprep.subr.mxu0 0.0
    %1973 = vmatpush1.msra.mxu0 0.0
    %1974 = vmatprep.subr.mxu0 0.0
    %1975 = vmatpush1.msra.mxu0 0.0
    %1976 = vmatprep.subr.mxu0 0.0
    %1977 = vmatpush1.msra.mxu0 0.0
    %1978 = vmatprep.subr.mxu0 0.0
    %1979 = vmatpush1.msra.mxu0 0.0
    %1980 = vmatprep.subr.mxu0 0.0
    %1981 = vmatpush1.msra.mxu0 0.0
    %1982 = vmatprep.subr.mxu0 0.0
    %1983 = vmatpush1.msra.mxu0 0.0
    %1984 = vmatprep.subr.mxu0 0.0
    %1985 = vmatpush1.msra.mxu0 0.0
    %1986 = vmatprep.subr.mxu0 0.0
    %1987 = vmatpush1.msra.mxu0 0.0
    %1988 = vmatprep.mubr.f32.mxu0 0.0
    %1989 = vmatmul.mubr.f32.gmra.mrb[0].mxu0 %v1879
    %v1990 = vpop.f32.mrb[0].mxu0
    %v1991 = vadd.f32 %v1917, %v1990
    %v1992 = vpop.f32.mrb[0].mxu0
    %v1993 = vadd.f32 %v1921, %v1992
    %1994 = vdwg.mxu0
    %v1995 = vxor.u32 %v1991, 2147483648
    %v1996 = vmul.f32 %v1995, 1.442695
    %v1997 = vpow.pop %v1996
    %v1998 = vadd.f32 %v1997, 1.0
    %v1999 = vrcp.pop %v1998
    %v2000 = vmul.f32 1.0, %v1999
    %2002 = vrot.lane.b32.xlu0 %v1991, 32
    %v2003 = vpop.permute.xlu0 %2002
    %v2005 = vmul.f32 %v2000, %v2003
    %2007 = vrot.lane.b32.xlu0 %v2005, 64
    %v2008 = vpop.permute.xlu0 %2007
    %v2010 = vadd.f32 %v1991, %v2008
    %v2011 = vtanh.pop %v2010
    %v2012 = vsub.f32 1.0, %v2000
    %2014 = vrot.lane.b32.xlu0 %v2011, 96
    %v2015 = vpop.permute.xlu0 %2014
    %v2017 = vmul.f32 %v2012, %v2015
    %v2018 = vmul.f32 %v2000, %v1203
    %v2019 = vadd.f32 %v2017, %v2018
    %v2020 = vxor.u32 %v1993, 2147483648
    %v2021 = vmul.f32 %v2020, 1.442695
    %v2022 = vpow.pop %v2021
    %v2023 = vadd.f32 %v2022, 1.0
    %v2024 = vrcp.pop %v2023
    %v2025 = vmul.f32 1.0, %v2024
    %2027 = vrot.lane.b32.xlu0 %v1993, 32
    %v2028 = vpop.permute.xlu0 %2027
    %v2030 = vmul.f32 %v2025, %v2028
    %2032 = vrot.lane.b32.xlu0 %v2030, 64
    %v2033 = vpop.permute.xlu0 %2032
    %v2035 = vadd.f32 %v1993, %v2033
    %v2036 = vtanh.pop %v2035
    %v2037 = vsub.f32 1.0, %v2025
    %2039 = vrot.lane.b32.xlu0 %v2036, 96
    %v2040 = vpop.permute.xlu0 %2039
    %v2042 = vmul.f32 %v2037, %v2040
    %v2043 = vmul.f32 %v2025, %v1228
    %v2044 = vadd.f32 %v2042, %v2043
    %2046 = vrot.lane.b32.xlu0 %v2019, 96
    %v2047 = vpop.permute.xlu0 %2046
    %v2049 = vsel %vm158, %v2047, %v2044
    %v2050 = vld [vmem:[%s6] sm:$0xff]
    %v2051 = vld [vmem:[%s6 + $0x8] sm:$0xff]
    %v2052 = vld [vmem:[%s6 + $0x10] sm:$0xff]
    %v2053 = vld [vmem:[%s6 + $0x18] sm:$0xff]
    %v2054 = vld [vmem:[%s6 + $0x20] sm:$0xff]
    %v2055 = vld [vmem:[%s6 + $0x28] sm:$0xff]
    %v2056 = vld [vmem:[%s6 + $0x30] sm:$0xff]
    %v2057 = vld [vmem:[%s6 + $0x38] sm:$0xff]
    %v2058 = vld [vmem:[#allocation11] sm:$0x1]
    %v2060 = vlaneseq
    %v2061 = vshrl.u32 %v2060, 7
    %v2062 = vsub.s32 0, %v2061
    %v2063 = vrot.slane %v2058, %v2062
    %v2066 = vsel %vm243, %v2049, 0
    %2068 = vmatprep.subr.mxu0 0.0
    %2069 = vmatpush1.msra.mxu0 %v2050
    %2070 = vmatprep.subr.mxu0 0.0
    %2071 = vmatpush1.msra.mxu0 %v2051
    %2072 = vmatprep.subr.mxu0 0.0
    %2073 = vmatpush1.msra.mxu0 %v2052
    %2074 = vmatprep.subr.mxu0 0.0
    %2075 = vmatpush1.msra.mxu0 %v2053
    %2076 = vmatprep.subr.mxu0 0.0
    %2077 = vmatpush1.msra.mxu0 %v2054
    %2078 = vmatprep.subr.mxu0 0.0
    %2079 = vmatpush1.msra.mxu0 %v2055
    %2080 = vmatprep.subr.mxu0 0.0
    %2081 = vmatpush1.msra.mxu0 %v2056
    %2082 = vmatprep.subr.mxu0 0.0
    %2083 = vmatpush1.msra.mxu0 %v2057
    %2084 = vmatprep.subr.mxu0 0.0
    %2085 = vmatpush1.msra.mxu0 0.0
    %2086 = vmatprep.subr.mxu0 0.0
    %2087 = vmatpush1.msra.mxu0 0.0
    %2088 = vmatprep.subr.mxu0 0.0
    %2089 = vmatpush1.msra.mxu0 0.0
    %2090 = vmatprep.subr.mxu0 0.0
    %2091 = vmatpush1.msra.mxu0 0.0
    %2092 = vmatprep.subr.mxu0 0.0
    %2093 = vmatpush1.msra.mxu0 0.0
    %2094 = vmatprep.subr.mxu0 0.0
    %2095 = vmatpush1.msra.mxu0 0.0
    %2096 = vmatprep.subr.mxu0 0.0
    %2097 = vmatpush1.msra.mxu0 0.0
    %2098 = vmatprep.subr.mxu0 0.0
    %2099 = vmatpush1.msra.mxu0 0.0
    %2100 = vmatprep.subr.mxu0 0.0
    %2101 = vmatpush1.msra.mxu0 0.0
    %2102 = vmatprep.subr.mxu0 0.0
    %2103 = vmatpush1.msra.mxu0 0.0
    %2104 = vmatprep.subr.mxu0 0.0
    %2105 = vmatpush1.msra.mxu0 0.0
    %2106 = vmatprep.subr.mxu0 0.0
    %2107 = vmatpush1.msra.mxu0 0.0
    %2108 = vmatprep.subr.mxu0 0.0
    %2109 = vmatpush1.msra.mxu0 0.0
    %2110 = vmatprep.subr.mxu0 0.0
    %2111 = vmatpush1.msra.mxu0 0.0
    %2112 = vmatprep.subr.mxu0 0.0
    %2113 = vmatpush1.msra.mxu0 0.0
    %2114 = vmatprep.subr.mxu0 0.0
    %2115 = vmatpush1.msra.mxu0 0.0
    %2116 = vmatprep.subr.mxu0 0.0
    %2117 = vmatpush1.msra.mxu0 0.0
    %2118 = vmatprep.subr.mxu0 0.0
    %2119 = vmatpush1.msra.mxu0 0.0
    %2120 = vmatprep.subr.mxu0 0.0
    %2121 = vmatpush1.msra.mxu0 0.0
    %2122 = vmatprep.subr.mxu0 0.0
    %2123 = vmatpush1.msra.mxu0 0.0
    %2124 = vmatprep.subr.mxu0 0.0
    %2125 = vmatpush1.msra.mxu0 0.0
    %2126 = vmatprep.subr.mxu0 0.0
    %2127 = vmatpush1.msra.mxu0 0.0
    %2128 = vmatprep.subr.mxu0 0.0
    %2129 = vmatpush1.msra.mxu0 0.0
    %2130 = vmatprep.subr.mxu0 0.0
    %2131 = vmatpush1.msra.mxu0 0.0
    %2132 = vmatprep.mubr.f32.mxu0 0.0
    %2133 = vmatmul.mubr.f32.gmra.mrb[0].mxu0 %v2066
    %v2134 = vpop.f32.mrb[0].mxu0
    %v2135 = vadd.f32 %v2063, %v2134
    %v2136 = vpop.f32.mrb[0].mxu0
    %2137 = vdwg.mxu0
    %v2138 = vmul.f32 %v2135, 0.5
    %v2139 = vmul.f32 %v2138, 1.442695
    %v2140 = vpow.pop %v2139
    %2142 = vrot.lane.b32.xlu0 %v2140, 120
    %v2143 = vpop.permute.xlu0 %2142
    %v2145 = vmul.f32 %v1774, %v2143
    %v2146 = vadd.f32 %v2145, %v2135
    %v2147 = vld [vmem:[#allocation13] sm:$0xff]
    %v2149 = vsel %vm515, %v2146, 0
    %2151 = vmatprep.subr.mxu0 0.0
    %2152 = vmatpush1.msra.mxu0 %v2147
    %2153 = vmatprep.subr.mxu0 0.0
    %2154 = vmatpush1.msra.mxu0 0.0
    %2155 = vmatprep.subr.mxu0 0.0
    %2156 = vmatpush1.msra.mxu0 0.0
    %2157 = vmatprep.subr.mxu0 0.0
    %2158 = vmatpush1.msra.mxu0 0.0
    %2159 = vmatprep.subr.mxu0 0.0
    %2160 = vmatpush1.msra.mxu0 0.0
    %2161 = vmatprep.subr.mxu0 0.0
    %2162 = vmatpush1.msra.mxu0 0.0
    %2163 = vmatprep.subr.mxu0 0.0
    %2164 = vmatpush1.msra.mxu0 0.0
    %2165 = vmatprep.subr.mxu0 0.0
    %2166 = vmatpush1.msra.mxu0 0.0
    %2167 = vmatprep.subr.mxu0 0.0
    %2168 = vmatpush1.msra.mxu0 0.0
    %2169 = vmatprep.subr.mxu0 0.0
    %2170 = vmatpush1.msra.mxu0 0.0
    %2171 = vmatprep.subr.mxu0 0.0
    %2172 = vmatpush1.msra.mxu0 0.0
    %2173 = vmatprep.subr.mxu0 0.0
    %2174 = vmatpush1.msra.mxu0 0.0
    %2175 = vmatprep.subr.mxu0 0.0
    %2176 = vmatpush1.msra.mxu0 0.0
    %2177 = vmatprep.subr.mxu0 0.0
    %2178 = vmatpush1.msra.mxu0 0.0
    %2179 = vmatprep.subr.mxu0 0.0
    %2180 = vmatpush1.msra.mxu0 0.0
    %2181 = vmatprep.subr.mxu0 0.0
    %2182 = vmatpush1.msra.mxu0 0.0
    %2183 = vmatprep.subr.mxu0 0.0
    %2184 = vmatpush1.msra.mxu0 0.0
    %2185 = vmatprep.subr.mxu0 0.0
    %2186 = vmatpush1.msra.mxu0 0.0
    %2187 = vmatprep.subr.mxu0 0.0
    %2188 = vmatpush1.msra.mxu0 0.0
    %2189 = vmatprep.subr.mxu0 0.0
    %2190 = vmatpush1.msra.mxu0 0.0
    %2191 = vmatprep.subr.mxu0 0.0
    %2192 = vmatpush1.msra.mxu0 0.0
    %2193 = vmatprep.subr.mxu0 0.0
    %2194 = vmatpush1.msra.mxu0 0.0
    %2195 = vmatprep.subr.mxu0 0.0
    %2196 = vmatpush1.msra.mxu0 0.0
    %2197 = vmatprep.subr.mxu0 0.0
    %2198 = vmatpush1.msra.mxu0 0.0
    %2199 = vmatprep.subr.mxu0 0.0
    %2200 = vmatpush1.msra.mxu0 0.0
    %2201 = vmatprep.subr.mxu0 0.0
    %2202 = vmatpush1.msra.mxu0 0.0
    %2203 = vmatprep.subr.mxu0 0.0
    %2204 = vmatpush1.msra.mxu0 0.0
    %2205 = vmatprep.subr.mxu0 0.0
    %2206 = vmatpush1.msra.mxu0 0.0
    %2207 = vmatprep.subr.mxu0 0.0
    %2208 = vmatpush1.msra.mxu0 0.0
    %2209 = vmatprep.subr.mxu0 0.0
    %2210 = vmatpush1.msra.mxu0 0.0
    %2211 = vmatprep.subr.mxu0 0.0
    %2212 = vmatpush1.msra.mxu0 0.0
    %2213 = vmatprep.subr.mxu0 0.0
    %2214 = vmatpush1.msra.mxu0 0.0
    %2215 = vmatprep.mubr.f32.mxu0 0.0
    %2216 = vmatmul.mubr.f32.gmra.mrb[0].mxu0 %v2149
    %v2217 = vpop.f32.mrb[0].mxu0
    %v2218 = vadd.f32 0.0, %v2217
    %v2219 = vpop.f32.mrb[0].mxu0
    %2220 = vdwg.mxu0
    %2222 = vrot.lane.b32.xlu0 %v2218, 64
    %v2223 = vpop.permute.xlu0 %2222
    %v2225 = vadd.f32 %v1868, %v2223
    %2227 = vrot.lane.b32.xlu0 %v2225, 64
    %v2228 = vpop.permute.xlu0 %2227
    %v2230 = vsel %vm158, %v2228, %v1527
    %v2231 = vld [vmem:[%s9] sm:$0xff]
    %v2232 = vld [vmem:[%s9 + $0x8] sm:$0xff]
    %v2233 = vld [vmem:[%s9 + $0x10] sm:$0xff]
    %v2234 = vld [vmem:[%s9 + $0x18] sm:$0xff]
    %v2235 = vld [vmem:[%s9 + $0x20] sm:$0xff]
    %v2236 = vld [vmem:[%s9 + $0x28] sm:$0xff]
    %v2237 = vld [vmem:[%s9 + $0x30] sm:$0xff]
    %v2238 = vld [vmem:[%s9 + $0x38] sm:$0xff]
    %v2239 = vld [vmem:[%s10] sm:$0x1]
    %v2241 = vlaneseq
    %v2242 = vshrl.u32 %v2241, 7
    %v2243 = vsub.s32 0, %v2242
    %v2244 = vrot.slane %v2239, %v2243
    %v2247 = vsel %vm243, %v2230, 0
    %2249 = vmatprep.subr.mxu0 0.0
    %2250 = vmatpush1.msra.mxu0 %v2231
    %2251 = vmatprep.subr.mxu0 0.0
    %2252 = vmatpush1.msra.mxu0 %v2232
    %2253 = vmatprep.subr.mxu0 0.0
    %2254 = vmatpush1.msra.mxu0 %v2233
    %2255 = vmatprep.subr.mxu0 0.0
    %2256 = vmatpush1.msra.mxu0 %v2234
    %2257 = vmatprep.subr.mxu0 0.0
    %2258 = vmatpush1.msra.mxu0 %v2235
    %2259 = vmatprep.subr.mxu0 0.0
    %2260 = vmatpush1.msra.mxu0 %v2236
    %2261 = vmatprep.subr.mxu0 0.0
    %2262 = vmatpush1.msra.mxu0 %v2237
    %2263 = vmatprep.subr.mxu0 0.0
    %2264 = vmatpush1.msra.mxu0 %v2238
    %2265 = vmatprep.subr.mxu0 0.0
    %2266 = vmatpush1.msra.mxu0 0.0
    %2267 = vmatprep.subr.mxu0 0.0
    %2268 = vmatpush1.msra.mxu0 0.0
    %2269 = vmatprep.subr.mxu0 0.0
    %2270 = vmatpush1.msra.mxu0 0.0
    %2271 = vmatprep.subr.mxu0 0.0
    %2272 = vmatpush1.msra.mxu0 0.0
    %2273 = vmatprep.subr.mxu0 0.0
    %2274 = vmatpush1.msra.mxu0 0.0
    %2275 = vmatprep.subr.mxu0 0.0
    %2276 = vmatpush1.msra.mxu0 0.0
    %2277 = vmatprep.subr.mxu0 0.0
    %2278 = vmatpush1.msra.mxu0 0.0
    %2279 = vmatprep.subr.mxu0 0.0
    %2280 = vmatpush1.msra.mxu0 0.0
    %2281 = vmatprep.subr.mxu0 0.0
    %2282 = vmatpush1.msra.mxu0 0.0
    %2283 = vmatprep.subr.mxu0 0.0
    %2284 = vmatpush1.msra.mxu0 0.0
    %2285 = vmatprep.subr.mxu0 0.0
    %2286 = vmatpush1.msra.mxu0 0.0
    %2287 = vmatprep.subr.mxu0 0.0
    %2288 = vmatpush1.msra.mxu0 0.0
    %2289 = vmatprep.subr.mxu0 0.0
    %2290 = vmatpush1.msra.mxu0 0.0
    %2291 = vmatprep.subr.mxu0 0.0
    %2292 = vmatpush1.msra.mxu0 0.0
    %2293 = vmatprep.subr.mxu0 0.0
    %2294 = vmatpush1.msra.mxu0 0.0
    %2295 = vmatprep.subr.mxu0 0.0
    %2296 = vmatpush1.msra.mxu0 0.0
    %2297 = vmatprep.subr.mxu0 0.0
    %2298 = vmatpush1.msra.mxu0 0.0
    %2299 = vmatprep.subr.mxu0 0.0
    %2300 = vmatpush1.msra.mxu0 0.0
    %2301 = vmatprep.subr.mxu0 0.0
    %2302 = vmatpush1.msra.mxu0 0.0
    %2303 = vmatprep.subr.mxu0 0.0
    %2304 = vmatpush1.msra.mxu0 0.0
    %2305 = vmatprep.subr.mxu0 0.0
    %2306 = vmatpush1.msra.mxu0 0.0
    %2307 = vmatprep.subr.mxu0 0.0
    %2308 = vmatpush1.msra.mxu0 0.0
    %2309 = vmatprep.subr.mxu0 0.0
    %2310 = vmatpush1.msra.mxu0 0.0
    %2311 = vmatprep.subr.mxu0 0.0
    %2312 = vmatpush1.msra.mxu0 0.0
    %2313 = vmatprep.mubr.f32.mxu0 0.0
    %2314 = vmatmul.mubr.f32.gmra.mrb[0].mxu0 %v2247
    %v2315 = vpop.f32.mrb[0].mxu0
    %v2316 = vadd.f32 %v2244, %v2315
    %v2317 = vpop.f32.mrb[0].mxu0
    %2318 = vdwg.mxu0
    %v2319 = vxor.u32 %v2316, 2147483648
    %v2320 = vmul.f32 %v2319, 1.442695
    %v2321 = vpow.pop %v2320
    %v2322 = vadd.f32 %v2321, 1.0
    %v2323 = vrcp.pop %v2322
    %v2324 = vmul.f32 1.0, %v2323
    %2326 = vrot.lane.b32.xlu0 %v2316, 32
    %v2327 = vpop.permute.xlu0 %2326
    %v2329 = vmul.f32 %v2324, %v2327
    %2331 = vrot.lane.b32.xlu0 %v2329, 64
    %v2332 = vpop.permute.xlu0 %2331
    %v2334 = vadd.f32 %v2316, %v2332
    %v2335 = vtanh.pop %v2334
    %v2336 = vsub.f32 1.0, %v2324
    %2338 = vrot.lane.b32.xlu0 %v2335, 96
    %v2339 = vpop.permute.xlu0 %2338
    %v2341 = vmul.f32 %v2336, %v2339
    %v2342 = vmul.f32 %v2324, %v1527
    %v2343 = vadd.f32 %v2341, %v2342
    %2345 = vrot.lane.b32.xlu0 %v2343, 96
    %v2346 = vpop.permute.xlu0 %2345
    %v2348 = vsel %vm158, %v2346, %v1645
    %v2349 = vld [vmem:[%s11] sm:$0xff]
    %v2350 = vld [vmem:[%s11 + $0x8] sm:$0xff]
    %v2351 = vld [vmem:[%s11 + $0x10] sm:$0xff]
    %v2352 = vld [vmem:[%s11 + $0x18] sm:$0xff]
    %v2353 = vld [vmem:[%s11 + $0x20] sm:$0xff]
    %v2354 = vld [vmem:[%s11 + $0x28] sm:$0xff]
    %v2355 = vld [vmem:[%s11 + $0x30] sm:$0xff]
    %v2356 = vld [vmem:[%s11 + $0x38] sm:$0xff]
    %v2357 = vld [vmem:[%s12] sm:$0x1]
    %v2359 = vlaneseq
    %v2360 = vshrl.u32 %v2359, 7
    %v2361 = vsub.s32 0, %v2360
    %v2362 = vrot.slane %v2357, %v2361
    %v2365 = vsel %vm243, %v2348, 0
    %2367 = vmatprep.subr.mxu0 0.0
    %2368 = vmatpush1.msra.mxu0 %v2349
    %2369 = vmatprep.subr.mxu0 0.0
    %2370 = vmatpush1.msra.mxu0 %v2350
    %2371 = vmatprep.subr.mxu0 0.0
    %2372 = vmatpush1.msra.mxu0 %v2351
    %2373 = vmatprep.subr.mxu0 0.0
    %2374 = vmatpush1.msra.mxu0 %v2352
    %2375 = vmatprep.subr.mxu0 0.0
    %2376 = vmatpush1.msra.mxu0 %v2353
    %2377 = vmatprep.subr.mxu0 0.0
    %2378 = vmatpush1.msra.mxu0 %v2354
    %2379 = vmatprep.subr.mxu0 0.0
    %2380 = vmatpush1.msra.mxu0 %v2355
    %2381 = vmatprep.subr.mxu0 0.0
    %2382 = vmatpush1.msra.mxu0 %v2356
    %2383 = vmatprep.subr.mxu0 0.0
    %2384 = vmatpush1.msra.mxu0 0.0
    %2385 = vmatprep.subr.mxu0 0.0
    %2386 = vmatpush1.msra.mxu0 0.0
    %2387 = vmatprep.subr.mxu0 0.0
    %2388 = vmatpush1.msra.mxu0 0.0
    %2389 = vmatprep.subr.mxu0 0.0
    %2390 = vmatpush1.msra.mxu0 0.0
    %2391 = vmatprep.subr.mxu0 0.0
    %2392 = vmatpush1.msra.mxu0 0.0
    %2393 = vmatprep.subr.mxu0 0.0
    %2394 = vmatpush1.msra.mxu0 0.0
    %2395 = vmatprep.subr.mxu0 0.0
    %2396 = vmatpush1.msra.mxu0 0.0
    %2397 = vmatprep.subr.mxu0 0.0
    %2398 = vmatpush1.msra.mxu0 0.0
    %2399 = vmatprep.subr.mxu0 0.0
    %2400 = vmatpush1.msra.mxu0 0.0
    %2401 = vmatprep.subr.mxu0 0.0
    %2402 = vmatpush1.msra.mxu0 0.0
    %2403 = vmatprep.subr.mxu0 0.0
    %2404 = vmatpush1.msra.mxu0 0.0
    %2405 = vmatprep.subr.mxu0 0.0
    %2406 = vmatpush1.msra.mxu0 0.0
    %2407 = vmatprep.subr.mxu0 0.0
    %2408 = vmatpush1.msra.mxu0 0.0
    %2409 = vmatprep.subr.mxu0 0.0
    %2410 = vmatpush1.msra.mxu0 0.0
    %2411 = vmatprep.subr.mxu0 0.0
    %2412 = vmatpush1.msra.mxu0 0.0
    %2413 = vmatprep.subr.mxu0 0.0
    %2414 = vmatpush1.msra.mxu0 0.0
    %2415 = vmatprep.subr.mxu0 0.0
    %2416 = vmatpush1.msra.mxu0 0.0
    %2417 = vmatprep.subr.mxu0 0.0
    %2418 = vmatpush1.msra.mxu0 0.0
    %2419 = vmatprep.subr.mxu0 0.0
    %2420 = vmatpush1.msra.mxu0 0.0
    %2421 = vmatprep.subr.mxu0 0.0
    %2422 = vmatpush1.msra.mxu0 0.0
    %2423 = vmatprep.subr.mxu0 0.0
    %2424 = vmatpush1.msra.mxu0 0.0
    %2425 = vmatprep.subr.mxu0 0.0
    %2426 = vmatpush1.msra.mxu0 0.0
    %2427 = vmatprep.subr.mxu0 0.0
    %2428 = vmatpush1.msra.mxu0 0.0
    %2429 = vmatprep.subr.mxu0 0.0
    %2430 = vmatpush1.msra.mxu0 0.0
    %2431 = vmatprep.mubr.f32.mxu0 0.0
    %2432 = vmatmul.mubr.f32.gmra.mrb[0].mxu0 %v2365
    %v2433 = vpop.f32.mrb[0].mxu0
    %v2434 = vadd.f32 %v2362, %v2433
    %v2435 = vpop.f32.mrb[0].mxu0
    %2436 = vdwg.mxu0
    %v2437 = vxor.u32 %v2434, 2147483648
    %v2438 = vmul.f32 %v2437, 1.442695
    %v2439 = vpow.pop %v2438
    %v2440 = vadd.f32 %v2439, 1.0
    %v2441 = vrcp.pop %v2440
    %v2442 = vmul.f32 1.0, %v2441
    %2444 = vrot.lane.b32.xlu0 %v2434, 32
    %v2445 = vpop.permute.xlu0 %2444
    %v2447 = vmul.f32 %v2442, %v2445
    %2449 = vrot.lane.b32.xlu0 %v2447, 64
    %v2450 = vpop.permute.xlu0 %2449
    %v2452 = vadd.f32 %v2434, %v2450
    %v2453 = vtanh.pop %v2452
    %v2454 = vsub.f32 1.0, %v2442
    %2456 = vrot.lane.b32.xlu0 %v2453, 96
    %v2457 = vpop.permute.xlu0 %2456
    %v2459 = vmul.f32 %v2454, %v2457
    %v2460 = vmul.f32 %v2442, %v1645
    %v2461 = vadd.f32 %v2459, %v2460
    %v2462 = vld [vmem:[%s13] sm:$0xff]
    %v2463 = vld [vmem:[%s13 + $0x8] sm:$0xff]
    %v2464 = vld [vmem:[%s13 + $0x10] sm:$0xff]
    %v2465 = vld [vmem:[%s13 + $0x18] sm:$0xff]
    %v2466 = vld [vmem:[%s14] sm:$0x1]
    %v2468 = vlaneseq
    %v2469 = vshrl.u32 %v2468, 7
    %v2470 = vsub.s32 0, %v2469
    %v2471 = vrot.slane %v2466, %v2470
    %2474 = vrot.lane.b32.xlu0 %v2461, 96
    %v2475 = vpop.permute.xlu0 %2474
    %v2476 = vsel %vm158, %v2475, 0
    %2478 = vmatprep.subr.mxu0 0.0
    %2479 = vmatpush1.msra.mxu0 %v2462
    %2480 = vmatprep.subr.mxu0 0.0
    %2481 = vmatpush1.msra.mxu0 %v2463
    %2482 = vmatprep.subr.mxu0 0.0
    %2483 = vmatpush1.msra.mxu0 %v2464
    %2484 = vmatprep.subr.mxu0 0.0
    %2485 = vmatpush1.msra.mxu0 %v2465
    %2486 = vmatprep.subr.mxu0 0.0
    %2487 = vmatpush1.msra.mxu0 0.0
    %2488 = vmatprep.subr.mxu0 0.0
    %2489 = vmatpush1.msra.mxu0 0.0
    %2490 = vmatprep.subr.mxu0 0.0
    %2491 = vmatpush1.msra.mxu0 0.0
    %2492 = vmatprep.subr.mxu0 0.0
    %2493 = vmatpush1.msra.mxu0 0.0
    %2494 = vmatprep.subr.mxu0 0.0
    %2495 = vmatpush1.msra.mxu0 0.0
    %2496 = vmatprep.subr.mxu0 0.0
    %2497 = vmatpush1.msra.mxu0 0.0
    %2498 = vmatprep.subr.mxu0 0.0
    %2499 = vmatpush1.msra.mxu0 0.0
    %2500 = vmatprep.subr.mxu0 0.0
    %2501 = vmatpush1.msra.mxu0 0.0
    %2502 = vmatprep.subr.mxu0 0.0
    %2503 = vmatpush1.msra.mxu0 0.0
    %2504 = vmatprep.subr.mxu0 0.0
    %2505 = vmatpush1.msra.mxu0 0.0
    %2506 = vmatprep.subr.mxu0 0.0
    %2507 = vmatpush1.msra.mxu0 0.0
    %2508 = vmatprep.subr.mxu0 0.0
    %2509 = vmatpush1.msra.mxu0 0.0
    %2510 = vmatprep.subr.mxu0 0.0
    %2511 = vmatpush1.msra.mxu0 0.0
    %2512 = vmatprep.subr.mxu0 0.0
    %2513 = vmatpush1.msra.mxu0 0.0
    %2514 = vmatprep.subr.mxu0 0.0
    %2515 = vmatpush1.msra.mxu0 0.0
    %2516 = vmatprep.subr.mxu0 0.0
    %2517 = vmatpush1.msra.mxu0 0.0
    %2518 = vmatprep.subr.mxu0 0.0
    %2519 = vmatpush1.msra.mxu0 0.0
    %2520 = vmatprep.subr.mxu0 0.0
    %2521 = vmatpush1.msra.mxu0 0.0
    %2522 = vmatprep.subr.mxu0 0.0
    %2523 = vmatpush1.msra.mxu0 0.0
    %2524 = vmatprep.subr.mxu0 0.0
    %2525 = vmatpush1.msra.mxu0 0.0
    %2526 = vmatprep.subr.mxu0 0.0
    %2527 = vmatpush1.msra.mxu0 0.0
    %2528 = vmatprep.subr.mxu0 0.0
    %2529 = vmatpush1.msra.mxu0 0.0
    %2530 = vmatprep.subr.mxu0 0.0
    %2531 = vmatpush1.msra.mxu0 0.0
    %2532 = vmatprep.subr.mxu0 0.0
    %2533 = vmatpush1.msra.mxu0 0.0
    %2534 = vmatprep.subr.mxu0 0.0
    %2535 = vmatpush1.msra.mxu0 0.0
    %2536 = vmatprep.subr.mxu0 0.0
    %2537 = vmatpush1.msra.mxu0 0.0
    %2538 = vmatprep.subr.mxu0 0.0
    %2539 = vmatpush1.msra.mxu0 0.0
    %2540 = vmatprep.subr.mxu0 0.0
    %2541 = vmatpush1.msra.mxu0 0.0
    %2542 = vmatprep.mubr.f32.mxu0 0.0
    %2543 = vmatmul.mubr.f32.gmra.mrb[0].mxu0 %v2476
    %v2544 = vpop.f32.mrb[0].mxu0
    %v2545 = vadd.f32 %v2471, %v2544
    %v2546 = vpop.f32.mrb[0].mxu0
    %2547 = vdwg.mxu0
    %s2548 = scalar_lea.vmem [#allocation14], 4
    %2549 = vst.msk [vmem:[%s2548] sm:$0x3] %vm916, %v2545
    %v2550 = vsub.f32 %v2545, %v1772
    %v2551 = vmul.f32 %v2550, %v2550
    %v2552 = vadd.f32 %v1736, %v2551
    %v2553 = vmul.f32 %v2135, 1.442695
    %v2554 = vpow.pop %v2553
    %2556 = vrot.lane.b32.xlu0 %v2135, 16
    %v2557 = vpop.permute.xlu0 %2556
    %v2559 = vsub.f32 %v2135, %v2557
    %v2560 = vmul.f32 %v2559, 0.5
    %2561 = vrot.lane.b32.xlu0 %v2135, 112
    %v2562 = vpop.permute.xlu0 %2561
    %v2564 = vsub.f32 %v2135, %v2562
    %v2565 = vmul.f32 %v2564, %v2564
    %2567 = vrot.lane.b32.xlu0 %v2565, 8
    %v2568 = vpop.permute.xlu0 %2567
    %v2570 = vadd.f32 %v2554, %v2568
    %v2571 = vsub.f32 0.0, %v2135
    %v2572 = vmul.f32 %v2571, 1.442695
    %v2573 = vpow.pop %v2572
    %v2574 = vmul.f32 %v2573, 0.5
    %2576 = vrot.lane.b32.xlu0 %v2574, 112
    %v2577 = vpop.permute.xlu0 %2576
    %v2579 = vmul.f32 %v2570, %v2577
    %2581 = vrot.lane.b32.xlu0 %v2579, 16
    %v2582 = vpop.permute.xlu0 %2581
    %v2584 = vadd.f32 %v2560, %v2582
    %v2585 = vsub.f32 %v2584, 0.5
    %v2586 = vadd.f32 %v1770, %v2585
    %s2587 = scalar_lea.vmem [#allocation2], 6
    %v2588 = vld [vmem:[%s2587] sm:$0x3]
    %s2589 = scalar_lea.vmem [#allocation5], 6
    %v2590 = vld [vmem:[%s2589] sm:$0x3]
    %2592 = vrot.lane.b32.xlu0 %v2545, 16
    %v2593 = vpop.permute.xlu0 %2592
    %v2595 = vsel %vm146, %v2588, %v2593
    %v2596 = vld [vmem:[#allocation7] sm:$0xff]
    %v2597 = vld [vmem:[#allocation7 + $0x8] sm:$0xff]
    %v2598 = vld [vmem:[#allocation7 + $0x10] sm:$0xff]
    %v2599 = vld [vmem:[#allocation7 + $0x18] sm:$0xff]
    %v2600 = vld [vmem:[%s3] sm:$0x1]
    %v2601 = vmul.f32 %v2600, 0.42857146
    %v2602 = vlaneseq
    %v2603 = vshrl.u32 %v2602, 7
    %v2604 = vsub.s32 0, %v2603
    %v2605 = vrot.slane %v2601, %v2604
    %v2607 = vsel %vm158, %v2595, 0
    %2609 = vmatprep.subr.mxu0 0.0
    %2610 = vmatpush1.msra.mxu0 %v2596
    %2611 = vmatprep.subr.mxu0 0.0
    %2612 = vmatpush1.msra.mxu0 %v2597
    %2613 = vmatprep.subr.mxu0 0.0
    %2614 = vmatpush1.msra.mxu0 %v2598
    %2615 = vmatprep.subr.mxu0 0.0
    %2616 = vmatpush1.msra.mxu0 %v2599
    %2617 = vmatprep.subr.mxu0 0.0
    %2618 = vmatpush1.msra.mxu0 0.0
    %2619 = vmatprep.subr.mxu0 0.0
    %2620 = vmatpush1.msra.mxu0 0.0
    %2621 = vmatprep.subr.mxu0 0.0
    %2622 = vmatpush1.msra.mxu0 0.0
    %2623 = vmatprep.subr.mxu0 0.0
    %2624 = vmatpush1.msra.mxu0 0.0
    %2625 = vmatprep.subr.mxu0 0.0
    %2626 = vmatpush1.msra.mxu0 0.0
    %2627 = vmatprep.subr.mxu0 0.0
    %2628 = vmatpush1.msra.mxu0 0.0
    %2629 = vmatprep.subr.mxu0 0.0
    %2630 = vmatpush1.msra.mxu0 0.0
    %2631 = vmatprep.subr.mxu0 0.0
    %2632 = vmatpush1.msra.mxu0 0.0
    %2633 = vmatprep.subr.mxu0 0.0
    %2634 = vmatpush1.msra.mxu0 0.0
    %2635 = vmatprep.subr.mxu0 0.0
    %2636 = vmatpush1.msra.mxu0 0.0
    %2637 = vmatprep.subr.mxu0 0.0
    %2638 = vmatpush1.msra.mxu0 0.0
    %2639 = vmatprep.subr.mxu0 0.0
    %2640 = vmatpush1.msra.mxu0 0.0
    %2641 = vmatprep.subr.mxu0 0.0
    %2642 = vmatpush1.msra.mxu0 0.0
    %2643 = vmatprep.subr.mxu0 0.0
    %2644 = vmatpush1.msra.mxu0 0.0
    %2645 = vmatprep.subr.mxu0 0.0
    %2646 = vmatpush1.msra.mxu0 0.0
    %2647 = vmatprep.subr.mxu0 0.0
    %2648 = vmatpush1.msra.mxu0 0.0
    %2649 = vmatprep.subr.mxu0 0.0
    %2650 = vmatpush1.msra.mxu0 0.0
    %2651 = vmatprep.subr.mxu0 0.0
    %2652 = vmatpush1.msra.mxu0 0.0
    %2653 = vmatprep.subr.mxu0 0.0
    %2654 = vmatpush1.msra.mxu0 0.0
    %2655 = vmatprep.subr.mxu0 0.0
    %2656 = vmatpush1.msra.mxu0 0.0
    %2657 = vmatprep.subr.mxu0 0.0
    %2658 = vmatpush1.msra.mxu0 0.0
    %2659 = vmatprep.subr.mxu0 0.0
    %2660 = vmatpush1.msra.mxu0 0.0
    %2661 = vmatprep.subr.mxu0 0.0
    %2662 = vmatpush1.msra.mxu0 0.0
    %2663 = vmatprep.subr.mxu0 0.0
    %2664 = vmatpush1.msra.mxu0 0.0
    %2665 = vmatprep.subr.mxu0 0.0
    %2666 = vmatpush1.msra.mxu0 0.0
    %2667 = vmatprep.subr.mxu0 0.0
    %2668 = vmatpush1.msra.mxu0 0.0
    %2669 = vmatprep.subr.mxu0 0.0
    %2670 = vmatpush1.msra.mxu0 0.0
    %2671 = vmatprep.subr.mxu0 0.0
    %2672 = vmatpush1.msra.mxu0 0.0
    %2673 = vmatprep.mubr.f32.mxu0 0.0
    %2674 = vmatmul.mubr.f32.gmra.mrb[0].mxu0 %v2607
    %v2675 = vpop.f32.mrb[0].mxu0
    %v2676 = vadd.f32 %v2605, %v2675
    %v2677 = vpop.f32.mrb[0].mxu0
    %2678 = vdwg.mxu0
    %v2679 = vld [vmem:[%s3 + $0x1] sm:$0x1]
    %v2680 = vlaneseq
    %v2681 = vshrl.u32 %v2680, 7
    %v2682 = vsub.s32 0, %v2681
    %v2683 = vrot.slane %v2679, %v2682
    %v2684 = vadd.f32 %v2676, %v2683
    %2686 = vrot.lane.b32.xlu0 %v2684, 32
    %v2687 = vpop.permute.xlu0 %2686
    %2690 = vrot.lane.b32.xlu0 %v2044, 64
    %v2691 = vpop.permute.xlu0 %2690
    %v2693 = vsel %vm158, %v2684, %v2019
    %v2694 = vsel %vm243, %v2693, %v2687
    %v2695 = vsel %vm245, %v2694, %v2691
    %v2696 = vld [vmem:[#allocation8] sm:$0xff]
    %v2697 = vld [vmem:[#allocation8 + $0x8] sm:$0xff]
    %v2698 = vld [vmem:[#allocation8 + $0x10] sm:$0xff]
    %v2699 = vld [vmem:[#allocation8 + $0x18] sm:$0xff]
    %v2700 = vld [vmem:[#allocation8 + $0x20] sm:$0xff]
    %v2701 = vld [vmem:[#allocation8 + $0x28] sm:$0xff]
    %v2702 = vld [vmem:[#allocation8 + $0x30] sm:$0xff]
    %v2703 = vld [vmem:[#allocation8 + $0x38] sm:$0xff]
    %v2704 = vld [vmem:[#allocation8 + $0x40] sm:$0xff]
    %v2705 = vld [vmem:[#allocation8 + $0x48] sm:$0xff]
    %v2706 = vld [vmem:[#allocation8 + $0x50] sm:$0xff]
    %v2707 = vld [vmem:[#allocation8 + $0x58] sm:$0xff]
    %v2708 = vld [vmem:[#allocation8 + $0x60] sm:$0xff]
    %v2709 = vld [vmem:[#allocation8 + $0x68] sm:$0xff]
    %v2710 = vld [vmem:[#allocation8 + $0x70] sm:$0xff]
    %v2711 = vld [vmem:[#allocation8 + $0x78] sm:$0xff]
    %v2712 = vld [vmem:[#allocation8 + $0x80] sm:$0xff]
    %v2713 = vld [vmem:[#allocation8 + $0x88] sm:$0xff]
    %v2714 = vld [vmem:[#allocation8 + $0x90] sm:$0xff]
    %v2715 = vld [vmem:[#allocation8 + $0x98] sm:$0xff]
    %v2716 = vld [vmem:[#allocation8 + $0xa0] sm:$0xff]
    %v2717 = vld [vmem:[#allocation8 + $0xa8] sm:$0xff]
    %v2718 = vld [vmem:[#allocation8 + $0xb0] sm:$0xff]
    %v2719 = vld [vmem:[#allocation8 + $0xb8] sm:$0xff]
    %v2720 = vld [vmem:[#allocation8 + $0xc0] sm:$0xff]
    %v2721 = vld [vmem:[#allocation8 + $0xc8] sm:$0xff]
    %v2722 = vld [vmem:[#allocation8 + $0xd0] sm:$0xff]
    %v2723 = vld [vmem:[#allocation8 + $0xd8] sm:$0xff]
    %v2724 = vld [vmem:[#allocation8 + $0xe0] sm:$0xff]
    %v2725 = vld [vmem:[#allocation8 + $0xe8] sm:$0xff]
    %v2726 = vld [vmem:[#allocation8 + $0xf0] sm:$0xff]
    %v2727 = vld [vmem:[#allocation8 + $0xf8] sm:$0xff]
    %v2728 = vld [vmem:[#allocation10] sm:$0x3]
    %v2730 = vlaneseq
    %v2731 = vshrl.u32 %v2730, 7
    %v2732 = vsub.s32 0, %v2731
    %v2733 = vrot.slane %v2728, %v2732
    %v2734 = vlaneseq
    %v2735 = vshrl.u32 %v2734, 7
    %v2736 = vsub.s32 1, %v2735
    %v2737 = vrot.slane %v2728, %v2736
    %2740 = vmatprep.subr.mxu0 %v2697
    %2741 = vmatpush1.msra.mxu0 %v2696
    %2742 = vmatprep.subr.mxu0 %v2699
    %2743 = vmatpush1.msra.mxu0 %v2698
    %2744 = vmatprep.subr.mxu0 %v2701
    %2745 = vmatpush1.msra.mxu0 %v2700
    %2746 = vmatprep.subr.mxu0 %v2703
    %2747 = vmatpush1.msra.mxu0 %v2702
    %2748 = vmatprep.subr.mxu0 %v2705
    %2749 = vmatpush1.msra.mxu0 %v2704
    %2750 = vmatprep.subr.mxu0 %v2707
    %2751 = vmatpush1.msra.mxu0 %v2706
    %2752 = vmatprep.subr.mxu0 %v2709
    %2753 = vmatpush1.msra.mxu0 %v2708
    %2754 = vmatprep.subr.mxu0 %v2711
    %2755 = vmatpush1.msra.mxu0 %v2710
    %2756 = vmatprep.subr.mxu0 %v2713
    %2757 = vmatpush1.msra.mxu0 %v2712
    %2758 = vmatprep.subr.mxu0 %v2715
    %2759 = vmatpush1.msra.mxu0 %v2714
    %2760 = vmatprep.subr.mxu0 %v2717
    %2761 = vmatpush1.msra.mxu0 %v2716
    %2762 = vmatprep.subr.mxu0 %v2719
    %2763 = vmatpush1.msra.mxu0 %v2718
    %2764 = vmatprep.subr.mxu0 %v2721
    %2765 = vmatpush1.msra.mxu0 %v2720
    %2766 = vmatprep.subr.mxu0 %v2723
    %2767 = vmatpush1.msra.mxu0 %v2722
    %2768 = vmatprep.subr.mxu0 %v2725
    %2769 = vmatpush1.msra.mxu0 %v2724
    %2770 = vmatprep.subr.mxu0 %v2727
    %2771 = vmatpush1.msra.mxu0 %v2726
    %2772 = vmatprep.subr.mxu0 0.0
    %2773 = vmatpush1.msra.mxu0 0.0
    %2774 = vmatprep.subr.mxu0 0.0
    %2775 = vmatpush1.msra.mxu0 0.0
    %2776 = vmatprep.subr.mxu0 0.0
    %2777 = vmatpush1.msra.mxu0 0.0
    %2778 = vmatprep.subr.mxu0 0.0
    %2779 = vmatpush1.msra.mxu0 0.0
    %2780 = vmatprep.subr.mxu0 0.0
    %2781 = vmatpush1.msra.mxu0 0.0
    %2782 = vmatprep.subr.mxu0 0.0
    %2783 = vmatpush1.msra.mxu0 0.0
    %2784 = vmatprep.subr.mxu0 0.0
    %2785 = vmatpush1.msra.mxu0 0.0
    %2786 = vmatprep.subr.mxu0 0.0
    %2787 = vmatpush1.msra.mxu0 0.0
    %2788 = vmatprep.subr.mxu0 0.0
    %2789 = vmatpush1.msra.mxu0 0.0
    %2790 = vmatprep.subr.mxu0 0.0
    %2791 = vmatpush1.msra.mxu0 0.0
    %2792 = vmatprep.subr.mxu0 0.0
    %2793 = vmatpush1.msra.mxu0 0.0
    %2794 = vmatprep.subr.mxu0 0.0
    %2795 = vmatpush1.msra.mxu0 0.0
    %2796 = vmatprep.subr.mxu0 0.0
    %2797 = vmatpush1.msra.mxu0 0.0
    %2798 = vmatprep.subr.mxu0 0.0
    %2799 = vmatpush1.msra.mxu0 0.0
    %2800 = vmatprep.subr.mxu0 0.0
    %2801 = vmatpush1.msra.mxu0 0.0
    %2802 = vmatprep.subr.mxu0 0.0
    %2803 = vmatpush1.msra.mxu0 0.0
    %2804 = vmatprep.mubr.f32.mxu0 0.0
    %2805 = vmatmul.mubr.f32.gmra.mrb[0].mxu0 %v2695
    %v2806 = vpop.f32.mrb[0].mxu0
    %v2807 = vadd.f32 %v2733, %v2806
    %v2808 = vpop.f32.mrb[0].mxu0
    %v2809 = vadd.f32 %v2737, %v2808
    %2810 = vdwg.mxu0
    %v2811 = vxor.u32 %v2807, 2147483648
    %v2812 = vmul.f32 %v2811, 1.442695
    %v2813 = vpow.pop %v2812
    %v2814 = vadd.f32 %v2813, 1.0
    %v2815 = vrcp.pop %v2814
    %v2816 = vmul.f32 1.0, %v2815
    %2818 = vrot.lane.b32.xlu0 %v2807, 32
    %v2819 = vpop.permute.xlu0 %2818
    %v2821 = vmul.f32 %v2816, %v2819
    %2823 = vrot.lane.b32.xlu0 %v2821, 64
    %v2824 = vpop.permute.xlu0 %2823
    %v2826 = vadd.f32 %v2807, %v2824
    %v2827 = vtanh.pop %v2826
    %v2828 = vsub.f32 1.0, %v2816
    %2830 = vrot.lane.b32.xlu0 %v2827, 96
    %v2831 = vpop.permute.xlu0 %2830
    %v2833 = vmul.f32 %v2828, %v2831
    %v2834 = vmul.f32 %v2816, %v2019
    %v2835 = vadd.f32 %v2833, %v2834
    %v2836 = vxor.u32 %v2809, 2147483648
    %v2837 = vmul.f32 %v2836, 1.442695
    %v2838 = vpow.pop %v2837
    %v2839 = vadd.f32 %v2838, 1.0
    %v2840 = vrcp.pop %v2839
    %v2841 = vmul.f32 1.0, %v2840
    %2843 = vrot.lane.b32.xlu0 %v2809, 32
    %v2844 = vpop.permute.xlu0 %2843
    %v2846 = vmul.f32 %v2841, %v2844
    %2848 = vrot.lane.b32.xlu0 %v2846, 64
    %v2849 = vpop.permute.xlu0 %2848
    %v2851 = vadd.f32 %v2809, %v2849
    %v2852 = vtanh.pop %v2851
    %v2853 = vsub.f32 1.0, %v2841
    %2855 = vrot.lane.b32.xlu0 %v2852, 96
    %v2856 = vpop.permute.xlu0 %2855
    %v2858 = vmul.f32 %v2853, %v2856
    %v2859 = vmul.f32 %v2841, %v2044
    %v2860 = vadd.f32 %v2858, %v2859
    %2862 = vrot.lane.b32.xlu0 %v2835, 96
    %v2863 = vpop.permute.xlu0 %2862
    %v2865 = vsel %vm158, %v2863, %v2860
    %v2866 = vld [vmem:[%s6] sm:$0xff]
    %v2867 = vld [vmem:[%s6 + $0x8] sm:$0xff]
    %v2868 = vld [vmem:[%s6 + $0x10] sm:$0xff]
    %v2869 = vld [vmem:[%s6 + $0x18] sm:$0xff]
    %v2870 = vld [vmem:[%s6 + $0x20] sm:$0xff]
    %v2871 = vld [vmem:[%s6 + $0x28] sm:$0xff]
    %v2872 = vld [vmem:[%s6 + $0x30] sm:$0xff]
    %v2873 = vld [vmem:[%s6 + $0x38] sm:$0xff]
    %v2874 = vld [vmem:[#allocation11] sm:$0x1]
    %v2876 = vlaneseq
    %v2877 = vshrl.u32 %v2876, 7
    %v2878 = vsub.s32 0, %v2877
    %v2879 = vrot.slane %v2874, %v2878
    %v2882 = vsel %vm243, %v2865, 0
    %2884 = vmatprep.subr.mxu0 0.0
    %2885 = vmatpush1.msra.mxu0 %v2866
    %2886 = vmatprep.subr.mxu0 0.0
    %2887 = vmatpush1.msra.mxu0 %v2867
    %2888 = vmatprep.subr.mxu0 0.0
    %2889 = vmatpush1.msra.mxu0 %v2868
    %2890 = vmatprep.subr.mxu0 0.0
    %2891 = vmatpush1.msra.mxu0 %v2869
    %2892 = vmatprep.subr.mxu0 0.0
    %2893 = vmatpush1.msra.mxu0 %v2870
    %2894 = vmatprep.subr.mxu0 0.0
    %2895 = vmatpush1.msra.mxu0 %v2871
    %2896 = vmatprep.subr.mxu0 0.0
    %2897 = vmatpush1.msra.mxu0 %v2872
    %2898 = vmatprep.subr.mxu0 0.0
    %2899 = vmatpush1.msra.mxu0 %v2873
    %2900 = vmatprep.subr.mxu0 0.0
    %2901 = vmatpush1.msra.mxu0 0.0
    %2902 = vmatprep.subr.mxu0 0.0
    %2903 = vmatpush1.msra.mxu0 0.0
    %2904 = vmatprep.subr.mxu0 0.0
    %2905 = vmatpush1.msra.mxu0 0.0
    %2906 = vmatprep.subr.mxu0 0.0
    %2907 = vmatpush1.msra.mxu0 0.0
    %2908 = vmatprep.subr.mxu0 0.0
    %2909 = vmatpush1.msra.mxu0 0.0
    %2910 = vmatprep.subr.mxu0 0.0
    %2911 = vmatpush1.msra.mxu0 0.0
    %2912 = vmatprep.subr.mxu0 0.0
    %2913 = vmatpush1.msra.mxu0 0.0
    %2914 = vmatprep.subr.mxu0 0.0
    %2915 = vmatpush1.msra.mxu0 0.0
    %2916 = vmatprep.subr.mxu0 0.0
    %2917 = vmatpush1.msra.mxu0 0.0
    %2918 = vmatprep.subr.mxu0 0.0
    %2919 = vmatpush1.msra.mxu0 0.0
    %2920 = vmatprep.subr.mxu0 0.0
    %2921 = vmatpush1.msra.mxu0 0.0
    %2922 = vmatprep.subr.mxu0 0.0
    %2923 = vmatpush1.msra.mxu0 0.0
    %2924 = vmatprep.subr.mxu0 0.0
    %2925 = vmatpush1.msra.mxu0 0.0
    %2926 = vmatprep.subr.mxu0 0.0
    %2927 = vmatpush1.msra.mxu0 0.0
    %2928 = vmatprep.subr.mxu0 0.0
    %2929 = vmatpush1.msra.mxu0 0.0
    %2930 = vmatprep.subr.mxu0 0.0
    %2931 = vmatpush1.msra.mxu0 0.0
    %2932 = vmatprep.subr.mxu0 0.0
    %2933 = vmatpush1.msra.mxu0 0.0
    %2934 = vmatprep.subr.mxu0 0.0
    %2935 = vmatpush1.msra.mxu0 0.0
    %2936 = vmatprep.subr.mxu0 0.0
    %2937 = vmatpush1.msra.mxu0 0.0
    %2938 = vmatprep.subr.mxu0 0.0
    %2939 = vmatpush1.msra.mxu0 0.0
    %2940 = vmatprep.subr.mxu0 0.0
    %2941 = vmatpush1.msra.mxu0 0.0
    %2942 = vmatprep.subr.mxu0 0.0
    %2943 = vmatpush1.msra.mxu0 0.0
    %2944 = vmatprep.subr.mxu0 0.0
    %2945 = vmatpush1.msra.mxu0 0.0
    %2946 = vmatprep.subr.mxu0 0.0
    %2947 = vmatpush1.msra.mxu0 0.0
    %2948 = vmatprep.mubr.f32.mxu0 0.0
    %2949 = vmatmul.mubr.f32.gmra.mrb[0].mxu0 %v2882
    %v2950 = vpop.f32.mrb[0].mxu0
    %v2951 = vadd.f32 %v2879, %v2950
    %v2952 = vpop.f32.mrb[0].mxu0
    %2953 = vdwg.mxu0
    %v2954 = vmul.f32 %v2951, 0.5
    %v2955 = vmul.f32 %v2954, 1.442695
    %v2956 = vpow.pop %v2955
    %2958 = vrot.lane.b32.xlu0 %v2956, 120
    %v2959 = vpop.permute.xlu0 %2958
    %v2961 = vmul.f32 %v2590, %v2959
    %v2962 = vadd.f32 %v2961, %v2951
    %v2963 = vld [vmem:[#allocation13] sm:$0xff]
    %v2965 = vsel %vm515, %v2962, 0
    %2967 = vmatprep.subr.mxu0 0.0
    %2968 = vmatpush1.msra.mxu0 %v2963
    %2969 = vmatprep.subr.mxu0 0.0
    %2970 = vmatpush1.msra.mxu0 0.0
    %2971 = vmatprep.subr.mxu0 0.0
    %2972 = vmatpush1.msra.mxu0 0.0
    %2973 = vmatprep.subr.mxu0 0.0
    %2974 = vmatpush1.msra.mxu0 0.0
    %2975 = vmatprep.subr.mxu0 0.0
    %2976 = vmatpush1.msra.mxu0 0.0
    %2977 = vmatprep.subr.mxu0 0.0
    %2978 = vmatpush1.msra.mxu0 0.0
    %2979 = vmatprep.subr.mxu0 0.0
    %2980 = vmatpush1.msra.mxu0 0.0
    %2981 = vmatprep.subr.mxu0 0.0
    %2982 = vmatpush1.msra.mxu0 0.0
    %2983 = vmatprep.subr.mxu0 0.0
    %2984 = vmatpush1.msra.mxu0 0.0
    %2985 = vmatprep.subr.mxu0 0.0
    %2986 = vmatpush1.msra.mxu0 0.0
    %2987 = vmatprep.subr.mxu0 0.0
    %2988 = vmatpush1.msra.mxu0 0.0
    %2989 = vmatprep.subr.mxu0 0.0
    %2990 = vmatpush1.msra.mxu0 0.0
    %2991 = vmatprep.subr.mxu0 0.0
    %2992 = vmatpush1.msra.mxu0 0.0
    %2993 = vmatprep.subr.mxu0 0.0
    %2994 = vmatpush1.msra.mxu0 0.0
    %2995 = vmatprep.subr.mxu0 0.0
    %2996 = vmatpush1.msra.mxu0 0.0
    %2997 = vmatprep.subr.mxu0 0.0
    %2998 = vmatpush1.msra.mxu0 0.0
    %2999 = vmatprep.subr.mxu0 0.0
    %3000 = vmatpush1.msra.mxu0 0.0
    %3001 = vmatprep.subr.mxu0 0.0
    %3002 = vmatpush1.msra.mxu0 0.0
    %3003 = vmatprep.subr.mxu0 0.0
    %3004 = vmatpush1.msra.mxu0 0.0
    %3005 = vmatprep.subr.mxu0 0.0
    %3006 = vmatpush1.msra.mxu0 0.0
    %3007 = vmatprep.subr.mxu0 0.0
    %3008 = vmatpush1.msra.mxu0 0.0
    %3009 = vmatprep.subr.mxu0 0.0
    %3010 = vmatpush1.msra.mxu0 0.0
    %3011 = vmatprep.subr.mxu0 0.0
    %3012 = vmatpush1.msra.mxu0 0.0
    %3013 = vmatprep.subr.mxu0 0.0
    %3014 = vmatpush1.msra.mxu0 0.0
    %3015 = vmatprep.subr.mxu0 0.0
    %3016 = vmatpush1.msra.mxu0 0.0
    %3017 = vmatprep.subr.mxu0 0.0
    %3018 = vmatpush1.msra.mxu0 0.0
    %3019 = vmatprep.subr.mxu0 0.0
    %3020 = vmatpush1.msra.mxu0 0.0
    %3021 = vmatprep.subr.mxu0 0.0
    %3022 = vmatpush1.msra.mxu0 0.0
    %3023 = vmatprep.subr.mxu0 0.0
    %3024 = vmatpush1.msra.mxu0 0.0
    %3025 = vmatprep.subr.mxu0 0.0
    %3026 = vmatpush1.msra.mxu0 0.0
    %3027 = vmatprep.subr.mxu0 0.0
    %3028 = vmatpush1.msra.mxu0 0.0
    %3029 = vmatprep.subr.mxu0 0.0
    %3030 = vmatpush1.msra.mxu0 0.0
    %3031 = vmatprep.mubr.f32.mxu0 0.0
    %3032 = vmatmul.mubr.f32.gmra.mrb[0].mxu0 %v2965
    %v3033 = vpop.f32.mrb[0].mxu0
    %v3034 = vadd.f32 0.0, %v3033
    %v3035 = vpop.f32.mrb[0].mxu0
    %3036 = vdwg.mxu0
    %3038 = vrot.lane.b32.xlu0 %v3034, 64
    %v3039 = vpop.permute.xlu0 %3038
    %v3041 = vadd.f32 %v2684, %v3039
    %3043 = vrot.lane.b32.xlu0 %v3041, 64
    %v3044 = vpop.permute.xlu0 %3043
    %v3046 = vsel %vm158, %v3044, %v2343
    %v3047 = vld [vmem:[%s9] sm:$0xff]
    %v3048 = vld [vmem:[%s9 + $0x8] sm:$0xff]
    %v3049 = vld [vmem:[%s9 + $0x10] sm:$0xff]
    %v3050 = vld [vmem:[%s9 + $0x18] sm:$0xff]
    %v3051 = vld [vmem:[%s9 + $0x20] sm:$0xff]
    %v3052 = vld [vmem:[%s9 + $0x28] sm:$0xff]
    %v3053 = vld [vmem:[%s9 + $0x30] sm:$0xff]
    %v3054 = vld [vmem:[%s9 + $0x38] sm:$0xff]
    %v3055 = vld [vmem:[%s10] sm:$0x1]
    %v3057 = vlaneseq
    %v3058 = vshrl.u32 %v3057, 7
    %v3059 = vsub.s32 0, %v3058
    %v3060 = vrot.slane %v3055, %v3059
    %v3063 = vsel %vm243, %v3046, 0
    %3065 = vmatprep.subr.mxu0 0.0
    %3066 = vmatpush1.msra.mxu0 %v3047
    %3067 = vmatprep.subr.mxu0 0.0
    %3068 = vmatpush1.msra.mxu0 %v3048
    %3069 = vmatprep.subr.mxu0 0.0
    %3070 = vmatpush1.msra.mxu0 %v3049
    %3071 = vmatprep.subr.mxu0 0.0
    %3072 = vmatpush1.msra.mxu0 %v3050
    %3073 = vmatprep.subr.mxu0 0.0
    %3074 = vmatpush1.msra.mxu0 %v3051
    %3075 = vmatprep.subr.mxu0 0.0
    %3076 = vmatpush1.msra.mxu0 %v3052
    %3077 = vmatprep.subr.mxu0 0.0
    %3078 = vmatpush1.msra.mxu0 %v3053
    %3079 = vmatprep.subr.mxu0 0.0
    %3080 = vmatpush1.msra.mxu0 %v3054
    %3081 = vmatprep.subr.mxu0 0.0
    %3082 = vmatpush1.msra.mxu0 0.0
    %3083 = vmatprep.subr.mxu0 0.0
    %3084 = vmatpush1.msra.mxu0 0.0
    %3085 = vmatprep.subr.mxu0 0.0
    %3086 = vmatpush1.msra.mxu0 0.0
    %3087 = vmatprep.subr.mxu0 0.0
    %3088 = vmatpush1.msra.mxu0 0.0
    %3089 = vmatprep.subr.mxu0 0.0
    %3090 = vmatpush1.msra.mxu0 0.0
    %3091 = vmatprep.subr.mxu0 0.0
    %3092 = vmatpush1.msra.mxu0 0.0
    %3093 = vmatprep.subr.mxu0 0.0
    %3094 = vmatpush1.msra.mxu0 0.0
    %3095 = vmatprep.subr.mxu0 0.0
    %3096 = vmatpush1.msra.mxu0 0.0
    %3097 = vmatprep.subr.mxu0 0.0
    %3098 = vmatpush1.msra.mxu0 0.0
    %3099 = vmatprep.subr.mxu0 0.0
    %3100 = vmatpush1.msra.mxu0 0.0
    %3101 = vmatprep.subr.mxu0 0.0
    %3102 = vmatpush1.msra.mxu0 0.0
    %3103 = vmatprep.subr.mxu0 0.0
    %3104 = vmatpush1.msra.mxu0 0.0
    %3105 = vmatprep.subr.mxu0 0.0
    %3106 = vmatpush1.msra.mxu0 0.0
    %3107 = vmatprep.subr.mxu0 0.0
    %3108 = vmatpush1.msra.mxu0 0.0
    %3109 = vmatprep.subr.mxu0 0.0
    %3110 = vmatpush1.msra.mxu0 0.0
    %3111 = vmatprep.subr.mxu0 0.0
    %3112 = vmatpush1.msra.mxu0 0.0
    %3113 = vmatprep.subr.mxu0 0.0
    %3114 = vmatpush1.msra.mxu0 0.0
    %3115 = vmatprep.subr.mxu0 0.0
    %3116 = vmatpush1.msra.mxu0 0.0
    %3117 = vmatprep.subr.mxu0 0.0
    %3118 = vmatpush1.msra.mxu0 0.0
    %3119 = vmatprep.subr.mxu0 0.0
    %3120 = vmatpush1.msra.mxu0 0.0
    %3121 = vmatprep.subr.mxu0 0.0
    %3122 = vmatpush1.msra.mxu0 0.0
    %3123 = vmatprep.subr.mxu0 0.0
    %3124 = vmatpush1.msra.mxu0 0.0
    %3125 = vmatprep.subr.mxu0 0.0
    %3126 = vmatpush1.msra.mxu0 0.0
    %3127 = vmatprep.subr.mxu0 0.0
    %3128 = vmatpush1.msra.mxu0 0.0
    %3129 = vmatprep.mubr.f32.mxu0 0.0
    %3130 = vmatmul.mubr.f32.gmra.mrb[0].mxu0 %v3063
    %v3131 = vpop.f32.mrb[0].mxu0
    %v3132 = vadd.f32 %v3060, %v3131
    %v3133 = vpop.f32.mrb[0].mxu0
    %3134 = vdwg.mxu0
    %v3135 = vxor.u32 %v3132, 2147483648
    %v3136 = vmul.f32 %v3135, 1.442695
    %v3137 = vpow.pop %v3136
    %v3138 = vadd.f32 %v3137, 1.0
    %v3139 = vrcp.pop %v3138
    %v3140 = vmul.f32 1.0, %v3139
    %3142 = vrot.lane.b32.xlu0 %v3132, 32
    %v3143 = vpop.permute.xlu0 %3142
    %v3145 = vmul.f32 %v3140, %v3143
    %3147 = vrot.lane.b32.xlu0 %v3145, 64
    %v3148 = vpop.permute.xlu0 %3147
    %v3150 = vadd.f32 %v3132, %v3148
    %v3151 = vtanh.pop %v3150
    %v3152 = vsub.f32 1.0, %v3140
    %3154 = vrot.lane.b32.xlu0 %v3151, 96
    %v3155 = vpop.permute.xlu0 %3154
    %v3157 = vmul.f32 %v3152, %v3155
    %v3158 = vmul.f32 %v3140, %v2343
    %v3159 = vadd.f32 %v3157, %v3158
    %3161 = vrot.lane.b32.xlu0 %v3159, 96
    %v3162 = vpop.permute.xlu0 %3161
    %v3164 = vsel %vm158, %v3162, %v2461
    %v3165 = vld [vmem:[%s11] sm:$0xff]
    %v3166 = vld [vmem:[%s11 + $0x8] sm:$0xff]
    %v3167 = vld [vmem:[%s11 + $0x10] sm:$0xff]
    %v3168 = vld [vmem:[%s11 + $0x18] sm:$0xff]
    %v3169 = vld [vmem:[%s11 + $0x20] sm:$0xff]
    %v3170 = vld [vmem:[%s11 + $0x28] sm:$0xff]
    %v3171 = vld [vmem:[%s11 + $0x30] sm:$0xff]
    %v3172 = vld [vmem:[%s11 + $0x38] sm:$0xff]
    %v3173 = vld [vmem:[%s12] sm:$0x1]
    %v3175 = vlaneseq
    %v3176 = vshrl.u32 %v3175, 7
    %v3177 = vsub.s32 0, %v3176
    %v3178 = vrot.slane %v3173, %v3177
    %v3181 = vsel %vm243, %v3164, 0
    %3183 = vmatprep.subr.mxu0 0.0
    %3184 = vmatpush1.msra.mxu0 %v3165
    %3185 = vmatprep.subr.mxu0 0.0
    %3186 = vmatpush1.msra.mxu0 %v3166
    %3187 = vmatprep.subr.mxu0 0.0
    %3188 = vmatpush1.msra.mxu0 %v3167
    %3189 = vmatprep.subr.mxu0 0.0
    %3190 = vmatpush1.msra.mxu0 %v3168
    %3191 = vmatprep.subr.mxu0 0.0
    %3192 = vmatpush1.msra.mxu0 %v3169
    %3193 = vmatprep.subr.mxu0 0.0
    %3194 = vmatpush1.msra.mxu0 %v3170
    %3195 = vmatprep.subr.mxu0 0.0
    %3196 = vmatpush1.msra.mxu0 %v3171
    %3197 = vmatprep.subr.mxu0 0.0
    %3198 = vmatpush1.msra.mxu0 %v3172
    %3199 = vmatprep.subr.mxu0 0.0
    %3200 = vmatpush1.msra.mxu0 0.0
    %3201 = vmatprep.subr.mxu0 0.0
    %3202 = vmatpush1.msra.mxu0 0.0
    %3203 = vmatprep.subr.mxu0 0.0
    %3204 = vmatpush1.msra.mxu0 0.0
    %3205 = vmatprep.subr.mxu0 0.0
    %3206 = vmatpush1.msra.mxu0 0.0
    %3207 = vmatprep.subr.mxu0 0.0
    %3208 = vmatpush1.msra.mxu0 0.0
    %3209 = vmatprep.subr.mxu0 0.0
    %3210 = vmatpush1.msra.mxu0 0.0
    %3211 = vmatprep.subr.mxu0 0.0
    %3212 = vmatpush1.msra.mxu0 0.0
    %3213 = vmatprep.subr.mxu0 0.0
    %3214 = vmatpush1.msra.mxu0 0.0
    %3215 = vmatprep.subr.mxu0 0.0
    %3216 = vmatpush1.msra.mxu0 0.0
    %3217 = vmatprep.subr.mxu0 0.0
    %3218 = vmatpush1.msra.mxu0 0.0
    %3219 = vmatprep.subr.mxu0 0.0
    %3220 = vmatpush1.msra.mxu0 0.0
    %3221 = vmatprep.subr.mxu0 0.0
    %3222 = vmatpush1.msra.mxu0 0.0
    %3223 = vmatprep.subr.mxu0 0.0
    %3224 = vmatpush1.msra.mxu0 0.0
    %3225 = vmatprep.subr.mxu0 0.0
    %3226 = vmatpush1.msra.mxu0 0.0
    %3227 = vmatprep.subr.mxu0 0.0
    %3228 = vmatpush1.msra.mxu0 0.0
    %3229 = vmatprep.subr.mxu0 0.0
    %3230 = vmatpush1.msra.mxu0 0.0
    %3231 = vmatprep.subr.mxu0 0.0
    %3232 = vmatpush1.msra.mxu0 0.0
    %3233 = vmatprep.subr.mxu0 0.0
    %3234 = vmatpush1.msra.mxu0 0.0
    %3235 = vmatprep.subr.mxu0 0.0
    %3236 = vmatpush1.msra.mxu0 0.0
    %3237 = vmatprep.subr.mxu0 0.0
    %3238 = vmatpush1.msra.mxu0 0.0
    %3239 = vmatprep.subr.mxu0 0.0
    %3240 = vmatpush1.msra.mxu0 0.0
    %3241 = vmatprep.subr.mxu0 0.0
    %3242 = vmatpush1.msra.mxu0 0.0
    %3243 = vmatprep.subr.mxu0 0.0
    %3244 = vmatpush1.msra.mxu0 0.0
    %3245 = vmatprep.subr.mxu0 0.0
    %3246 = vmatpush1.msra.mxu0 0.0
    %3247 = vmatprep.mubr.f32.mxu0 0.0
    %3248 = vmatmul.mubr.f32.gmra.mrb[0].mxu0 %v3181
    %v3249 = vpop.f32.mrb[0].mxu0
    %v3250 = vadd.f32 %v3178, %v3249
    %v3251 = vpop.f32.mrb[0].mxu0
    %3252 = vdwg.mxu0
    %v3253 = vxor.u32 %v3250, 2147483648
    %v3254 = vmul.f32 %v3253, 1.442695
    %v3255 = vpow.pop %v3254
    %v3256 = vadd.f32 %v3255, 1.0
    %v3257 = vrcp.pop %v3256
    %v3258 = vmul.f32 1.0, %v3257
    %3260 = vrot.lane.b32.xlu0 %v3250, 32
    %v3261 = vpop.permute.xlu0 %3260
    %v3263 = vmul.f32 %v3258, %v3261
    %3265 = vrot.lane.b32.xlu0 %v3263, 64
    %v3266 = vpop.permute.xlu0 %3265
    %v3268 = vadd.f32 %v3250, %v3266
    %v3269 = vtanh.pop %v3268
    %v3270 = vsub.f32 1.0, %v3258
    %3272 = vrot.lane.b32.xlu0 %v3269, 96
    %v3273 = vpop.permute.xlu0 %3272
    %v3275 = vmul.f32 %v3270, %v3273
    %v3276 = vmul.f32 %v3258, %v2461
    %v3277 = vadd.f32 %v3275, %v3276
    %v3278 = vld [vmem:[%s13] sm:$0xff]
    %v3279 = vld [vmem:[%s13 + $0x8] sm:$0xff]
    %v3280 = vld [vmem:[%s13 + $0x10] sm:$0xff]
    %v3281 = vld [vmem:[%s13 + $0x18] sm:$0xff]
    %v3282 = vld [vmem:[%s14] sm:$0x1]
    %v3284 = vlaneseq
    %v3285 = vshrl.u32 %v3284, 7
    %v3286 = vsub.s32 0, %v3285
    %v3287 = vrot.slane %v3282, %v3286
    %3290 = vrot.lane.b32.xlu0 %v3277, 96
    %v3291 = vpop.permute.xlu0 %3290
    %v3292 = vsel %vm158, %v3291, 0
    %3294 = vmatprep.subr.mxu0 0.0
    %3295 = vmatpush1.msra.mxu0 %v3278
    %3296 = vmatprep.subr.mxu0 0.0
    %3297 = vmatpush1.msra.mxu0 %v3279
    %3298 = vmatprep.subr.mxu0 0.0
    %3299 = vmatpush1.msra.mxu0 %v3280
    %3300 = vmatprep.subr.mxu0 0.0
    %3301 = vmatpush1.msra.mxu0 %v3281
    %3302 = vmatprep.subr.mxu0 0.0
    %3303 = vmatpush1.msra.mxu0 0.0
    %3304 = vmatprep.subr.mxu0 0.0
    %3305 = vmatpush1.msra.mxu0 0.0
    %3306 = vmatprep.subr.mxu0 0.0
    %3307 = vmatpush1.msra.mxu0 0.0
    %3308 = vmatprep.subr.mxu0 0.0
    %3309 = vmatpush1.msra.mxu0 0.0
    %3310 = vmatprep.subr.mxu0 0.0
    %3311 = vmatpush1.msra.mxu0 0.0
    %3312 = vmatprep.subr.mxu0 0.0
    %3313 = vmatpush1.msra.mxu0 0.0
    %3314 = vmatprep.subr.mxu0 0.0
    %3315 = vmatpush1.msra.mxu0 0.0
    %3316 = vmatprep.subr.mxu0 0.0
    %3317 = vmatpush1.msra.mxu0 0.0
    %3318 = vmatprep.subr.mxu0 0.0
    %3319 = vmatpush1.msra.mxu0 0.0
    %3320 = vmatprep.subr.mxu0 0.0
    %3321 = vmatpush1.msra.mxu0 0.0
    %3322 = vmatprep.subr.mxu0 0.0
    %3323 = vmatpush1.msra.mxu0 0.0
    %3324 = vmatprep.subr.mxu0 0.0
    %3325 = vmatpush1.msra.mxu0 0.0
    %3326 = vmatprep.subr.mxu0 0.0
    %3327 = vmatpush1.msra.mxu0 0.0
    %3328 = vmatprep.subr.mxu0 0.0
    %3329 = vmatpush1.msra.mxu0 0.0
    %3330 = vmatprep.subr.mxu0 0.0
    %3331 = vmatpush1.msra.mxu0 0.0
    %3332 = vmatprep.subr.mxu0 0.0
    %3333 = vmatpush1.msra.mxu0 0.0
    %3334 = vmatprep.subr.mxu0 0.0
    %3335 = vmatpush1.msra.mxu0 0.0
    %3336 = vmatprep.subr.mxu0 0.0
    %3337 = vmatpush1.msra.mxu0 0.0
    %3338 = vmatprep.subr.mxu0 0.0
    %3339 = vmatpush1.msra.mxu0 0.0
    %3340 = vmatprep.subr.mxu0 0.0
    %3341 = vmatpush1.msra.mxu0 0.0
    %3342 = vmatprep.subr.mxu0 0.0
    %3343 = vmatpush1.msra.mxu0 0.0
    %3344 = vmatprep.subr.mxu0 0.0
    %3345 = vmatpush1.msra.mxu0 0.0
    %3346 = vmatprep.subr.mxu0 0.0
    %3347 = vmatpush1.msra.mxu0 0.0
    %3348 = vmatprep.subr.mxu0 0.0
    %3349 = vmatpush1.msra.mxu0 0.0
    %3350 = vmatprep.subr.mxu0 0.0
    %3351 = vmatpush1.msra.mxu0 0.0
    %3352 = vmatprep.subr.mxu0 0.0
    %3353 = vmatpush1.msra.mxu0 0.0
    %3354 = vmatprep.subr.mxu0 0.0
    %3355 = vmatpush1.msra.mxu0 0.0
    %3356 = vmatprep.subr.mxu0 0.0
    %3357 = vmatpush1.msra.mxu0 0.0
    %3358 = vmatprep.mubr.f32.mxu0 0.0
    %3359 = vmatmul.mubr.f32.gmra.mrb[0].mxu0 %v3292
    %v3360 = vpop.f32.mrb[0].mxu0
    %v3361 = vadd.f32 %v3287, %v3360
    %v3362 = vpop.f32.mrb[0].mxu0
    %3363 = vdwg.mxu0
    %s3364 = scalar_lea.vmem [#allocation14], 6
    %3365 = vst.msk [vmem:[%s3364] sm:$0x3] %vm916, %v3361
    %v3366 = vsub.f32 %v3361, %v2588
    %v3367 = vmul.f32 %v3366, %v3366
    %v3368 = vadd.f32 %v2552, %v3367
    %v3369 = vmul.f32 %v2951, 1.442695
    %v3370 = vpow.pop %v3369
    %3372 = vrot.lane.b32.xlu0 %v2951, 16
    %v3373 = vpop.permute.xlu0 %3372
    %v3375 = vsub.f32 %v2951, %v3373
    %v3376 = vmul.f32 %v3375, 0.5
    %3377 = vrot.lane.b32.xlu0 %v2951, 112
    %v3378 = vpop.permute.xlu0 %3377
    %v3380 = vsub.f32 %v2951, %v3378
    %v3381 = vmul.f32 %v3380, %v3380
    %3383 = vrot.lane.b32.xlu0 %v3381, 8
    %v3384 = vpop.permute.xlu0 %3383
    %v3386 = vadd.f32 %v3370, %v3384
    %v3387 = vsub.f32 0.0, %v2951
    %v3388 = vmul.f32 %v3387, 1.442695
    %v3389 = vpow.pop %v3388
    %v3390 = vmul.f32 %v3389, 0.5
    %3392 = vrot.lane.b32.xlu0 %v3390, 112
    %v3393 = vpop.permute.xlu0 %3392
    %v3395 = vmul.f32 %v3386, %v3393
    %3397 = vrot.lane.b32.xlu0 %v3395, 16
    %v3398 = vpop.permute.xlu0 %3397
    %v3400 = vadd.f32 %v3376, %v3398
    %v3401 = vsub.f32 %v3400, 0.5
    %v3402 = vadd.f32 %v2586, %v3401
    %s3403 = scalar_lea.vmem [#allocation2], 8
    %v3404 = vld [vmem:[%s3403] sm:$0x3]
    %s3405 = scalar_lea.vmem [#allocation5], 8
    %v3406 = vld [vmem:[%s3405] sm:$0x3]
    %3408 = vrot.lane.b32.xlu0 %v3361, 16
    %v3409 = vpop.permute.xlu0 %3408
    %v3411 = vsel %vm146, %v3404, %v3409
    %v3412 = vld [vmem:[#allocation7] sm:$0xff]
    %v3413 = vld [vmem:[#allocation7 + $0x8] sm:$0xff]
    %v3414 = vld [vmem:[#allocation7 + $0x10] sm:$0xff]
    %v3415 = vld [vmem:[#allocation7 + $0x18] sm:$0xff]
    %v3416 = vld [vmem:[%s3] sm:$0x1]
    %v3417 = vmul.f32 %v3416, 0.5714286
    %v3418 = vlaneseq
    %v3419 = vshrl.u32 %v3418, 7
    %v3420 = vsub.s32 0, %v3419
    %v3421 = vrot.slane %v3417, %v3420
    %v3423 = vsel %vm158, %v3411, 0
    %3425 = vmatprep.subr.mxu0 0.0
    %3426 = vmatpush1.msra.mxu0 %v3412
    %3427 = vmatprep.subr.mxu0 0.0
    %3428 = vmatpush1.msra.mxu0 %v3413
    %3429 = vmatprep.subr.mxu0 0.0
    %3430 = vmatpush1.msra.mxu0 %v3414
    %3431 = vmatprep.subr.mxu0 0.0
    %3432 = vmatpush1.msra.mxu0 %v3415
    %3433 = vmatprep.subr.mxu0 0.0
    %3434 = vmatpush1.msra.mxu0 0.0
    %3435 = vmatprep.subr.mxu0 0.0
    %3436 = vmatpush1.msra.mxu0 0.0
    %3437 = vmatprep.subr.mxu0 0.0
    %3438 = vmatpush1.msra.mxu0 0.0
    %3439 = vmatprep.subr.mxu0 0.0
    %3440 = vmatpush1.msra.mxu0 0.0
    %3441 = vmatprep.subr.mxu0 0.0
    %3442 = vmatpush1.msra.mxu0 0.0
    %3443 = vmatprep.subr.mxu0 0.0
    %3444 = vmatpush1.msra.mxu0 0.0
    %3445 = vmatprep.subr.mxu0 0.0
    %3446 = vmatpush1.msra.mxu0 0.0
    %3447 = vmatprep.subr.mxu0 0.0
    %3448 = vmatpush1.msra.mxu0 0.0
    %3449 = vmatprep.subr.mxu0 0.0
    %3450 = vmatpush1.msra.mxu0 0.0
    %3451 = vmatprep.subr.mxu0 0.0
    %3452 = vmatpush1.msra.mxu0 0.0
    %3453 = vmatprep.subr.mxu0 0.0
    %3454 = vmatpush1.msra.mxu0 0.0
    %3455 = vmatprep.subr.mxu0 0.0
    %3456 = vmatpush1.msra.mxu0 0.0
    %3457 = vmatprep.subr.mxu0 0.0
    %3458 = vmatpush1.msra.mxu0 0.0
    %3459 = vmatprep.subr.mxu0 0.0
    %3460 = vmatpush1.msra.mxu0 0.0
    %3461 = vmatprep.subr.mxu0 0.0
    %3462 = vmatpush1.msra.mxu0 0.0
    %3463 = vmatprep.subr.mxu0 0.0
    %3464 = vmatpush1.msra.mxu0 0.0
    %3465 = vmatprep.subr.mxu0 0.0
    %3466 = vmatpush1.msra.mxu0 0.0
    %3467 = vmatprep.subr.mxu0 0.0
    %3468 = vmatpush1.msra.mxu0 0.0
    %3469 = vmatprep.subr.mxu0 0.0
    %3470 = vmatpush1.msra.mxu0 0.0
    %3471 = vmatprep.subr.mxu0 0.0
    %3472 = vmatpush1.msra.mxu0 0.0
    %3473 = vmatprep.subr.mxu0 0.0
    %3474 = vmatpush1.msra.mxu0 0.0
    %3475 = vmatprep.subr.mxu0 0.0
    %3476 = vmatpush1.msra.mxu0 0.0
    %3477 = vmatprep.subr.mxu0 0.0
    %3478 = vmatpush1.msra.mxu0 0.0
    %3479 = vmatprep.subr.mxu0 0.0
    %3480 = vmatpush1.msra.mxu0 0.0
    %3481 = vmatprep.subr.mxu0 0.0
    %3482 = vmatpush1.msra.mxu0 0.0
    %3483 = vmatprep.subr.mxu0 0.0
    %3484 = vmatpush1.msra.mxu0 0.0
    %3485 = vmatprep.subr.mxu0 0.0
    %3486 = vmatpush1.msra.mxu0 0.0
    %3487 = vmatprep.subr.mxu0 0.0
    %3488 = vmatpush1.msra.mxu0 0.0
    %3489 = vmatprep.mubr.f32.mxu0 0.0
    %3490 = vmatmul.mubr.f32.gmra.mrb[0].mxu0 %v3423
    %v3491 = vpop.f32.mrb[0].mxu0
    %v3492 = vadd.f32 %v3421, %v3491
    %v3493 = vpop.f32.mrb[0].mxu0
    %3494 = vdwg.mxu0
    %v3495 = vld [vmem:[%s3 + $0x1] sm:$0x1]
    %v3496 = vlaneseq
    %v3497 = vshrl.u32 %v3496, 7
    %v3498 = vsub.s32 0, %v3497
    %v3499 = vrot.slane %v3495, %v3498
    %v3500 = vadd.f32 %v3492, %v3499
    %3502 = vrot.lane.b32.xlu0 %v3500, 32
    %v3503 = vpop.permute.xlu0 %3502
    %3506 = vrot.lane.b32.xlu0 %v2860, 64
    %v3507 = vpop.permute.xlu0 %3506
    %v3509 = vsel %vm158, %v3500, %v2835
    %v3510 = vsel %vm243, %v3509, %v3503
    %v3511 = vsel %vm245, %v3510, %v3507
    %v3512 = vld [vmem:[#allocation8] sm:$0xff]
    %v3513 = vld [vmem:[#allocation8 + $0x8] sm:$0xff]
    %v3514 = vld [vmem:[#allocation8 + $0x10] sm:$0xff]
    %v3515 = vld [vmem:[#allocation8 + $0x18] sm:$0xff]
    %v3516 = vld [vmem:[#allocation8 + $0x20] sm:$0xff]
    %v3517 = vld [vmem:[#allocation8 + $0x28] sm:$0xff]
    %v3518 = vld [vmem:[#allocation8 + $0x30] sm:$0xff]
    %v3519 = vld [vmem:[#allocation8 + $0x38] sm:$0xff]
    %v3520 = vld [vmem:[#allocation8 + $0x40] sm:$0xff]
    %v3521 = vld [vmem:[#allocation8 + $0x48] sm:$0xff]
    %v3522 = vld [vmem:[#allocation8 + $0x50] sm:$0xff]
    %v3523 = vld [vmem:[#allocation8 + $0x58] sm:$0xff]
    %v3524 = vld [vmem:[#allocation8 + $0x60] sm:$0xff]
    %v3525 = vld [vmem:[#allocation8 + $0x68] sm:$0xff]
    %v3526 = vld [vmem:[#allocation8 + $0x70] sm:$0xff]
    %v3527 = vld [vmem:[#allocation8 + $0x78] sm:$0xff]
    %v3528 = vld [vmem:[#allocation8 + $0x80] sm:$0xff]
    %v3529 = vld [vmem:[#allocation8 + $0x88] sm:$0xff]
    %v3530 = vld [vmem:[#allocation8 + $0x90] sm:$0xff]
    %v3531 = vld [vmem:[#allocation8 + $0x98] sm:$0xff]
    %v3532 = vld [vmem:[#allocation8 + $0xa0] sm:$0xff]
    %v3533 = vld [vmem:[#allocation8 + $0xa8] sm:$0xff]
    %v3534 = vld [vmem:[#allocation8 + $0xb0] sm:$0xff]
    %v3535 = vld [vmem:[#allocation8 + $0xb8] sm:$0xff]
    %v3536 = vld [vmem:[#allocation8 + $0xc0] sm:$0xff]
    %v3537 = vld [vmem:[#allocation8 + $0xc8] sm:$0xff]
    %v3538 = vld [vmem:[#allocation8 + $0xd0] sm:$0xff]
    %v3539 = vld [vmem:[#allocation8 + $0xd8] sm:$0xff]
    %v3540 = vld [vmem:[#allocation8 + $0xe0] sm:$0xff]
    %v3541 = vld [vmem:[#allocation8 + $0xe8] sm:$0xff]
    %v3542 = vld [vmem:[#allocation8 + $0xf0] sm:$0xff]
    %v3543 = vld [vmem:[#allocation8 + $0xf8] sm:$0xff]
    %v3544 = vld [vmem:[#allocation10] sm:$0x3]
    %v3546 = vlaneseq
    %v3547 = vshrl.u32 %v3546, 7
    %v3548 = vsub.s32 0, %v3547
    %v3549 = vrot.slane %v3544, %v3548
    %v3550 = vlaneseq
    %v3551 = vshrl.u32 %v3550, 7
    %v3552 = vsub.s32 1, %v3551
    %v3553 = vrot.slane %v3544, %v3552
    %3556 = vmatprep.subr.mxu0 %v3513
    %3557 = vmatpush1.msra.mxu0 %v3512
    %3558 = vmatprep.subr.mxu0 %v3515
    %3559 = vmatpush1.msra.mxu0 %v3514
    %3560 = vmatprep.subr.mxu0 %v3517
    %3561 = vmatpush1.msra.mxu0 %v3516
    %3562 = vmatprep.subr.mxu0 %v3519
    %3563 = vmatpush1.msra.mxu0 %v3518
    %3564 = vmatprep.subr.mxu0 %v3521
    %3565 = vmatpush1.msra.mxu0 %v3520
    %3566 = vmatprep.subr.mxu0 %v3523
    %3567 = vmatpush1.msra.mxu0 %v3522
    %3568 = vmatprep.subr.mxu0 %v3525
    %3569 = vmatpush1.msra.mxu0 %v3524
    %3570 = vmatprep.subr.mxu0 %v3527
    %3571 = vmatpush1.msra.mxu0 %v3526
    %3572 = vmatprep.subr.mxu0 %v3529
    %3573 = vmatpush1.msra.mxu0 %v3528
    %3574 = vmatprep.subr.mxu0 %v3531
    %3575 = vmatpush1.msra.mxu0 %v3530
    %3576 = vmatprep.subr.mxu0 %v3533
    %3577 = vmatpush1.msra.mxu0 %v3532
    %3578 = vmatprep.subr.mxu0 %v3535
    %3579 = vmatpush1.msra.mxu0 %v3534
    %3580 = vmatprep.subr.mxu0 %v3537
    %3581 = vmatpush1.msra.mxu0 %v3536
    %3582 = vmatprep.subr.mxu0 %v3539
    %3583 = vmatpush1.msra.mxu0 %v3538
    %3584 = vmatprep.subr.mxu0 %v3541
    %3585 = vmatpush1.msra.mxu0 %v3540
    %3586 = vmatprep.subr.mxu0 %v3543
    %3587 = vmatpush1.msra.mxu0 %v3542
    %3588 = vmatprep.subr.mxu0 0.0
    %3589 = vmatpush1.msra.mxu0 0.0
    %3590 = vmatprep.subr.mxu0 0.0
    %3591 = vmatpush1.msra.mxu0 0.0
    %3592 = vmatprep.subr.mxu0 0.0
    %3593 = vmatpush1.msra.mxu0 0.0
    %3594 = vmatprep.subr.mxu0 0.0
    %3595 = vmatpush1.msra.mxu0 0.0
    %3596 = vmatprep.subr.mxu0 0.0
    %3597 = vmatpush1.msra.mxu0 0.0
    %3598 = vmatprep.subr.mxu0 0.0
    %3599 = vmatpush1.msra.mxu0 0.0
    %3600 = vmatprep.subr.mxu0 0.0
    %3601 = vmatpush1.msra.mxu0 0.0
    %3602 = vmatprep.subr.mxu0 0.0
    %3603 = vmatpush1.msra.mxu0 0.0
    %3604 = vmatprep.subr.mxu0 0.0
    %3605 = vmatpush1.msra.mxu0 0.0
    %3606 = vmatprep.subr.mxu0 0.0
    %3607 = vmatpush1.msra.mxu0 0.0
    %3608 = vmatprep.subr.mxu0 0.0
    %3609 = vmatpush1.msra.mxu0 0.0
    %3610 = vmatprep.subr.mxu0 0.0
    %3611 = vmatpush1.msra.mxu0 0.0
    %3612 = vmatprep.subr.mxu0 0.0
    %3613 = vmatpush1.msra.mxu0 0.0
    %3614 = vmatprep.subr.mxu0 0.0
    %3615 = vmatpush1.msra.mxu0 0.0
    %3616 = vmatprep.subr.mxu0 0.0
    %3617 = vmatpush1.msra.mxu0 0.0
    %3618 = vmatprep.subr.mxu0 0.0
    %3619 = vmatpush1.msra.mxu0 0.0
    %3620 = vmatprep.mubr.f32.mxu0 0.0
    %3621 = vmatmul.mubr.f32.gmra.mrb[0].mxu0 %v3511
    %v3622 = vpop.f32.mrb[0].mxu0
    %v3623 = vadd.f32 %v3549, %v3622
    %v3624 = vpop.f32.mrb[0].mxu0
    %v3625 = vadd.f32 %v3553, %v3624
    %3626 = vdwg.mxu0
    %v3627 = vxor.u32 %v3623, 2147483648
    %v3628 = vmul.f32 %v3627, 1.442695
    %v3629 = vpow.pop %v3628
    %v3630 = vadd.f32 %v3629, 1.0
    %v3631 = vrcp.pop %v3630
    %v3632 = vmul.f32 1.0, %v3631
    %3634 = vrot.lane.b32.xlu0 %v3623, 32
    %v3635 = vpop.permute.xlu0 %3634
    %v3637 = vmul.f32 %v3632, %v3635
    %3639 = vrot.lane.b32.xlu0 %v3637, 64
    %v3640 = vpop.permute.xlu0 %3639
    %v3642 = vadd.f32 %v3623, %v3640
    %v3643 = vtanh.pop %v3642
    %v3644 = vsub.f32 1.0, %v3632
    %3646 = vrot.lane.b32.xlu0 %v3643, 96
    %v3647 = vpop.permute.xlu0 %3646
    %v3649 = vmul.f32 %v3644, %v3647
    %v3650 = vmul.f32 %v3632, %v2835
    %v3651 = vadd.f32 %v3649, %v3650
    %v3652 = vxor.u32 %v3625, 2147483648
    %v3653 = vmul.f32 %v3652, 1.442695
    %v3654 = vpow.pop %v3653
    %v3655 = vadd.f32 %v3654, 1.0
    %v3656 = vrcp.pop %v3655
    %v3657 = vmul.f32 1.0, %v3656
    %3659 = vrot.lane.b32.xlu0 %v3625, 32
    %v3660 = vpop.permute.xlu0 %3659
    %v3662 = vmul.f32 %v3657, %v3660
    %3664 = vrot.lane.b32.xlu0 %v3662, 64
    %v3665 = vpop.permute.xlu0 %3664
    %v3667 = vadd.f32 %v3625, %v3665
    %v3668 = vtanh.pop %v3667
    %v3669 = vsub.f32 1.0, %v3657
    %3671 = vrot.lane.b32.xlu0 %v3668, 96
    %v3672 = vpop.permute.xlu0 %3671
    %v3674 = vmul.f32 %v3669, %v3672
    %v3675 = vmul.f32 %v3657, %v2860
    %v3676 = vadd.f32 %v3674, %v3675
    %3678 = vrot.lane.b32.xlu0 %v3651, 96
    %v3679 = vpop.permute.xlu0 %3678
    %v3681 = vsel %vm158, %v3679, %v3676
    %v3682 = vld [vmem:[%s6] sm:$0xff]
    %v3683 = vld [vmem:[%s6 + $0x8] sm:$0xff]
    %v3684 = vld [vmem:[%s6 + $0x10] sm:$0xff]
    %v3685 = vld [vmem:[%s6 + $0x18] sm:$0xff]
    %v3686 = vld [vmem:[%s6 + $0x20] sm:$0xff]
    %v3687 = vld [vmem:[%s6 + $0x28] sm:$0xff]
    %v3688 = vld [vmem:[%s6 + $0x30] sm:$0xff]
    %v3689 = vld [vmem:[%s6 + $0x38] sm:$0xff]
    %v3690 = vld [vmem:[#allocation11] sm:$0x1]
    %v3692 = vlaneseq
    %v3693 = vshrl.u32 %v3692, 7
    %v3694 = vsub.s32 0, %v3693
    %v3695 = vrot.slane %v3690, %v3694
    %v3698 = vsel %vm243, %v3681, 0
    %3700 = vmatprep.subr.mxu0 0.0
    %3701 = vmatpush1.msra.mxu0 %v3682
    %3702 = vmatprep.subr.mxu0 0.0
    %3703 = vmatpush1.msra.mxu0 %v3683
    %3704 = vmatprep.subr.mxu0 0.0
    %3705 = vmatpush1.msra.mxu0 %v3684
    %3706 = vmatprep.subr.mxu0 0.0
    %3707 = vmatpush1.msra.mxu0 %v3685
    %3708 = vmatprep.subr.mxu0 0.0
    %3709 = vmatpush1.msra.mxu0 %v3686
    %3710 = vmatprep.subr.mxu0 0.0
    %3711 = vmatpush1.msra.mxu0 %v3687
    %3712 = vmatprep.subr.mxu0 0.0
    %3713 = vmatpush1.msra.mxu0 %v3688
    %3714 = vmatprep.subr.mxu0 0.0
    %3715 = vmatpush1.msra.mxu0 %v3689
    %3716 = vmatprep.subr.mxu0 0.0
    %3717 = vmatpush1.msra.mxu0 0.0
    %3718 = vmatprep.subr.mxu0 0.0
    %3719 = vmatpush1.msra.mxu0 0.0
    %3720 = vmatprep.subr.mxu0 0.0
    %3721 = vmatpush1.msra.mxu0 0.0
    %3722 = vmatprep.subr.mxu0 0.0
    %3723 = vmatpush1.msra.mxu0 0.0
    %3724 = vmatprep.subr.mxu0 0.0
    %3725 = vmatpush1.msra.mxu0 0.0
    %3726 = vmatprep.subr.mxu0 0.0
    %3727 = vmatpush1.msra.mxu0 0.0
    %3728 = vmatprep.subr.mxu0 0.0
    %3729 = vmatpush1.msra.mxu0 0.0
    %3730 = vmatprep.subr.mxu0 0.0
    %3731 = vmatpush1.msra.mxu0 0.0
    %3732 = vmatprep.subr.mxu0 0.0
    %3733 = vmatpush1.msra.mxu0 0.0
    %3734 = vmatprep.subr.mxu0 0.0
    %3735 = vmatpush1.msra.mxu0 0.0
    %3736 = vmatprep.subr.mxu0 0.0
    %3737 = vmatpush1.msra.mxu0 0.0
    %3738 = vmatprep.subr.mxu0 0.0
    %3739 = vmatpush1.msra.mxu0 0.0
    %3740 = vmatprep.subr.mxu0 0.0
    %3741 = vmatpush1.msra.mxu0 0.0
    %3742 = vmatprep.subr.mxu0 0.0
    %3743 = vmatpush1.msra.mxu0 0.0
    %3744 = vmatprep.subr.mxu0 0.0
    %3745 = vmatpush1.msra.mxu0 0.0
    %3746 = vmatprep.subr.mxu0 0.0
    %3747 = vmatpush1.msra.mxu0 0.0
    %3748 = vmatprep.subr.mxu0 0.0
    %3749 = vmatpush1.msra.mxu0 0.0
    %3750 = vmatprep.subr.mxu0 0.0
    %3751 = vmatpush1.msra.mxu0 0.0
    %3752 = vmatprep.subr.mxu0 0.0
    %3753 = vmatpush1.msra.mxu0 0.0
    %3754 = vmatprep.subr.mxu0 0.0
    %3755 = vmatpush1.msra.mxu0 0.0
    %3756 = vmatprep.subr.mxu0 0.0
    %3757 = vmatpush1.msra.mxu0 0.0
    %3758 = vmatprep.subr.mxu0 0.0
    %3759 = vmatpush1.msra.mxu0 0.0
    %3760 = vmatprep.subr.mxu0 0.0
    %3761 = vmatpush1.msra.mxu0 0.0
    %3762 = vmatprep.subr.mxu0 0.0
    %3763 = vmatpush1.msra.mxu0 0.0
    %3764 = vmatprep.mubr.f32.mxu0 0.0
    %3765 = vmatmul.mubr.f32.gmra.mrb[0].mxu0 %v3698
    %v3766 = vpop.f32.mrb[0].mxu0
    %v3767 = vadd.f32 %v3695, %v3766
    %v3768 = vpop.f32.mrb[0].mxu0
    %3769 = vdwg.mxu0
    %v3770 = vmul.f32 %v3767, 0.5
    %v3771 = vmul.f32 %v3770, 1.442695
    %v3772 = vpow.pop %v3771
    %3774 = vrot.lane.b32.xlu0 %v3772, 120
    %v3775 = vpop.permute.xlu0 %3774
    %v3777 = vmul.f32 %v3406, %v3775
    %v3778 = vadd.f32 %v3777, %v3767
    %v3779 = vld [vmem:[#allocation13] sm:$0xff]
    %v3781 = vsel %vm515, %v3778, 0
    %3783 = vmatprep.subr.mxu0 0.0
    %3784 = vmatpush1.msra.mxu0 %v3779
    %3785 = vmatprep.subr.mxu0 0.0
    %3786 = vmatpush1.msra.mxu0 0.0
    %3787 = vmatprep.subr.mxu0 0.0
    %3788 = vmatpush1.msra.mxu0 0.0
    %3789 = vmatprep.subr.mxu0 0.0
    %3790 = vmatpush1.msra.mxu0 0.0
    %3791 = vmatprep.subr.mxu0 0.0
    %3792 = vmatpush1.msra.mxu0 0.0
    %3793 = vmatprep.subr.mxu0 0.0
    %3794 = vmatpush1.msra.mxu0 0.0
    %3795 = vmatprep.subr.mxu0 0.0
    %3796 = vmatpush1.msra.mxu0 0.0
    %3797 = vmatprep.subr.mxu0 0.0
    %3798 = vmatpush1.msra.mxu0 0.0
    %3799 = vmatprep.subr.mxu0 0.0
    %3800 = vmatpush1.msra.mxu0 0.0
    %3801 = vmatprep.subr.mxu0 0.0
    %3802 = vmatpush1.msra.mxu0 0.0
    %3803 = vmatprep.subr.mxu0 0.0
    %3804 = vmatpush1.msra.mxu0 0.0
    %3805 = vmatprep.subr.mxu0 0.0
    %3806 = vmatpush1.msra.mxu0 0.0
    %3807 = vmatprep.subr.mxu0 0.0
    %3808 = vmatpush1.msra.mxu0 0.0
    %3809 = vmatprep.subr.mxu0 0.0
    %3810 = vmatpush1.msra.mxu0 0.0
    %3811 = vmatprep.subr.mxu0 0.0
    %3812 = vmatpush1.msra.mxu0 0.0
    %3813 = vmatprep.subr.mxu0 0.0
    %3814 = vmatpush1.msra.mxu0 0.0
    %3815 = vmatprep.subr.mxu0 0.0
    %3816 = vmatpush1.msra.mxu0 0.0
    %3817 = vmatprep.subr.mxu0 0.0
    %3818 = vmatpush1.msra.mxu0 0.0
    %3819 = vmatprep.subr.mxu0 0.0
    %3820 = vmatpush1.msra.mxu0 0.0
    %3821 = vmatprep.subr.mxu0 0.0
    %3822 = vmatpush1.msra.mxu0 0.0
    %3823 = vmatprep.subr.mxu0 0.0
    %3824 = vmatpush1.msra.mxu0 0.0
    %3825 = vmatprep.subr.mxu0 0.0
    %3826 = vmatpush1.msra.mxu0 0.0
    %3827 = vmatprep.subr.mxu0 0.0
    %3828 = vmatpush1.msra.mxu0 0.0
    %3829 = vmatprep.subr.mxu0 0.0
    %3830 = vmatpush1.msra.mxu0 0.0
    %3831 = vmatprep.subr.mxu0 0.0
    %3832 = vmatpush1.msra.mxu0 0.0
    %3833 = vmatprep.subr.mxu0 0.0
    %3834 = vmatpush1.msra.mxu0 0.0
    %3835 = vmatprep.subr.mxu0 0.0
    %3836 = vmatpush1.msra.mxu0 0.0
    %3837 = vmatprep.subr.mxu0 0.0
    %3838 = vmatpush1.msra.mxu0 0.0
    %3839 = vmatprep.subr.mxu0 0.0
    %3840 = vmatpush1.msra.mxu0 0.0
    %3841 = vmatprep.subr.mxu0 0.0
    %3842 = vmatpush1.msra.mxu0 0.0
    %3843 = vmatprep.subr.mxu0 0.0
    %3844 = vmatpush1.msra.mxu0 0.0
    %3845 = vmatprep.subr.mxu0 0.0
    %3846 = vmatpush1.msra.mxu0 0.0
    %3847 = vmatprep.mubr.f32.mxu0 0.0
    %3848 = vmatmul.mubr.f32.gmra.mrb[0].mxu0 %v3781
    %v3849 = vpop.f32.mrb[0].mxu0
    %v3850 = vadd.f32 0.0, %v3849
    %v3851 = vpop.f32.mrb[0].mxu0
    %3852 = vdwg.mxu0
    %3854 = vrot.lane.b32.xlu0 %v3850, 64
    %v3855 = vpop.permute.xlu0 %3854
    %v3857 = vadd.f32 %v3500, %v3855
    %3859 = vrot.lane.b32.xlu0 %v3857, 64
    %v3860 = vpop.permute.xlu0 %3859
    %v3862 = vsel %vm158, %v3860, %v3159
    %v3863 = vld [vmem:[%s9] sm:$0xff]
    %v3864 = vld [vmem:[%s9 + $0x8] sm:$0xff]
    %v3865 = vld [vmem:[%s9 + $0x10] sm:$0xff]
    %v3866 = vld [vmem:[%s9 + $0x18] sm:$0xff]
    %v3867 = vld [vmem:[%s9 + $0x20] sm:$0xff]
    %v3868 = vld [vmem:[%s9 + $0x28] sm:$0xff]
    %v3869 = vld [vmem:[%s9 + $0x30] sm:$0xff]
    %v3870 = vld [vmem:[%s9 + $0x38] sm:$0xff]
    %v3871 = vld [vmem:[%s10] sm:$0x1]
    %v3873 = vlaneseq
    %v3874 = vshrl.u32 %v3873, 7
    %v3875 = vsub.s32 0, %v3874
    %v3876 = vrot.slane %v3871, %v3875
    %v3879 = vsel %vm243, %v3862, 0
    %3881 = vmatprep.subr.mxu0 0.0
    %3882 = vmatpush1.msra.mxu0 %v3863
    %3883 = vmatprep.subr.mxu0 0.0
    %3884 = vmatpush1.msra.mxu0 %v3864
    %3885 = vmatprep.subr.mxu0 0.0
    %3886 = vmatpush1.msra.mxu0 %v3865
    %3887 = vmatprep.subr.mxu0 0.0
    %3888 = vmatpush1.msra.mxu0 %v3866
    %3889 = vmatprep.subr.mxu0 0.0
    %3890 = vmatpush1.msra.mxu0 %v3867
    %3891 = vmatprep.subr.mxu0 0.0
    %3892 = vmatpush1.msra.mxu0 %v3868
    %3893 = vmatprep.subr.mxu0 0.0
    %3894 = vmatpush1.msra.mxu0 %v3869
    %3895 = vmatprep.subr.mxu0 0.0
    %3896 = vmatpush1.msra.mxu0 %v3870
    %3897 = vmatprep.subr.mxu0 0.0
    %3898 = vmatpush1.msra.mxu0 0.0
    %3899 = vmatprep.subr.mxu0 0.0
    %3900 = vmatpush1.msra.mxu0 0.0
    %3901 = vmatprep.subr.mxu0 0.0
    %3902 = vmatpush1.msra.mxu0 0.0
    %3903 = vmatprep.subr.mxu0 0.0
    %3904 = vmatpush1.msra.mxu0 0.0
    %3905 = vmatprep.subr.mxu0 0.0
    %3906 = vmatpush1.msra.mxu0 0.0
    %3907 = vmatprep.subr.mxu0 0.0
    %3908 = vmatpush1.msra.mxu0 0.0
    %3909 = vmatprep.subr.mxu0 0.0
    %3910 = vmatpush1.msra.mxu0 0.0
    %3911 = vmatprep.subr.mxu0 0.0
    %3912 = vmatpush1.msra.mxu0 0.0
    %3913 = vmatprep.subr.mxu0 0.0
    %3914 = vmatpush1.msra.mxu0 0.0
    %3915 = vmatprep.subr.mxu0 0.0
    %3916 = vmatpush1.msra.mxu0 0.0
    %3917 = vmatprep.subr.mxu0 0.0
    %3918 = vmatpush1.msra.mxu0 0.0
    %3919 = vmatprep.subr.mxu0 0.0
    %3920 = vmatpush1.msra.mxu0 0.0
    %3921 = vmatprep.subr.mxu0 0.0
    %3922 = vmatpush1.msra.mxu0 0.0
    %3923 = vmatprep.subr.mxu0 0.0
    %3924 = vmatpush1.msra.mxu0 0.0
    %3925 = vmatprep.subr.mxu0 0.0
    %3926 = vmatpush1.msra.mxu0 0.0
    %3927 = vmatprep.subr.mxu0 0.0
    %3928 = vmatpush1.msra.mxu0 0.0
    %3929 = vmatprep.subr.mxu0 0.0
    %3930 = vmatpush1.msra.mxu0 0.0
    %3931 = vmatprep.subr.mxu0 0.0
    %3932 = vmatpush1.msra.mxu0 0.0
    %3933 = vmatprep.subr.mxu0 0.0
    %3934 = vmatpush1.msra.mxu0 0.0
    %3935 = vmatprep.subr.mxu0 0.0
    %3936 = vmatpush1.msra.mxu0 0.0
    %3937 = vmatprep.subr.mxu0 0.0
    %3938 = vmatpush1.msra.mxu0 0.0
    %3939 = vmatprep.subr.mxu0 0.0
    %3940 = vmatpush1.msra.mxu0 0.0
    %3941 = vmatprep.subr.mxu0 0.0
    %3942 = vmatpush1.msra.mxu0 0.0
    %3943 = vmatprep.subr.mxu0 0.0
    %3944 = vmatpush1.msra.mxu0 0.0
    %3945 = vmatprep.mubr.f32.mxu0 0.0
    %3946 = vmatmul.mubr.f32.gmra.mrb[0].mxu0 %v3879
    %v3947 = vpop.f32.mrb[0].mxu0
    %v3948 = vadd.f32 %v3876, %v3947
    %v3949 = vpop.f32.mrb[0].mxu0
    %3950 = vdwg.mxu0
    %v3951 = vxor.u32 %v3948, 2147483648
    %v3952 = vmul.f32 %v3951, 1.442695
    %v3953 = vpow.pop %v3952
    %v3954 = vadd.f32 %v3953, 1.0
    %v3955 = vrcp.pop %v3954
    %v3956 = vmul.f32 1.0, %v3955
    %3958 = vrot.lane.b32.xlu0 %v3948, 32
    %v3959 = vpop.permute.xlu0 %3958
    %v3961 = vmul.f32 %v3956, %v3959
    %3963 = vrot.lane.b32.xlu0 %v3961, 64
    %v3964 = vpop.permute.xlu0 %3963
    %v3966 = vadd.f32 %v3948, %v3964
    %v3967 = vtanh.pop %v3966
    %v3968 = vsub.f32 1.0, %v3956
    %3970 = vrot.lane.b32.xlu0 %v3967, 96
    %v3971 = vpop.permute.xlu0 %3970
    %v3973 = vmul.f32 %v3968, %v3971
    %v3974 = vmul.f32 %v3956, %v3159
    %v3975 = vadd.f32 %v3973, %v3974
    %3977 = vrot.lane.b32.xlu0 %v3975, 96
    %v3978 = vpop.permute.xlu0 %3977
    %v3980 = vsel %vm158, %v3978, %v3277
    %v3981 = vld [vmem:[%s11] sm:$0xff]
    %v3982 = vld [vmem:[%s11 + $0x8] sm:$0xff]
    %v3983 = vld [vmem:[%s11 + $0x10] sm:$0xff]
    %v3984 = vld [vmem:[%s11 + $0x18] sm:$0xff]
    %v3985 = vld [vmem:[%s11 + $0x20] sm:$0xff]
    %v3986 = vld [vmem:[%s11 + $0x28] sm:$0xff]
    %v3987 = vld [vmem:[%s11 + $0x30] sm:$0xff]
    %v3988 = vld [vmem:[%s11 + $0x38] sm:$0xff]
    %v3989 = vld [vmem:[%s12] sm:$0x1]
    %v3991 = vlaneseq
    %v3992 = vshrl.u32 %v3991, 7
    %v3993 = vsub.s32 0, %v3992
    %v3994 = vrot.slane %v3989, %v3993
    %v3997 = vsel %vm243, %v3980, 0
    %3999 = vmatprep.subr.mxu0 0.0
    %4000 = vmatpush1.msra.mxu0 %v3981
    %4001 = vmatprep.subr.mxu0 0.0
    %4002 = vmatpush1.msra.mxu0 %v3982
    %4003 = vmatprep.subr.mxu0 0.0
    %4004 = vmatpush1.msra.mxu0 %v3983
    %4005 = vmatprep.subr.mxu0 0.0
    %4006 = vmatpush1.msra.mxu0 %v3984
    %4007 = vmatprep.subr.mxu0 0.0
    %4008 = vmatpush1.msra.mxu0 %v3985
    %4009 = vmatprep.subr.mxu0 0.0
    %4010 = vmatpush1.msra.mxu0 %v3986
    %4011 = vmatprep.subr.mxu0 0.0
    %4012 = vmatpush1.msra.mxu0 %v3987
    %4013 = vmatprep.subr.mxu0 0.0
    %4014 = vmatpush1.msra.mxu0 %v3988
    %4015 = vmatprep.subr.mxu0 0.0
    %4016 = vmatpush1.msra.mxu0 0.0
    %4017 = vmatprep.subr.mxu0 0.0
    %4018 = vmatpush1.msra.mxu0 0.0
    %4019 = vmatprep.subr.mxu0 0.0
    %4020 = vmatpush1.msra.mxu0 0.0
    %4021 = vmatprep.subr.mxu0 0.0
    %4022 = vmatpush1.msra.mxu0 0.0
    %4023 = vmatprep.subr.mxu0 0.0
    %4024 = vmatpush1.msra.mxu0 0.0
    %4025 = vmatprep.subr.mxu0 0.0
    %4026 = vmatpush1.msra.mxu0 0.0
    %4027 = vmatprep.subr.mxu0 0.0
    %4028 = vmatpush1.msra.mxu0 0.0
    %4029 = vmatprep.subr.mxu0 0.0
    %4030 = vmatpush1.msra.mxu0 0.0
    %4031 = vmatprep.subr.mxu0 0.0
    %4032 = vmatpush1.msra.mxu0 0.0
    %4033 = vmatprep.subr.mxu0 0.0
    %4034 = vmatpush1.msra.mxu0 0.0
    %4035 = vmatprep.subr.mxu0 0.0
    %4036 = vmatpush1.msra.mxu0 0.0
    %4037 = vmatprep.subr.mxu0 0.0
    %4038 = vmatpush1.msra.mxu0 0.0
    %4039 = vmatprep.subr.mxu0 0.0
    %4040 = vmatpush1.msra.mxu0 0.0
    %4041 = vmatprep.subr.mxu0 0.0
    %4042 = vmatpush1.msra.mxu0 0.0
    %4043 = vmatprep.subr.mxu0 0.0
    %4044 = vmatpush1.msra.mxu0 0.0
    %4045 = vmatprep.subr.mxu0 0.0
    %4046 = vmatpush1.msra.mxu0 0.0
    %4047 = vmatprep.subr.mxu0 0.0
    %4048 = vmatpush1.msra.mxu0 0.0
    %4049 = vmatprep.subr.mxu0 0.0
    %4050 = vmatpush1.msra.mxu0 0.0
    %4051 = vmatprep.subr.mxu0 0.0
    %4052 = vmatpush1.msra.mxu0 0.0
    %4053 = vmatprep.subr.mxu0 0.0
    %4054 = vmatpush1.msra.mxu0 0.0
    %4055 = vmatprep.subr.mxu0 0.0
    %4056 = vmatpush1.msra.mxu0 0.0
    %4057 = vmatprep.subr.mxu0 0.0
    %4058 = vmatpush1.msra.mxu0 0.0
    %4059 = vmatprep.subr.mxu0 0.0
    %4060 = vmatpush1.msra.mxu0 0.0
    %4061 = vmatprep.subr.mxu0 0.0
    %4062 = vmatpush1.msra.mxu0 0.0
    %4063 = vmatprep.mubr.f32.mxu0 0.0
    %4064 = vmatmul.mubr.f32.gmra.mrb[0].mxu0 %v3997
    %v4065 = vpop.f32.mrb[0].mxu0
    %v4066 = vadd.f32 %v3994, %v4065
    %v4067 = vpop.f32.mrb[0].mxu0
    %4068 = vdwg.mxu0
    %v4069 = vxor.u32 %v4066, 2147483648
    %v4070 = vmul.f32 %v4069, 1.442695
    %v4071 = vpow.pop %v4070
    %v4072 = vadd.f32 %v4071, 1.0
    %v4073 = vrcp.pop %v4072
    %v4074 = vmul.f32 1.0, %v4073
    %4076 = vrot.lane.b32.xlu0 %v4066, 32
    %v4077 = vpop.permute.xlu0 %4076
    %v4079 = vmul.f32 %v4074, %v4077
    %4081 = vrot.lane.b32.xlu0 %v4079, 64
    %v4082 = vpop.permute.xlu0 %4081
    %v4084 = vadd.f32 %v4066, %v4082
    %v4085 = vtanh.pop %v4084
    %v4086 = vsub.f32 1.0, %v4074
    %4088 = vrot.lane.b32.xlu0 %v4085, 96
    %v4089 = vpop.permute.xlu0 %4088
    %v4091 = vmul.f32 %v4086, %v4089
    %v4092 = vmul.f32 %v4074, %v3277
    %v4093 = vadd.f32 %v4091, %v4092
    %v4094 = vld [vmem:[%s13] sm:$0xff]
    %v4095 = vld [vmem:[%s13 + $0x8] sm:$0xff]
    %v4096 = vld [vmem:[%s13 + $0x10] sm:$0xff]
    %v4097 = vld [vmem:[%s13 + $0x18] sm:$0xff]
    %v4098 = vld [vmem:[%s14] sm:$0x1]
    %v4100 = vlaneseq
    %v4101 = vshrl.u32 %v4100, 7
    %v4102 = vsub.s32 0, %v4101
    %v4103 = vrot.slane %v4098, %v4102
    %4106 = vrot.lane.b32.xlu0 %v4093, 96
    %v4107 = vpop.permute.xlu0 %4106
    %v4108 = vsel %vm158, %v4107, 0
    %4110 = vmatprep.subr.mxu0 0.0
    %4111 = vmatpush1.msra.mxu0 %v4094
    %4112 = vmatprep.subr.mxu0 0.0
    %4113 = vmatpush1.msra.mxu0 %v4095
    %4114 = vmatprep.subr.mxu0 0.0
    %4115 = vmatpush1.msra.mxu0 %v4096
    %4116 = vmatprep.subr.mxu0 0.0
    %4117 = vmatpush1.msra.mxu0 %v4097
    %4118 = vmatprep.subr.mxu0 0.0
    %4119 = vmatpush1.msra.mxu0 0.0
    %4120 = vmatprep.subr.mxu0 0.0
    %4121 = vmatpush1.msra.mxu0 0.0
    %4122 = vmatprep.subr.mxu0 0.0
    %4123 = vmatpush1.msra.mxu0 0.0
    %4124 = vmatprep.subr.mxu0 0.0
    %4125 = vmatpush1.msra.mxu0 0.0
    %4126 = vmatprep.subr.mxu0 0.0
    %4127 = vmatpush1.msra.mxu0 0.0
    %4128 = vmatprep.subr.mxu0 0.0
    %4129 = vmatpush1.msra.mxu0 0.0
    %4130 = vmatprep.subr.mxu0 0.0
    %4131 = vmatpush1.msra.mxu0 0.0
    %4132 = vmatprep.subr.mxu0 0.0
    %4133 = vmatpush1.msra.mxu0 0.0
    %4134 = vmatprep.subr.mxu0 0.0
    %4135 = vmatpush1.msra.mxu0 0.0
    %4136 = vmatprep.subr.mxu0 0.0
    %4137 = vmatpush1.msra.mxu0 0.0
    %4138 = vmatprep.subr.mxu0 0.0
    %4139 = vmatpush1.msra.mxu0 0.0
    %4140 = vmatprep.subr.mxu0 0.0
    %4141 = vmatpush1.msra.mxu0 0.0
    %4142 = vmatprep.subr.mxu0 0.0
    %4143 = vmatpush1.msra.mxu0 0.0
    %4144 = vmatprep.subr.mxu0 0.0
    %4145 = vmatpush1.msra.mxu0 0.0
    %4146 = vmatprep.subr.mxu0 0.0
    %4147 = vmatpush1.msra.mxu0 0.0
    %4148 = vmatprep.subr.mxu0 0.0
    %4149 = vmatpush1.msra.mxu0 0.0
    %4150 = vmatprep.subr.mxu0 0.0
    %4151 = vmatpush1.msra.mxu0 0.0
    %4152 = vmatprep.subr.mxu0 0.0
    %4153 = vmatpush1.msra.mxu0 0.0
    %4154 = vmatprep.subr.mxu0 0.0
    %4155 = vmatpush1.msra.mxu0 0.0
    %4156 = vmatprep.subr.mxu0 0.0
    %4157 = vmatpush1.msra.mxu0 0.0
    %4158 = vmatprep.subr.mxu0 0.0
    %4159 = vmatpush1.msra.mxu0 0.0
    %4160 = vmatprep.subr.mxu0 0.0
    %4161 = vmatpush1.msra.mxu0 0.0
    %4162 = vmatprep.subr.mxu0 0.0
    %4163 = vmatpush1.msra.mxu0 0.0
    %4164 = vmatprep.subr.mxu0 0.0
    %4165 = vmatpush1.msra.mxu0 0.0
    %4166 = vmatprep.subr.mxu0 0.0
    %4167 = vmatpush1.msra.mxu0 0.0
    %4168 = vmatprep.subr.mxu0 0.0
    %4169 = vmatpush1.msra.mxu0 0.0
    %4170 = vmatprep.subr.mxu0 0.0
    %4171 = vmatpush1.msra.mxu0 0.0
    %4172 = vmatprep.subr.mxu0 0.0
    %4173 = vmatpush1.msra.mxu0 0.0
    %4174 = vmatprep.mubr.f32.mxu0 0.0
    %4175 = vmatmul.mubr.f32.gmra.mrb[0].mxu0 %v4108
    %v4176 = vpop.f32.mrb[0].mxu0
    %v4177 = vadd.f32 %v4103, %v4176
    %v4178 = vpop.f32.mrb[0].mxu0
    %4179 = vdwg.mxu0
    %s4180 = scalar_lea.vmem [#allocation14], 8
    %4181 = vst.msk [vmem:[%s4180] sm:$0x3] %vm916, %v4177
    %v4182 = vsub.f32 %v4177, %v3404
    %v4183 = vmul.f32 %v4182, %v4182
    %v4184 = vadd.f32 %v3368, %v4183
    %v4185 = vmul.f32 %v3767, 1.442695
    %v4186 = vpow.pop %v4185
    %4188 = vrot.lane.b32.xlu0 %v3767, 16
    %v4189 = vpop.permute.xlu0 %4188
    %v4191 = vsub.f32 %v3767, %v4189
    %v4192 = vmul.f32 %v4191, 0.5
    %4193 = vrot.lane.b32.xlu0 %v3767, 112
    %v4194 = vpop.permute.xlu0 %4193
    %v4196 = vsub.f32 %v3767, %v4194
    %v4197 = vmul.f32 %v4196, %v4196
    %4199 = vrot.lane.b32.xlu0 %v4197, 8
    %v4200 = vpop.permute.xlu0 %4199
    %v4202 = vadd.f32 %v4186, %v4200
    %v4203 = vsub.f32 0.0, %v3767
    %v4204 = vmul.f32 %v4203, 1.442695
    %v4205 = vpow.pop %v4204
    %v4206 = vmul.f32 %v4205, 0.5
    %4208 = vrot.lane.b32.xlu0 %v4206, 112
    %v4209 = vpop.permute.xlu0 %4208
    %v4211 = vmul.f32 %v4202, %v4209
    %4213 = vrot.lane.b32.xlu0 %v4211, 16
    %v4214 = vpop.permute.xlu0 %4213
    %v4216 = vadd.f32 %v4192, %v4214
    %v4217 = vsub.f32 %v4216, 0.5
    %v4218 = vadd.f32 %v3402, %v4217
    %s4219 = scalar_lea.vmem [#allocation2], 10
    %v4220 = vld [vmem:[%s4219] sm:$0x3]
    %s4221 = scalar_lea.vmem [#allocation5], 10
    %v4222 = vld [vmem:[%s4221] sm:$0x3]
    %4224 = vrot.lane.b32.xlu0 %v4177, 16
    %v4225 = vpop.permute.xlu0 %4224
    %v4227 = vsel %vm146, %v4220, %v4225
    %v4228 = vld [vmem:[#allocation7] sm:$0xff]
    %v4229 = vld [vmem:[#allocation7 + $0x8] sm:$0xff]
    %v4230 = vld [vmem:[#allocation7 + $0x10] sm:$0xff]
    %v4231 = vld [vmem:[#allocation7 + $0x18] sm:$0xff]
    %v4232 = vld [vmem:[%s3] sm:$0x1]
    %v4233 = vmul.f32 %v4232, 0.71428573
    %v4234 = vlaneseq
    %v4235 = vshrl.u32 %v4234, 7
    %v4236 = vsub.s32 0, %v4235
    %v4237 = vrot.slane %v4233, %v4236
    %v4239 = vsel %vm158, %v4227, 0
    %4241 = vmatprep.subr.mxu0 0.0
    %4242 = vmatpush1.msra.mxu0 %v4228
    %4243 = vmatprep.subr.mxu0 0.0
    %4244 = vmatpush1.msra.mxu0 %v4229
    %4245 = vmatprep.subr.mxu0 0.0
    %4246 = vmatpush1.msra.mxu0 %v4230
    %4247 = vmatprep.subr.mxu0 0.0
    %4248 = vmatpush1.msra.mxu0 %v4231
    %4249 = vmatprep.subr.mxu0 0.0
    %4250 = vmatpush1.msra.mxu0 0.0
    %4251 = vmatprep.subr.mxu0 0.0
    %4252 = vmatpush1.msra.mxu0 0.0
    %4253 = vmatprep.subr.mxu0 0.0
    %4254 = vmatpush1.msra.mxu0 0.0
    %4255 = vmatprep.subr.mxu0 0.0
    %4256 = vmatpush1.msra.mxu0 0.0
    %4257 = vmatprep.subr.mxu0 0.0
    %4258 = vmatpush1.msra.mxu0 0.0
    %4259 = vmatprep.subr.mxu0 0.0
    %4260 = vmatpush1.msra.mxu0 0.0
    %4261 = vmatprep.subr.mxu0 0.0
    %4262 = vmatpush1.msra.mxu0 0.0
    %4263 = vmatprep.subr.mxu0 0.0
    %4264 = vmatpush1.msra.mxu0 0.0
    %4265 = vmatprep.subr.mxu0 0.0
    %4266 = vmatpush1.msra.mxu0 0.0
    %4267 = vmatprep.subr.mxu0 0.0
    %4268 = vmatpush1.msra.mxu0 0.0
    %4269 = vmatprep.subr.mxu0 0.0
    %4270 = vmatpush1.msra.mxu0 0.0
    %4271 = vmatprep.subr.mxu0 0.0
    %4272 = vmatpush1.msra.mxu0 0.0
    %4273 = vmatprep.subr.mxu0 0.0
    %4274 = vmatpush1.msra.mxu0 0.0
    %4275 = vmatprep.subr.mxu0 0.0
    %4276 = vmatpush1.msra.mxu0 0.0
    %4277 = vmatprep.subr.mxu0 0.0
    %4278 = vmatpush1.msra.mxu0 0.0
    %4279 = vmatprep.subr.mxu0 0.0
    %4280 = vmatpush1.msra.mxu0 0.0
    %4281 = vmatprep.subr.mxu0 0.0
    %4282 = vmatpush1.msra.mxu0 0.0
    %4283 = vmatprep.subr.mxu0 0.0
    %4284 = vmatpush1.msra.mxu0 0.0
    %4285 = vmatprep.subr.mxu0 0.0
    %4286 = vmatpush1.msra.mxu0 0.0
    %4287 = vmatprep.subr.mxu0 0.0
    %4288 = vmatpush1.msra.mxu0 0.0
    %4289 = vmatprep.subr.mxu0 0.0
    %4290 = vmatpush1.msra.mxu0 0.0
    %4291 = vmatprep.subr.mxu0 0.0
    %4292 = vmatpush1.msra.mxu0 0.0
    %4293 = vmatprep.subr.mxu0 0.0
    %4294 = vmatpush1.msra.mxu0 0.0
    %4295 = vmatprep.subr.mxu0 0.0
    %4296 = vmatpush1.msra.mxu0 0.0
    %4297 = vmatprep.subr.mxu0 0.0
    %4298 = vmatpush1.msra.mxu0 0.0
    %4299 = vmatprep.subr.mxu0 0.0
    %4300 = vmatpush1.msra.mxu0 0.0
    %4301 = vmatprep.subr.mxu0 0.0
    %4302 = vmatpush1.msra.mxu0 0.0
    %4303 = vmatprep.subr.mxu0 0.0
    %4304 = vmatpush1.msra.mxu0 0.0
    %4305 = vmatprep.mubr.f32.mxu0 0.0
    %4306 = vmatmul.mubr.f32.gmra.mrb[0].mxu0 %v4239
    %v4307 = vpop.f32.mrb[0].mxu0
    %v4308 = vadd.f32 %v4237, %v4307
    %v4309 = vpop.f32.mrb[0].mxu0
    %4310 = vdwg.mxu0
    %v4311 = vld [vmem:[%s3 + $0x1] sm:$0x1]
    %v4312 = vlaneseq
    %v4313 = vshrl.u32 %v4312, 7
    %v4314 = vsub.s32 0, %v4313
    %v4315 = vrot.slane %v4311, %v4314
    %v4316 = vadd.f32 %v4308, %v4315
    %4318 = vrot.lane.b32.xlu0 %v4316, 32
    %v4319 = vpop.permute.xlu0 %4318
    %4322 = vrot.lane.b32.xlu0 %v3676, 64
    %v4323 = vpop.permute.xlu0 %4322
    %v4325 = vsel %vm158, %v4316, %v3651
    %v4326 = vsel %vm243, %v4325, %v4319
    %v4327 = vsel %vm245, %v4326, %v4323
    %v4328 = vld [vmem:[#allocation8] sm:$0xff]
    %v4329 = vld [vmem:[#allocation8 + $0x8] sm:$0xff]
    %v4330 = vld [vmem:[#allocation8 + $0x10] sm:$0xff]
    %v4331 = vld [vmem:[#allocation8 + $0x18] sm:$0xff]
    %v4332 = vld [vmem:[#allocation8 + $0x20] sm:$0xff]
    %v4333 = vld [vmem:[#allocation8 + $0x28] sm:$0xff]
    %v4334 = vld [vmem:[#allocation8 + $0x30] sm:$0xff]
    %v4335 = vld [vmem:[#allocation8 + $0x38] sm:$0xff]
    %v4336 = vld [vmem:[#allocation8 + $0x40] sm:$0xff]
    %v4337 = vld [vmem:[#allocation8 + $0x48] sm:$0xff]
    %v4338 = vld [vmem:[#allocation8 + $0x50] sm:$0xff]
    %v4339 = vld [vmem:[#allocation8 + $0x58] sm:$0xff]
    %v4340 = vld [vmem:[#allocation8 + $0x60] sm:$0xff]
    %v4341 = vld [vmem:[#allocation8 + $0x68] sm:$0xff]
    %v4342 = vld [vmem:[#allocation8 + $0x70] sm:$0xff]
    %v4343 = vld [vmem:[#allocation8 + $0x78] sm:$0xff]
    %v4344 = vld [vmem:[#allocation8 + $0x80] sm:$0xff]
    %v4345 = vld [vmem:[#allocation8 + $0x88] sm:$0xff]
    %v4346 = vld [vmem:[#allocation8 + $0x90] sm:$0xff]
    %v4347 = vld [vmem:[#allocation8 + $0x98] sm:$0xff]
    %v4348 = vld [vmem:[#allocation8 + $0xa0] sm:$0xff]
    %v4349 = vld [vmem:[#allocation8 + $0xa8] sm:$0xff]
    %v4350 = vld [vmem:[#allocation8 + $0xb0] sm:$0xff]
    %v4351 = vld [vmem:[#allocation8 + $0xb8] sm:$0xff]
    %v4352 = vld [vmem:[#allocation8 + $0xc0] sm:$0xff]
    %v4353 = vld [vmem:[#allocation8 + $0xc8] sm:$0xff]
    %v4354 = vld [vmem:[#allocation8 + $0xd0] sm:$0xff]
    %v4355 = vld [vmem:[#allocation8 + $0xd8] sm:$0xff]
    %v4356 = vld [vmem:[#allocation8 + $0xe0] sm:$0xff]
    %v4357 = vld [vmem:[#allocation8 + $0xe8] sm:$0xff]
    %v4358 = vld [vmem:[#allocation8 + $0xf0] sm:$0xff]
    %v4359 = vld [vmem:[#allocation8 + $0xf8] sm:$0xff]
    %v4360 = vld [vmem:[#allocation10] sm:$0x3]
    %v4362 = vlaneseq
    %v4363 = vshrl.u32 %v4362, 7
    %v4364 = vsub.s32 0, %v4363
    %v4365 = vrot.slane %v4360, %v4364
    %v4366 = vlaneseq
    %v4367 = vshrl.u32 %v4366, 7
    %v4368 = vsub.s32 1, %v4367
    %v4369 = vrot.slane %v4360, %v4368
    %4372 = vmatprep.subr.mxu0 %v4329
    %4373 = vmatpush1.msra.mxu0 %v4328
    %4374 = vmatprep.subr.mxu0 %v4331
    %4375 = vmatpush1.msra.mxu0 %v4330
    %4376 = vmatprep.subr.mxu0 %v4333
    %4377 = vmatpush1.msra.mxu0 %v4332
    %4378 = vmatprep.subr.mxu0 %v4335
    %4379 = vmatpush1.msra.mxu0 %v4334
    %4380 = vmatprep.subr.mxu0 %v4337
    %4381 = vmatpush1.msra.mxu0 %v4336
    %4382 = vmatprep.subr.mxu0 %v4339
    %4383 = vmatpush1.msra.mxu0 %v4338
    %4384 = vmatprep.subr.mxu0 %v4341
    %4385 = vmatpush1.msra.mxu0 %v4340
    %4386 = vmatprep.subr.mxu0 %v4343
    %4387 = vmatpush1.msra.mxu0 %v4342
    %4388 = vmatprep.subr.mxu0 %v4345
    %4389 = vmatpush1.msra.mxu0 %v4344
    %4390 = vmatprep.subr.mxu0 %v4347
    %4391 = vmatpush1.msra.mxu0 %v4346
    %4392 = vmatprep.subr.mxu0 %v4349
    %4393 = vmatpush1.msra.mxu0 %v4348
    %4394 = vmatprep.subr.mxu0 %v4351
    %4395 = vmatpush1.msra.mxu0 %v4350
    %4396 = vmatprep.subr.mxu0 %v4353
    %4397 = vmatpush1.msra.mxu0 %v4352
    %4398 = vmatprep.subr.mxu0 %v4355
    %4399 = vmatpush1.msra.mxu0 %v4354
    %4400 = vmatprep.subr.mxu0 %v4357
    %4401 = vmatpush1.msra.mxu0 %v4356
    %4402 = vmatprep.subr.mxu0 %v4359
    %4403 = vmatpush1.msra.mxu0 %v4358
    %4404 = vmatprep.subr.mxu0 0.0
    %4405 = vmatpush1.msra.mxu0 0.0
    %4406 = vmatprep.subr.mxu0 0.0
    %4407 = vmatpush1.msra.mxu0 0.0
    %4408 = vmatprep.subr.mxu0 0.0
    %4409 = vmatpush1.msra.mxu0 0.0
    %4410 = vmatprep.subr.mxu0 0.0
    %4411 = vmatpush1.msra.mxu0 0.0
    %4412 = vmatprep.subr.mxu0 0.0
    %4413 = vmatpush1.msra.mxu0 0.0
    %4414 = vmatprep.subr.mxu0 0.0
    %4415 = vmatpush1.msra.mxu0 0.0
    %4416 = vmatprep.subr.mxu0 0.0
    %4417 = vmatpush1.msra.mxu0 0.0
    %4418 = vmatprep.subr.mxu0 0.0
    %4419 = vmatpush1.msra.mxu0 0.0
    %4420 = vmatprep.subr.mxu0 0.0
    %4421 = vmatpush1.msra.mxu0 0.0
    %4422 = vmatprep.subr.mxu0 0.0
    %4423 = vmatpush1.msra.mxu0 0.0
    %4424 = vmatprep.subr.mxu0 0.0
    %4425 = vmatpush1.msra.mxu0 0.0
    %4426 = vmatprep.subr.mxu0 0.0
    %4427 = vmatpush1.msra.mxu0 0.0
    %4428 = vmatprep.subr.mxu0 0.0
    %4429 = vmatpush1.msra.mxu0 0.0
    %4430 = vmatprep.subr.mxu0 0.0
    %4431 = vmatpush1.msra.mxu0 0.0
    %4432 = vmatprep.subr.mxu0 0.0
    %4433 = vmatpush1.msra.mxu0 0.0
    %4434 = vmatprep.subr.mxu0 0.0
    %4435 = vmatpush1.msra.mxu0 0.0
    %4436 = vmatprep.mubr.f32.mxu0 0.0
    %4437 = vmatmul.mubr.f32.gmra.mrb[0].mxu0 %v4327
    %v4438 = vpop.f32.mrb[0].mxu0
    %v4439 = vadd.f32 %v4365, %v4438
    %v4440 = vpop.f32.mrb[0].mxu0
    %v4441 = vadd.f32 %v4369, %v4440
    %4442 = vdwg.mxu0
    %v4443 = vxor.u32 %v4439, 2147483648
    %v4444 = vmul.f32 %v4443, 1.442695
    %v4445 = vpow.pop %v4444
    %v4446 = vadd.f32 %v4445, 1.0
    %v4447 = vrcp.pop %v4446
    %v4448 = vmul.f32 1.0, %v4447
    %4450 = vrot.lane.b32.xlu0 %v4439, 32
    %v4451 = vpop.permute.xlu0 %4450
    %v4453 = vmul.f32 %v4448, %v4451
    %4455 = vrot.lane.b32.xlu0 %v4453, 64
    %v4456 = vpop.permute.xlu0 %4455
    %v4458 = vadd.f32 %v4439, %v4456
    %v4459 = vtanh.pop %v4458
    %v4460 = vsub.f32 1.0, %v4448
    %4462 = vrot.lane.b32.xlu0 %v4459, 96
    %v4463 = vpop.permute.xlu0 %4462
    %v4465 = vmul.f32 %v4460, %v4463
    %v4466 = vmul.f32 %v4448, %v3651
    %v4467 = vadd.f32 %v4465, %v4466
    %v4468 = vxor.u32 %v4441, 2147483648
    %v4469 = vmul.f32 %v4468, 1.442695
    %v4470 = vpow.pop %v4469
    %v4471 = vadd.f32 %v4470, 1.0
    %v4472 = vrcp.pop %v4471
    %v4473 = vmul.f32 1.0, %v4472
    %4475 = vrot.lane.b32.xlu0 %v4441, 32
    %v4476 = vpop.permute.xlu0 %4475
    %v4478 = vmul.f32 %v4473, %v4476
    %4480 = vrot.lane.b32.xlu0 %v4478, 64
    %v4481 = vpop.permute.xlu0 %4480
    %v4483 = vadd.f32 %v4441, %v4481
    %v4484 = vtanh.pop %v4483
    %v4485 = vsub.f32 1.0, %v4473
    %4487 = vrot.lane.b32.xlu0 %v4484, 96
    %v4488 = vpop.permute.xlu0 %4487
    %v4490 = vmul.f32 %v4485, %v4488
    %v4491 = vmul.f32 %v4473, %v3676
    %v4492 = vadd.f32 %v4490, %v4491
    %4494 = vrot.lane.b32.xlu0 %v4467, 96
    %v4495 = vpop.permute.xlu0 %4494
    %v4497 = vsel %vm158, %v4495, %v4492
    %v4498 = vld [vmem:[%s6] sm:$0xff]
    %v4499 = vld [vmem:[%s6 + $0x8] sm:$0xff]
    %v4500 = vld [vmem:[%s6 + $0x10] sm:$0xff]
    %v4501 = vld [vmem:[%s6 + $0x18] sm:$0xff]
    %v4502 = vld [vmem:[%s6 + $0x20] sm:$0xff]
    %v4503 = vld [vmem:[%s6 + $0x28] sm:$0xff]
    %v4504 = vld [vmem:[%s6 + $0x30] sm:$0xff]
    %v4505 = vld [vmem:[%s6 + $0x38] sm:$0xff]
    %v4506 = vld [vmem:[#allocation11] sm:$0x1]
    %v4508 = vlaneseq
    %v4509 = vshrl.u32 %v4508, 7
    %v4510 = vsub.s32 0, %v4509
    %v4511 = vrot.slane %v4506, %v4510
    %v4514 = vsel %vm243, %v4497, 0
    %4516 = vmatprep.subr.mxu0 0.0
    %4517 = vmatpush1.msra.mxu0 %v4498
    %4518 = vmatprep.subr.mxu0 0.0
    %4519 = vmatpush1.msra.mxu0 %v4499
    %4520 = vmatprep.subr.mxu0 0.0
    %4521 = vmatpush1.msra.mxu0 %v4500
    %4522 = vmatprep.subr.mxu0 0.0
    %4523 = vmatpush1.msra.mxu0 %v4501
    %4524 = vmatprep.subr.mxu0 0.0
    %4525 = vmatpush1.msra.mxu0 %v4502
    %4526 = vmatprep.subr.mxu0 0.0
    %4527 = vmatpush1.msra.mxu0 %v4503
    %4528 = vmatprep.subr.mxu0 0.0
    %4529 = vmatpush1.msra.mxu0 %v4504
    %4530 = vmatprep.subr.mxu0 0.0
    %4531 = vmatpush1.msra.mxu0 %v4505
    %4532 = vmatprep.subr.mxu0 0.0
    %4533 = vmatpush1.msra.mxu0 0.0
    %4534 = vmatprep.subr.mxu0 0.0
    %4535 = vmatpush1.msra.mxu0 0.0
    %4536 = vmatprep.subr.mxu0 0.0
    %4537 = vmatpush1.msra.mxu0 0.0
    %4538 = vmatprep.subr.mxu0 0.0
    %4539 = vmatpush1.msra.mxu0 0.0
    %4540 = vmatprep.subr.mxu0 0.0
    %4541 = vmatpush1.msra.mxu0 0.0
    %4542 = vmatprep.subr.mxu0 0.0
    %4543 = vmatpush1.msra.mxu0 0.0
    %4544 = vmatprep.subr.mxu0 0.0
    %4545 = vmatpush1.msra.mxu0 0.0
    %4546 = vmatprep.subr.mxu0 0.0
    %4547 = vmatpush1.msra.mxu0 0.0
    %4548 = vmatprep.subr.mxu0 0.0
    %4549 = vmatpush1.msra.mxu0 0.0
    %4550 = vmatprep.subr.mxu0 0.0
    %4551 = vmatpush1.msra.mxu0 0.0
    %4552 = vmatprep.subr.mxu0 0.0
    %4553 = vmatpush1.msra.mxu0 0.0
    %4554 = vmatprep.subr.mxu0 0.0
    %4555 = vmatpush1.msra.mxu0 0.0
    %4556 = vmatprep.subr.mxu0 0.0
    %4557 = vmatpush1.msra.mxu0 0.0
    %4558 = vmatprep.subr.mxu0 0.0
    %4559 = vmatpush1.msra.mxu0 0.0
    %4560 = vmatprep.subr.mxu0 0.0
    %4561 = vmatpush1.msra.mxu0 0.0
    %4562 = vmatprep.subr.mxu0 0.0
    %4563 = vmatpush1.msra.mxu0 0.0
    %4564 = vmatprep.subr.mxu0 0.0
    %4565 = vmatpush1.msra.mxu0 0.0
    %4566 = vmatprep.subr.mxu0 0.0
    %4567 = vmatpush1.msra.mxu0 0.0
    %4568 = vmatprep.subr.mxu0 0.0
    %4569 = vmatpush1.msra.mxu0 0.0
    %4570 = vmatprep.subr.mxu0 0.0
    %4571 = vmatpush1.msra.mxu0 0.0
    %4572 = vmatprep.subr.mxu0 0.0
    %4573 = vmatpush1.msra.mxu0 0.0
    %4574 = vmatprep.subr.mxu0 0.0
    %4575 = vmatpush1.msra.mxu0 0.0
    %4576 = vmatprep.subr.mxu0 0.0
    %4577 = vmatpush1.msra.mxu0 0.0
    %4578 = vmatprep.subr.mxu0 0.0
    %4579 = vmatpush1.msra.mxu0 0.0
    %4580 = vmatprep.mubr.f32.mxu0 0.0
    %4581 = vmatmul.mubr.f32.gmra.mrb[0].mxu0 %v4514
    %v4582 = vpop.f32.mrb[0].mxu0
    %v4583 = vadd.f32 %v4511, %v4582
    %v4584 = vpop.f32.mrb[0].mxu0
    %4585 = vdwg.mxu0
    %v4586 = vmul.f32 %v4583, 0.5
    %v4587 = vmul.f32 %v4586, 1.442695
    %v4588 = vpow.pop %v4587
    %4590 = vrot.lane.b32.xlu0 %v4588, 120
    %v4591 = vpop.permute.xlu0 %4590
    %v4593 = vmul.f32 %v4222, %v4591
    %v4594 = vadd.f32 %v4593, %v4583
    %v4595 = vld [vmem:[#allocation13] sm:$0xff]
    %v4597 = vsel %vm515, %v4594, 0
    %4599 = vmatprep.subr.mxu0 0.0
    %4600 = vmatpush1.msra.mxu0 %v4595
    %4601 = vmatprep.subr.mxu0 0.0
    %4602 = vmatpush1.msra.mxu0 0.0
    %4603 = vmatprep.subr.mxu0 0.0
    %4604 = vmatpush1.msra.mxu0 0.0
    %4605 = vmatprep.subr.mxu0 0.0
    %4606 = vmatpush1.msra.mxu0 0.0
    %4607 = vmatprep.subr.mxu0 0.0
    %4608 = vmatpush1.msra.mxu0 0.0
    %4609 = vmatprep.subr.mxu0 0.0
    %4610 = vmatpush1.msra.mxu0 0.0
    %4611 = vmatprep.subr.mxu0 0.0
    %4612 = vmatpush1.msra.mxu0 0.0
    %4613 = vmatprep.subr.mxu0 0.0
    %4614 = vmatpush1.msra.mxu0 0.0
    %4615 = vmatprep.subr.mxu0 0.0
    %4616 = vmatpush1.msra.mxu0 0.0
    %4617 = vmatprep.subr.mxu0 0.0
    %4618 = vmatpush1.msra.mxu0 0.0
    %4619 = vmatprep.subr.mxu0 0.0
    %4620 = vmatpush1.msra.mxu0 0.0
    %4621 = vmatprep.subr.mxu0 0.0
    %4622 = vmatpush1.msra.mxu0 0.0
    %4623 = vmatprep.subr.mxu0 0.0
    %4624 = vmatpush1.msra.mxu0 0.0
    %4625 = vmatprep.subr.mxu0 0.0
    %4626 = vmatpush1.msra.mxu0 0.0
    %4627 = vmatprep.subr.mxu0 0.0
    %4628 = vmatpush1.msra.mxu0 0.0
    %4629 = vmatprep.subr.mxu0 0.0
    %4630 = vmatpush1.msra.mxu0 0.0
    %4631 = vmatprep.subr.mxu0 0.0
    %4632 = vmatpush1.msra.mxu0 0.0
    %4633 = vmatprep.subr.mxu0 0.0
    %4634 = vmatpush1.msra.mxu0 0.0
    %4635 = vmatprep.subr.mxu0 0.0
    %4636 = vmatpush1.msra.mxu0 0.0
    %4637 = vmatprep.subr.mxu0 0.0
    %4638 = vmatpush1.msra.mxu0 0.0
    %4639 = vmatprep.subr.mxu0 0.0
    %4640 = vmatpush1.msra.mxu0 0.0
    %4641 = vmatprep.subr.mxu0 0.0
    %4642 = vmatpush1.msra.mxu0 0.0
    %4643 = vmatprep.subr.mxu0 0.0
    %4644 = vmatpush1.msra.mxu0 0.0
    %4645 = vmatprep.subr.mxu0 0.0
    %4646 = vmatpush1.msra.mxu0 0.0
    %4647 = vmatprep.subr.mxu0 0.0
    %4648 = vmatpush1.msra.mxu0 0.0
    %4649 = vmatprep.subr.mxu0 0.0
    %4650 = vmatpush1.msra.mxu0 0.0
    %4651 = vmatprep.subr.mxu0 0.0
    %4652 = vmatpush1.msra.mxu0 0.0
    %4653 = vmatprep.subr.mxu0 0.0
    %4654 = vmatpush1.msra.mxu0 0.0
    %4655 = vmatprep.subr.mxu0 0.0
    %4656 = vmatpush1.msra.mxu0 0.0
    %4657 = vmatprep.subr.mxu0 0.0
    %4658 = vmatpush1.msra.mxu0 0.0
    %4659 = vmatprep.subr.mxu0 0.0
    %4660 = vmatpush1.msra.mxu0 0.0
    %4661 = vmatprep.subr.mxu0 0.0
    %4662 = vmatpush1.msra.mxu0 0.0
    %4663 = vmatprep.mubr.f32.mxu0 0.0
    %4664 = vmatmul.mubr.f32.gmra.mrb[0].mxu0 %v4597
    %v4665 = vpop.f32.mrb[0].mxu0
    %v4666 = vadd.f32 0.0, %v4665
    %v4667 = vpop.f32.mrb[0].mxu0
    %4668 = vdwg.mxu0
    %4670 = vrot.lane.b32.xlu0 %v4666, 64
    %v4671 = vpop.permute.xlu0 %4670
    %v4673 = vadd.f32 %v4316, %v4671
    %4675 = vrot.lane.b32.xlu0 %v4673, 64
    %v4676 = vpop.permute.xlu0 %4675
    %v4678 = vsel %vm158, %v4676, %v3975
    %v4679 = vld [vmem:[%s9] sm:$0xff]
    %v4680 = vld [vmem:[%s9 + $0x8] sm:$0xff]
    %v4681 = vld [vmem:[%s9 + $0x10] sm:$0xff]
    %v4682 = vld [vmem:[%s9 + $0x18] sm:$0xff]
    %v4683 = vld [vmem:[%s9 + $0x20] sm:$0xff]
    %v4684 = vld [vmem:[%s9 + $0x28] sm:$0xff]
    %v4685 = vld [vmem:[%s9 + $0x30] sm:$0xff]
    %v4686 = vld [vmem:[%s9 + $0x38] sm:$0xff]
    %v4687 = vld [vmem:[%s10] sm:$0x1]
    %v4689 = vlaneseq
    %v4690 = vshrl.u32 %v4689, 7
    %v4691 = vsub.s32 0, %v4690
    %v4692 = vrot.slane %v4687, %v4691
    %v4695 = vsel %vm243, %v4678, 0
    %4697 = vmatprep.subr.mxu0 0.0
    %4698 = vmatpush1.msra.mxu0 %v4679
    %4699 = vmatprep.subr.mxu0 0.0
    %4700 = vmatpush1.msra.mxu0 %v4680
    %4701 = vmatprep.subr.mxu0 0.0
    %4702 = vmatpush1.msra.mxu0 %v4681
    %4703 = vmatprep.subr.mxu0 0.0
    %4704 = vmatpush1.msra.mxu0 %v4682
    %4705 = vmatprep.subr.mxu0 0.0
    %4706 = vmatpush1.msra.mxu0 %v4683
    %4707 = vmatprep.subr.mxu0 0.0
    %4708 = vmatpush1.msra.mxu0 %v4684
    %4709 = vmatprep.subr.mxu0 0.0
    %4710 = vmatpush1.msra.mxu0 %v4685
    %4711 = vmatprep.subr.mxu0 0.0
    %4712 = vmatpush1.msra.mxu0 %v4686
    %4713 = vmatprep.subr.mxu0 0.0
    %4714 = vmatpush1.msra.mxu0 0.0
    %4715 = vmatprep.subr.mxu0 0.0
    %4716 = vmatpush1.msra.mxu0 0.0
    %4717 = vmatprep.subr.mxu0 0.0
    %4718 = vmatpush1.msra.mxu0 0.0
    %4719 = vmatprep.subr.mxu0 0.0
    %4720 = vmatpush1.msra.mxu0 0.0
    %4721 = vmatprep.subr.mxu0 0.0
    %4722 = vmatpush1.msra.mxu0 0.0
    %4723 = vmatprep.subr.mxu0 0.0
    %4724 = vmatpush1.msra.mxu0 0.0
    %4725 = vmatprep.subr.mxu0 0.0
    %4726 = vmatpush1.msra.mxu0 0.0
    %4727 = vmatprep.subr.mxu0 0.0
    %4728 = vmatpush1.msra.mxu0 0.0
    %4729 = vmatprep.subr.mxu0 0.0
    %4730 = vmatpush1.msra.mxu0 0.0
    %4731 = vmatprep.subr.mxu0 0.0
    %4732 = vmatpush1.msra.mxu0 0.0
    %4733 = vmatprep.subr.mxu0 0.0
    %4734 = vmatpush1.msra.mxu0 0.0
    %4735 = vmatprep.subr.mxu0 0.0
    %4736 = vmatpush1.msra.mxu0 0.0
    %4737 = vmatprep.subr.mxu0 0.0
    %4738 = vmatpush1.msra.mxu0 0.0
    %4739 = vmatprep.subr.mxu0 0.0
    %4740 = vmatpush1.msra.mxu0 0.0
    %4741 = vmatprep.subr.mxu0 0.0
    %4742 = vmatpush1.msra.mxu0 0.0
    %4743 = vmatprep.subr.mxu0 0.0
    %4744 = vmatpush1.msra.mxu0 0.0
    %4745 = vmatprep.subr.mxu0 0.0
    %4746 = vmatpush1.msra.mxu0 0.0
    %4747 = vmatprep.subr.mxu0 0.0
    %4748 = vmatpush1.msra.mxu0 0.0
    %4749 = vmatprep.subr.mxu0 0.0
    %4750 = vmatpush1.msra.mxu0 0.0
    %4751 = vmatprep.subr.mxu0 0.0
    %4752 = vmatpush1.msra.mxu0 0.0
    %4753 = vmatprep.subr.mxu0 0.0
    %4754 = vmatpush1.msra.mxu0 0.0
    %4755 = vmatprep.subr.mxu0 0.0
    %4756 = vmatpush1.msra.mxu0 0.0
    %4757 = vmatprep.subr.mxu0 0.0
    %4758 = vmatpush1.msra.mxu0 0.0
    %4759 = vmatprep.subr.mxu0 0.0
    %4760 = vmatpush1.msra.mxu0 0.0
    %4761 = vmatprep.mubr.f32.mxu0 0.0
    %4762 = vmatmul.mubr.f32.gmra.mrb[0].mxu0 %v4695
    %v4763 = vpop.f32.mrb[0].mxu0
    %v4764 = vadd.f32 %v4692, %v4763
    %v4765 = vpop.f32.mrb[0].mxu0
    %4766 = vdwg.mxu0
    %v4767 = vxor.u32 %v4764, 2147483648
    %v4768 = vmul.f32 %v4767, 1.442695
    %v4769 = vpow.pop %v4768
    %v4770 = vadd.f32 %v4769, 1.0
    %v4771 = vrcp.pop %v4770
    %v4772 = vmul.f32 1.0, %v4771
    %4774 = vrot.lane.b32.xlu0 %v4764, 32
    %v4775 = vpop.permute.xlu0 %4774
    %v4777 = vmul.f32 %v4772, %v4775
    %4779 = vrot.lane.b32.xlu0 %v4777, 64
    %v4780 = vpop.permute.xlu0 %4779
    %v4782 = vadd.f32 %v4764, %v4780
    %v4783 = vtanh.pop %v4782
    %v4784 = vsub.f32 1.0, %v4772
    %4786 = vrot.lane.b32.xlu0 %v4783, 96
    %v4787 = vpop.permute.xlu0 %4786
    %v4789 = vmul.f32 %v4784, %v4787
    %v4790 = vmul.f32 %v4772, %v3975
    %v4791 = vadd.f32 %v4789, %v4790
    %4793 = vrot.lane.b32.xlu0 %v4791, 96
    %v4794 = vpop.permute.xlu0 %4793
    %v4796 = vsel %vm158, %v4794, %v4093
    %v4797 = vld [vmem:[%s11] sm:$0xff]
    %v4798 = vld [vmem:[%s11 + $0x8] sm:$0xff]
    %v4799 = vld [vmem:[%s11 + $0x10] sm:$0xff]
    %v4800 = vld [vmem:[%s11 + $0x18] sm:$0xff]
    %v4801 = vld [vmem:[%s11 + $0x20] sm:$0xff]
    %v4802 = vld [vmem:[%s11 + $0x28] sm:$0xff]
    %v4803 = vld [vmem:[%s11 + $0x30] sm:$0xff]
    %v4804 = vld [vmem:[%s11 + $0x38] sm:$0xff]
    %v4805 = vld [vmem:[%s12] sm:$0x1]
    %v4807 = vlaneseq
    %v4808 = vshrl.u32 %v4807, 7
    %v4809 = vsub.s32 0, %v4808
    %v4810 = vrot.slane %v4805, %v4809
    %v4813 = vsel %vm243, %v4796, 0
    %4815 = vmatprep.subr.mxu0 0.0
    %4816 = vmatpush1.msra.mxu0 %v4797
    %4817 = vmatprep.subr.mxu0 0.0
    %4818 = vmatpush1.msra.mxu0 %v4798
    %4819 = vmatprep.subr.mxu0 0.0
    %4820 = vmatpush1.msra.mxu0 %v4799
    %4821 = vmatprep.subr.mxu0 0.0
    %4822 = vmatpush1.msra.mxu0 %v4800
    %4823 = vmatprep.subr.mxu0 0.0
    %4824 = vmatpush1.msra.mxu0 %v4801
    %4825 = vmatprep.subr.mxu0 0.0
    %4826 = vmatpush1.msra.mxu0 %v4802
    %4827 = vmatprep.subr.mxu0 0.0
    %4828 = vmatpush1.msra.mxu0 %v4803
    %4829 = vmatprep.subr.mxu0 0.0
    %4830 = vmatpush1.msra.mxu0 %v4804
    %4831 = vmatprep.subr.mxu0 0.0
    %4832 = vmatpush1.msra.mxu0 0.0
    %4833 = vmatprep.subr.mxu0 0.0
    %4834 = vmatpush1.msra.mxu0 0.0
    %4835 = vmatprep.subr.mxu0 0.0
    %4836 = vmatpush1.msra.mxu0 0.0
    %4837 = vmatprep.subr.mxu0 0.0
    %4838 = vmatpush1.msra.mxu0 0.0
    %4839 = vmatprep.subr.mxu0 0.0
    %4840 = vmatpush1.msra.mxu0 0.0
    %4841 = vmatprep.subr.mxu0 0.0
    %4842 = vmatpush1.msra.mxu0 0.0
    %4843 = vmatprep.subr.mxu0 0.0
    %4844 = vmatpush1.msra.mxu0 0.0
    %4845 = vmatprep.subr.mxu0 0.0
    %4846 = vmatpush1.msra.mxu0 0.0
    %4847 = vmatprep.subr.mxu0 0.0
    %4848 = vmatpush1.msra.mxu0 0.0
    %4849 = vmatprep.subr.mxu0 0.0
    %4850 = vmatpush1.msra.mxu0 0.0
    %4851 = vmatprep.subr.mxu0 0.0
    %4852 = vmatpush1.msra.mxu0 0.0
    %4853 = vmatprep.subr.mxu0 0.0
    %4854 = vmatpush1.msra.mxu0 0.0
    %4855 = vmatprep.subr.mxu0 0.0
    %4856 = vmatpush1.msra.mxu0 0.0
    %4857 = vmatprep.subr.mxu0 0.0
    %4858 = vmatpush1.msra.mxu0 0.0
    %4859 = vmatprep.subr.mxu0 0.0
    %4860 = vmatpush1.msra.mxu0 0.0
    %4861 = vmatprep.subr.mxu0 0.0
    %4862 = vmatpush1.msra.mxu0 0.0
    %4863 = vmatprep.subr.mxu0 0.0
    %4864 = vmatpush1.msra.mxu0 0.0
    %4865 = vmatprep.subr.mxu0 0.0
    %4866 = vmatpush1.msra.mxu0 0.0
    %4867 = vmatprep.subr.mxu0 0.0
    %4868 = vmatpush1.msra.mxu0 0.0
    %4869 = vmatprep.subr.mxu0 0.0
    %4870 = vmatpush1.msra.mxu0 0.0
    %4871 = vmatprep.subr.mxu0 0.0
    %4872 = vmatpush1.msra.mxu0 0.0
    %4873 = vmatprep.subr.mxu0 0.0
    %4874 = vmatpush1.msra.mxu0 0.0
    %4875 = vmatprep.subr.mxu0 0.0
    %4876 = vmatpush1.msra.mxu0 0.0
    %4877 = vmatprep.subr.mxu0 0.0
    %4878 = vmatpush1.msra.mxu0 0.0
    %4879 = vmatprep.mubr.f32.mxu0 0.0
    %4880 = vmatmul.mubr.f32.gmra.mrb[0].mxu0 %v4813
    %v4881 = vpop.f32.mrb[0].mxu0
    %v4882 = vadd.f32 %v4810, %v4881
    %v4883 = vpop.f32.mrb[0].mxu0
    %4884 = vdwg.mxu0
    %v4885 = vxor.u32 %v4882, 2147483648
    %v4886 = vmul.f32 %v4885, 1.442695
    %v4887 = vpow.pop %v4886
    %v4888 = vadd.f32 %v4887, 1.0
    %v4889 = vrcp.pop %v4888
    %v4890 = vmul.f32 1.0, %v4889
    %4892 = vrot.lane.b32.xlu0 %v4882, 32
    %v4893 = vpop.permute.xlu0 %4892
    %v4895 = vmul.f32 %v4890, %v4893
    %4897 = vrot.lane.b32.xlu0 %v4895, 64
    %v4898 = vpop.permute.xlu0 %4897
    %v4900 = vadd.f32 %v4882, %v4898
    %v4901 = vtanh.pop %v4900
    %v4902 = vsub.f32 1.0, %v4890
    %4904 = vrot.lane.b32.xlu0 %v4901, 96
    %v4905 = vpop.permute.xlu0 %4904
    %v4907 = vmul.f32 %v4902, %v4905
    %v4908 = vmul.f32 %v4890, %v4093
    %v4909 = vadd.f32 %v4907, %v4908
    %v4910 = vld [vmem:[%s13] sm:$0xff]
    %v4911 = vld [vmem:[%s13 + $0x8] sm:$0xff]
    %v4912 = vld [vmem:[%s13 + $0x10] sm:$0xff]
    %v4913 = vld [vmem:[%s13 + $0x18] sm:$0xff]
    %v4914 = vld [vmem:[%s14] sm:$0x1]
    %v4916 = vlaneseq
    %v4917 = vshrl.u32 %v4916, 7
    %v4918 = vsub.s32 0, %v4917
    %v4919 = vrot.slane %v4914, %v4918
    %4922 = vrot.lane.b32.xlu0 %v4909, 96
    %v4923 = vpop.permute.xlu0 %4922
    %v4924 = vsel %vm158, %v4923, 0
    %4926 = vmatprep.subr.mxu0 0.0
    %4927 = vmatpush1.msra.mxu0 %v4910
    %4928 = vmatprep.subr.mxu0 0.0
    %4929 = vmatpush1.msra.mxu0 %v4911
    %4930 = vmatprep.subr.mxu0 0.0
    %4931 = vmatpush1.msra.mxu0 %v4912
    %4932 = vmatprep.subr.mxu0 0.0
    %4933 = vmatpush1.msra.mxu0 %v4913
    %4934 = vmatprep.subr.mxu0 0.0
    %4935 = vmatpush1.msra.mxu0 0.0
    %4936 = vmatprep.subr.mxu0 0.0
    %4937 = vmatpush1.msra.mxu0 0.0
    %4938 = vmatprep.subr.mxu0 0.0
    %4939 = vmatpush1.msra.mxu0 0.0
    %4940 = vmatprep.subr.mxu0 0.0
    %4941 = vmatpush1.msra.mxu0 0.0
    %4942 = vmatprep.subr.mxu0 0.0
    %4943 = vmatpush1.msra.mxu0 0.0
    %4944 = vmatprep.subr.mxu0 0.0
    %4945 = vmatpush1.msra.mxu0 0.0
    %4946 = vmatprep.subr.mxu0 0.0
    %4947 = vmatpush1.msra.mxu0 0.0
    %4948 = vmatprep.subr.mxu0 0.0
    %4949 = vmatpush1.msra.mxu0 0.0
    %4950 = vmatprep.subr.mxu0 0.0
    %4951 = vmatpush1.msra.mxu0 0.0
    %4952 = vmatprep.subr.mxu0 0.0
    %4953 = vmatpush1.msra.mxu0 0.0
    %4954 = vmatprep.subr.mxu0 0.0
    %4955 = vmatpush1.msra.mxu0 0.0
    %4956 = vmatprep.subr.mxu0 0.0
    %4957 = vmatpush1.msra.mxu0 0.0
    %4958 = vmatprep.subr.mxu0 0.0
    %4959 = vmatpush1.msra.mxu0 0.0
    %4960 = vmatprep.subr.mxu0 0.0
    %4961 = vmatpush1.msra.mxu0 0.0
    %4962 = vmatprep.subr.mxu0 0.0
    %4963 = vmatpush1.msra.mxu0 0.0
    %4964 = vmatprep.subr.mxu0 0.0
    %4965 = vmatpush1.msra.mxu0 0.0
    %4966 = vmatprep.subr.mxu0 0.0
    %4967 = vmatpush1.msra.mxu0 0.0
    %4968 = vmatprep.subr.mxu0 0.0
    %4969 = vmatpush1.msra.mxu0 0.0
    %4970 = vmatprep.subr.mxu0 0.0
    %4971 = vmatpush1.msra.mxu0 0.0
    %4972 = vmatprep.subr.mxu0 0.0
    %4973 = vmatpush1.msra.mxu0 0.0
    %4974 = vmatprep.subr.mxu0 0.0
    %4975 = vmatpush1.msra.mxu0 0.0
    %4976 = vmatprep.subr.mxu0 0.0
    %4977 = vmatpush1.msra.mxu0 0.0
    %4978 = vmatprep.subr.mxu0 0.0
    %4979 = vmatpush1.msra.mxu0 0.0
    %4980 = vmatprep.subr.mxu0 0.0
    %4981 = vmatpush1.msra.mxu0 0.0
    %4982 = vmatprep.subr.mxu0 0.0
    %4983 = vmatpush1.msra.mxu0 0.0
    %4984 = vmatprep.subr.mxu0 0.0
    %4985 = vmatpush1.msra.mxu0 0.0
    %4986 = vmatprep.subr.mxu0 0.0
    %4987 = vmatpush1.msra.mxu0 0.0
    %4988 = vmatprep.subr.mxu0 0.0
    %4989 = vmatpush1.msra.mxu0 0.0
    %4990 = vmatprep.mubr.f32.mxu0 0.0
    %4991 = vmatmul.mubr.f32.gmra.mrb[0].mxu0 %v4924
    %v4992 = vpop.f32.mrb[0].mxu0
    %v4993 = vadd.f32 %v4919, %v4992
    %v4994 = vpop.f32.mrb[0].mxu0
    %4995 = vdwg.mxu0
    %s4996 = scalar_lea.vmem [#allocation14], 10
    %4997 = vst.msk [vmem:[%s4996] sm:$0x3] %vm916, %v4993
    %v4998 = vsub.f32 %v4993, %v4220
    %v4999 = vmul.f32 %v4998, %v4998
    %v5000 = vadd.f32 %v4184, %v4999
    %v5001 = vmul.f32 %v4583, 1.442695
    %v5002 = vpow.pop %v5001
    %5004 = vrot.lane.b32.xlu0 %v4583, 16
    %v5005 = vpop.permute.xlu0 %5004
    %v5007 = vsub.f32 %v4583, %v5005
    %v5008 = vmul.f32 %v5007, 0.5
    %5009 = vrot.lane.b32.xlu0 %v4583, 112
    %v5010 = vpop.permute.xlu0 %5009
    %v5012 = vsub.f32 %v4583, %v5010
    %v5013 = vmul.f32 %v5012, %v5012
    %5015 = vrot.lane.b32.xlu0 %v5013, 8
    %v5016 = vpop.permute.xlu0 %5015
    %v5018 = vadd.f32 %v5002, %v5016
    %v5019 = vsub.f32 0.0, %v4583
    %v5020 = vmul.f32 %v5019, 1.442695
    %v5021 = vpow.pop %v5020
    %v5022 = vmul.f32 %v5021, 0.5
    %5024 = vrot.lane.b32.xlu0 %v5022, 112
    %v5025 = vpop.permute.xlu0 %5024
    %v5027 = vmul.f32 %v5018, %v5025
    %5029 = vrot.lane.b32.xlu0 %v5027, 16
    %v5030 = vpop.permute.xlu0 %5029
    %v5032 = vadd.f32 %v5008, %v5030
    %v5033 = vsub.f32 %v5032, 0.5
    %v5034 = vadd.f32 %v4218, %v5033
    %s5035 = scalar_lea.vmem [#allocation2], 12
    %v5036 = vld [vmem:[%s5035] sm:$0x3]
    %s5037 = scalar_lea.vmem [#allocation5], 12
    %v5038 = vld [vmem:[%s5037] sm:$0x3]
    %5040 = vrot.lane.b32.xlu0 %v4993, 16
    %v5041 = vpop.permute.xlu0 %5040
    %v5043 = vsel %vm146, %v5036, %v5041
    %v5044 = vld [vmem:[#allocation7] sm:$0xff]
    %v5045 = vld [vmem:[#allocation7 + $0x8] sm:$0xff]
    %v5046 = vld [vmem:[#allocation7 + $0x10] sm:$0xff]
    %v5047 = vld [vmem:[#allocation7 + $0x18] sm:$0xff]
    %v5048 = vld [vmem:[%s3] sm:$0x1]
    %v5049 = vmul.f32 %v5048, 0.8571429
    %v5050 = vlaneseq
    %v5051 = vshrl.u32 %v5050, 7
    %v5052 = vsub.s32 0, %v5051
    %v5053 = vrot.slane %v5049, %v5052
    %v5055 = vsel %vm158, %v5043, 0
    %5057 = vmatprep.subr.mxu0 0.0
    %5058 = vmatpush1.msra.mxu0 %v5044
    %5059 = vmatprep.subr.mxu0 0.0
    %5060 = vmatpush1.msra.mxu0 %v5045
    %5061 = vmatprep.subr.mxu0 0.0
    %5062 = vmatpush1.msra.mxu0 %v5046
    %5063 = vmatprep.subr.mxu0 0.0
    %5064 = vmatpush1.msra.mxu0 %v5047
    %5065 = vmatprep.subr.mxu0 0.0
    %5066 = vmatpush1.msra.mxu0 0.0
    %5067 = vmatprep.subr.mxu0 0.0
    %5068 = vmatpush1.msra.mxu0 0.0
    %5069 = vmatprep.subr.mxu0 0.0
    %5070 = vmatpush1.msra.mxu0 0.0
    %5071 = vmatprep.subr.mxu0 0.0
    %5072 = vmatpush1.msra.mxu0 0.0
    %5073 = vmatprep.subr.mxu0 0.0
    %5074 = vmatpush1.msra.mxu0 0.0
    %5075 = vmatprep.subr.mxu0 0.0
    %5076 = vmatpush1.msra.mxu0 0.0
    %5077 = vmatprep.subr.mxu0 0.0
    %5078 = vmatpush1.msra.mxu0 0.0
    %5079 = vmatprep.subr.mxu0 0.0
    %5080 = vmatpush1.msra.mxu0 0.0
    %5081 = vmatprep.subr.mxu0 0.0
    %5082 = vmatpush1.msra.mxu0 0.0
    %5083 = vmatprep.subr.mxu0 0.0
    %5084 = vmatpush1.msra.mxu0 0.0
    %5085 = vmatprep.subr.mxu0 0.0
    %5086 = vmatpush1.msra.mxu0 0.0
    %5087 = vmatprep.subr.mxu0 0.0
    %5088 = vmatpush1.msra.mxu0 0.0
    %5089 = vmatprep.subr.mxu0 0.0
    %5090 = vmatpush1.msra.mxu0 0.0
    %5091 = vmatprep.subr.mxu0 0.0
    %5092 = vmatpush1.msra.mxu0 0.0
    %5093 = vmatprep.subr.mxu0 0.0
    %5094 = vmatpush1.msra.mxu0 0.0
    %5095 = vmatprep.subr.mxu0 0.0
    %5096 = vmatpush1.msra.mxu0 0.0
    %5097 = vmatprep.subr.mxu0 0.0
    %5098 = vmatpush1.msra.mxu0 0.0
    %5099 = vmatprep.subr.mxu0 0.0
    %5100 = vmatpush1.msra.mxu0 0.0
    %5101 = vmatprep.subr.mxu0 0.0
    %5102 = vmatpush1.msra.mxu0 0.0
    %5103 = vmatprep.subr.mxu0 0.0
    %5104 = vmatpush1.msra.mxu0 0.0
    %5105 = vmatprep.subr.mxu0 0.0
    %5106 = vmatpush1.msra.mxu0 0.0
    %5107 = vmatprep.subr.mxu0 0.0
    %5108 = vmatpush1.msra.mxu0 0.0
    %5109 = vmatprep.subr.mxu0 0.0
    %5110 = vmatpush1.msra.mxu0 0.0
    %5111 = vmatprep.subr.mxu0 0.0
    %5112 = vmatpush1.msra.mxu0 0.0
    %5113 = vmatprep.subr.mxu0 0.0
    %5114 = vmatpush1.msra.mxu0 0.0
    %5115 = vmatprep.subr.mxu0 0.0
    %5116 = vmatpush1.msra.mxu0 0.0
    %5117 = vmatprep.subr.mxu0 0.0
    %5118 = vmatpush1.msra.mxu0 0.0
    %5119 = vmatprep.subr.mxu0 0.0
    %5120 = vmatpush1.msra.mxu0 0.0
    %5121 = vmatprep.mubr.f32.mxu0 0.0
    %5122 = vmatmul.mubr.f32.gmra.mrb[0].mxu0 %v5055
    %v5123 = vpop.f32.mrb[0].mxu0
    %v5124 = vadd.f32 %v5053, %v5123
    %v5125 = vpop.f32.mrb[0].mxu0
    %5126 = vdwg.mxu0
    %v5127 = vld [vmem:[%s3 + $0x1] sm:$0x1]
    %v5128 = vlaneseq
    %v5129 = vshrl.u32 %v5128, 7
    %v5130 = vsub.s32 0, %v5129
    %v5131 = vrot.slane %v5127, %v5130
    %v5132 = vadd.f32 %v5124, %v5131
    %5134 = vrot.lane.b32.xlu0 %v5132, 32
    %v5135 = vpop.permute.xlu0 %5134
    %5138 = vrot.lane.b32.xlu0 %v4492, 64
    %v5139 = vpop.permute.xlu0 %5138
    %v5141 = vsel %vm158, %v5132, %v4467
    %v5142 = vsel %vm243, %v5141, %v5135
    %v5143 = vsel %vm245, %v5142, %v5139
    %v5144 = vld [vmem:[#allocation8] sm:$0xff]
    %v5145 = vld [vmem:[#allocation8 + $0x8] sm:$0xff]
    %v5146 = vld [vmem:[#allocation8 + $0x10] sm:$0xff]
    %v5147 = vld [vmem:[#allocation8 + $0x18] sm:$0xff]
    %v5148 = vld [vmem:[#allocation8 + $0x20] sm:$0xff]
    %v5149 = vld [vmem:[#allocation8 + $0x28] sm:$0xff]
    %v5150 = vld [vmem:[#allocation8 + $0x30] sm:$0xff]
    %v5151 = vld [vmem:[#allocation8 + $0x38] sm:$0xff]
    %v5152 = vld [vmem:[#allocation8 + $0x40] sm:$0xff]
    %v5153 = vld [vmem:[#allocation8 + $0x48] sm:$0xff]
    %v5154 = vld [vmem:[#allocation8 + $0x50] sm:$0xff]
    %v5155 = vld [vmem:[#allocation8 + $0x58] sm:$0xff]
    %v5156 = vld [vmem:[#allocation8 + $0x60] sm:$0xff]
    %v5157 = vld [vmem:[#allocation8 + $0x68] sm:$0xff]
    %v5158 = vld [vmem:[#allocation8 + $0x70] sm:$0xff]
    %v5159 = vld [vmem:[#allocation8 + $0x78] sm:$0xff]
    %v5160 = vld [vmem:[#allocation8 + $0x80] sm:$0xff]
    %v5161 = vld [vmem:[#allocation8 + $0x88] sm:$0xff]
    %v5162 = vld [vmem:[#allocation8 + $0x90] sm:$0xff]
    %v5163 = vld [vmem:[#allocation8 + $0x98] sm:$0xff]
    %v5164 = vld [vmem:[#allocation8 + $0xa0] sm:$0xff]
    %v5165 = vld [vmem:[#allocation8 + $0xa8] sm:$0xff]
    %v5166 = vld [vmem:[#allocation8 + $0xb0] sm:$0xff]
    %v5167 = vld [vmem:[#allocation8 + $0xb8] sm:$0xff]
    %v5168 = vld [vmem:[#allocation8 + $0xc0] sm:$0xff]
    %v5169 = vld [vmem:[#allocation8 + $0xc8] sm:$0xff]
    %v5170 = vld [vmem:[#allocation8 + $0xd0] sm:$0xff]
    %v5171 = vld [vmem:[#allocation8 + $0xd8] sm:$0xff]
    %v5172 = vld [vmem:[#allocation8 + $0xe0] sm:$0xff]
    %v5173 = vld [vmem:[#allocation8 + $0xe8] sm:$0xff]
    %v5174 = vld [vmem:[#allocation8 + $0xf0] sm:$0xff]
    %v5175 = vld [vmem:[#allocation8 + $0xf8] sm:$0xff]
    %v5176 = vld [vmem:[#allocation10] sm:$0x3]
    %v5178 = vlaneseq
    %v5179 = vshrl.u32 %v5178, 7
    %v5180 = vsub.s32 0, %v5179
    %v5181 = vrot.slane %v5176, %v5180
    %v5182 = vlaneseq
    %v5183 = vshrl.u32 %v5182, 7
    %v5184 = vsub.s32 1, %v5183
    %v5185 = vrot.slane %v5176, %v5184
    %5188 = vmatprep.subr.mxu0 %v5145
    %5189 = vmatpush1.msra.mxu0 %v5144
    %5190 = vmatprep.subr.mxu0 %v5147
    %5191 = vmatpush1.msra.mxu0 %v5146
    %5192 = vmatprep.subr.mxu0 %v5149
    %5193 = vmatpush1.msra.mxu0 %v5148
    %5194 = vmatprep.subr.mxu0 %v5151
    %5195 = vmatpush1.msra.mxu0 %v5150
    %5196 = vmatprep.subr.mxu0 %v5153
    %5197 = vmatpush1.msra.mxu0 %v5152
    %5198 = vmatprep.subr.mxu0 %v5155
    %5199 = vmatpush1.msra.mxu0 %v5154
    %5200 = vmatprep.subr.mxu0 %v5157
    %5201 = vmatpush1.msra.mxu0 %v5156
    %5202 = vmatprep.subr.mxu0 %v5159
    %5203 = vmatpush1.msra.mxu0 %v5158
    %5204 = vmatprep.subr.mxu0 %v5161
    %5205 = vmatpush1.msra.mxu0 %v5160
    %5206 = vmatprep.subr.mxu0 %v5163
    %5207 = vmatpush1.msra.mxu0 %v5162
    %5208 = vmatprep.subr.mxu0 %v5165
    %5209 = vmatpush1.msra.mxu0 %v5164
    %5210 = vmatprep.subr.mxu0 %v5167
    %5211 = vmatpush1.msra.mxu0 %v5166
    %5212 = vmatprep.subr.mxu0 %v5169
    %5213 = vmatpush1.msra.mxu0 %v5168
    %5214 = vmatprep.subr.mxu0 %v5171
    %5215 = vmatpush1.msra.mxu0 %v5170
    %5216 = vmatprep.subr.mxu0 %v5173
    %5217 = vmatpush1.msra.mxu0 %v5172
    %5218 = vmatprep.subr.mxu0 %v5175
    %5219 = vmatpush1.msra.mxu0 %v5174
    %5220 = vmatprep.subr.mxu0 0.0
    %5221 = vmatpush1.msra.mxu0 0.0
    %5222 = vmatprep.subr.mxu0 0.0
    %5223 = vmatpush1.msra.mxu0 0.0
    %5224 = vmatprep.subr.mxu0 0.0
    %5225 = vmatpush1.msra.mxu0 0.0
    %5226 = vmatprep.subr.mxu0 0.0
    %5227 = vmatpush1.msra.mxu0 0.0
    %5228 = vmatprep.subr.mxu0 0.0
    %5229 = vmatpush1.msra.mxu0 0.0
    %5230 = vmatprep.subr.mxu0 0.0
    %5231 = vmatpush1.msra.mxu0 0.0
    %5232 = vmatprep.subr.mxu0 0.0
    %5233 = vmatpush1.msra.mxu0 0.0
    %5234 = vmatprep.subr.mxu0 0.0
    %5235 = vmatpush1.msra.mxu0 0.0
    %5236 = vmatprep.subr.mxu0 0.0
    %5237 = vmatpush1.msra.mxu0 0.0
    %5238 = vmatprep.subr.mxu0 0.0
    %5239 = vmatpush1.msra.mxu0 0.0
    %5240 = vmatprep.subr.mxu0 0.0
    %5241 = vmatpush1.msra.mxu0 0.0
    %5242 = vmatprep.subr.mxu0 0.0
    %5243 = vmatpush1.msra.mxu0 0.0
    %5244 = vmatprep.subr.mxu0 0.0
    %5245 = vmatpush1.msra.mxu0 0.0
    %5246 = vmatprep.subr.mxu0 0.0
    %5247 = vmatpush1.msra.mxu0 0.0
    %5248 = vmatprep.subr.mxu0 0.0
    %5249 = vmatpush1.msra.mxu0 0.0
    %5250 = vmatprep.subr.mxu0 0.0
    %5251 = vmatpush1.msra.mxu0 0.0
    %5252 = vmatprep.mubr.f32.mxu0 0.0
    %5253 = vmatmul.mubr.f32.gmra.mrb[0].mxu0 %v5143
    %v5254 = vpop.f32.mrb[0].mxu0
    %v5255 = vadd.f32 %v5181, %v5254
    %v5256 = vpop.f32.mrb[0].mxu0
    %v5257 = vadd.f32 %v5185, %v5256
    %5258 = vdwg.mxu0
    %v5259 = vxor.u32 %v5255, 2147483648
    %v5260 = vmul.f32 %v5259, 1.442695
    %v5261 = vpow.pop %v5260
    %v5262 = vadd.f32 %v5261, 1.0
    %v5263 = vrcp.pop %v5262
    %v5264 = vmul.f32 1.0, %v5263
    %5266 = vrot.lane.b32.xlu0 %v5255, 32
    %v5267 = vpop.permute.xlu0 %5266
    %v5269 = vmul.f32 %v5264, %v5267
    %5271 = vrot.lane.b32.xlu0 %v5269, 64
    %v5272 = vpop.permute.xlu0 %5271
    %v5274 = vadd.f32 %v5255, %v5272
    %v5275 = vtanh.pop %v5274
    %v5276 = vsub.f32 1.0, %v5264
    %5278 = vrot.lane.b32.xlu0 %v5275, 96
    %v5279 = vpop.permute.xlu0 %5278
    %v5281 = vmul.f32 %v5276, %v5279
    %v5282 = vmul.f32 %v5264, %v4467
    %v5283 = vadd.f32 %v5281, %v5282
    %v5284 = vxor.u32 %v5257, 2147483648
    %v5285 = vmul.f32 %v5284, 1.442695
    %v5286 = vpow.pop %v5285
    %v5287 = vadd.f32 %v5286, 1.0
    %v5288 = vrcp.pop %v5287
    %v5289 = vmul.f32 1.0, %v5288
    %5291 = vrot.lane.b32.xlu0 %v5257, 32
    %v5292 = vpop.permute.xlu0 %5291
    %v5294 = vmul.f32 %v5289, %v5292
    %5296 = vrot.lane.b32.xlu0 %v5294, 64
    %v5297 = vpop.permute.xlu0 %5296
    %v5299 = vadd.f32 %v5257, %v5297
    %v5300 = vtanh.pop %v5299
    %v5301 = vsub.f32 1.0, %v5289
    %5303 = vrot.lane.b32.xlu0 %v5300, 96
    %v5304 = vpop.permute.xlu0 %5303
    %v5306 = vmul.f32 %v5301, %v5304
    %v5307 = vmul.f32 %v5289, %v4492
    %v5308 = vadd.f32 %v5306, %v5307
    %5310 = vrot.lane.b32.xlu0 %v5283, 96
    %v5311 = vpop.permute.xlu0 %5310
    %v5313 = vsel %vm158, %v5311, %v5308
    %v5314 = vld [vmem:[%s6] sm:$0xff]
    %v5315 = vld [vmem:[%s6 + $0x8] sm:$0xff]
    %v5316 = vld [vmem:[%s6 + $0x10] sm:$0xff]
    %v5317 = vld [vmem:[%s6 + $0x18] sm:$0xff]
    %v5318 = vld [vmem:[%s6 + $0x20] sm:$0xff]
    %v5319 = vld [vmem:[%s6 + $0x28] sm:$0xff]
    %v5320 = vld [vmem:[%s6 + $0x30] sm:$0xff]
    %v5321 = vld [vmem:[%s6 + $0x38] sm:$0xff]
    %v5322 = vld [vmem:[#allocation11] sm:$0x1]
    %v5324 = vlaneseq
    %v5325 = vshrl.u32 %v5324, 7
    %v5326 = vsub.s32 0, %v5325
    %v5327 = vrot.slane %v5322, %v5326
    %v5330 = vsel %vm243, %v5313, 0
    %5332 = vmatprep.subr.mxu0 0.0
    %5333 = vmatpush1.msra.mxu0 %v5314
    %5334 = vmatprep.subr.mxu0 0.0
    %5335 = vmatpush1.msra.mxu0 %v5315
    %5336 = vmatprep.subr.mxu0 0.0
    %5337 = vmatpush1.msra.mxu0 %v5316
    %5338 = vmatprep.subr.mxu0 0.0
    %5339 = vmatpush1.msra.mxu0 %v5317
    %5340 = vmatprep.subr.mxu0 0.0
    %5341 = vmatpush1.msra.mxu0 %v5318
    %5342 = vmatprep.subr.mxu0 0.0
    %5343 = vmatpush1.msra.mxu0 %v5319
    %5344 = vmatprep.subr.mxu0 0.0
    %5345 = vmatpush1.msra.mxu0 %v5320
    %5346 = vmatprep.subr.mxu0 0.0
    %5347 = vmatpush1.msra.mxu0 %v5321
    %5348 = vmatprep.subr.mxu0 0.0
    %5349 = vmatpush1.msra.mxu0 0.0
    %5350 = vmatprep.subr.mxu0 0.0
    %5351 = vmatpush1.msra.mxu0 0.0
    %5352 = vmatprep.subr.mxu0 0.0
    %5353 = vmatpush1.msra.mxu0 0.0
    %5354 = vmatprep.subr.mxu0 0.0
    %5355 = vmatpush1.msra.mxu0 0.0
    %5356 = vmatprep.subr.mxu0 0.0
    %5357 = vmatpush1.msra.mxu0 0.0
    %5358 = vmatprep.subr.mxu0 0.0
    %5359 = vmatpush1.msra.mxu0 0.0
    %5360 = vmatprep.subr.mxu0 0.0
    %5361 = vmatpush1.msra.mxu0 0.0
    %5362 = vmatprep.subr.mxu0 0.0
    %5363 = vmatpush1.msra.mxu0 0.0
    %5364 = vmatprep.subr.mxu0 0.0
    %5365 = vmatpush1.msra.mxu0 0.0
    %5366 = vmatprep.subr.mxu0 0.0
    %5367 = vmatpush1.msra.mxu0 0.0
    %5368 = vmatprep.subr.mxu0 0.0
    %5369 = vmatpush1.msra.mxu0 0.0
    %5370 = vmatprep.subr.mxu0 0.0
    %5371 = vmatpush1.msra.mxu0 0.0
    %5372 = vmatprep.subr.mxu0 0.0
    %5373 = vmatpush1.msra.mxu0 0.0
    %5374 = vmatprep.subr.mxu0 0.0
    %5375 = vmatpush1.msra.mxu0 0.0
    %5376 = vmatprep.subr.mxu0 0.0
    %5377 = vmatpush1.msra.mxu0 0.0
    %5378 = vmatprep.subr.mxu0 0.0
    %5379 = vmatpush1.msra.mxu0 0.0
    %5380 = vmatprep.subr.mxu0 0.0
    %5381 = vmatpush1.msra.mxu0 0.0
    %5382 = vmatprep.subr.mxu0 0.0
    %5383 = vmatpush1.msra.mxu0 0.0
    %5384 = vmatprep.subr.mxu0 0.0
    %5385 = vmatpush1.msra.mxu0 0.0
    %5386 = vmatprep.subr.mxu0 0.0
    %5387 = vmatpush1.msra.mxu0 0.0
    %5388 = vmatprep.subr.mxu0 0.0
    %5389 = vmatpush1.msra.mxu0 0.0
    %5390 = vmatprep.subr.mxu0 0.0
    %5391 = vmatpush1.msra.mxu0 0.0
    %5392 = vmatprep.subr.mxu0 0.0
    %5393 = vmatpush1.msra.mxu0 0.0
    %5394 = vmatprep.subr.mxu0 0.0
    %5395 = vmatpush1.msra.mxu0 0.0
    %5396 = vmatprep.mubr.f32.mxu0 0.0
    %5397 = vmatmul.mubr.f32.gmra.mrb[0].mxu0 %v5330
    %v5398 = vpop.f32.mrb[0].mxu0
    %v5399 = vadd.f32 %v5327, %v5398
    %v5400 = vpop.f32.mrb[0].mxu0
    %5401 = vdwg.mxu0
    %v5402 = vmul.f32 %v5399, 0.5
    %v5403 = vmul.f32 %v5402, 1.442695
    %v5404 = vpow.pop %v5403
    %5406 = vrot.lane.b32.xlu0 %v5404, 120
    %v5407 = vpop.permute.xlu0 %5406
    %v5409 = vmul.f32 %v5038, %v5407
    %v5410 = vadd.f32 %v5409, %v5399
    %v5411 = vld [vmem:[#allocation13] sm:$0xff]
    %v5413 = vsel %vm515, %v5410, 0
    %5415 = vmatprep.subr.mxu0 0.0
    %5416 = vmatpush1.msra.mxu0 %v5411
    %5417 = vmatprep.subr.mxu0 0.0
    %5418 = vmatpush1.msra.mxu0 0.0
    %5419 = vmatprep.subr.mxu0 0.0
    %5420 = vmatpush1.msra.mxu0 0.0
    %5421 = vmatprep.subr.mxu0 0.0
    %5422 = vmatpush1.msra.mxu0 0.0
    %5423 = vmatprep.subr.mxu0 0.0
    %5424 = vmatpush1.msra.mxu0 0.0
    %5425 = vmatprep.subr.mxu0 0.0
    %5426 = vmatpush1.msra.mxu0 0.0
    %5427 = vmatprep.subr.mxu0 0.0
    %5428 = vmatpush1.msra.mxu0 0.0
    %5429 = vmatprep.subr.mxu0 0.0
    %5430 = vmatpush1.msra.mxu0 0.0
    %5431 = vmatprep.subr.mxu0 0.0
    %5432 = vmatpush1.msra.mxu0 0.0
    %5433 = vmatprep.subr.mxu0 0.0
    %5434 = vmatpush1.msra.mxu0 0.0
    %5435 = vmatprep.subr.mxu0 0.0
    %5436 = vmatpush1.msra.mxu0 0.0
    %5437 = vmatprep.subr.mxu0 0.0
    %5438 = vmatpush1.msra.mxu0 0.0
    %5439 = vmatprep.subr.mxu0 0.0
    %5440 = vmatpush1.msra.mxu0 0.0
    %5441 = vmatprep.subr.mxu0 0.0
    %5442 = vmatpush1.msra.mxu0 0.0
    %5443 = vmatprep.subr.mxu0 0.0
    %5444 = vmatpush1.msra.mxu0 0.0
    %5445 = vmatprep.subr.mxu0 0.0
    %5446 = vmatpush1.msra.mxu0 0.0
    %5447 = vmatprep.subr.mxu0 0.0
    %5448 = vmatpush1.msra.mxu0 0.0
    %5449 = vmatprep.subr.mxu0 0.0
    %5450 = vmatpush1.msra.mxu0 0.0
    %5451 = vmatprep.subr.mxu0 0.0
    %5452 = vmatpush1.msra.mxu0 0.0
    %5453 = vmatprep.subr.mxu0 0.0
    %5454 = vmatpush1.msra.mxu0 0.0
    %5455 = vmatprep.subr.mxu0 0.0
    %5456 = vmatpush1.msra.mxu0 0.0
    %5457 = vmatprep.subr.mxu0 0.0
    %5458 = vmatpush1.msra.mxu0 0.0
    %5459 = vmatprep.subr.mxu0 0.0
    %5460 = vmatpush1.msra.mxu0 0.0
    %5461 = vmatprep.subr.mxu0 0.0
    %5462 = vmatpush1.msra.mxu0 0.0
    %5463 = vmatprep.subr.mxu0 0.0
    %5464 = vmatpush1.msra.mxu0 0.0
    %5465 = vmatprep.subr.mxu0 0.0
    %5466 = vmatpush1.msra.mxu0 0.0
    %5467 = vmatprep.subr.mxu0 0.0
    %5468 = vmatpush1.msra.mxu0 0.0
    %5469 = vmatprep.subr.mxu0 0.0
    %5470 = vmatpush1.msra.mxu0 0.0
    %5471 = vmatprep.subr.mxu0 0.0
    %5472 = vmatpush1.msra.mxu0 0.0
    %5473 = vmatprep.subr.mxu0 0.0
    %5474 = vmatpush1.msra.mxu0 0.0
    %5475 = vmatprep.subr.mxu0 0.0
    %5476 = vmatpush1.msra.mxu0 0.0
    %5477 = vmatprep.subr.mxu0 0.0
    %5478 = vmatpush1.msra.mxu0 0.0
    %5479 = vmatprep.mubr.f32.mxu0 0.0
    %5480 = vmatmul.mubr.f32.gmra.mrb[0].mxu0 %v5413
    %v5481 = vpop.f32.mrb[0].mxu0
    %v5482 = vadd.f32 0.0, %v5481
    %v5483 = vpop.f32.mrb[0].mxu0
    %5484 = vdwg.mxu0
    %5486 = vrot.lane.b32.xlu0 %v5482, 64
    %v5487 = vpop.permute.xlu0 %5486
    %v5489 = vadd.f32 %v5132, %v5487
    %5491 = vrot.lane.b32.xlu0 %v5489, 64
    %v5492 = vpop.permute.xlu0 %5491
    %v5494 = vsel %vm158, %v5492, %v4791
    %v5495 = vld [vmem:[%s9] sm:$0xff]
    %v5496 = vld [vmem:[%s9 + $0x8] sm:$0xff]
    %v5497 = vld [vmem:[%s9 + $0x10] sm:$0xff]
    %v5498 = vld [vmem:[%s9 + $0x18] sm:$0xff]
    %v5499 = vld [vmem:[%s9 + $0x20] sm:$0xff]
    %v5500 = vld [vmem:[%s9 + $0x28] sm:$0xff]
    %v5501 = vld [vmem:[%s9 + $0x30] sm:$0xff]
    %v5502 = vld [vmem:[%s9 + $0x38] sm:$0xff]
    %v5503 = vld [vmem:[%s10] sm:$0x1]
    %v5505 = vlaneseq
    %v5506 = vshrl.u32 %v5505, 7
    %v5507 = vsub.s32 0, %v5506
    %v5508 = vrot.slane %v5503, %v5507
    %v5511 = vsel %vm243, %v5494, 0
    %5513 = vmatprep.subr.mxu0 0.0
    %5514 = vmatpush1.msra.mxu0 %v5495
    %5515 = vmatprep.subr.mxu0 0.0
    %5516 = vmatpush1.msra.mxu0 %v5496
    %5517 = vmatprep.subr.mxu0 0.0
    %5518 = vmatpush1.msra.mxu0 %v5497
    %5519 = vmatprep.subr.mxu0 0.0
    %5520 = vmatpush1.msra.mxu0 %v5498
    %5521 = vmatprep.subr.mxu0 0.0
    %5522 = vmatpush1.msra.mxu0 %v5499
    %5523 = vmatprep.subr.mxu0 0.0
    %5524 = vmatpush1.msra.mxu0 %v5500
    %5525 = vmatprep.subr.mxu0 0.0
    %5526 = vmatpush1.msra.mxu0 %v5501
    %5527 = vmatprep.subr.mxu0 0.0
    %5528 = vmatpush1.msra.mxu0 %v5502
    %5529 = vmatprep.subr.mxu0 0.0
    %5530 = vmatpush1.msra.mxu0 0.0
    %5531 = vmatprep.subr.mxu0 0.0
    %5532 = vmatpush1.msra.mxu0 0.0
    %5533 = vmatprep.subr.mxu0 0.0
    %5534 = vmatpush1.msra.mxu0 0.0
    %5535 = vmatprep.subr.mxu0 0.0
    %5536 = vmatpush1.msra.mxu0 0.0
    %5537 = vmatprep.subr.mxu0 0.0
    %5538 = vmatpush1.msra.mxu0 0.0
    %5539 = vmatprep.subr.mxu0 0.0
    %5540 = vmatpush1.msra.mxu0 0.0
    %5541 = vmatprep.subr.mxu0 0.0
    %5542 = vmatpush1.msra.mxu0 0.0
    %5543 = vmatprep.subr.mxu0 0.0
    %5544 = vmatpush1.msra.mxu0 0.0
    %5545 = vmatprep.subr.mxu0 0.0
    %5546 = vmatpush1.msra.mxu0 0.0
    %5547 = vmatprep.subr.mxu0 0.0
    %5548 = vmatpush1.msra.mxu0 0.0
    %5549 = vmatprep.subr.mxu0 0.0
    %5550 = vmatpush1.msra.mxu0 0.0
    %5551 = vmatprep.subr.mxu0 0.0
    %5552 = vmatpush1.msra.mxu0 0.0
    %5553 = vmatprep.subr.mxu0 0.0
    %5554 = vmatpush1.msra.mxu0 0.0
    %5555 = vmatprep.subr.mxu0 0.0
    %5556 = vmatpush1.msra.mxu0 0.0
    %5557 = vmatprep.subr.mxu0 0.0
    %5558 = vmatpush1.msra.mxu0 0.0
    %5559 = vmatprep.subr.mxu0 0.0
    %5560 = vmatpush1.msra.mxu0 0.0
    %5561 = vmatprep.subr.mxu0 0.0
    %5562 = vmatpush1.msra.mxu0 0.0
    %5563 = vmatprep.subr.mxu0 0.0
    %5564 = vmatpush1.msra.mxu0 0.0
    %5565 = vmatprep.subr.mxu0 0.0
    %5566 = vmatpush1.msra.mxu0 0.0
    %5567 = vmatprep.subr.mxu0 0.0
    %5568 = vmatpush1.msra.mxu0 0.0
    %5569 = vmatprep.subr.mxu0 0.0
    %5570 = vmatpush1.msra.mxu0 0.0
    %5571 = vmatprep.subr.mxu0 0.0
    %5572 = vmatpush1.msra.mxu0 0.0
    %5573 = vmatprep.subr.mxu0 0.0
    %5574 = vmatpush1.msra.mxu0 0.0
    %5575 = vmatprep.subr.mxu0 0.0
    %5576 = vmatpush1.msra.mxu0 0.0
    %5577 = vmatprep.mubr.f32.mxu0 0.0
    %5578 = vmatmul.mubr.f32.gmra.mrb[0].mxu0 %v5511
    %v5579 = vpop.f32.mrb[0].mxu0
    %v5580 = vadd.f32 %v5508, %v5579
    %v5581 = vpop.f32.mrb[0].mxu0
    %5582 = vdwg.mxu0
    %v5583 = vxor.u32 %v5580, 2147483648
    %v5584 = vmul.f32 %v5583, 1.442695
    %v5585 = vpow.pop %v5584
    %v5586 = vadd.f32 %v5585, 1.0
    %v5587 = vrcp.pop %v5586
    %v5588 = vmul.f32 1.0, %v5587
    %5590 = vrot.lane.b32.xlu0 %v5580, 32
    %v5591 = vpop.permute.xlu0 %5590
    %v5593 = vmul.f32 %v5588, %v5591
    %5595 = vrot.lane.b32.xlu0 %v5593, 64
    %v5596 = vpop.permute.xlu0 %5595
    %v5598 = vadd.f32 %v5580, %v5596
    %v5599 = vtanh.pop %v5598
    %v5600 = vsub.f32 1.0, %v5588
    %5602 = vrot.lane.b32.xlu0 %v5599, 96
    %v5603 = vpop.permute.xlu0 %5602
    %v5605 = vmul.f32 %v5600, %v5603
    %v5606 = vmul.f32 %v5588, %v4791
    %v5607 = vadd.f32 %v5605, %v5606
    %5609 = vrot.lane.b32.xlu0 %v5607, 96
    %v5610 = vpop.permute.xlu0 %5609
    %v5612 = vsel %vm158, %v5610, %v4909
    %v5613 = vld [vmem:[%s11] sm:$0xff]
    %v5614 = vld [vmem:[%s11 + $0x8] sm:$0xff]
    %v5615 = vld [vmem:[%s11 + $0x10] sm:$0xff]
    %v5616 = vld [vmem:[%s11 + $0x18] sm:$0xff]
    %v5617 = vld [vmem:[%s11 + $0x20] sm:$0xff]
    %v5618 = vld [vmem:[%s11 + $0x28] sm:$0xff]
    %v5619 = vld [vmem:[%s11 + $0x30] sm:$0xff]
    %v5620 = vld [vmem:[%s11 + $0x38] sm:$0xff]
    %v5621 = vld [vmem:[%s12] sm:$0x1]
    %v5623 = vlaneseq
    %v5624 = vshrl.u32 %v5623, 7
    %v5625 = vsub.s32 0, %v5624
    %v5626 = vrot.slane %v5621, %v5625
    %v5629 = vsel %vm243, %v5612, 0
    %5631 = vmatprep.subr.mxu0 0.0
    %5632 = vmatpush1.msra.mxu0 %v5613
    %5633 = vmatprep.subr.mxu0 0.0
    %5634 = vmatpush1.msra.mxu0 %v5614
    %5635 = vmatprep.subr.mxu0 0.0
    %5636 = vmatpush1.msra.mxu0 %v5615
    %5637 = vmatprep.subr.mxu0 0.0
    %5638 = vmatpush1.msra.mxu0 %v5616
    %5639 = vmatprep.subr.mxu0 0.0
    %5640 = vmatpush1.msra.mxu0 %v5617
    %5641 = vmatprep.subr.mxu0 0.0
    %5642 = vmatpush1.msra.mxu0 %v5618
    %5643 = vmatprep.subr.mxu0 0.0
    %5644 = vmatpush1.msra.mxu0 %v5619
    %5645 = vmatprep.subr.mxu0 0.0
    %5646 = vmatpush1.msra.mxu0 %v5620
    %5647 = vmatprep.subr.mxu0 0.0
    %5648 = vmatpush1.msra.mxu0 0.0
    %5649 = vmatprep.subr.mxu0 0.0
    %5650 = vmatpush1.msra.mxu0 0.0
    %5651 = vmatprep.subr.mxu0 0.0
    %5652 = vmatpush1.msra.mxu0 0.0
    %5653 = vmatprep.subr.mxu0 0.0
    %5654 = vmatpush1.msra.mxu0 0.0
    %5655 = vmatprep.subr.mxu0 0.0
    %5656 = vmatpush1.msra.mxu0 0.0
    %5657 = vmatprep.subr.mxu0 0.0
    %5658 = vmatpush1.msra.mxu0 0.0
    %5659 = vmatprep.subr.mxu0 0.0
    %5660 = vmatpush1.msra.mxu0 0.0
    %5661 = vmatprep.subr.mxu0 0.0
    %5662 = vmatpush1.msra.mxu0 0.0
    %5663 = vmatprep.subr.mxu0 0.0
    %5664 = vmatpush1.msra.mxu0 0.0
    %5665 = vmatprep.subr.mxu0 0.0
    %5666 = vmatpush1.msra.mxu0 0.0
    %5667 = vmatprep.subr.mxu0 0.0
    %5668 = vmatpush1.msra.mxu0 0.0
    %5669 = vmatprep.subr.mxu0 0.0
    %5670 = vmatpush1.msra.mxu0 0.0
    %5671 = vmatprep.subr.mxu0 0.0
    %5672 = vmatpush1.msra.mxu0 0.0
    %5673 = vmatprep.subr.mxu0 0.0
    %5674 = vmatpush1.msra.mxu0 0.0
    %5675 = vmatprep.subr.mxu0 0.0
    %5676 = vmatpush1.msra.mxu0 0.0
    %5677 = vmatprep.subr.mxu0 0.0
    %5678 = vmatpush1.msra.mxu0 0.0
    %5679 = vmatprep.subr.mxu0 0.0
    %5680 = vmatpush1.msra.mxu0 0.0
    %5681 = vmatprep.subr.mxu0 0.0
    %5682 = vmatpush1.msra.mxu0 0.0
    %5683 = vmatprep.subr.mxu0 0.0
    %5684 = vmatpush1.msra.mxu0 0.0
    %5685 = vmatprep.subr.mxu0 0.0
    %5686 = vmatpush1.msra.mxu0 0.0
    %5687 = vmatprep.subr.mxu0 0.0
    %5688 = vmatpush1.msra.mxu0 0.0
    %5689 = vmatprep.subr.mxu0 0.0
    %5690 = vmatpush1.msra.mxu0 0.0
    %5691 = vmatprep.subr.mxu0 0.0
    %5692 = vmatpush1.msra.mxu0 0.0
    %5693 = vmatprep.subr.mxu0 0.0
    %5694 = vmatpush1.msra.mxu0 0.0
    %5695 = vmatprep.mubr.f32.mxu0 0.0
    %5696 = vmatmul.mubr.f32.gmra.mrb[0].mxu0 %v5629
    %v5697 = vpop.f32.mrb[0].mxu0
    %v5698 = vadd.f32 %v5626, %v5697
    %v5699 = vpop.f32.mrb[0].mxu0
    %5700 = vdwg.mxu0
    %v5701 = vxor.u32 %v5698, 2147483648
    %v5702 = vmul.f32 %v5701, 1.442695
    %v5703 = vpow.pop %v5702
    %v5704 = vadd.f32 %v5703, 1.0
    %v5705 = vrcp.pop %v5704
    %v5706 = vmul.f32 1.0, %v5705
    %5708 = vrot.lane.b32.xlu0 %v5698, 32
    %v5709 = vpop.permute.xlu0 %5708
    %v5711 = vmul.f32 %v5706, %v5709
    %5713 = vrot.lane.b32.xlu0 %v5711, 64
    %v5714 = vpop.permute.xlu0 %5713
    %v5716 = vadd.f32 %v5698, %v5714
    %v5717 = vtanh.pop %v5716
    %v5718 = vsub.f32 1.0, %v5706
    %5720 = vrot.lane.b32.xlu0 %v5717, 96
    %v5721 = vpop.permute.xlu0 %5720
    %v5723 = vmul.f32 %v5718, %v5721
    %v5724 = vmul.f32 %v5706, %v4909
    %v5725 = vadd.f32 %v5723, %v5724
    %v5726 = vld [vmem:[%s13] sm:$0xff]
    %v5727 = vld [vmem:[%s13 + $0x8] sm:$0xff]
    %v5728 = vld [vmem:[%s13 + $0x10] sm:$0xff]
    %v5729 = vld [vmem:[%s13 + $0x18] sm:$0xff]
    %v5730 = vld [vmem:[%s14] sm:$0x1]
    %v5732 = vlaneseq
    %v5733 = vshrl.u32 %v5732, 7
    %v5734 = vsub.s32 0, %v5733
    %v5735 = vrot.slane %v5730, %v5734
    %5738 = vrot.lane.b32.xlu0 %v5725, 96
    %v5739 = vpop.permute.xlu0 %5738
    %v5740 = vsel %vm158, %v5739, 0
    %5742 = vmatprep.subr.mxu0 0.0
    %5743 = vmatpush1.msra.mxu0 %v5726
    %5744 = vmatprep.subr.mxu0 0.0
    %5745 = vmatpush1.msra.mxu0 %v5727
    %5746 = vmatprep.subr.mxu0 0.0
    %5747 = vmatpush1.msra.mxu0 %v5728
    %5748 = vmatprep.subr.mxu0 0.0
    %5749 = vmatpush1.msra.mxu0 %v5729
    %5750 = vmatprep.subr.mxu0 0.0
    %5751 = vmatpush1.msra.mxu0 0.0
    %5752 = vmatprep.subr.mxu0 0.0
    %5753 = vmatpush1.msra.mxu0 0.0
    %5754 = vmatprep.subr.mxu0 0.0
    %5755 = vmatpush1.msra.mxu0 0.0
    %5756 = vmatprep.subr.mxu0 0.0
    %5757 = vmatpush1.msra.mxu0 0.0
    %5758 = vmatprep.subr.mxu0 0.0
    %5759 = vmatpush1.msra.mxu0 0.0
    %5760 = vmatprep.subr.mxu0 0.0
    %5761 = vmatpush1.msra.mxu0 0.0
    %5762 = vmatprep.subr.mxu0 0.0
    %5763 = vmatpush1.msra.mxu0 0.0
    %5764 = vmatprep.subr.mxu0 0.0
    %5765 = vmatpush1.msra.mxu0 0.0
    %5766 = vmatprep.subr.mxu0 0.0
    %5767 = vmatpush1.msra.mxu0 0.0
    %5768 = vmatprep.subr.mxu0 0.0
    %5769 = vmatpush1.msra.mxu0 0.0
    %5770 = vmatprep.subr.mxu0 0.0
    %5771 = vmatpush1.msra.mxu0 0.0
    %5772 = vmatprep.subr.mxu0 0.0
    %5773 = vmatpush1.msra.mxu0 0.0
    %5774 = vmatprep.subr.mxu0 0.0
    %5775 = vmatpush1.msra.mxu0 0.0
    %5776 = vmatprep.subr.mxu0 0.0
    %5777 = vmatpush1.msra.mxu0 0.0
    %5778 = vmatprep.subr.mxu0 0.0
    %5779 = vmatpush1.msra.mxu0 0.0
    %5780 = vmatprep.subr.mxu0 0.0
    %5781 = vmatpush1.msra.mxu0 0.0
    %5782 = vmatprep.subr.mxu0 0.0
    %5783 = vmatpush1.msra.mxu0 0.0
    %5784 = vmatprep.subr.mxu0 0.0
    %5785 = vmatpush1.msra.mxu0 0.0
    %5786 = vmatprep.subr.mxu0 0.0
    %5787 = vmatpush1.msra.mxu0 0.0
    %5788 = vmatprep.subr.mxu0 0.0
    %5789 = vmatpush1.msra.mxu0 0.0
    %5790 = vmatprep.subr.mxu0 0.0
    %5791 = vmatpush1.msra.mxu0 0.0
    %5792 = vmatprep.subr.mxu0 0.0
    %5793 = vmatpush1.msra.mxu0 0.0
    %5794 = vmatprep.subr.mxu0 0.0
    %5795 = vmatpush1.msra.mxu0 0.0
    %5796 = vmatprep.subr.mxu0 0.0
    %5797 = vmatpush1.msra.mxu0 0.0
    %5798 = vmatprep.subr.mxu0 0.0
    %5799 = vmatpush1.msra.mxu0 0.0
    %5800 = vmatprep.subr.mxu0 0.0
    %5801 = vmatpush1.msra.mxu0 0.0
    %5802 = vmatprep.subr.mxu0 0.0
    %5803 = vmatpush1.msra.mxu0 0.0
    %5804 = vmatprep.subr.mxu0 0.0
    %5805 = vmatpush1.msra.mxu0 0.0
    %5806 = vmatprep.mubr.f32.mxu0 0.0
    %5807 = vmatmul.mubr.f32.gmra.mrb[0].mxu0 %v5740
    %v5808 = vpop.f32.mrb[0].mxu0
    %v5809 = vadd.f32 %v5735, %v5808
    %v5810 = vpop.f32.mrb[0].mxu0
    %5811 = vdwg.mxu0
    %s5812 = scalar_lea.vmem [#allocation14], 12
    %5813 = vst.msk [vmem:[%s5812] sm:$0x3] %vm916, %v5809
    %v5814 = vsub.f32 %v5809, %v5036
    %v5815 = vmul.f32 %v5814, %v5814
    %v5816 = vadd.f32 %v5000, %v5815
    %v5817 = vmul.f32 %v5399, 1.442695
    %v5818 = vpow.pop %v5817
    %5820 = vrot.lane.b32.xlu0 %v5399, 16
    %v5821 = vpop.permute.xlu0 %5820
    %v5823 = vsub.f32 %v5399, %v5821
    %v5824 = vmul.f32 %v5823, 0.5
    %5825 = vrot.lane.b32.xlu0 %v5399, 112
    %v5826 = vpop.permute.xlu0 %5825
    %v5828 = vsub.f32 %v5399, %v5826
    %v5829 = vmul.f32 %v5828, %v5828
    %5831 = vrot.lane.b32.xlu0 %v5829, 8
    %v5832 = vpop.permute.xlu0 %5831
    %v5834 = vadd.f32 %v5818, %v5832
    %v5835 = vsub.f32 0.0, %v5399
    %v5836 = vmul.f32 %v5835, 1.442695
    %v5837 = vpow.pop %v5836
    %v5838 = vmul.f32 %v5837, 0.5
    %5840 = vrot.lane.b32.xlu0 %v5838, 112
    %v5841 = vpop.permute.xlu0 %5840
    %v5843 = vmul.f32 %v5834, %v5841
    %5845 = vrot.lane.b32.xlu0 %v5843, 16
    %v5846 = vpop.permute.xlu0 %5845
    %v5848 = vadd.f32 %v5824, %v5846
    %v5849 = vsub.f32 %v5848, 0.5
    %v5850 = vadd.f32 %v5034, %v5849
    %s5851 = scalar_lea.vmem [#allocation2], 14
    %v5852 = vld [vmem:[%s5851] sm:$0x3]
    %s5853 = scalar_lea.vmem [#allocation5], 14
    %v5854 = vld [vmem:[%s5853] sm:$0x3]
    %5856 = vrot.lane.b32.xlu0 %v5809, 16
    %v5857 = vpop.permute.xlu0 %5856
    %v5859 = vsel %vm146, %v5852, %v5857
    %v5860 = vld [vmem:[#allocation7] sm:$0xff]
    %v5861 = vld [vmem:[#allocation7 + $0x8] sm:$0xff]
    %v5862 = vld [vmem:[#allocation7 + $0x10] sm:$0xff]
    %v5863 = vld [vmem:[#allocation7 + $0x18] sm:$0xff]
    %v5864 = vld [vmem:[%s3] sm:$0x1]
    %v5865 = vlaneseq
    %v5866 = vshrl.u32 %v5865, 7
    %v5867 = vsub.s32 0, %v5866
    %v5868 = vrot.slane %v5864, %v5867
    %v5870 = vsel %vm158, %v5859, 0
    %5872 = vmatprep.subr.mxu0 0.0
    %5873 = vmatpush1.msra.mxu0 %v5860
    %5874 = vmatprep.subr.mxu0 0.0
    %5875 = vmatpush1.msra.mxu0 %v5861
    %5876 = vmatprep.subr.mxu0 0.0
    %5877 = vmatpush1.msra.mxu0 %v5862
    %5878 = vmatprep.subr.mxu0 0.0
    %5879 = vmatpush1.msra.mxu0 %v5863
    %5880 = vmatprep.subr.mxu0 0.0
    %5881 = vmatpush1.msra.mxu0 0.0
    %5882 = vmatprep.subr.mxu0 0.0
    %5883 = vmatpush1.msra.mxu0 0.0
    %5884 = vmatprep.subr.mxu0 0.0
    %5885 = vmatpush1.msra.mxu0 0.0
    %5886 = vmatprep.subr.mxu0 0.0
    %5887 = vmatpush1.msra.mxu0 0.0
    %5888 = vmatprep.subr.mxu0 0.0
    %5889 = vmatpush1.msra.mxu0 0.0
    %5890 = vmatprep.subr.mxu0 0.0
    %5891 = vmatpush1.msra.mxu0 0.0
    %5892 = vmatprep.subr.mxu0 0.0
    %5893 = vmatpush1.msra.mxu0 0.0
    %5894 = vmatprep.subr.mxu0 0.0
    %5895 = vmatpush1.msra.mxu0 0.0
    %5896 = vmatprep.subr.mxu0 0.0
    %5897 = vmatpush1.msra.mxu0 0.0
    %5898 = vmatprep.subr.mxu0 0.0
    %5899 = vmatpush1.msra.mxu0 0.0
    %5900 = vmatprep.subr.mxu0 0.0
    %5901 = vmatpush1.msra.mxu0 0.0
    %5902 = vmatprep.subr.mxu0 0.0
    %5903 = vmatpush1.msra.mxu0 0.0
    %5904 = vmatprep.subr.mxu0 0.0
    %5905 = vmatpush1.msra.mxu0 0.0
    %5906 = vmatprep.subr.mxu0 0.0
    %5907 = vmatpush1.msra.mxu0 0.0
    %5908 = vmatprep.subr.mxu0 0.0
    %5909 = vmatpush1.msra.mxu0 0.0
    %5910 = vmatprep.subr.mxu0 0.0
    %5911 = vmatpush1.msra.mxu0 0.0
    %5912 = vmatprep.subr.mxu0 0.0
    %5913 = vmatpush1.msra.mxu0 0.0
    %5914 = vmatprep.subr.mxu0 0.0
    %5915 = vmatpush1.msra.mxu0 0.0
    %5916 = vmatprep.subr.mxu0 0.0
    %5917 = vmatpush1.msra.mxu0 0.0
    %5918 = vmatprep.subr.mxu0 0.0
    %5919 = vmatpush1.msra.mxu0 0.0
    %5920 = vmatprep.subr.mxu0 0.0
    %5921 = vmatpush1.msra.mxu0 0.0
    %5922 = vmatprep.subr.mxu0 0.0
    %5923 = vmatpush1.msra.mxu0 0.0
    %5924 = vmatprep.subr.mxu0 0.0
    %5925 = vmatpush1.msra.mxu0 0.0
    %5926 = vmatprep.subr.mxu0 0.0
    %5927 = vmatpush1.msra.mxu0 0.0
    %5928 = vmatprep.subr.mxu0 0.0
    %5929 = vmatpush1.msra.mxu0 0.0
    %5930 = vmatprep.subr.mxu0 0.0
    %5931 = vmatpush1.msra.mxu0 0.0
    %5932 = vmatprep.subr.mxu0 0.0
    %5933 = vmatpush1.msra.mxu0 0.0
    %5934 = vmatprep.subr.mxu0 0.0
    %5935 = vmatpush1.msra.mxu0 0.0
    %5936 = vmatprep.mubr.f32.mxu0 0.0
    %5937 = vmatmul.mubr.f32.gmra.mrb[0].mxu0 %v5870
    %v5938 = vpop.f32.mrb[0].mxu0
    %v5939 = vadd.f32 %v5868, %v5938
    %v5940 = vpop.f32.mrb[0].mxu0
    %5941 = vdwg.mxu0
    %v5942 = vld [vmem:[%s3 + $0x1] sm:$0x1]
    %v5943 = vlaneseq
    %v5944 = vshrl.u32 %v5943, 7
    %v5945 = vsub.s32 0, %v5944
    %v5946 = vrot.slane %v5942, %v5945
    %v5947 = vadd.f32 %v5939, %v5946
    %5949 = vrot.lane.b32.xlu0 %v5947, 32
    %v5950 = vpop.permute.xlu0 %5949
    %5953 = vrot.lane.b32.xlu0 %v5308, 64
    %v5954 = vpop.permute.xlu0 %5953
    %v5956 = vsel %vm158, %v5947, %v5283
    %v5957 = vsel %vm243, %v5956, %v5950
    %v5958 = vsel %vm245, %v5957, %v5954
    %v5959 = vld [vmem:[#allocation8] sm:$0xff]
    %v5960 = vld [vmem:[#allocation8 + $0x8] sm:$0xff]
    %v5961 = vld [vmem:[#allocation8 + $0x10] sm:$0xff]
    %v5962 = vld [vmem:[#allocation8 + $0x18] sm:$0xff]
    %v5963 = vld [vmem:[#allocation8 + $0x20] sm:$0xff]
    %v5964 = vld [vmem:[#allocation8 + $0x28] sm:$0xff]
    %v5965 = vld [vmem:[#allocation8 + $0x30] sm:$0xff]
    %v5966 = vld [vmem:[#allocation8 + $0x38] sm:$0xff]
    %v5967 = vld [vmem:[#allocation8 + $0x40] sm:$0xff]
    %v5968 = vld [vmem:[#allocation8 + $0x48] sm:$0xff]
    %v5969 = vld [vmem:[#allocation8 + $0x50] sm:$0xff]
    %v5970 = vld [vmem:[#allocation8 + $0x58] sm:$0xff]
    %v5971 = vld [vmem:[#allocation8 + $0x60] sm:$0xff]
    %v5972 = vld [vmem:[#allocation8 + $0x68] sm:$0xff]
    %v5973 = vld [vmem:[#allocation8 + $0x70] sm:$0xff]
    %v5974 = vld [vmem:[#allocation8 + $0x78] sm:$0xff]
    %v5975 = vld [vmem:[#allocation8 + $0x80] sm:$0xff]
    %v5976 = vld [vmem:[#allocation8 + $0x88] sm:$0xff]
    %v5977 = vld [vmem:[#allocation8 + $0x90] sm:$0xff]
    %v5978 = vld [vmem:[#allocation8 + $0x98] sm:$0xff]
    %v5979 = vld [vmem:[#allocation8 + $0xa0] sm:$0xff]
    %v5980 = vld [vmem:[#allocation8 + $0xa8] sm:$0xff]
    %v5981 = vld [vmem:[#allocation8 + $0xb0] sm:$0xff]
    %v5982 = vld [vmem:[#allocation8 + $0xb8] sm:$0xff]
    %v5983 = vld [vmem:[#allocation8 + $0xc0] sm:$0xff]
    %v5984 = vld [vmem:[#allocation8 + $0xc8] sm:$0xff]
    %v5985 = vld [vmem:[#allocation8 + $0xd0] sm:$0xff]
    %v5986 = vld [vmem:[#allocation8 + $0xd8] sm:$0xff]
    %v5987 = vld [vmem:[#allocation8 + $0xe0] sm:$0xff]
    %v5988 = vld [vmem:[#allocation8 + $0xe8] sm:$0xff]
    %v5989 = vld [vmem:[#allocation8 + $0xf0] sm:$0xff]
    %v5990 = vld [vmem:[#allocation8 + $0xf8] sm:$0xff]
    %v5991 = vld [vmem:[#allocation10] sm:$0x3]
    %v5993 = vlaneseq
    %v5994 = vshrl.u32 %v5993, 7
    %v5995 = vsub.s32 0, %v5994
    %v5996 = vrot.slane %v5991, %v5995
    %v5997 = vlaneseq
    %v5998 = vshrl.u32 %v5997, 7
    %v5999 = vsub.s32 1, %v5998
    %v6000 = vrot.slane %v5991, %v5999
    %6003 = vmatprep.subr.mxu0 %v5960
    %6004 = vmatpush1.msra.mxu0 %v5959
    %6005 = vmatprep.subr.mxu0 %v5962
    %6006 = vmatpush1.msra.mxu0 %v5961
    %6007 = vmatprep.subr.mxu0 %v5964
    %6008 = vmatpush1.msra.mxu0 %v5963
    %6009 = vmatprep.subr.mxu0 %v5966
    %6010 = vmatpush1.msra.mxu0 %v5965
    %6011 = vmatprep.subr.mxu0 %v5968
    %6012 = vmatpush1.msra.mxu0 %v5967
    %6013 = vmatprep.subr.mxu0 %v5970
    %6014 = vmatpush1.msra.mxu0 %v5969
    %6015 = vmatprep.subr.mxu0 %v5972
    %6016 = vmatpush1.msra.mxu0 %v5971
    %6017 = vmatprep.subr.mxu0 %v5974
    %6018 = vmatpush1.msra.mxu0 %v5973
    %6019 = vmatprep.subr.mxu0 %v5976
    %6020 = vmatpush1.msra.mxu0 %v5975
    %6021 = vmatprep.subr.mxu0 %v5978
    %6022 = vmatpush1.msra.mxu0 %v5977
    %6023 = vmatprep.subr.mxu0 %v5980
    %6024 = vmatpush1.msra.mxu0 %v5979
    %6025 = vmatprep.subr.mxu0 %v5982
    %6026 = vmatpush1.msra.mxu0 %v5981
    %6027 = vmatprep.subr.mxu0 %v5984
    %6028 = vmatpush1.msra.mxu0 %v5983
    %6029 = vmatprep.subr.mxu0 %v5986
    %6030 = vmatpush1.msra.mxu0 %v5985
    %6031 = vmatprep.subr.mxu0 %v5988
    %6032 = vmatpush1.msra.mxu0 %v5987
    %6033 = vmatprep.subr.mxu0 %v5990
    %6034 = vmatpush1.msra.mxu0 %v5989
    %6035 = vmatprep.subr.mxu0 0.0
    %6036 = vmatpush1.msra.mxu0 0.0
    %6037 = vmatprep.subr.mxu0 0.0
    %6038 = vmatpush1.msra.mxu0 0.0
    %6039 = vmatprep.subr.mxu0 0.0
    %6040 = vmatpush1.msra.mxu0 0.0
    %6041 = vmatprep.subr.mxu0 0.0
    %6042 = vmatpush1.msra.mxu0 0.0
    %6043 = vmatprep.subr.mxu0 0.0
    %6044 = vmatpush1.msra.mxu0 0.0
    %6045 = vmatprep.subr.mxu0 0.0
    %6046 = vmatpush1.msra.mxu0 0.0
    %6047 = vmatprep.subr.mxu0 0.0
    %6048 = vmatpush1.msra.mxu0 0.0
    %6049 = vmatprep.subr.mxu0 0.0
    %6050 = vmatpush1.msra.mxu0 0.0
    %6051 = vmatprep.subr.mxu0 0.0
    %6052 = vmatpush1.msra.mxu0 0.0
    %6053 = vmatprep.subr.mxu0 0.0
    %6054 = vmatpush1.msra.mxu0 0.0
    %6055 = vmatprep.subr.mxu0 0.0
    %6056 = vmatpush1.msra.mxu0 0.0
    %6057 = vmatprep.subr.mxu0 0.0
    %6058 = vmatpush1.msra.mxu0 0.0
    %6059 = vmatprep.subr.mxu0 0.0
    %6060 = vmatpush1.msra.mxu0 0.0
    %6061 = vmatprep.subr.mxu0 0.0
    %6062 = vmatpush1.msra.mxu0 0.0
    %6063 = vmatprep.subr.mxu0 0.0
    %6064 = vmatpush1.msra.mxu0 0.0
    %6065 = vmatprep.subr.mxu0 0.0
    %6066 = vmatpush1.msra.mxu0 0.0
    %6067 = vmatprep.mubr.f32.mxu0 0.0
    %6068 = vmatmul.mubr.f32.gmra.mrb[0].mxu0 %v5958
    %v6069 = vpop.f32.mrb[0].mxu0
    %v6070 = vadd.f32 %v5996, %v6069
    %v6071 = vpop.f32.mrb[0].mxu0
    %v6072 = vadd.f32 %v6000, %v6071
    %6073 = vdwg.mxu0
    %v6074 = vxor.u32 %v6070, 2147483648
    %v6075 = vmul.f32 %v6074, 1.442695
    %v6076 = vpow.pop %v6075
    %v6077 = vadd.f32 %v6076, 1.0
    %v6078 = vrcp.pop %v6077
    %v6079 = vmul.f32 1.0, %v6078
    %6081 = vrot.lane.b32.xlu0 %v6070, 32
    %v6082 = vpop.permute.xlu0 %6081
    %v6084 = vmul.f32 %v6079, %v6082
    %6086 = vrot.lane.b32.xlu0 %v6084, 64
    %v6087 = vpop.permute.xlu0 %6086
    %v6089 = vadd.f32 %v6070, %v6087
    %v6090 = vtanh.pop %v6089
    %v6091 = vsub.f32 1.0, %v6079
    %6093 = vrot.lane.b32.xlu0 %v6090, 96
    %v6094 = vpop.permute.xlu0 %6093
    %v6096 = vmul.f32 %v6091, %v6094
    %v6097 = vmul.f32 %v6079, %v5283
    %v6098 = vadd.f32 %v6096, %v6097
    %v6099 = vxor.u32 %v6072, 2147483648
    %v6100 = vmul.f32 %v6099, 1.442695
    %v6101 = vpow.pop %v6100
    %v6102 = vadd.f32 %v6101, 1.0
    %v6103 = vrcp.pop %v6102
    %v6104 = vmul.f32 1.0, %v6103
    %6106 = vrot.lane.b32.xlu0 %v6072, 32
    %v6107 = vpop.permute.xlu0 %6106
    %v6109 = vmul.f32 %v6104, %v6107
    %6111 = vrot.lane.b32.xlu0 %v6109, 64
    %v6112 = vpop.permute.xlu0 %6111
    %v6114 = vadd.f32 %v6072, %v6112
    %v6115 = vtanh.pop %v6114
    %v6116 = vsub.f32 1.0, %v6104
    %6118 = vrot.lane.b32.xlu0 %v6115, 96
    %v6119 = vpop.permute.xlu0 %6118
    %v6121 = vmul.f32 %v6116, %v6119
    %v6122 = vmul.f32 %v6104, %v5308
    %v6123 = vadd.f32 %v6121, %v6122
    %6125 = vrot.lane.b32.xlu0 %v6098, 96
    %v6126 = vpop.permute.xlu0 %6125
    %v6128 = vsel %vm158, %v6126, %v6123
    %v6129 = vld [vmem:[%s6] sm:$0xff]
    %v6130 = vld [vmem:[%s6 + $0x8] sm:$0xff]
    %v6131 = vld [vmem:[%s6 + $0x10] sm:$0xff]
    %v6132 = vld [vmem:[%s6 + $0x18] sm:$0xff]
    %v6133 = vld [vmem:[%s6 + $0x20] sm:$0xff]
    %v6134 = vld [vmem:[%s6 + $0x28] sm:$0xff]
    %v6135 = vld [vmem:[%s6 + $0x30] sm:$0xff]
    %v6136 = vld [vmem:[%s6 + $0x38] sm:$0xff]
    %v6137 = vld [vmem:[#allocation11] sm:$0x1]
    %v6139 = vlaneseq
    %v6140 = vshrl.u32 %v6139, 7
    %v6141 = vsub.s32 0, %v6140
    %v6142 = vrot.slane %v6137, %v6141
    %v6145 = vsel %vm243, %v6128, 0
    %6147 = vmatprep.subr.mxu0 0.0
    %6148 = vmatpush1.msra.mxu0 %v6129
    %6149 = vmatprep.subr.mxu0 0.0
    %6150 = vmatpush1.msra.mxu0 %v6130
    %6151 = vmatprep.subr.mxu0 0.0
    %6152 = vmatpush1.msra.mxu0 %v6131
    %6153 = vmatprep.subr.mxu0 0.0
    %6154 = vmatpush1.msra.mxu0 %v6132
    %6155 = vmatprep.subr.mxu0 0.0
    %6156 = vmatpush1.msra.mxu0 %v6133
    %6157 = vmatprep.subr.mxu0 0.0
    %6158 = vmatpush1.msra.mxu0 %v6134
    %6159 = vmatprep.subr.mxu0 0.0
    %6160 = vmatpush1.msra.mxu0 %v6135
    %6161 = vmatprep.subr.mxu0 0.0
    %6162 = vmatpush1.msra.mxu0 %v6136
    %6163 = vmatprep.subr.mxu0 0.0
    %6164 = vmatpush1.msra.mxu0 0.0
    %6165 = vmatprep.subr.mxu0 0.0
    %6166 = vmatpush1.msra.mxu0 0.0
    %6167 = vmatprep.subr.mxu0 0.0
    %6168 = vmatpush1.msra.mxu0 0.0
    %6169 = vmatprep.subr.mxu0 0.0
    %6170 = vmatpush1.msra.mxu0 0.0
    %6171 = vmatprep.subr.mxu0 0.0
    %6172 = vmatpush1.msra.mxu0 0.0
    %6173 = vmatprep.subr.mxu0 0.0
    %6174 = vmatpush1.msra.mxu0 0.0
    %6175 = vmatprep.subr.mxu0 0.0
    %6176 = vmatpush1.msra.mxu0 0.0
    %6177 = vmatprep.subr.mxu0 0.0
    %6178 = vmatpush1.msra.mxu0 0.0
    %6179 = vmatprep.subr.mxu0 0.0
    %6180 = vmatpush1.msra.mxu0 0.0
    %6181 = vmatprep.subr.mxu0 0.0
    %6182 = vmatpush1.msra.mxu0 0.0
    %6183 = vmatprep.subr.mxu0 0.0
    %6184 = vmatpush1.msra.mxu0 0.0
    %6185 = vmatprep.subr.mxu0 0.0
    %6186 = vmatpush1.msra.mxu0 0.0
    %6187 = vmatprep.subr.mxu0 0.0
    %6188 = vmatpush1.msra.mxu0 0.0
    %6189 = vmatprep.subr.mxu0 0.0
    %6190 = vmatpush1.msra.mxu0 0.0
    %6191 = vmatprep.subr.mxu0 0.0
    %6192 = vmatpush1.msra.mxu0 0.0
    %6193 = vmatprep.subr.mxu0 0.0
    %6194 = vmatpush1.msra.mxu0 0.0
    %6195 = vmatprep.subr.mxu0 0.0
    %6196 = vmatpush1.msra.mxu0 0.0
    %6197 = vmatprep.subr.mxu0 0.0
    %6198 = vmatpush1.msra.mxu0 0.0
    %6199 = vmatprep.subr.mxu0 0.0
    %6200 = vmatpush1.msra.mxu0 0.0
    %6201 = vmatprep.subr.mxu0 0.0
    %6202 = vmatpush1.msra.mxu0 0.0
    %6203 = vmatprep.subr.mxu0 0.0
    %6204 = vmatpush1.msra.mxu0 0.0
    %6205 = vmatprep.subr.mxu0 0.0
    %6206 = vmatpush1.msra.mxu0 0.0
    %6207 = vmatprep.subr.mxu0 0.0
    %6208 = vmatpush1.msra.mxu0 0.0
    %6209 = vmatprep.subr.mxu0 0.0
    %6210 = vmatpush1.msra.mxu0 0.0
    %6211 = vmatprep.mubr.f32.mxu0 0.0
    %6212 = vmatmul.mubr.f32.gmra.mrb[0].mxu0 %v6145
    %v6213 = vpop.f32.mrb[0].mxu0
    %v6214 = vadd.f32 %v6142, %v6213
    %v6215 = vpop.f32.mrb[0].mxu0
    %6216 = vdwg.mxu0
    %v6217 = vmul.f32 %v6214, 0.5
    %v6218 = vmul.f32 %v6217, 1.442695
    %v6219 = vpow.pop %v6218
    %6221 = vrot.lane.b32.xlu0 %v6219, 120
    %v6222 = vpop.permute.xlu0 %6221
    %v6224 = vmul.f32 %v5854, %v6222
    %v6225 = vadd.f32 %v6224, %v6214
    %v6226 = vld [vmem:[#allocation13] sm:$0xff]
    %v6228 = vsel %vm515, %v6225, 0
    %6230 = vmatprep.subr.mxu0 0.0
    %6231 = vmatpush1.msra.mxu0 %v6226
    %6232 = vmatprep.subr.mxu0 0.0
    %6233 = vmatpush1.msra.mxu0 0.0
    %6234 = vmatprep.subr.mxu0 0.0
    %6235 = vmatpush1.msra.mxu0 0.0
    %6236 = vmatprep.subr.mxu0 0.0
    %6237 = vmatpush1.msra.mxu0 0.0
    %6238 = vmatprep.subr.mxu0 0.0
    %6239 = vmatpush1.msra.mxu0 0.0
    %6240 = vmatprep.subr.mxu0 0.0
    %6241 = vmatpush1.msra.mxu0 0.0
    %6242 = vmatprep.subr.mxu0 0.0
    %6243 = vmatpush1.msra.mxu0 0.0
    %6244 = vmatprep.subr.mxu0 0.0
    %6245 = vmatpush1.msra.mxu0 0.0
    %6246 = vmatprep.subr.mxu0 0.0
    %6247 = vmatpush1.msra.mxu0 0.0
    %6248 = vmatprep.subr.mxu0 0.0
    %6249 = vmatpush1.msra.mxu0 0.0
    %6250 = vmatprep.subr.mxu0 0.0
    %6251 = vmatpush1.msra.mxu0 0.0
    %6252 = vmatprep.subr.mxu0 0.0
    %6253 = vmatpush1.msra.mxu0 0.0
    %6254 = vmatprep.subr.mxu0 0.0
    %6255 = vmatpush1.msra.mxu0 0.0
    %6256 = vmatprep.subr.mxu0 0.0
    %6257 = vmatpush1.msra.mxu0 0.0
    %6258 = vmatprep.subr.mxu0 0.0
    %6259 = vmatpush1.msra.mxu0 0.0
    %6260 = vmatprep.subr.mxu0 0.0
    %6261 = vmatpush1.msra.mxu0 0.0
    %6262 = vmatprep.subr.mxu0 0.0
    %6263 = vmatpush1.msra.mxu0 0.0
    %6264 = vmatprep.subr.mxu0 0.0
    %6265 = vmatpush1.msra.mxu0 0.0
    %6266 = vmatprep.subr.mxu0 0.0
    %6267 = vmatpush1.msra.mxu0 0.0
    %6268 = vmatprep.subr.mxu0 0.0
    %6269 = vmatpush1.msra.mxu0 0.0
    %6270 = vmatprep.subr.mxu0 0.0
    %6271 = vmatpush1.msra.mxu0 0.0
    %6272 = vmatprep.subr.mxu0 0.0
    %6273 = vmatpush1.msra.mxu0 0.0
    %6274 = vmatprep.subr.mxu0 0.0
    %6275 = vmatpush1.msra.mxu0 0.0
    %6276 = vmatprep.subr.mxu0 0.0
    %6277 = vmatpush1.msra.mxu0 0.0
    %6278 = vmatprep.subr.mxu0 0.0
    %6279 = vmatpush1.msra.mxu0 0.0
    %6280 = vmatprep.subr.mxu0 0.0
    %6281 = vmatpush1.msra.mxu0 0.0
    %6282 = vmatprep.subr.mxu0 0.0
    %6283 = vmatpush1.msra.mxu0 0.0
    %6284 = vmatprep.subr.mxu0 0.0
    %6285 = vmatpush1.msra.mxu0 0.0
    %6286 = vmatprep.subr.mxu0 0.0
    %6287 = vmatpush1.msra.mxu0 0.0
    %6288 = vmatprep.subr.mxu0 0.0
    %6289 = vmatpush1.msra.mxu0 0.0
    %6290 = vmatprep.subr.mxu0 0.0
    %6291 = vmatpush1.msra.mxu0 0.0
    %6292 = vmatprep.subr.mxu0 0.0
    %6293 = vmatpush1.msra.mxu0 0.0
    %6294 = vmatprep.mubr.f32.mxu0 0.0
    %6295 = vmatmul.mubr.f32.gmra.mrb[0].mxu0 %v6228
    %v6296 = vpop.f32.mrb[0].mxu0
    %v6297 = vadd.f32 0.0, %v6296
    %v6298 = vpop.f32.mrb[0].mxu0
    %6299 = vdwg.mxu0
    %6301 = vrot.lane.b32.xlu0 %v6297, 64
    %v6302 = vpop.permute.xlu0 %6301
    %v6304 = vadd.f32 %v5947, %v6302
    %6306 = vrot.lane.b32.xlu0 %v6304, 64
    %v6307 = vpop.permute.xlu0 %6306
    %v6309 = vsel %vm158, %v6307, %v5607
    %v6310 = vld [vmem:[%s9] sm:$0xff]
    %v6311 = vld [vmem:[%s9 + $0x8] sm:$0xff]
    %v6312 = vld [vmem:[%s9 + $0x10] sm:$0xff]
    %v6313 = vld [vmem:[%s9 + $0x18] sm:$0xff]
    %v6314 = vld [vmem:[%s9 + $0x20] sm:$0xff]
    %v6315 = vld [vmem:[%s9 + $0x28] sm:$0xff]
    %v6316 = vld [vmem:[%s9 + $0x30] sm:$0xff]
    %v6317 = vld [vmem:[%s9 + $0x38] sm:$0xff]
    %v6318 = vld [vmem:[%s10] sm:$0x1]
    %v6320 = vlaneseq
    %v6321 = vshrl.u32 %v6320, 7
    %v6322 = vsub.s32 0, %v6321
    %v6323 = vrot.slane %v6318, %v6322
    %v6326 = vsel %vm243, %v6309, 0
    %6328 = vmatprep.subr.mxu0 0.0
    %6329 = vmatpush1.msra.mxu0 %v6310
    %6330 = vmatprep.subr.mxu0 0.0
    %6331 = vmatpush1.msra.mxu0 %v6311
    %6332 = vmatprep.subr.mxu0 0.0
    %6333 = vmatpush1.msra.mxu0 %v6312
    %6334 = vmatprep.subr.mxu0 0.0
    %6335 = vmatpush1.msra.mxu0 %v6313
    %6336 = vmatprep.subr.mxu0 0.0
    %6337 = vmatpush1.msra.mxu0 %v6314
    %6338 = vmatprep.subr.mxu0 0.0
    %6339 = vmatpush1.msra.mxu0 %v6315
    %6340 = vmatprep.subr.mxu0 0.0
    %6341 = vmatpush1.msra.mxu0 %v6316
    %6342 = vmatprep.subr.mxu0 0.0
    %6343 = vmatpush1.msra.mxu0 %v6317
    %6344 = vmatprep.subr.mxu0 0.0
    %6345 = vmatpush1.msra.mxu0 0.0
    %6346 = vmatprep.subr.mxu0 0.0
    %6347 = vmatpush1.msra.mxu0 0.0
    %6348 = vmatprep.subr.mxu0 0.0
    %6349 = vmatpush1.msra.mxu0 0.0
    %6350 = vmatprep.subr.mxu0 0.0
    %6351 = vmatpush1.msra.mxu0 0.0
    %6352 = vmatprep.subr.mxu0 0.0
    %6353 = vmatpush1.msra.mxu0 0.0
    %6354 = vmatprep.subr.mxu0 0.0
    %6355 = vmatpush1.msra.mxu0 0.0
    %6356 = vmatprep.subr.mxu0 0.0
    %6357 = vmatpush1.msra.mxu0 0.0
    %6358 = vmatprep.subr.mxu0 0.0
    %6359 = vmatpush1.msra.mxu0 0.0
    %6360 = vmatprep.subr.mxu0 0.0
    %6361 = vmatpush1.msra.mxu0 0.0
    %6362 = vmatprep.subr.mxu0 0.0
    %6363 = vmatpush1.msra.mxu0 0.0
    %6364 = vmatprep.subr.mxu0 0.0
    %6365 = vmatpush1.msra.mxu0 0.0
    %6366 = vmatprep.subr.mxu0 0.0
    %6367 = vmatpush1.msra.mxu0 0.0
    %6368 = vmatprep.subr.mxu0 0.0
    %6369 = vmatpush1.msra.mxu0 0.0
    %6370 = vmatprep.subr.mxu0 0.0
    %6371 = vmatpush1.msra.mxu0 0.0
    %6372 = vmatprep.subr.mxu0 0.0
    %6373 = vmatpush1.msra.mxu0 0.0
    %6374 = vmatprep.subr.mxu0 0.0
    %6375 = vmatpush1.msra.mxu0 0.0
    %6376 = vmatprep.subr.mxu0 0.0
    %6377 = vmatpush1.msra.mxu0 0.0
    %6378 = vmatprep.subr.mxu0 0.0
    %6379 = vmatpush1.msra.mxu0 0.0
    %6380 = vmatprep.subr.mxu0 0.0
    %6381 = vmatpush1.msra.mxu0 0.0
    %6382 = vmatprep.subr.mxu0 0.0
    %6383 = vmatpush1.msra.mxu0 0.0
    %6384 = vmatprep.subr.mxu0 0.0
    %6385 = vmatpush1.msra.mxu0 0.0
    %6386 = vmatprep.subr.mxu0 0.0
    %6387 = vmatpush1.msra.mxu0 0.0
    %6388 = vmatprep.subr.mxu0 0.0
    %6389 = vmatpush1.msra.mxu0 0.0
    %6390 = vmatprep.subr.mxu0 0.0
    %6391 = vmatpush1.msra.mxu0 0.0
    %6392 = vmatprep.mubr.f32.mxu0 0.0
    %6393 = vmatmul.mubr.f32.gmra.mrb[0].mxu0 %v6326
    %v6394 = vpop.f32.mrb[0].mxu0
    %v6395 = vadd.f32 %v6323, %v6394
    %v6396 = vpop.f32.mrb[0].mxu0
    %6397 = vdwg.mxu0
    %v6398 = vxor.u32 %v6395, 2147483648
    %v6399 = vmul.f32 %v6398, 1.442695
    %v6400 = vpow.pop %v6399
    %v6401 = vadd.f32 %v6400, 1.0
    %v6402 = vrcp.pop %v6401
    %v6403 = vmul.f32 1.0, %v6402
    %6405 = vrot.lane.b32.xlu0 %v6395, 32
    %v6406 = vpop.permute.xlu0 %6405
    %v6408 = vmul.f32 %v6403, %v6406
    %6410 = vrot.lane.b32.xlu0 %v6408, 64
    %v6411 = vpop.permute.xlu0 %6410
    %v6413 = vadd.f32 %v6395, %v6411
    %v6414 = vtanh.pop %v6413
    %v6415 = vsub.f32 1.0, %v6403
    %6417 = vrot.lane.b32.xlu0 %v6414, 96
    %v6418 = vpop.permute.xlu0 %6417
    %v6420 = vmul.f32 %v6415, %v6418
    %v6421 = vmul.f32 %v6403, %v5607
    %v6422 = vadd.f32 %v6420, %v6421
    %6424 = vrot.lane.b32.xlu0 %v6422, 96
    %v6425 = vpop.permute.xlu0 %6424
    %v6427 = vsel %vm158, %v6425, %v5725
    %v6428 = vld [vmem:[%s11] sm:$0xff]
    %v6429 = vld [vmem:[%s11 + $0x8] sm:$0xff]
    %v6430 = vld [vmem:[%s11 + $0x10] sm:$0xff]
    %v6431 = vld [vmem:[%s11 + $0x18] sm:$0xff]
    %v6432 = vld [vmem:[%s11 + $0x20] sm:$0xff]
    %v6433 = vld [vmem:[%s11 + $0x28] sm:$0xff]
    %v6434 = vld [vmem:[%s11 + $0x30] sm:$0xff]
    %v6435 = vld [vmem:[%s11 + $0x38] sm:$0xff]
    %v6436 = vld [vmem:[%s12] sm:$0x1]
    %v6438 = vlaneseq
    %v6439 = vshrl.u32 %v6438, 7
    %v6440 = vsub.s32 0, %v6439
    %v6441 = vrot.slane %v6436, %v6440
    %v6444 = vsel %vm243, %v6427, 0
    %6446 = vmatprep.subr.mxu0 0.0
    %6447 = vmatpush1.msra.mxu0 %v6428
    %6448 = vmatprep.subr.mxu0 0.0
    %6449 = vmatpush1.msra.mxu0 %v6429
    %6450 = vmatprep.subr.mxu0 0.0
    %6451 = vmatpush1.msra.mxu0 %v6430
    %6452 = vmatprep.subr.mxu0 0.0
    %6453 = vmatpush1.msra.mxu0 %v6431
    %6454 = vmatprep.subr.mxu0 0.0
    %6455 = vmatpush1.msra.mxu0 %v6432
    %6456 = vmatprep.subr.mxu0 0.0
    %6457 = vmatpush1.msra.mxu0 %v6433
    %6458 = vmatprep.subr.mxu0 0.0
    %6459 = vmatpush1.msra.mxu0 %v6434
    %6460 = vmatprep.subr.mxu0 0.0
    %6461 = vmatpush1.msra.mxu0 %v6435
    %6462 = vmatprep.subr.mxu0 0.0
    %6463 = vmatpush1.msra.mxu0 0.0
    %6464 = vmatprep.subr.mxu0 0.0
    %6465 = vmatpush1.msra.mxu0 0.0
    %6466 = vmatprep.subr.mxu0 0.0
    %6467 = vmatpush1.msra.mxu0 0.0
    %6468 = vmatprep.subr.mxu0 0.0
    %6469 = vmatpush1.msra.mxu0 0.0
    %6470 = vmatprep.subr.mxu0 0.0
    %6471 = vmatpush1.msra.mxu0 0.0
    %6472 = vmatprep.subr.mxu0 0.0
    %6473 = vmatpush1.msra.mxu0 0.0
    %6474 = vmatprep.subr.mxu0 0.0
    %6475 = vmatpush1.msra.mxu0 0.0
    %6476 = vmatprep.subr.mxu0 0.0
    %6477 = vmatpush1.msra.mxu0 0.0
    %6478 = vmatprep.subr.mxu0 0.0
    %6479 = vmatpush1.msra.mxu0 0.0
    %6480 = vmatprep.subr.mxu0 0.0
    %6481 = vmatpush1.msra.mxu0 0.0
    %6482 = vmatprep.subr.mxu0 0.0
    %6483 = vmatpush1.msra.mxu0 0.0
    %6484 = vmatprep.subr.mxu0 0.0
    %6485 = vmatpush1.msra.mxu0 0.0
    %6486 = vmatprep.subr.mxu0 0.0
    %6487 = vmatpush1.msra.mxu0 0.0
    %6488 = vmatprep.subr.mxu0 0.0
    %6489 = vmatpush1.msra.mxu0 0.0
    %6490 = vmatprep.subr.mxu0 0.0
    %6491 = vmatpush1.msra.mxu0 0.0
    %6492 = vmatprep.subr.mxu0 0.0
    %6493 = vmatpush1.msra.mxu0 0.0
    %6494 = vmatprep.subr.mxu0 0.0
    %6495 = vmatpush1.msra.mxu0 0.0
    %6496 = vmatprep.subr.mxu0 0.0
    %6497 = vmatpush1.msra.mxu0 0.0
    %6498 = vmatprep.subr.mxu0 0.0
    %6499 = vmatpush1.msra.mxu0 0.0
    %6500 = vmatprep.subr.mxu0 0.0
    %6501 = vmatpush1.msra.mxu0 0.0
    %6502 = vmatprep.subr.mxu0 0.0
    %6503 = vmatpush1.msra.mxu0 0.0
    %6504 = vmatprep.subr.mxu0 0.0
    %6505 = vmatpush1.msra.mxu0 0.0
    %6506 = vmatprep.subr.mxu0 0.0
    %6507 = vmatpush1.msra.mxu0 0.0
    %6508 = vmatprep.subr.mxu0 0.0
    %6509 = vmatpush1.msra.mxu0 0.0
    %6510 = vmatprep.mubr.f32.mxu0 0.0
    %6511 = vmatmul.mubr.f32.gmra.mrb[0].mxu0 %v6444
    %v6512 = vpop.f32.mrb[0].mxu0
    %v6513 = vadd.f32 %v6441, %v6512
    %v6514 = vpop.f32.mrb[0].mxu0
    %6515 = vdwg.mxu0
    %v6516 = vxor.u32 %v6513, 2147483648
    %v6517 = vmul.f32 %v6516, 1.442695
    %v6518 = vpow.pop %v6517
    %v6519 = vadd.f32 %v6518, 1.0
    %v6520 = vrcp.pop %v6519
    %v6521 = vmul.f32 1.0, %v6520
    %6523 = vrot.lane.b32.xlu0 %v6513, 32
    %v6524 = vpop.permute.xlu0 %6523
    %v6526 = vmul.f32 %v6521, %v6524
    %6528 = vrot.lane.b32.xlu0 %v6526, 64
    %v6529 = vpop.permute.xlu0 %6528
    %v6531 = vadd.f32 %v6513, %v6529
    %v6532 = vtanh.pop %v6531
    %v6533 = vsub.f32 1.0, %v6521
    %6535 = vrot.lane.b32.xlu0 %v6532, 96
    %v6536 = vpop.permute.xlu0 %6535
    %v6538 = vmul.f32 %v6533, %v6536
    %v6539 = vmul.f32 %v6521, %v5725
    %v6540 = vadd.f32 %v6538, %v6539
    %v6541 = vld [vmem:[%s13] sm:$0xff]
    %v6542 = vld [vmem:[%s13 + $0x8] sm:$0xff]
    %v6543 = vld [vmem:[%s13 + $0x10] sm:$0xff]
    %v6544 = vld [vmem:[%s13 + $0x18] sm:$0xff]
    %v6545 = vld [vmem:[%s14] sm:$0x1]
    %v6547 = vlaneseq
    %v6548 = vshrl.u32 %v6547, 7
    %v6549 = vsub.s32 0, %v6548
    %v6550 = vrot.slane %v6545, %v6549
    %6553 = vrot.lane.b32.xlu0 %v6540, 96
    %v6554 = vpop.permute.xlu0 %6553
    %v6555 = vsel %vm158, %v6554, 0
    %6557 = vmatprep.subr.mxu0 0.0
    %6558 = vmatpush1.msra.mxu0 %v6541
    %6559 = vmatprep.subr.mxu0 0.0
    %6560 = vmatpush1.msra.mxu0 %v6542
    %6561 = vmatprep.subr.mxu0 0.0
    %6562 = vmatpush1.msra.mxu0 %v6543
    %6563 = vmatprep.subr.mxu0 0.0
    %6564 = vmatpush1.msra.mxu0 %v6544
    %6565 = vmatprep.subr.mxu0 0.0
    %6566 = vmatpush1.msra.mxu0 0.0
    %6567 = vmatprep.subr.mxu0 0.0
    %6568 = vmatpush1.msra.mxu0 0.0
    %6569 = vmatprep.subr.mxu0 0.0
    %6570 = vmatpush1.msra.mxu0 0.0
    %6571 = vmatprep.subr.mxu0 0.0
    %6572 = vmatpush1.msra.mxu0 0.0
    %6573 = vmatprep.subr.mxu0 0.0
    %6574 = vmatpush1.msra.mxu0 0.0
    %6575 = vmatprep.subr.mxu0 0.0
    %6576 = vmatpush1.msra.mxu0 0.0
    %6577 = vmatprep.subr.mxu0 0.0
    %6578 = vmatpush1.msra.mxu0 0.0
    %6579 = vmatprep.subr.mxu0 0.0
    %6580 = vmatpush1.msra.mxu0 0.0
    %6581 = vmatprep.subr.mxu0 0.0
    %6582 = vmatpush1.msra.mxu0 0.0
    %6583 = vmatprep.subr.mxu0 0.0
    %6584 = vmatpush1.msra.mxu0 0.0
    %6585 = vmatprep.subr.mxu0 0.0
    %6586 = vmatpush1.msra.mxu0 0.0
    %6587 = vmatprep.subr.mxu0 0.0
    %6588 = vmatpush1.msra.mxu0 0.0
    %6589 = vmatprep.subr.mxu0 0.0
    %6590 = vmatpush1.msra.mxu0 0.0
    %6591 = vmatprep.subr.mxu0 0.0
    %6592 = vmatpush1.msra.mxu0 0.0
    %6593 = vmatprep.subr.mxu0 0.0
    %6594 = vmatpush1.msra.mxu0 0.0
    %6595 = vmatprep.subr.mxu0 0.0
    %6596 = vmatpush1.msra.mxu0 0.0
    %6597 = vmatprep.subr.mxu0 0.0
    %6598 = vmatpush1.msra.mxu0 0.0
    %6599 = vmatprep.subr.mxu0 0.0
    %6600 = vmatpush1.msra.mxu0 0.0
    %6601 = vmatprep.subr.mxu0 0.0
    %6602 = vmatpush1.msra.mxu0 0.0
    %6603 = vmatprep.subr.mxu0 0.0
    %6604 = vmatpush1.msra.mxu0 0.0
    %6605 = vmatprep.subr.mxu0 0.0
    %6606 = vmatpush1.msra.mxu0 0.0
    %6607 = vmatprep.subr.mxu0 0.0
    %6608 = vmatpush1.msra.mxu0 0.0
    %6609 = vmatprep.subr.mxu0 0.0
    %6610 = vmatpush1.msra.mxu0 0.0
    %6611 = vmatprep.subr.mxu0 0.0
    %6612 = vmatpush1.msra.mxu0 0.0
    %6613 = vmatprep.subr.mxu0 0.0
    %6614 = vmatpush1.msra.mxu0 0.0
    %6615 = vmatprep.subr.mxu0 0.0
    %6616 = vmatpush1.msra.mxu0 0.0
    %6617 = vmatprep.subr.mxu0 0.0
    %6618 = vmatpush1.msra.mxu0 0.0
    %6619 = vmatprep.subr.mxu0 0.0
    %6620 = vmatpush1.msra.mxu0 0.0
    %6621 = vmatprep.mubr.f32.mxu0 0.0
    %6622 = vmatmul.mubr.f32.gmra.mrb[0].mxu0 %v6555
    %v6623 = vpop.f32.mrb[0].mxu0
    %v6624 = vadd.f32 %v6550, %v6623
    %v6625 = vpop.f32.mrb[0].mxu0
    %6626 = vdwg.mxu0
    %s6627 = scalar_lea.vmem [#allocation14], 14
    %6628 = vst.msk [vmem:[%s6627] sm:$0x3] %vm916, %v6624
    %v6629 = vsub.f32 %v6624, %v5852
    %v6630 = vmul.f32 %v6629, %v6629
    %v6631 = vadd.f32 %v5816, %v6630
    %v6632 = vmul.f32 %v6214, 1.442695
    %v6633 = vpow.pop %v6632
    %6635 = vrot.lane.b32.xlu0 %v6214, 16
    %v6636 = vpop.permute.xlu0 %6635
    %v6638 = vsub.f32 %v6214, %v6636
    %v6639 = vmul.f32 %v6638, 0.5
    %6640 = vrot.lane.b32.xlu0 %v6214, 112
    %v6641 = vpop.permute.xlu0 %6640
    %v6643 = vsub.f32 %v6214, %v6641
    %v6644 = vmul.f32 %v6643, %v6643
    %6646 = vrot.lane.b32.xlu0 %v6644, 8
    %v6647 = vpop.permute.xlu0 %6646
    %v6649 = vadd.f32 %v6633, %v6647
    %v6650 = vsub.f32 0.0, %v6214
    %v6651 = vmul.f32 %v6650, 1.442695
    %v6652 = vpow.pop %v6651
    %v6653 = vmul.f32 %v6652, 0.5
    %6655 = vrot.lane.b32.xlu0 %v6653, 112
    %v6656 = vpop.permute.xlu0 %6655
    %v6658 = vmul.f32 %v6649, %v6656
    %6660 = vrot.lane.b32.xlu0 %v6658, 16
    %v6661 = vpop.permute.xlu0 %6660
    %v6663 = vadd.f32 %v6639, %v6661
    %v6664 = vsub.f32 %v6663, 0.5
    %v6665 = vadd.f32 %v5850, %v6664
    %v6666 = vsel %vm916, %v6631, 0.0
    %6667 = vadd.xlane.f32.xlu0 %v6666
    %v6668 = vpop.xlane.xlu0 %6667
    %v6669 = vrot.slane %v6668, 4
    %v6670 = vadd.f32 %v6668, %v6669
    %v6671 = vrot.slane %v6670, 2
    %v6672 = vadd.f32 %v6670, %v6671
    %v6673 = vrot.slane %v6672, 1
    %v6674 = vadd.f32 %v6672, %v6673
    %s6675 = vtos %v6674
    %v6676 = vstv %s6675
    %v6677 = vmul.f32 %v6676, 0.03125
    %vm6678 = vcmask 0
    %6679 = vst.msk [vmem:[#allocation15] sm:$0x1] %vm6678, %v6677
    %6681 = vrot.lane.b32.xlu0 %v6665, 104
    %v6682 = vpop.permute.xlu0 %6681
    %vm6684 = vcmask 58368
    %v6685 = vsel %vm6684, %v6682, 0.0
    %6686 = vadd.xlane.f32.xlu0 %v6685
    %v6687 = vpop.xlane.xlu0 %6686
    %v6688 = vrot.slane %v6687, 4
    %v6689 = vadd.f32 %v6687, %v6688
    %v6690 = vrot.slane %v6689, 2
    %v6691 = vadd.f32 %v6689, %v6690
    %v6692 = vrot.slane %v6691, 1
    %v6693 = vadd.f32 %v6691, %v6692
    %s6694 = vtos %v6693
    %v6695 = vstv %s6694
    %v6696 = vmul.f32 %v6695, 0.5
    %6697 = vst.msk [vmem:[#allocation17] sm:$0x1] %vm6678, %v6696
    // Predicated region
    $region90: #{tpu_custom_call.1} parent=1 // pred_check
      _
    $region91: #{tpu_custom_call.1} parent=1 // pred_check_branch
      %6699 = sbr.rel (0) target = $region93
    $region92: #{tpu_custom_call.1} parent=1 // pred_region
      %s6701 = ssub.s32 256, 256
      %6702 = vsyncadd [#allocation4], %s6701
      %s6703 = sshll.u32 [#allocation14], 4
      %s6704 = int_to_ptr.vmem [resolvable:$true] %s6703
      %6709 = dma.vmem_to_hbm [thread:$0]  %s6704, 256, %s15, [#allocation4], 32, 32, 2
    $region93: #{tpu_custom_call.1} parent=1 // pred_fallthru
      _
    // Predicated region
    $region94: #{tpu_custom_call.1} parent=1 // pred_check
      _
    $region95: #{tpu_custom_call.1} parent=1 // pred_check_branch
      %6711 = sbr.rel (0) target = $region97
    $region96: #{tpu_custom_call.1} parent=1 // pred_region
      %s6713 = ssub.s32 16, 16
      %6714 = vsyncadd [#allocation16], %s6713
      %s6716 = sshll.u32 [#allocation15], 4
      %s6717 = int_to_ptr.vmem [resolvable:$true] %s6716
      %6719 = dma.vmem_to_hbm [thread:$0]  %s6717, 16, %s16, [#allocation16]
    $region97: #{tpu_custom_call.1} parent=1 // pred_fallthru
      _
    // Predicated region
    $region98: #{tpu_custom_call.1} parent=1 // pred_check
      _
    $region99: #{tpu_custom_call.1} parent=1 // pred_check_branch
      %6721 = sbr.rel (0) target = $region101
    $region100: #{tpu_custom_call.1} parent=1 // pred_region
      %s6723 = ssub.s32 16, 16
      %6724 = vsyncadd [#allocation16], %s6723
      %s6726 = sshll.u32 [#allocation17], 4
      %s6727 = int_to_ptr.vmem [resolvable:$true] %s6726
      %6729 = dma.vmem_to_hbm [thread:$0]  %s6727, 16, %s17, [#allocation16]
    $region101: #{tpu_custom_call.1} parent=1 // pred_fallthru
      _
    // Predicated region
    $region102: #{tpu_custom_call.1} parent=1 // pred_check
      _
    $region103: #{tpu_custom_call.1} parent=1 // pred_check_branch
      %6731 = sbr.rel (0) target = $region105
    $region104: #{tpu_custom_call.1} parent=1 // pred_region
      %6732 = dma.done [#allocation4], 256
    $region105: #{tpu_custom_call.1} parent=1 // pred_fallthru
      _
    // Predicated region
    $region106: #{tpu_custom_call.1} parent=1 // pred_check
      _
    $region107: #{tpu_custom_call.1} parent=1 // pred_check_branch
      %6734 = sbr.rel (0) target = $region109
    $region108: #{tpu_custom_call.1} parent=1 // pred_region
      %6735 = dma.done [#allocation16], 16
    $region109: #{tpu_custom_call.1} parent=1 // pred_fallthru
      _
    // Predicated region
    $region110: #{tpu_custom_call.1} parent=1 // pred_check
      _
    $region111: #{tpu_custom_call.1} parent=1 // pred_check_branch
      %6737 = sbr.rel (0) target = $region113
    $region112: #{tpu_custom_call.1} parent=1 // pred_region
      %6738 = dma.done [#allocation16], 16
    $region113: #{tpu_custom_call.1} parent=1 // pred_fallthru
      _
    %6739 = vsyncpa [#allocation3], 1
    %6740 = vsyncpa [#allocation6], 1
    %6741 = vsyncpa [#allocation9], 1
    %6742 = vsyncpa [#allocation12], 1
    %6743 = vsyncpa [#allocation4], 1
    %6744 = vsyncpa [#allocation16], 1

</llo_original>
